<compile_context>
chip_gen: v7x
topology: tpu7x:2x2x1
jax: 0.10.0
libtpu: 0.0.40
codegen_flags: <defaults>
</compile_context>

<pallas_src>
import functools

import jax
import jax.numpy as jnp
from jax import lax
from jax.experimental import pallas as pl
from jax.experimental.pallas import tpu as pltpu


_VMEM_LIMIT = 32 * 1024 * 1024  # scoped-VMEM cap; safe on v5e/v6e/v7x for these tile sizes


def _pick_row_tile(h, target):
    """Row-block height: full image if small, else an even divisor of H <= target."""
    if h <= target:
        return h
    start = target - (target % 2)
    for cand in range(start, 3, -2):
        if h % cand == 0:
            return cand
    return h  # pathological H: fall back to a single full-height block (still correct)


# ------------------------- Pallas kernels -------------------------

def _pointwise_kernel(*refs, n_parts, out_splits, act):
    """out = SiLU(concat(x_parts, ch) @ w + b); output optionally split along channels."""
    x_refs = refs[:n_parts]
    w_ref = refs[n_parts]
    b_ref = refs[n_parts + 1]
    o_refs = refs[n_parts + 2:]

    if n_parts == 1:
        x = x_refs[0][...]
    else:
        # In-VMEM channel concat -> one big-K MXU matmul (HBM concat never materialized).
        x = jnp.concatenate([r[...] for r in x_refs], axis=-1)
    acc = jnp.dot(x, w_ref[...], preferred_element_type=jnp.float32)
    acc = acc + b_ref[...].astype(jnp.float32)
    if act:
        acc = acc * jax.nn.sigmoid(acc)  # SiLU in f32 (EUP + VPU)
    off = 0
    for o_ref, sz in zip(o_refs, out_splits):
        o_ref[...] = acc[:, off:off + sz].astype(o_ref.dtype)
        off += sz


def _conv3x3_mxu(xp, w, b, h_out, width, act):
    """3x3 SAME conv via im2col. xp: (h_out+2, width, cin) f32 with row halos already
    zeroed where they fall outside the image; w: (9*cin, cout); b: (1, cout) f32."""
    cin = xp.shape[-1]
    cout = w.shape[-1]
    zcol = jnp.zeros((xp.shape[0], 1, cin), jnp.float32)
    x_m1 = jnp.concatenate([zcol, xp[:, :width - 1, :]], axis=1)  # column j-1 (zero at j=0)
    x_p1 = jnp.concatenate([xp[:, 1:, :], zcol], axis=1)          # column j+1 (zero at j=W-1)
    shifted = (x_m1, xp, x_p1)
    cols = [shifted[kw][kh:kh + h_out] for kh in range(3) for kw in range(3)]
    patches = jnp.concatenate(cols, axis=-1).reshape(h_out * width, 9 * cin)
    acc = jnp.dot(patches.astype(w.dtype), w, preferred_element_type=jnp.float32)
    acc = acc + b.astype(jnp.float32)
    if act:
        acc = acc * jax.nn.sigmoid(acc)  # SiLU
    return acc.reshape(h_out, width, cout)


def _bottleneck_kernel(xm_ref, xt_ref, xb_ref, w1_ref, b1_ref, w2_ref, b2_ref, o_ref,
                       *, th, width, shortcut):
    """Fused Bottleneck: SiLU(conv3x3) -> SiLU(conv3x3) (+x); intermediate stays in VMEM."""
    hi = pl.program_id(1)
    nh = pl.num_programs(1)

    xm = xm_ref[0].astype(jnp.float32)   # (th, W, c)  rows r0 .. r0+th-1
    xt = xt_ref[0].astype(jnp.float32)   # (2,  W, c)  rows r0-2, r0-1
    xb = xb_ref[0].astype(jnp.float32)   # (2,  W, c)  rows r0+th, r0+th+1
    # zero the halo rows that fall outside the image (select -> NaN/Inf safe)
    xt = jnp.where(hi == 0, jnp.zeros_like(xt), xt)
    xb = jnp.where(hi == nh - 1, jnp.zeros_like(xb), xb)
    xp = jnp.concatenate([xt, xm, xb], axis=0)            # (th+4, W, c)

    # first 3x3 conv + SiLU over th+2 rows, entirely in VMEM (never written to HBM)
    cmid = w1_ref.shape[-1]
    mid = _conv3x3_mxu(xp, w1_ref[...], b1_ref[...], th + 2, width, act=True)

    # intermediate rows that are SAME zero-padding for the second conv must be true zeros
    zrow = jnp.zeros((1, width, cmid), jnp.float32)
    top = jnp.where(hi == 0, zrow, mid[:1])
    bot = jnp.where(hi == nh - 1, zrow, mid[th + 1:])
    mid = jnp.concatenate([top, mid[1:th + 1], bot], axis=0)

    # second 3x3 conv + SiLU, fused residual
    y = _conv3x3_mxu(mid, w2_ref[...], b2_ref[...], th, width, act=True)
    if shortcut:
        y = y + xm
    o_ref[0] = y.astype(o_ref.dtype)


# ------------------------- wrappers -------------------------

def pointwise_conv(x_parts, w, b, *, act=True, out_splits=None, tile_n_target=2048):
    """1x1 conv (+folded BN, +SiLU) over the implicit channel-concat of x_parts."""
    B, H, W, _ = x_parts[0].shape
    N = B * H * W
    Cout = w.shape[-1]
    if out_splits is None:
        out_splits = (Cout,)
    assert sum(out_splits) == Cout
    xs = [p.reshape(N, p.shape[-1]) for p in x_parts]
    tile_n = N if N <= tile_n_target else tile_n_target     # target is a multiple of 8
    grid = (pl.cdiv(N, tile_n),)                             # partial tail tile handled by Pallas

    in_specs = [pl.BlockSpec((tile_n, xf.shape[1]), lambda i: (i, 0)) for xf in xs]
    in_specs.append(pl.BlockSpec(w.shape, lambda i: (0, 0)))
    in_specs.append(pl.BlockSpec(b.shape, lambda i: (0, 0)))
    out_shape = tuple(jax.ShapeDtypeStruct((N, s), x_parts[0].dtype) for s in out_splits)
    out_specs = tuple(pl.BlockSpec((tile_n, s), lambda i: (i, 0)) for s in out_splits)

    outs = pl.pallas_call(
        functools.partial(_pointwise_kernel, n_parts=len(xs),
                          out_splits=tuple(out_splits), act=act),
        out_shape=out_shape,
        grid=grid,
        in_specs=in_specs,
        out_specs=out_specs,
        compiler_params=pltpu.CompilerParams(
            dimension_semantics=("parallel",), vmem_limit_bytes=_VMEM_LIMIT),
    )(*xs, w, b)
    return tuple(o.reshape(B, H, W, s) for o, s in zip(outs, out_splits))


def bottleneck_block(x, w1, b1, w2, b2, *, shortcut, th_target=16):
    """Fused Bottleneck over row blocks with 2-row halos fetched via extra BlockSpecs."""
    B, H, W, cin = x.shape
    cout = w2.shape[-1]
    th = _pick_row_tile(H, th_target)   # divides H (or equals H), even when nH > 1
    nH = H // th
    th2 = th // 2
    nblk2 = pl.cdiv(H, 2)

    in_specs = [
        pl.BlockSpec((1, th, W, cin), lambda bi, hi: (bi, hi, 0, 0)),
        # 2-row halos above / below the block (clamped at the image border, zeroed in-kernel)
        pl.BlockSpec((1, 2, W, cin),
                     lambda bi, hi: (bi, jnp.maximum(hi * th2 - 1, 0), 0, 0)),
        pl.BlockSpec((1, 2, W, cin),
                     lambda bi, hi: (bi, jnp.minimum((hi + 1) * th2, nblk2 - 1), 0, 0)),
        pl.BlockSpec(w1.shape, lambda bi, hi: (0, 0)),
        pl.BlockSpec(b1.shape, lambda bi, hi: (0, 0)),
        pl.BlockSpec(w2.shape, lambda bi, hi: (0, 0)),
        pl.BlockSpec(b2.shape, lambda bi, hi: (0, 0)),
    ]
    kern = functools.partial(_bottleneck_kernel, th=th, width=W, shortcut=shortcut)
    return pl.pallas_call(
        kern,
        out_shape=jax.ShapeDtypeStruct((B, H, W, cout), x.dtype),
        grid=(B, nH),
        in_specs=in_specs,
        out_specs=pl.BlockSpec((1, th, W, cout), lambda bi, hi: (bi, hi, 0, 0)),
        compiler_params=pltpu.CompilerParams(
            dimension_semantics=("parallel", "parallel"), vmem_limit_bytes=_VMEM_LIMIT),
    )(x, x, x, w1, b1, w2, b2)


# ------------------------- C2f forward -------------------------

def c2f_forward(x, params, c2, n, shortcut=True, e=0.5, compute_dtype=None):
    c = int(c2 * e)
    dt = compute_dtype if compute_dtype is not None else x.dtype
    cast = lambda a: a.astype(dt)
    xc = cast(x)

    # cv1: c1 -> 2c; the two halves are written as separate arrays so downstream kernels
    # never DMA or lane-slice unused channels.
    y0, y1 = pointwise_conv([xc], cast(params["cv1_w"]), params["cv1_b"],
                            act=True, out_splits=(c, c))

    ys = [y0, y1]
    prev = y1
    for k in range(n):
        bp = params["m"][k]
        w1 = cast(bp["cv1_w"].reshape(9 * c, c))
        w2 = cast(bp["cv2_w"].reshape(9 * c, c))
        prev = bottleneck_block(prev, w1, bp["cv1_b"], w2, bp["cv2_b"], shortcut=shortcut)
        ys.append(prev)

    # cv2 on concat(ys, channel): the concat happens only inside VMEM (single big-K matmul).
    (out,) = pointwise_conv(ys, cast(params["cv2_w"]), params["cv2_b"], act=True)
    return out


# ------------------------- parameter init (BN folded, eval mode) -------------------------

def _bn_fold(key, cout, eps=1e-5):
    k1, k2, k3, k4 = jax.random.split(key, 4)
    gamma = 1.0 + 0.1 * jax.random.normal(k1, (cout,), jnp.float32)
    beta = 0.1 * jax.random.normal(k2, (cout,), jnp.float32)
    mean = 0.1 * jax.random.normal(k3, (cout,), jnp.float32)
    var = jnp.abs(jax.random.normal(k4, (cout,), jnp.float32)) + 0.5
    scale = gamma / jnp.sqrt(var + eps)
    return scale, beta - mean * scale


def make_conv1x1(key, cin, cout):
    kw, kb = jax.random.split(key)
    w = 0.1 * jax.random.normal(kw, (cin, cout), jnp.float32)
    scale, bias = _bn_fold(kb, cout)
    return w * scale[None, :], bias[None, :]


def make_conv3x3(key, cin, cout):
    kw, kb = jax.random.split(key)
    w = 0.1 * jax.random.normal(kw, (3, 3, cin, cout), jnp.float32)
    scale, bias = _bn_fold(kb, cout)
    return w * scale[None, None, None, :], bias[None, :]


def build_params(key, c1, c2, n, e=0.5):
    c = int(c2 * e)
    ks = jax.random.split(key, 2 + 2 * n)
    p = {"m": []}
    p["cv1_w"], p["cv1_b"] = make_conv1x1(ks[0], c1, 2 * c)
    p["cv2_w"], p["cv2_b"] = make_conv1x1(ks[1], (2 + n) * c, c2)
    for k in range(n):
        bp = {}
        bp["cv1_w"], bp["cv1_b"] = make_conv3x3(ks[2 + 2 * k], c, c)
        bp["cv2_w"], bp["cv2_b"] = make_conv3x3(ks[3 + 2 * k], c, c)
        p["m"].append(bp)
    return p


# ------------------------- pure-JAX reference -------------------------

def _silu(x):
    return x * jax.nn.sigmoid(x)


def _ref_conv1x1(x, w, b, act=True):
    y = jnp.einsum("bhwc,cd->bhwd", x, w) + b.reshape(1, 1, 1, -1)
    return _silu(y) if act else y


def _ref_conv3x3(x, w, b, act=True):
    y = lax.conv_general_dilated(x, w, (1, 1), "SAME",
                                 dimension_numbers=("NHWC", "HWIO", "NHWC"))
    y = y + b.reshape(1, 1, 1, -1)
    return _silu(y) if act else y


def reference_c2f(x, p, c2, n, shortcut=True, e=0.5):
    c = int(c2 * e)
    y = _ref_conv1x1(x, p["cv1_w"], p["cv1_b"])
    ys = [y[..., :c], y[..., c:2 * c]]
    for k in range(n):
        bp = p["m"][k]
        prev = ys[-1]
        t = _ref_conv3x3(prev, bp["cv1_w"], bp["cv1_b"])
        t = _ref_conv3x3(t, bp["cv2_w"], bp["cv2_b"])
        ys.append(prev + t if shortcut else t)
    return _ref_conv1x1(jnp.concatenate(ys, -1), p["cv2_w"], p["cv2_b"])


# ------------------------- main -------------------------

if __name__ == "__main__":
    B, H, W = 2, 16, 16
    key = jax.random.PRNGKey(0)

    configs = [
        # (c1, c2, n, shortcut, compute_dtype, tolerance)
        (16, 16, 1, True, jnp.float32, 2e-3),    # residual path exercised, f32
        (8, 16, 2, False, jnp.float32, 2e-3),    # two stacked Bottlenecks, no residual, f32
        (16, 16, 1, True, jnp.bfloat16, 2.5e-1), # bf16 MXU/DMA path (f32 accumulation)
    ]
    for (c1, c2, n, shortcut, cdt, tol) in configs:
        kx, kp = jax.random.split(jax.random.fold_in(key, 17 * c1 + n))
        x = jax.random.normal(kx, (B, H, W, c1), jnp.float32)
        params = build_params(kp, c1, c2, n)

        fwd = jax.jit(functools.partial(c2f_forward, params=params, c2=c2, n=n,
                                        shortcut=shortcut, compute_dtype=cdt))
        out = jax.block_until_ready(fwd(x))
        assert out.shape == (B, H, W, c2), out.shape

        ref = reference_c2f(x, params, c2, n, shortcut)
        err = float(jnp.max(jnp.abs(out.astype(jnp.float32) - ref)))
        assert err < tol, f"config={(c1, c2, n, shortcut, cdt)} max abs err {err}"

    print("KERNEL_OK")
</pallas_src>

<mosaic_0001>
module attributes {stable_mosaic.version = 11 : i64} {
  func.func @_pointwise_kernel(%arg0: i32, %arg1: memref<512x8xf32, #tpu.memory_space<vmem>>, %arg2: memref<512x8xf32, #tpu.memory_space<vmem>>, %arg3: memref<512x8xf32, #tpu.memory_space<vmem>>, %arg4: memref<24x16xf32, #tpu.memory_space<vmem>>, %arg5: memref<1x16xf32, #tpu.memory_space<vmem>>, %arg6: memref<512x16xf32, #tpu.memory_space<vmem>>) attributes {dimension_semantics = [#tpu.dimension_semantics<parallel>], iteration_bounds = array<i64: 1>, scalar_prefetch = 0 : i64, scratch_operands = 0 : i64, tpu.core_type = #tpu.core_type<tc>, window_params = [{transform_indices = @transform_0, window_bounds = array<i64: 512, 8>}, {transform_indices = @transform_1, window_bounds = array<i64: 512, 8>}, {transform_indices = @transform_2, window_bounds = array<i64: 512, 8>}, {pipeline_mode = #tpu.pipeline_mode<synchronous>, transform_indices = @transform_3, window_bounds = array<i64: 24, 16>}, {pipeline_mode = #tpu.pipeline_mode<synchronous>, transform_indices = @transform_4, window_bounds = array<i64: 1, 16>}, {transform_indices = @transform_5, window_bounds = array<i64: 512, 16>}]} {
    %c0 = arith.constant 0 : index
    %c0_0 = arith.constant 0 : index
    %0 = vector.load %arg1[%c0, %c0_0] : memref<512x8xf32, #tpu.memory_space<vmem>>, vector<512x8xf32>
    %c0_1 = arith.constant 0 : index
    %c0_2 = arith.constant 0 : index
    %1 = vector.load %arg2[%c0_1, %c0_2] : memref<512x8xf32, #tpu.memory_space<vmem>>, vector<512x8xf32>
    %c0_3 = arith.constant 0 : index
    %c0_4 = arith.constant 0 : index
    %2 = vector.load %arg3[%c0_3, %c0_4] : memref<512x8xf32, #tpu.memory_space<vmem>>, vector<512x8xf32>
    %3 = tpu.concatenate %0, %1, %2 in 1 : vector<512x8xf32>, vector<512x8xf32>, vector<512x8xf32> -> vector<512x24xf32>
    %c0_5 = arith.constant 0 : index
    %c0_6 = arith.constant 0 : index
    %4 = vector.load %arg4[%c0_5, %c0_6] : memref<24x16xf32, #tpu.memory_space<vmem>>, vector<24x16xf32>
    %cst = arith.constant dense<0.000000e+00> : vector<512x16xf32>
    %5 = tpu.matmul %3, %4, %cst {dimension_numbers = #tpu.dot_dimension_numbers<[1], [0], [0], [1], [0, 0, 1, 1], [], []>} : vector<512x24xf32>, vector<24x16xf32>, vector<512x16xf32> -> vector<512x16xf32>
    %c0_7 = arith.constant 0 : index
    %c0_8 = arith.constant 0 : index
    %6 = vector.load %arg5[%c0_7, %c0_8] : memref<1x16xf32, #tpu.memory_space<vmem>>, vector<1x16xf32>
    %7 = vector.broadcast %6 : vector<1x16xf32> to vector<512x16xf32>
    %8 = arith.addf %5, %7 : vector<512x16xf32>
    %9 = arith.negf %8 : vector<512x16xf32>
    %10 = math.exp %9 : vector<512x16xf32>
    %cst_9 = arith.constant 1.000000e+00 : f32
    %11 = vector.broadcast %cst_9 : f32 to vector<512x16xf32>
    %12 = arith.addf %11, %10 : vector<512x16xf32>
    %13 = arith.divf %11, %12 : vector<512x16xf32>
    %14 = arith.mulf %8, %13 : vector<512x16xf32>
    %c0_10 = arith.constant 0 : index
    %c0_11 = arith.constant 0 : index
    %15 = vector.load %arg6[%c0_10, %c0_11] : memref<512x16xf32, #tpu.memory_space<vmem>>, vector<512x16xf32>
    tpu.vector_store %arg6[%c0_10, %c0_11], %14 {strides = array<i32>} : memref<512x16xf32, #tpu.memory_space<vmem>>, vector<512x16xf32>,
    return
  }
  func.func @transform_0(%arg0: i32) -> (i32, i32) {
    %c0_i32 = arith.constant 0 : i32
    %c0_i32_0 = arith.constant 0 : i32
    return %arg0, %c0_i32 : i32, i32
  }
  func.func @transform_1(%arg0: i32) -> (i32, i32) {
    %c0_i32 = arith.constant 0 : i32
    %c0_i32_0 = arith.constant 0 : i32
    return %arg0, %c0_i32 : i32, i32
  }
  func.func @transform_2(%arg0: i32) -> (i32, i32) {
    %c0_i32 = arith.constant 0 : i32
    %c0_i32_0 = arith.constant 0 : i32
    return %arg0, %c0_i32 : i32, i32
  }
  func.func @transform_3(%arg0: i32) -> (i32, i32) {
    %c0_i32 = arith.constant 0 : i32
    %c0_i32_0 = arith.constant 0 : i32
    %c0_i32_1 = arith.constant 0 : i32
    return %c0_i32, %c0_i32_0 : i32, i32
  }
  func.func @transform_4(%arg0: i32) -> (i32, i32) {
    %c0_i32 = arith.constant 0 : i32
    %c0_i32_0 = arith.constant 0 : i32
    %c0_i32_1 = arith.constant 0 : i32
    return %c0_i32, %c0_i32_0 : i32, i32
  }
  func.func @transform_5(%arg0: i32) -> (i32, i32) {
    %c0_i32 = arith.constant 0 : i32
    %c0_i32_0 = arith.constant 0 : i32
    return %arg0, %c0_i32 : i32, i32
  }
}

module attributes {stable_mosaic.version = 11 : i64} {
  func.func @_bottleneck_kernel(%arg0: i32, %arg1: i32, %arg2: memref<1x16x16x8xf32, #tpu.memory_space<vmem>>, %arg3: memref<1x2x16x8xf32, #tpu.memory_space<vmem>>, %arg4: memref<1x2x16x8xf32, #tpu.memory_space<vmem>>, %arg5: memref<72x8xf32, #tpu.memory_space<vmem>>, %arg6: memref<1x8xf32, #tpu.memory_space<vmem>>, %arg7: memref<72x8xf32, #tpu.memory_space<vmem>>, %arg8: memref<1x8xf32, #tpu.memory_space<vmem>>, %arg9: memref<1x16x16x8xf32, #tpu.memory_space<vmem>>) attributes {dimension_semantics = [#tpu.dimension_semantics<parallel>, #tpu.dimension_semantics<parallel>], iteration_bounds = array<i64: 2, 1>, scalar_prefetch = 0 : i64, scratch_operands = 0 : i64, tpu.core_type = #tpu.core_type<tc>, window_params = [{transform_indices = @transform_0, window_bounds = array<i64: 1, 16, 16, 8>}, {transform_indices = @transform_1, window_bounds = array<i64: 1, 2, 16, 8>}, {transform_indices = @transform_2, window_bounds = array<i64: 1, 2, 16, 8>}, {pipeline_mode = #tpu.pipeline_mode<synchronous>, transform_indices = @transform_3, window_bounds = array<i64: 72, 8>}, {pipeline_mode = #tpu.pipeline_mode<synchronous>, transform_indices = @transform_4, window_bounds = array<i64: 1, 8>}, {pipeline_mode = #tpu.pipeline_mode<synchronous>, transform_indices = @transform_5, window_bounds = array<i64: 72, 8>}, {pipeline_mode = #tpu.pipeline_mode<synchronous>, transform_indices = @transform_6, window_bounds = array<i64: 1, 8>}, {transform_indices = @transform_7, window_bounds = array<i64: 1, 16, 16, 8>}]} {
    %c0 = arith.constant 0 : index
    %c0_0 = arith.constant 0 : index
    %c0_1 = arith.constant 0 : index
    %c0_2 = arith.constant 0 : index
    %0 = vector.load %arg2[%c0, %c0_0, %c0_1, %c0_2] : memref<1x16x16x8xf32, #tpu.memory_space<vmem>>, vector<1x16x16x8xf32>
    %1 = vector.shape_cast %0 : vector<1x16x16x8xf32> to vector<16x16x8xf32>
    %c0_3 = arith.constant 0 : index
    %c0_4 = arith.constant 0 : index
    %c0_5 = arith.constant 0 : index
    %c0_6 = arith.constant 0 : index
    %2 = vector.load %arg3[%c0_3, %c0_4, %c0_5, %c0_6] : memref<1x2x16x8xf32, #tpu.memory_space<vmem>>, vector<1x2x16x8xf32>
    %3 = vector.shape_cast %2 : vector<1x2x16x8xf32> to vector<2x16x8xf32>
    %c0_7 = arith.constant 0 : index
    %c0_8 = arith.constant 0 : index
    %c0_9 = arith.constant 0 : index
    %c0_10 = arith.constant 0 : index
    %4 = vector.load %arg4[%c0_7, %c0_8, %c0_9, %c0_10] : memref<1x2x16x8xf32, #tpu.memory_space<vmem>>, vector<1x2x16x8xf32>
    %5 = vector.shape_cast %4 : vector<1x2x16x8xf32> to vector<2x16x8xf32>
    %c0_i32 = arith.constant 0 : i32
    %6 = arith.cmpi eq, %arg1, %c0_i32 : i32
    %cst = arith.constant 0.000000e+00 : f32
    %7 = vector.broadcast %cst : f32 to vector<2x16x8xf32>
    %8 = arith.select %6, %7, %3 : vector<2x16x8xf32>
    %c0_i32_11 = arith.constant 0 : i32
    %9 = arith.cmpi eq, %arg1, %c0_i32_11 : i32
    %cst_12 = arith.constant 0.000000e+00 : f32
    %10 = vector.broadcast %cst_12 : f32 to vector<2x16x8xf32>
    %11 = arith.select %9, %10, %5 : vector<2x16x8xf32>
    %12 = tpu.concatenate %8, %1, %11 in 0 : vector<2x16x8xf32>, vector<16x16x8xf32>, vector<2x16x8xf32> -> vector<20x16x8xf32>
    %c0_13 = arith.constant 0 : index
    %c0_14 = arith.constant 0 : index
    %13 = vector.load %arg5[%c0_13, %c0_14] : memref<72x8xf32, #tpu.memory_space<vmem>>, vector<72x8xf32>
    %c0_15 = arith.constant 0 : index
    %c0_16 = arith.constant 0 : index
    %14 = vector.load %arg6[%c0_15, %c0_16] : memref<1x8xf32, #tpu.memory_space<vmem>>, vector<1x8xf32>
    %cst_17 = arith.constant 0.000000e+00 : f32
    %15 = vector.broadcast %cst_17 : f32 to vector<20x1x8xf32>
    %16 = vector.extract_strided_slice %12 {offsets = [0, 0, 0], sizes = [20, 15, 8], strides = [1, 1, 1]} : vector<20x16x8xf32> to vector<20x15x8xf32>
    %17 = tpu.concatenate %15, %16 in 1 : vector<20x1x8xf32>, vector<20x15x8xf32> -> vector<20x16x8xf32>
    %18 = vector.extract_strided_slice %12 {offsets = [0, 1, 0], sizes = [20, 15, 8], strides = [1, 1, 1]} : vector<20x16x8xf32> to vector<20x15x8xf32>
    %19 = tpu.concatenate %18, %15 in 1 : vector<20x15x8xf32>, vector<20x1x8xf32> -> vector<20x16x8xf32>
    %20 = vector.extract_strided_slice %17 {offsets = [0, 0, 0], sizes = [18, 16, 8], strides = [1, 1, 1]} : vector<20x16x8xf32> to vector<18x16x8xf32>
    %21 = vector.extract_strided_slice %12 {offsets = [0, 0, 0], sizes = [18, 16, 8], strides = [1, 1, 1]} : vector<20x16x8xf32> to vector<18x16x8xf32>
    %22 = vector.extract_strided_slice %19 {offsets = [0, 0, 0], sizes = [18, 16, 8], strides = [1, 1, 1]} : vector<20x16x8xf32> to vector<18x16x8xf32>
    %23 = vector.extract_strided_slice %17 {offsets = [1, 0, 0], sizes = [18, 16, 8], strides = [1, 1, 1]} : vector<20x16x8xf32> to vector<18x16x8xf32>
    %24 = vector.extract_strided_slice %12 {offsets = [1, 0, 0], sizes = [18, 16, 8], strides = [1, 1, 1]} : vector<20x16x8xf32> to vector<18x16x8xf32>
    %25 = vector.extract_strided_slice %19 {offsets = [1, 0, 0], sizes = [18, 16, 8], strides = [1, 1, 1]} : vector<20x16x8xf32> to vector<18x16x8xf32>
    %26 = vector.extract_strided_slice %17 {offsets = [2, 0, 0], sizes = [18, 16, 8], strides = [1, 1, 1]} : vector<20x16x8xf32> to vector<18x16x8xf32>
    %27 = vector.extract_strided_slice %12 {offsets = [2, 0, 0], sizes = [18, 16, 8], strides = [1, 1, 1]} : vector<20x16x8xf32> to vector<18x16x8xf32>
    %28 = vector.extract_strided_slice %19 {offsets = [2, 0, 0], sizes = [18, 16, 8], strides = [1, 1, 1]} : vector<20x16x8xf32> to vector<18x16x8xf32>
    %29 = tpu.concatenate %20, %21, %22, %23, %24, %25, %26, %27, %28 in 2 : vector<18x16x8xf32>, vector<18x16x8xf32>, vector<18x16x8xf32>, vector<18x16x8xf32>, vector<18x16x8xf32>, vector<18x16x8xf32>, vector<18x16x8xf32>, vector<18x16x8xf32>, vector<18x16x8xf32> -> vector<18x16x72xf32>
    %30 = vector.shape_cast %29 : vector<18x16x72xf32> to vector<288x72xf32>
    %cst_18 = arith.constant dense<0.000000e+00> : vector<288x8xf32>
    %31 = tpu.matmul %30, %13, %cst_18 {dimension_numbers = #tpu.dot_dimension_numbers<[1], [0], [0], [1], [0, 0, 1, 1], [], []>} : vector<288x72xf32>, vector<72x8xf32>, vector<288x8xf32> -> vector<288x8xf32>
    %32 = vector.broadcast %14 : vector<1x8xf32> to vector<288x8xf32>
    %33 = arith.addf %31, %32 : vector<288x8xf32>
    %34 = arith.negf %33 : vector<288x8xf32>
    %35 = math.exp %34 : vector<288x8xf32>
    %cst_19 = arith.constant 1.000000e+00 : f32
    %36 = vector.broadcast %cst_19 : f32 to vector<288x8xf32>
    %37 = arith.addf %36, %35 : vector<288x8xf32>
    %38 = arith.divf %36, %37 : vector<288x8xf32>
    %39 = arith.mulf %33, %38 : vector<288x8xf32>
    %40 = vector.shape_cast %39 : vector<288x8xf32> to vector<18x16x8xf32>
    %cst_20 = arith.constant 0.000000e+00 : f32
    %41 = vector.broadcast %cst_20 : f32 to vector<1x16x8xf32>
    %c0_i32_21 = arith.constant 0 : i32
    %42 = arith.cmpi eq, %arg1, %c0_i32_21 : i32
    %43 = vector.extract_strided_slice %40 {offsets = [0, 0, 0], sizes = [1, 16, 8], strides = [1, 1, 1]} : vector<18x16x8xf32> to vector<1x16x8xf32>
    %44 = arith.select %42, %41, %43 : vector<1x16x8xf32>
    %c0_i32_22 = arith.constant 0 : i32
    %45 = arith.cmpi eq, %arg1, %c0_i32_22 : i32
    %46 = vector.extract_strided_slice %40 {offsets = [17, 0, 0], sizes = [1, 16, 8], strides = [1, 1, 1]} : vector<18x16x8xf32> to vector<1x16x8xf32>
    %47 = arith.select %45, %41, %46 : vector<1x16x8xf32>
    %48 = vector.extract_strided_slice %40 {offsets = [1, 0, 0], sizes = [16, 16, 8], strides = [1, 1, 1]} : vector<18x16x8xf32> to vector<16x16x8xf32>
    %49 = tpu.concatenate %44, %48, %47 in 0 : vector<1x16x8xf32>, vector<16x16x8xf32>, vector<1x16x8xf32> -> vector<18x16x8xf32>
    %c0_23 = arith.constant 0 : index
    %c0_24 = arith.constant 0 : index
    %50 = vector.load %arg7[%c0_23, %c0_24] : memref<72x8xf32, #tpu.memory_space<vmem>>, vector<72x8xf32>
    %c0_25 = arith.constant 0 : index
    %c0_26 = arith.constant 0 : index
    %51 = vector.load %arg8[%c0_25, %c0_26] : memref<1x8xf32, #tpu.memory_space<vmem>>, vector<1x8xf32>
    %cst_27 = arith.constant 0.000000e+00 : f32
    %52 = vector.broadcast %cst_27 : f32 to vector<18x1x8xf32>
    %53 = vector.extract_strided_slice %49 {offsets = [0, 0, 0], sizes = [18, 15, 8], strides = [1, 1, 1]} : vector<18x16x8xf32> to vector<18x15x8xf32>
    %54 = tpu.concatenate %52, %53 in 1 : vector<18x1x8xf32>, vector<18x15x8xf32> -> vector<18x16x8xf32>
    %55 = vector.extract_strided_slice %49 {offsets = [0, 1, 0], sizes = [18, 15, 8], strides = [1, 1, 1]} : vector<18x16x8xf32> to vector<18x15x8xf32>
    %56 = tpu.concatenate %55, %52 in 1 : vector<18x15x8xf32>, vector<18x1x8xf32> -> vector<18x16x8xf32>
    %57 = vector.extract_strided_slice %54 {offsets = [0, 0, 0], sizes = [16, 16, 8], strides = [1, 1, 1]} : vector<18x16x8xf32> to vector<16x16x8xf32>
    %58 = vector.extract_strided_slice %49 {offsets = [0, 0, 0], sizes = [16, 16, 8], strides = [1, 1, 1]} : vector<18x16x8xf32> to vector<16x16x8xf32>
    %59 = vector.extract_strided_slice %56 {offsets = [0, 0, 0], sizes = [16, 16, 8], strides = [1, 1, 1]} : vector<18x16x8xf32> to vector<16x16x8xf32>
    %60 = vector.extract_strided_slice %54 {offsets = [1, 0, 0], sizes = [16, 16, 8], strides = [1, 1, 1]} : vector<18x16x8xf32> to vector<16x16x8xf32>
    %61 = vector.extract_strided_slice %49 {offsets = [1, 0, 0], sizes = [16, 16, 8], strides = [1, 1, 1]} : vector<18x16x8xf32> to vector<16x16x8xf32>
    %62 = vector.extract_strided_slice %56 {offsets = [1, 0, 0], sizes = [16, 16, 8], strides = [1, 1, 1]} : vector<18x16x8xf32> to vector<16x16x8xf32>
    %63 = vector.extract_strided_slice %54 {offsets = [2, 0, 0], sizes = [16, 16, 8], strides = [1, 1, 1]} : vector<18x16x8xf32> to vector<16x16x8xf32>
    %64 = vector.extract_strided_slice %49 {offsets = [2, 0, 0], sizes = [16, 16, 8], strides = [1, 1, 1]} : vector<18x16x8xf32> to vector<16x16x8xf32>
    %65 = vector.extract_strided_slice %56 {offsets = [2, 0, 0], sizes = [16, 16, 8], strides = [1, 1, 1]} : vector<18x16x8xf32> to vector<16x16x8xf32>
    %66 = tpu.concatenate %57, %58, %59, %60, %61, %62, %63, %64, %65 in 2 : vector<16x16x8xf32>, vector<16x16x8xf32>, vector<16x16x8xf32>, vector<16x16x8xf32>, vector<16x16x8xf32>, vector<16x16x8xf32>, vector<16x16x8xf32>, vector<16x16x8xf32>, vector<16x16x8xf32> -> vector<16x16x72xf32>
    %67 = vector.shape_cast %66 : vector<16x16x72xf32> to vector<256x72xf32>
    %cst_28 = arith.constant dense<0.000000e+00> : vector<256x8xf32>
    %68 = tpu.matmul %67, %50, %cst_28 {dimension_numbers = #tpu.dot_dimension_numbers<[1], [0], [0], [1], [0, 0, 1, 1], [], []>} : vector<256x72xf32>, vector<72x8xf32>, vector<256x8xf32> -> vector<256x8xf32>
    %69 = vector.broadcast %51 : vector<1x8xf32> to vector<256x8xf32>
    %70 = arith.addf %68, %69 : vector<256x8xf32>
    %71 = arith.negf %70 : vector<256x8xf32>
    %72 = math.exp %71 : vector<256x8xf32>
    %cst_29 = arith.constant 1.000000e+00 : f32
    %73 = vector.broadcast %cst_29 : f32 to vector<256x8xf32>
    %74 = arith.addf %73, %72 : vector<256x8xf32>
    %75 = arith.divf %73, %74 : vector<256x8xf32>
    %76 = arith.mulf %70, %75 : vector<256x8xf32>
    %77 = vector.shape_cast %76 : vector<256x8xf32> to vector<16x16x8xf32>
    %78 = arith.addf %77, %1 : vector<16x16x8xf32>
    %c0_30 = arith.constant 0 : index
    %c0_31 = arith.constant 0 : index
    %c0_32 = arith.constant 0 : index
    %c0_33 = arith.constant 0 : index
    %79 = vector.load %arg9[%c0_30, %c0_31, %c0_32, %c0_33] : memref<1x16x16x8xf32, #tpu.memory_space<vmem>>, vector<1x16x16x8xf32>
    %80 = vector.shape_cast %79 : vector<1x16x16x8xf32> to vector<16x16x8xf32>
    %81 = vector.shape_cast %78 : vector<16x16x8xf32> to vector<1x16x16x8xf32>
    tpu.vector_store %arg9[%c0_30, %c0_31, %c0_32, %c0_33], %81 {strides = array<i32>} : memref<1x16x16x8xf32, #tpu.memory_space<vmem>>, vector<1x16x16x8xf32>,
    return
  }
  func.func @transform_0(%arg0: i32, %arg1: i32) -> (i32, i32, i32, i32) {
    %c0_i32 = arith.constant 0 : i32
    %c0_i32_0 = arith.constant 0 : i32
    %c0_i32_1 = arith.constant 0 : i32
    return %arg0, %arg1, %c0_i32, %c0_i32_0 : i32, i32, i32, i32
  }
  func.func @transform_1(%arg0: i32, %arg1: i32) -> (i32, i32, i32, i32) {
    %c8_i32 = arith.constant 8 : i32
    %0 = arith.muli %arg1, %c8_i32 : i32
    %c1_i32 = arith.constant 1 : i32
    %1 = arith.subi %0, %c1_i32 : i32
    %c0_i32 = arith.constant 0 : i32
    %2 = arith.maxsi %1, %c0_i32 : i32
    %c0_i32_0 = arith.constant 0 : i32
    %c0_i32_1 = arith.constant 0 : i32
    %c0_i32_2 = arith.constant 0 : i32
    return %arg0, %2, %c0_i32_0, %c0_i32_1 : i32, i32, i32, i32
  }
  func.func @transform_2(%arg0: i32, %arg1: i32) -> (i32, i32, i32, i32) {
    %c1_i32 = arith.constant 1 : i32
    %0 = arith.addi %arg1, %c1_i32 : i32
    %c8_i32 = arith.constant 8 : i32
    %1 = arith.muli %0, %c8_i32 : i32
    %c7_i32 = arith.constant 7 : i32
    %2 = arith.minsi %1, %c7_i32 : i32
    %c0_i32 = arith.constant 0 : i32
    %c0_i32_0 = arith.constant 0 : i32
    %c0_i32_1 = arith.constant 0 : i32
    return %arg0, %2, %c0_i32, %c0_i32_0 : i32, i32, i32, i32
  }
  func.func @transform_3(%arg0: i32, %arg1: i32) -> (i32, i32) {
    %c0_i32 = arith.constant 0 : i32
    %c0_i32_0 = arith.constant 0 : i32
    %c0_i32_1 = arith.constant 0 : i32
    return %c0_i32, %c0_i32_0 : i32, i32
  }
  func.func @transform_4(%arg0: i32, %arg1: i32) -> (i32, i32) {
    %c0_i32 = arith.constant 0 : i32
    %c0_i32_0 = arith.constant 0 : i32
    %c0_i32_1 = arith.constant 0 : i32
    return %c0_i32, %c0_i32_0 : i32, i32
  }
  func.func @transform_5(%arg0: i32, %arg1: i32) -> (i32, i32) {
    %c0_i32 = arith.constant 0 : i32
    %c0_i32_0 = arith.constant 0 : i32
    %c0_i32_1 = arith.constant 0 : i32
    return %c0_i32, %c0_i32_0 : i32, i32
  }
  func.func @transform_6(%arg0: i32, %arg1: i32) -> (i32, i32) {
    %c0_i32 = arith.constant 0 : i32
    %c0_i32_0 = arith.constant 0 : i32
    %c0_i32_1 = arith.constant 0 : i32
    return %c0_i32, %c0_i32_0 : i32, i32
  }
  func.func @transform_7(%arg0: i32, %arg1: i32) -> (i32, i32, i32, i32) {
    %c0_i32 = arith.constant 0 : i32
    %c0_i32_0 = arith.constant 0 : i32
    %c0_i32_1 = arith.constant 0 : i32
    return %arg0, %arg1, %c0_i32, %c0_i32_0 : i32, i32, i32, i32
  }
}

module attributes {stable_mosaic.version = 11 : i64} {
  func.func @_pointwise_kernel(%arg0: i32, %arg1: memref<512x16xf32, #tpu.memory_space<vmem>>, %arg2: memref<16x16xf32, #tpu.memory_space<vmem>>, %arg3: memref<1x16xf32, #tpu.memory_space<vmem>>, %arg4: memref<512x8xf32, #tpu.memory_space<vmem>>, %arg5: memref<512x8xf32, #tpu.memory_space<vmem>>) attributes {dimension_semantics = [#tpu.dimension_semantics<parallel>], iteration_bounds = array<i64: 1>, scalar_prefetch = 0 : i64, scratch_operands = 0 : i64, tpu.core_type = #tpu.core_type<tc>, window_params = [{transform_indices = @transform_0, window_bounds = array<i64: 512, 16>}, {pipeline_mode = #tpu.pipeline_mode<synchronous>, transform_indices = @transform_1, window_bounds = array<i64: 16, 16>}, {pipeline_mode = #tpu.pipeline_mode<synchronous>, transform_indices = @transform_2, window_bounds = array<i64: 1, 16>}, {transform_indices = @transform_3, window_bounds = array<i64: 512, 8>}, {transform_indices = @transform_4, window_bounds = array<i64: 512, 8>}]} {
    %c0 = arith.constant 0 : index
    %c0_0 = arith.constant 0 : index
    %0 = vector.load %arg1[%c0, %c0_0] : memref<512x16xf32, #tpu.memory_space<vmem>>, vector<512x16xf32>
    %c0_1 = arith.constant 0 : index
    %c0_2 = arith.constant 0 : index
    %1 = vector.load %arg2[%c0_1, %c0_2] : memref<16x16xf32, #tpu.memory_space<vmem>>, vector<16x16xf32>
    %cst = arith.constant dense<0.000000e+00> : vector<512x16xf32>
    %2 = tpu.matmul %0, %1, %cst {dimension_numbers = #tpu.dot_dimension_numbers<[1], [0], [0], [1], [0, 0, 1, 1], [], []>} : vector<512x16xf32>, vector<16x16xf32>, vector<512x16xf32> -> vector<512x16xf32>
    %c0_3 = arith.constant 0 : index
    %c0_4 = arith.constant 0 : index
    %3 = vector.load %arg3[%c0_3, %c0_4] : memref<1x16xf32, #tpu.memory_space<vmem>>, vector<1x16xf32>
    %4 = vector.broadcast %3 : vector<1x16xf32> to vector<512x16xf32>
    %5 = arith.addf %2, %4 : vector<512x16xf32>
    %6 = arith.negf %5 : vector<512x16xf32>
    %7 = math.exp %6 : vector<512x16xf32>
    %cst_5 = arith.constant 1.000000e+00 : f32
    %8 = vector.broadcast %cst_5 : f32 to vector<512x16xf32>
    %9 = arith.addf %8, %7 : vector<512x16xf32>
    %10 = arith.divf %8, %9 : vector<512x16xf32>
    %11 = arith.mulf %5, %10 : vector<512x16xf32>
    %12 = vector.extract_strided_slice %11 {offsets = [0, 0], sizes = [512, 8], strides = [1, 1]} : vector<512x16xf32> to vector<512x8xf32>
    %c0_6 = arith.constant 0 : index
    %c0_7 = arith.constant 0 : index
    %13 = vector.load %arg4[%c0_6, %c0_7] : memref<512x8xf32, #tpu.memory_space<vmem>>, vector<512x8xf32>
    tpu.vector_store %arg4[%c0_6, %c0_7], %12 {strides = array<i32>} : memref<512x8xf32, #tpu.memory_space<vmem>>, vector<512x8xf32>,
    %14 = vector.extract_strided_slice %11 {offsets = [0, 8], sizes = [512, 8], strides = [1, 1]} : vector<512x16xf32> to vector<512x8xf32>
    %c0_8 = arith.constant 0 : index
    %c0_9 = arith.constant 0 : index
    %15 = vector.load %arg5[%c0_8, %c0_9] : memref<512x8xf32, #tpu.memory_space<vmem>>, vector<512x8xf32>
    tpu.vector_store %arg5[%c0_8, %c0_9], %14 {strides = array<i32>} : memref<512x8xf32, #tpu.memory_space<vmem>>, vector<512x8xf32>,
    return
  }
  func.func @transform_0(%arg0: i32) -> (i32, i32) {
    %c0_i32 = arith.constant 0 : i32
    %c0_i32_0 = arith.constant 0 : i32
    return %arg0, %c0_i32 : i32, i32
  }
  func.func @transform_1(%arg0: i32) -> (i32, i32) {
    %c0_i32 = arith.constant 0 : i32
    %c0_i32_0 = arith.constant 0 : i32
    %c0_i32_1 = arith.constant 0 : i32
    return %c0_i32, %c0_i32_0 : i32, i32
  }
  func.func @transform_2(%arg0: i32) -> (i32, i32) {
    %c0_i32 = arith.constant 0 : i32
    %c0_i32_0 = arith.constant 0 : i32
    %c0_i32_1 = arith.constant 0 : i32
    return %c0_i32, %c0_i32_0 : i32, i32
  }
  func.func @transform_3(%arg0: i32) -> (i32, i32) {
    %c0_i32 = arith.constant 0 : i32
    %c0_i32_0 = arith.constant 0 : i32
    return %arg0, %c0_i32 : i32, i32
  }
  func.func @transform_4(%arg0: i32) -> (i32, i32) {
    %c0_i32 = arith.constant 0 : i32
    %c0_i32_0 = arith.constant 0 : i32
    return %arg0, %c0_i32 : i32, i32
  }
}

</mosaic_0001>

<llo_original>
// kernel: c2f_forward.3
$region0: #{c2f_forward.3}
  #allocation0 [shape = 'u32[]', space=smem, size = 0x4, offset = 0x4, fixed_abs, tag = 'smem constant byte address 0x4 - core index']
  #allocation1 [shape = 'u32[144,128]{1,0:T(1,128)}', space=vmem, size = 0x12000, scoped, tag = 'internal scratch']
  %s0 = inlined_call_operand.hbm [shape: f32[512,16], index: 0, kind: input, shape index: {}]
  %s1 = inlined_call_operand.vmem [shape: f32[16,16], index: 1, kind: input, shape index: {}]
  %s2 = inlined_call_operand.vmem [shape: f32[1,16], index: 2, kind: input, shape index: {}]
  %s3 = inlined_call_operand.vmem [shape: f32[512,8], index: 3, kind: output, shape index: {0}]
  %s4 = inlined_call_operand.vmem [shape: f32[512,8], index: 4, kind: output, shape index: {1}]
  %5 = xla_tuple %s3, %s4
  %s6 = sld [smem:[#allocation0]]
  $region34: #{c2f_forward.3} parent=0
    _
  %s8 = ssub.s32 1, %s6
  %s9 = scalar_select 0, %s8, %s6
  $region1: #{c2f_forward.3} parent=0
    #allocation2 [shape = 'u8[262144]{0}', space=vmem, size = 0x40000, scoped, tag = 'input window, operand 0, single buffered']
    #allocation3 [shape = 's32[1]{0}', space=sflag, size = 0x4, scoped, tag = 'scoped memory for c2f_forward.3']
    %10 = vsyncpa [#allocation3], 0
    // Predicated region
    $region2: #{c2f_forward.3} parent=1 // pred_check
      _
    $region3: #{c2f_forward.3} parent=1 // pred_check_branch
      %12 = sbr.rel (0) target = $region5
    $region4: #{c2f_forward.3} parent=1 // pred_region
      %s14 = ssub.s32 8192, 8192
      %15 = vsyncadd [#allocation3], %s14
      %s16 = sshll.u32 [#allocation2], 4
      %s17 = int_to_ptr.vmem [resolvable:$true] %s16
      %22 = dma.hbm_to_vmem [thread:$0]  %s0, 8192, %s17, [#allocation3], 128, 128, 8
    $region5: #{c2f_forward.3} parent=1 // pred_fallthru
      _
    // Predicated region
    $region6: #{c2f_forward.3} parent=1 // pred_check
      _
    $region7: #{c2f_forward.3} parent=1 // pred_check_branch
      %24 = sbr.rel (0) target = $region9
    $region8: #{c2f_forward.3} parent=1 // pred_region
      _
    $region9: #{c2f_forward.3} parent=1 // pred_fallthru
      _
    // Predicated region
    $region10: #{c2f_forward.3} parent=1 // pred_check
      _
    $region11: #{c2f_forward.3} parent=1 // pred_check_branch
      %26 = sbr.rel (0) target = $region13
    $region12: #{c2f_forward.3} parent=1 // pred_region
      _
    $region13: #{c2f_forward.3} parent=1 // pred_fallthru
      _
    // Predicated region
    $region14: #{c2f_forward.3} parent=1 // pred_check
      _
    $region15: #{c2f_forward.3} parent=1 // pred_check_branch
      %28 = sbr.rel (0) target = $region17
    $region16: #{c2f_forward.3} parent=1 // pred_region
      %29 = dma.done [#allocation3], 8192
    $region17: #{c2f_forward.3} parent=1 // pred_fallthru
      _
    %v30 = vld [vmem:[#allocation2] sm:$0xff]
    %v31 = vld [vmem:[#allocation2 + $0x8] sm:$0xff]
    %v32 = vld [vmem:[#allocation2 + $0x10] sm:$0xff]
    %v33 = vld [vmem:[#allocation2 + $0x18] sm:$0xff]
    %v34 = vld [vmem:[#allocation2 + $0x20] sm:$0xff]
    %v35 = vld [vmem:[#allocation2 + $0x28] sm:$0xff]
    %v36 = vld [vmem:[#allocation2 + $0x30] sm:$0xff]
    %v37 = vld [vmem:[#allocation2 + $0x38] sm:$0xff]
    %v38 = vld [vmem:[#allocation2 + $0x40] sm:$0xff]
    %v39 = vld [vmem:[#allocation2 + $0x48] sm:$0xff]
    %v40 = vld [vmem:[#allocation2 + $0x50] sm:$0xff]
    %v41 = vld [vmem:[#allocation2 + $0x58] sm:$0xff]
    %v42 = vld [vmem:[#allocation2 + $0x60] sm:$0xff]
    %v43 = vld [vmem:[#allocation2 + $0x68] sm:$0xff]
    %v44 = vld [vmem:[#allocation2 + $0x70] sm:$0xff]
    %v45 = vld [vmem:[#allocation2 + $0x78] sm:$0xff]
    %v46 = vld [vmem:[#allocation2 + $0x80] sm:$0xff]
    %v47 = vld [vmem:[#allocation2 + $0x88] sm:$0xff]
    %v48 = vld [vmem:[#allocation2 + $0x90] sm:$0xff]
    %v49 = vld [vmem:[#allocation2 + $0x98] sm:$0xff]
    %v50 = vld [vmem:[#allocation2 + $0xa0] sm:$0xff]
    %v51 = vld [vmem:[#allocation2 + $0xa8] sm:$0xff]
    %v52 = vld [vmem:[#allocation2 + $0xb0] sm:$0xff]
    %v53 = vld [vmem:[#allocation2 + $0xb8] sm:$0xff]
    %v54 = vld [vmem:[#allocation2 + $0xc0] sm:$0xff]
    %v55 = vld [vmem:[#allocation2 + $0xc8] sm:$0xff]
    %v56 = vld [vmem:[#allocation2 + $0xd0] sm:$0xff]
    %v57 = vld [vmem:[#allocation2 + $0xd8] sm:$0xff]
    %v58 = vld [vmem:[#allocation2 + $0xe0] sm:$0xff]
    %v59 = vld [vmem:[#allocation2 + $0xe8] sm:$0xff]
    %v60 = vld [vmem:[#allocation2 + $0xf0] sm:$0xff]
    %v61 = vld [vmem:[#allocation2 + $0xf8] sm:$0xff]
    %v62 = vld [vmem:[#allocation2 + $0x100] sm:$0xff]
    %v63 = vld [vmem:[#allocation2 + $0x108] sm:$0xff]
    %v64 = vld [vmem:[#allocation2 + $0x110] sm:$0xff]
    %v65 = vld [vmem:[#allocation2 + $0x118] sm:$0xff]
    %v66 = vld [vmem:[#allocation2 + $0x120] sm:$0xff]
    %v67 = vld [vmem:[#allocation2 + $0x128] sm:$0xff]
    %v68 = vld [vmem:[#allocation2 + $0x130] sm:$0xff]
    %v69 = vld [vmem:[#allocation2 + $0x138] sm:$0xff]
    %v70 = vld [vmem:[#allocation2 + $0x140] sm:$0xff]
    %v71 = vld [vmem:[#allocation2 + $0x148] sm:$0xff]
    %v72 = vld [vmem:[#allocation2 + $0x150] sm:$0xff]
    %v73 = vld [vmem:[#allocation2 + $0x158] sm:$0xff]
    %v74 = vld [vmem:[#allocation2 + $0x160] sm:$0xff]
    %v75 = vld [vmem:[#allocation2 + $0x168] sm:$0xff]
    %v76 = vld [vmem:[#allocation2 + $0x170] sm:$0xff]
    %v77 = vld [vmem:[#allocation2 + $0x178] sm:$0xff]
    %v78 = vld [vmem:[#allocation2 + $0x180] sm:$0xff]
    %v79 = vld [vmem:[#allocation2 + $0x188] sm:$0xff]
    %v80 = vld [vmem:[#allocation2 + $0x190] sm:$0xff]
    %v81 = vld [vmem:[#allocation2 + $0x198] sm:$0xff]
    %v82 = vld [vmem:[#allocation2 + $0x1a0] sm:$0xff]
    %v83 = vld [vmem:[#allocation2 + $0x1a8] sm:$0xff]
    %v84 = vld [vmem:[#allocation2 + $0x1b0] sm:$0xff]
    %v85 = vld [vmem:[#allocation2 + $0x1b8] sm:$0xff]
    %v86 = vld [vmem:[#allocation2 + $0x1c0] sm:$0xff]
    %v87 = vld [vmem:[#allocation2 + $0x1c8] sm:$0xff]
    %v88 = vld [vmem:[#allocation2 + $0x1d0] sm:$0xff]
    %v89 = vld [vmem:[#allocation2 + $0x1d8] sm:$0xff]
    %v90 = vld [vmem:[#allocation2 + $0x1e0] sm:$0xff]
    %v91 = vld [vmem:[#allocation2 + $0x1e8] sm:$0xff]
    %v92 = vld [vmem:[#allocation2 + $0x1f0] sm:$0xff]
    %v93 = vld [vmem:[#allocation2 + $0x1f8] sm:$0xff]
    %v94 = vld [vmem:[%s1] sm:$0xff]
    %v95 = vld [vmem:[%s1 + $0x8] sm:$0xff]
    %v96 = vld [vmem:[%s2] sm:$0x1]
    %v98 = vlaneseq
    %v99 = vshrl.u32 %v98, 7
    %v100 = vsub.s32 0, %v99
    %v101 = vrot.slane %v96, %v100
    %vm103 = vcmask 130048
    %v105 = vsel %vm103, %v30, 0
    %v108 = vsel %vm103, %v31, 0
    %v111 = vsel %vm103, %v32, 0
    %v114 = vsel %vm103, %v33, 0
    %v117 = vsel %vm103, %v34, 0
    %v120 = vsel %vm103, %v35, 0
    %v123 = vsel %vm103, %v36, 0
    %v126 = vsel %vm103, %v37, 0
    %v129 = vsel %vm103, %v38, 0
    %v132 = vsel %vm103, %v39, 0
    %v135 = vsel %vm103, %v40, 0
    %v138 = vsel %vm103, %v41, 0
    %v141 = vsel %vm103, %v42, 0
    %v144 = vsel %vm103, %v43, 0
    %v147 = vsel %vm103, %v44, 0
    %v150 = vsel %vm103, %v45, 0
    %v153 = vsel %vm103, %v46, 0
    %v156 = vsel %vm103, %v47, 0
    %v159 = vsel %vm103, %v48, 0
    %v162 = vsel %vm103, %v49, 0
    %v165 = vsel %vm103, %v50, 0
    %v168 = vsel %vm103, %v51, 0
    %v171 = vsel %vm103, %v52, 0
    %v174 = vsel %vm103, %v53, 0
    %v177 = vsel %vm103, %v54, 0
    %v180 = vsel %vm103, %v55, 0
    %v183 = vsel %vm103, %v56, 0
    %v186 = vsel %vm103, %v57, 0
    %v189 = vsel %vm103, %v58, 0
    %v192 = vsel %vm103, %v59, 0
    %v195 = vsel %vm103, %v60, 0
    %v198 = vsel %vm103, %v61, 0
    %v201 = vsel %vm103, %v62, 0
    %v204 = vsel %vm103, %v63, 0
    %v207 = vsel %vm103, %v64, 0
    %v210 = vsel %vm103, %v65, 0
    %v213 = vsel %vm103, %v66, 0
    %v216 = vsel %vm103, %v67, 0
    %v219 = vsel %vm103, %v68, 0
    %v222 = vsel %vm103, %v69, 0
    %v225 = vsel %vm103, %v70, 0
    %v228 = vsel %vm103, %v71, 0
    %v231 = vsel %vm103, %v72, 0
    %v234 = vsel %vm103, %v73, 0
    %v237 = vsel %vm103, %v74, 0
    %v240 = vsel %vm103, %v75, 0
    %v243 = vsel %vm103, %v76, 0
    %v246 = vsel %vm103, %v77, 0
    %v249 = vsel %vm103, %v78, 0
    %v252 = vsel %vm103, %v79, 0
    %v255 = vsel %vm103, %v80, 0
    %v258 = vsel %vm103, %v81, 0
    %v261 = vsel %vm103, %v82, 0
    %v264 = vsel %vm103, %v83, 0
    %v267 = vsel %vm103, %v84, 0
    %v270 = vsel %vm103, %v85, 0
    %v273 = vsel %vm103, %v86, 0
    %v276 = vsel %vm103, %v87, 0
    %v279 = vsel %vm103, %v88, 0
    %v282 = vsel %vm103, %v89, 0
    %v285 = vsel %vm103, %v90, 0
    %v288 = vsel %vm103, %v91, 0
    %v291 = vsel %vm103, %v92, 0
    %v294 = vsel %vm103, %v93, 0
    %296 = vmatprep.subr.mxu0 0.0
    %297 = vmatpush1.msra.mxu0 %v94
    %298 = vmatprep.subr.mxu0 0.0
    %299 = vmatpush1.msra.mxu0 %v95
    %300 = vmatprep.subr.mxu0 0.0
    %301 = vmatpush1.msra.mxu0 0.0
    %302 = vmatprep.subr.mxu0 0.0
    %303 = vmatpush1.msra.mxu0 0.0
    %304 = vmatprep.subr.mxu0 0.0
    %305 = vmatpush1.msra.mxu0 0.0
    %306 = vmatprep.subr.mxu0 0.0
    %307 = vmatpush1.msra.mxu0 0.0
    %308 = vmatprep.subr.mxu0 0.0
    %309 = vmatpush1.msra.mxu0 0.0
    %310 = vmatprep.subr.mxu0 0.0
    %311 = vmatpush1.msra.mxu0 0.0
    %312 = vmatprep.subr.mxu0 0.0
    %313 = vmatpush1.msra.mxu0 0.0
    %314 = vmatprep.subr.mxu0 0.0
    %315 = vmatpush1.msra.mxu0 0.0
    %316 = vmatprep.subr.mxu0 0.0
    %317 = vmatpush1.msra.mxu0 0.0
    %318 = vmatprep.subr.mxu0 0.0
    %319 = vmatpush1.msra.mxu0 0.0
    %320 = vmatprep.subr.mxu0 0.0
    %321 = vmatpush1.msra.mxu0 0.0
    %322 = vmatprep.subr.mxu0 0.0
    %323 = vmatpush1.msra.mxu0 0.0
    %324 = vmatprep.subr.mxu0 0.0
    %325 = vmatpush1.msra.mxu0 0.0
    %326 = vmatprep.subr.mxu0 0.0
    %327 = vmatpush1.msra.mxu0 0.0
    %328 = vmatprep.subr.mxu0 0.0
    %329 = vmatpush1.msra.mxu0 0.0
    %330 = vmatprep.subr.mxu0 0.0
    %331 = vmatpush1.msra.mxu0 0.0
    %332 = vmatprep.subr.mxu0 0.0
    %333 = vmatpush1.msra.mxu0 0.0
    %334 = vmatprep.subr.mxu0 0.0
    %335 = vmatpush1.msra.mxu0 0.0
    %336 = vmatprep.subr.mxu0 0.0
    %337 = vmatpush1.msra.mxu0 0.0
    %338 = vmatprep.subr.mxu0 0.0
    %339 = vmatpush1.msra.mxu0 0.0
    %340 = vmatprep.subr.mxu0 0.0
    %341 = vmatpush1.msra.mxu0 0.0
    %342 = vmatprep.subr.mxu0 0.0
    %343 = vmatpush1.msra.mxu0 0.0
    %344 = vmatprep.subr.mxu0 0.0
    %345 = vmatpush1.msra.mxu0 0.0
    %346 = vmatprep.subr.mxu0 0.0
    %347 = vmatpush1.msra.mxu0 0.0
    %348 = vmatprep.subr.mxu0 0.0
    %349 = vmatpush1.msra.mxu0 0.0
    %350 = vmatprep.subr.mxu0 0.0
    %351 = vmatpush1.msra.mxu0 0.0
    %352 = vmatprep.subr.mxu0 0.0
    %353 = vmatpush1.msra.mxu0 0.0
    %354 = vmatprep.subr.mxu0 0.0
    %355 = vmatpush1.msra.mxu0 0.0
    %356 = vmatprep.subr.mxu0 0.0
    %357 = vmatpush1.msra.mxu0 0.0
    %358 = vmatprep.subr.mxu0 0.0
    %359 = vmatpush1.msra.mxu0 0.0
    %360 = vmatprep.mubr.f32.mxu0 0.0
    %361 = vmatmul.mubr.f32.gmra.mrb[0].mxu0 %v105
    %v362 = vpop.f32.mrb[0].mxu0
    %v363 = vadd.f32 %v101, %v362
    %v364 = vpop.f32.mrb[0].mxu0
    %365 = vmatprep.mubr.f32.mxu0 0.0
    %366 = vmatmul.mubr.f32.gmra.mrb[0].mxu0 %v108
    %v367 = vpop.f32.mrb[0].mxu0
    %v368 = vadd.f32 %v101, %v367
    %v369 = vpop.f32.mrb[0].mxu0
    %370 = vmatprep.mubr.f32.mxu0 0.0
    %371 = vmatmul.mubr.f32.gmra.mrb[0].mxu0 %v111
    %v372 = vpop.f32.mrb[0].mxu0
    %v373 = vadd.f32 %v101, %v372
    %v374 = vpop.f32.mrb[0].mxu0
    %375 = vmatprep.mubr.f32.mxu0 0.0
    %376 = vmatmul.mubr.f32.gmra.mrb[0].mxu0 %v114
    %v377 = vpop.f32.mrb[0].mxu0
    %v378 = vadd.f32 %v101, %v377
    %v379 = vpop.f32.mrb[0].mxu0
    %380 = vmatprep.mubr.f32.mxu0 0.0
    %381 = vmatmul.mubr.f32.gmra.mrb[0].mxu0 %v117
    %v382 = vpop.f32.mrb[0].mxu0
    %v383 = vadd.f32 %v101, %v382
    %v384 = vpop.f32.mrb[0].mxu0
    %385 = vmatprep.mubr.f32.mxu0 0.0
    %386 = vmatmul.mubr.f32.gmra.mrb[0].mxu0 %v120
    %v387 = vpop.f32.mrb[0].mxu0
    %v388 = vadd.f32 %v101, %v387
    %v389 = vpop.f32.mrb[0].mxu0
    %390 = vmatprep.mubr.f32.mxu0 0.0
    %391 = vmatmul.mubr.f32.gmra.mrb[0].mxu0 %v123
    %v392 = vpop.f32.mrb[0].mxu0
    %v393 = vadd.f32 %v101, %v392
    %v394 = vpop.f32.mrb[0].mxu0
    %395 = vmatprep.mubr.f32.mxu0 0.0
    %396 = vmatmul.mubr.f32.gmra.mrb[0].mxu0 %v126
    %v397 = vpop.f32.mrb[0].mxu0
    %v398 = vadd.f32 %v101, %v397
    %v399 = vpop.f32.mrb[0].mxu0
    %400 = vmatprep.mubr.f32.mxu0 0.0
    %401 = vmatmul.mubr.f32.gmra.mrb[0].mxu0 %v129
    %v402 = vpop.f32.mrb[0].mxu0
    %v403 = vadd.f32 %v101, %v402
    %v404 = vpop.f32.mrb[0].mxu0
    %405 = vmatprep.mubr.f32.mxu0 0.0
    %406 = vmatmul.mubr.f32.gmra.mrb[0].mxu0 %v132
    %v407 = vpop.f32.mrb[0].mxu0
    %v408 = vadd.f32 %v101, %v407
    %v409 = vpop.f32.mrb[0].mxu0
    %410 = vmatprep.mubr.f32.mxu0 0.0
    %411 = vmatmul.mubr.f32.gmra.mrb[0].mxu0 %v135
    %v412 = vpop.f32.mrb[0].mxu0
    %v413 = vadd.f32 %v101, %v412
    %v414 = vpop.f32.mrb[0].mxu0
    %415 = vmatprep.mubr.f32.mxu0 0.0
    %416 = vmatmul.mubr.f32.gmra.mrb[0].mxu0 %v138
    %v417 = vpop.f32.mrb[0].mxu0
    %v418 = vadd.f32 %v101, %v417
    %v419 = vpop.f32.mrb[0].mxu0
    %420 = vmatprep.mubr.f32.mxu0 0.0
    %421 = vmatmul.mubr.f32.gmra.mrb[0].mxu0 %v141
    %v422 = vpop.f32.mrb[0].mxu0
    %v423 = vadd.f32 %v101, %v422
    %v424 = vpop.f32.mrb[0].mxu0
    %425 = vmatprep.mubr.f32.mxu0 0.0
    %426 = vmatmul.mubr.f32.gmra.mrb[0].mxu0 %v144
    %v427 = vpop.f32.mrb[0].mxu0
    %v428 = vadd.f32 %v101, %v427
    %v429 = vpop.f32.mrb[0].mxu0
    %430 = vmatprep.mubr.f32.mxu0 0.0
    %431 = vmatmul.mubr.f32.gmra.mrb[0].mxu0 %v147
    %v432 = vpop.f32.mrb[0].mxu0
    %v433 = vadd.f32 %v101, %v432
    %v434 = vpop.f32.mrb[0].mxu0
    %435 = vmatprep.mubr.f32.mxu0 0.0
    %436 = vmatmul.mubr.f32.gmra.mrb[0].mxu0 %v150
    %v437 = vpop.f32.mrb[0].mxu0
    %v438 = vadd.f32 %v101, %v437
    %v439 = vpop.f32.mrb[0].mxu0
    %440 = vmatprep.mubr.f32.mxu0 0.0
    %441 = vmatmul.mubr.f32.gmra.mrb[0].mxu0 %v153
    %v442 = vpop.f32.mrb[0].mxu0
    %v443 = vadd.f32 %v101, %v442
    %v444 = vpop.f32.mrb[0].mxu0
    %445 = vmatprep.mubr.f32.mxu0 0.0
    %446 = vmatmul.mubr.f32.gmra.mrb[0].mxu0 %v156
    %v447 = vpop.f32.mrb[0].mxu0
    %v448 = vadd.f32 %v101, %v447
    %v449 = vpop.f32.mrb[0].mxu0
    %450 = vmatprep.mubr.f32.mxu0 0.0
    %451 = vmatmul.mubr.f32.gmra.mrb[0].mxu0 %v159
    %v452 = vpop.f32.mrb[0].mxu0
    %v453 = vadd.f32 %v101, %v452
    %v454 = vpop.f32.mrb[0].mxu0
    %455 = vmatprep.mubr.f32.mxu0 0.0
    %456 = vmatmul.mubr.f32.gmra.mrb[0].mxu0 %v162
    %v457 = vpop.f32.mrb[0].mxu0
    %v458 = vadd.f32 %v101, %v457
    %v459 = vpop.f32.mrb[0].mxu0
    %460 = vmatprep.mubr.f32.mxu0 0.0
    %461 = vmatmul.mubr.f32.gmra.mrb[0].mxu0 %v165
    %v462 = vpop.f32.mrb[0].mxu0
    %v463 = vadd.f32 %v101, %v462
    %v464 = vpop.f32.mrb[0].mxu0
    %465 = vmatprep.mubr.f32.mxu0 0.0
    %466 = vmatmul.mubr.f32.gmra.mrb[0].mxu0 %v168
    %v467 = vpop.f32.mrb[0].mxu0
    %v468 = vadd.f32 %v101, %v467
    %v469 = vpop.f32.mrb[0].mxu0
    %470 = vmatprep.mubr.f32.mxu0 0.0
    %471 = vmatmul.mubr.f32.gmra.mrb[0].mxu0 %v171
    %v472 = vpop.f32.mrb[0].mxu0
    %v473 = vadd.f32 %v101, %v472
    %v474 = vpop.f32.mrb[0].mxu0
    %475 = vmatprep.mubr.f32.mxu0 0.0
    %476 = vmatmul.mubr.f32.gmra.mrb[0].mxu0 %v174
    %v477 = vpop.f32.mrb[0].mxu0
    %v478 = vadd.f32 %v101, %v477
    %v479 = vpop.f32.mrb[0].mxu0
    %480 = vmatprep.mubr.f32.mxu0 0.0
    %481 = vmatmul.mubr.f32.gmra.mrb[0].mxu0 %v177
    %v482 = vpop.f32.mrb[0].mxu0
    %v483 = vadd.f32 %v101, %v482
    %v484 = vpop.f32.mrb[0].mxu0
    %485 = vmatprep.mubr.f32.mxu0 0.0
    %486 = vmatmul.mubr.f32.gmra.mrb[0].mxu0 %v180
    %v487 = vpop.f32.mrb[0].mxu0
    %v488 = vadd.f32 %v101, %v487
    %v489 = vpop.f32.mrb[0].mxu0
    %490 = vmatprep.mubr.f32.mxu0 0.0
    %491 = vmatmul.mubr.f32.gmra.mrb[0].mxu0 %v183
    %v492 = vpop.f32.mrb[0].mxu0
    %v493 = vadd.f32 %v101, %v492
    %v494 = vpop.f32.mrb[0].mxu0
    %495 = vmatprep.mubr.f32.mxu0 0.0
    %496 = vmatmul.mubr.f32.gmra.mrb[0].mxu0 %v186
    %v497 = vpop.f32.mrb[0].mxu0
    %v498 = vadd.f32 %v101, %v497
    %v499 = vpop.f32.mrb[0].mxu0
    %500 = vmatprep.mubr.f32.mxu0 0.0
    %501 = vmatmul.mubr.f32.gmra.mrb[0].mxu0 %v189
    %v502 = vpop.f32.mrb[0].mxu0
    %v503 = vadd.f32 %v101, %v502
    %v504 = vpop.f32.mrb[0].mxu0
    %505 = vmatprep.mubr.f32.mxu0 0.0
    %506 = vmatmul.mubr.f32.gmra.mrb[0].mxu0 %v192
    %v507 = vpop.f32.mrb[0].mxu0
    %v508 = vadd.f32 %v101, %v507
    %v509 = vpop.f32.mrb[0].mxu0
    %510 = vmatprep.mubr.f32.mxu0 0.0
    %511 = vmatmul.mubr.f32.gmra.mrb[0].mxu0 %v195
    %v512 = vpop.f32.mrb[0].mxu0
    %v513 = vadd.f32 %v101, %v512
    %v514 = vpop.f32.mrb[0].mxu0
    %515 = vmatprep.mubr.f32.mxu0 0.0
    %516 = vmatmul.mubr.f32.gmra.mrb[0].mxu0 %v198
    %v517 = vpop.f32.mrb[0].mxu0
    %v518 = vadd.f32 %v101, %v517
    %v519 = vpop.f32.mrb[0].mxu0
    %520 = vmatprep.mubr.f32.mxu0 0.0
    %521 = vmatmul.mubr.f32.gmra.mrb[0].mxu0 %v201
    %v522 = vpop.f32.mrb[0].mxu0
    %v523 = vadd.f32 %v101, %v522
    %v524 = vpop.f32.mrb[0].mxu0
    %525 = vmatprep.mubr.f32.mxu0 0.0
    %526 = vmatmul.mubr.f32.gmra.mrb[0].mxu0 %v204
    %v527 = vpop.f32.mrb[0].mxu0
    %v528 = vadd.f32 %v101, %v527
    %v529 = vpop.f32.mrb[0].mxu0
    %530 = vmatprep.mubr.f32.mxu0 0.0
    %531 = vmatmul.mubr.f32.gmra.mrb[0].mxu0 %v207
    %v532 = vpop.f32.mrb[0].mxu0
    %v533 = vadd.f32 %v101, %v532
    %v534 = vpop.f32.mrb[0].mxu0
    %535 = vmatprep.mubr.f32.mxu0 0.0
    %536 = vmatmul.mubr.f32.gmra.mrb[0].mxu0 %v210
    %v537 = vpop.f32.mrb[0].mxu0
    %v538 = vadd.f32 %v101, %v537
    %v539 = vpop.f32.mrb[0].mxu0
    %540 = vmatprep.mubr.f32.mxu0 0.0
    %541 = vmatmul.mubr.f32.gmra.mrb[0].mxu0 %v213
    %v542 = vpop.f32.mrb[0].mxu0
    %v543 = vadd.f32 %v101, %v542
    %v544 = vpop.f32.mrb[0].mxu0
    %545 = vmatprep.mubr.f32.mxu0 0.0
    %546 = vmatmul.mubr.f32.gmra.mrb[0].mxu0 %v216
    %v547 = vpop.f32.mrb[0].mxu0
    %v548 = vadd.f32 %v101, %v547
    %v549 = vpop.f32.mrb[0].mxu0
    %550 = vmatprep.mubr.f32.mxu0 0.0
    %551 = vmatmul.mubr.f32.gmra.mrb[0].mxu0 %v219
    %v552 = vpop.f32.mrb[0].mxu0
    %v553 = vadd.f32 %v101, %v552
    %v554 = vpop.f32.mrb[0].mxu0
    %555 = vmatprep.mubr.f32.mxu0 0.0
    %556 = vmatmul.mubr.f32.gmra.mrb[0].mxu0 %v222
    %v557 = vpop.f32.mrb[0].mxu0
    %v558 = vadd.f32 %v101, %v557
    %v559 = vpop.f32.mrb[0].mxu0
    %560 = vmatprep.mubr.f32.mxu0 0.0
    %561 = vmatmul.mubr.f32.gmra.mrb[0].mxu0 %v225
    %v562 = vpop.f32.mrb[0].mxu0
    %v563 = vadd.f32 %v101, %v562
    %v564 = vpop.f32.mrb[0].mxu0
    %565 = vmatprep.mubr.f32.mxu0 0.0
    %566 = vmatmul.mubr.f32.gmra.mrb[0].mxu0 %v228
    %v567 = vpop.f32.mrb[0].mxu0
    %v568 = vadd.f32 %v101, %v567
    %v569 = vpop.f32.mrb[0].mxu0
    %570 = vmatprep.mubr.f32.mxu0 0.0
    %571 = vmatmul.mubr.f32.gmra.mrb[0].mxu0 %v231
    %v572 = vpop.f32.mrb[0].mxu0
    %v573 = vadd.f32 %v101, %v572
    %v574 = vpop.f32.mrb[0].mxu0
    %575 = vmatprep.mubr.f32.mxu0 0.0
    %576 = vmatmul.mubr.f32.gmra.mrb[0].mxu0 %v234
    %v577 = vpop.f32.mrb[0].mxu0
    %v578 = vadd.f32 %v101, %v577
    %v579 = vpop.f32.mrb[0].mxu0
    %580 = vmatprep.mubr.f32.mxu0 0.0
    %581 = vmatmul.mubr.f32.gmra.mrb[0].mxu0 %v237
    %v582 = vpop.f32.mrb[0].mxu0
    %v583 = vadd.f32 %v101, %v582
    %v584 = vpop.f32.mrb[0].mxu0
    %585 = vmatprep.mubr.f32.mxu0 0.0
    %586 = vmatmul.mubr.f32.gmra.mrb[0].mxu0 %v240
    %v587 = vpop.f32.mrb[0].mxu0
    %v588 = vadd.f32 %v101, %v587
    %v589 = vpop.f32.mrb[0].mxu0
    %590 = vmatprep.mubr.f32.mxu0 0.0
    %591 = vmatmul.mubr.f32.gmra.mrb[0].mxu0 %v243
    %v592 = vpop.f32.mrb[0].mxu0
    %v593 = vadd.f32 %v101, %v592
    %v594 = vpop.f32.mrb[0].mxu0
    %595 = vmatprep.mubr.f32.mxu0 0.0
    %596 = vmatmul.mubr.f32.gmra.mrb[0].mxu0 %v246
    %v597 = vpop.f32.mrb[0].mxu0
    %v598 = vadd.f32 %v101, %v597
    %v599 = vpop.f32.mrb[0].mxu0
    %600 = vmatprep.mubr.f32.mxu0 0.0
    %601 = vmatmul.mubr.f32.gmra.mrb[0].mxu0 %v249
    %v602 = vpop.f32.mrb[0].mxu0
    %v603 = vadd.f32 %v101, %v602
    %v604 = vpop.f32.mrb[0].mxu0
    %605 = vmatprep.mubr.f32.mxu0 0.0
    %606 = vmatmul.mubr.f32.gmra.mrb[0].mxu0 %v252
    %v607 = vpop.f32.mrb[0].mxu0
    %v608 = vadd.f32 %v101, %v607
    %v609 = vpop.f32.mrb[0].mxu0
    %610 = vmatprep.mubr.f32.mxu0 0.0
    %611 = vmatmul.mubr.f32.gmra.mrb[0].mxu0 %v255
    %v612 = vpop.f32.mrb[0].mxu0
    %v613 = vadd.f32 %v101, %v612
    %v614 = vpop.f32.mrb[0].mxu0
    %615 = vmatprep.mubr.f32.mxu0 0.0
    %616 = vmatmul.mubr.f32.gmra.mrb[0].mxu0 %v258
    %v617 = vpop.f32.mrb[0].mxu0
    %v618 = vadd.f32 %v101, %v617
    %v619 = vpop.f32.mrb[0].mxu0
    %620 = vmatprep.mubr.f32.mxu0 0.0
    %621 = vmatmul.mubr.f32.gmra.mrb[0].mxu0 %v261
    %v622 = vpop.f32.mrb[0].mxu0
    %v623 = vadd.f32 %v101, %v622
    %v624 = vpop.f32.mrb[0].mxu0
    %625 = vmatprep.mubr.f32.mxu0 0.0
    %626 = vmatmul.mubr.f32.gmra.mrb[0].mxu0 %v264
    %v627 = vpop.f32.mrb[0].mxu0
    %v628 = vadd.f32 %v101, %v627
    %v629 = vpop.f32.mrb[0].mxu0
    %630 = vmatprep.mubr.f32.mxu0 0.0
    %631 = vmatmul.mubr.f32.gmra.mrb[0].mxu0 %v267
    %v632 = vpop.f32.mrb[0].mxu0
    %v633 = vadd.f32 %v101, %v632
    %v634 = vpop.f32.mrb[0].mxu0
    %635 = vmatprep.mubr.f32.mxu0 0.0
    %636 = vmatmul.mubr.f32.gmra.mrb[0].mxu0 %v270
    %v637 = vpop.f32.mrb[0].mxu0
    %v638 = vadd.f32 %v101, %v637
    %v639 = vpop.f32.mrb[0].mxu0
    %640 = vmatprep.mubr.f32.mxu0 0.0
    %641 = vmatmul.mubr.f32.gmra.mrb[0].mxu0 %v273
    %v642 = vpop.f32.mrb[0].mxu0
    %v643 = vadd.f32 %v101, %v642
    %v644 = vpop.f32.mrb[0].mxu0
    %645 = vmatprep.mubr.f32.mxu0 0.0
    %646 = vmatmul.mubr.f32.gmra.mrb[0].mxu0 %v276
    %v647 = vpop.f32.mrb[0].mxu0
    %v648 = vadd.f32 %v101, %v647
    %v649 = vpop.f32.mrb[0].mxu0
    %650 = vmatprep.mubr.f32.mxu0 0.0
    %651 = vmatmul.mubr.f32.gmra.mrb[0].mxu0 %v279
    %v652 = vpop.f32.mrb[0].mxu0
    %v653 = vadd.f32 %v101, %v652
    %v654 = vpop.f32.mrb[0].mxu0
    %655 = vmatprep.mubr.f32.mxu0 0.0
    %656 = vmatmul.mubr.f32.gmra.mrb[0].mxu0 %v282
    %v657 = vpop.f32.mrb[0].mxu0
    %v658 = vadd.f32 %v101, %v657
    %v659 = vpop.f32.mrb[0].mxu0
    %660 = vmatprep.mubr.f32.mxu0 0.0
    %661 = vmatmul.mubr.f32.gmra.mrb[0].mxu0 %v285
    %v662 = vpop.f32.mrb[0].mxu0
    %v663 = vadd.f32 %v101, %v662
    %v664 = vpop.f32.mrb[0].mxu0
    %665 = vmatprep.mubr.f32.mxu0 0.0
    %666 = vmatmul.mubr.f32.gmra.mrb[0].mxu0 %v288
    %v667 = vpop.f32.mrb[0].mxu0
    %v668 = vadd.f32 %v101, %v667
    %v669 = vpop.f32.mrb[0].mxu0
    %670 = vmatprep.mubr.f32.mxu0 0.0
    %671 = vmatmul.mubr.f32.gmra.mrb[0].mxu0 %v291
    %v672 = vpop.f32.mrb[0].mxu0
    %v673 = vadd.f32 %v101, %v672
    %v674 = vpop.f32.mrb[0].mxu0
    %675 = vmatprep.mubr.f32.mxu0 0.0
    %676 = vmatmul.mubr.f32.gmra.mrb[0].mxu0 %v294
    %v677 = vpop.f32.mrb[0].mxu0
    %v678 = vadd.f32 %v101, %v677
    %v679 = vpop.f32.mrb[0].mxu0
    %680 = vdwg.mxu0
    %v681 = vxor.u32 %v363, 2147483648
    %v682 = vxor.u32 %v368, 2147483648
    %v683 = vxor.u32 %v373, 2147483648
    %v684 = vxor.u32 %v378, 2147483648
    %v685 = vxor.u32 %v383, 2147483648
    %v686 = vxor.u32 %v388, 2147483648
    %v687 = vxor.u32 %v393, 2147483648
    %v688 = vxor.u32 %v398, 2147483648
    %v689 = vxor.u32 %v403, 2147483648
    %v690 = vxor.u32 %v408, 2147483648
    %v691 = vxor.u32 %v413, 2147483648
    %v692 = vxor.u32 %v418, 2147483648
    %v693 = vxor.u32 %v423, 2147483648
    %v694 = vxor.u32 %v428, 2147483648
    %v695 = vxor.u32 %v433, 2147483648
    %v696 = vxor.u32 %v438, 2147483648
    %v697 = vxor.u32 %v443, 2147483648
    %v698 = vxor.u32 %v448, 2147483648
    %v699 = vxor.u32 %v453, 2147483648
    %v700 = vxor.u32 %v458, 2147483648
    %v701 = vxor.u32 %v463, 2147483648
    %v702 = vxor.u32 %v468, 2147483648
    %v703 = vxor.u32 %v473, 2147483648
    %v704 = vxor.u32 %v478, 2147483648
    %v705 = vxor.u32 %v483, 2147483648
    %v706 = vxor.u32 %v488, 2147483648
    %v707 = vxor.u32 %v493, 2147483648
    %v708 = vxor.u32 %v498, 2147483648
    %v709 = vxor.u32 %v503, 2147483648
    %v710 = vxor.u32 %v508, 2147483648
    %v711 = vxor.u32 %v513, 2147483648
    %v712 = vxor.u32 %v518, 2147483648
    %v713 = vxor.u32 %v523, 2147483648
    %v714 = vxor.u32 %v528, 2147483648
    %v715 = vxor.u32 %v533, 2147483648
    %v716 = vxor.u32 %v538, 2147483648
    %v717 = vxor.u32 %v543, 2147483648
    %v718 = vxor.u32 %v548, 2147483648
    %v719 = vxor.u32 %v553, 2147483648
    %v720 = vxor.u32 %v558, 2147483648
    %v721 = vxor.u32 %v563, 2147483648
    %v722 = vxor.u32 %v568, 2147483648
    %v723 = vxor.u32 %v573, 2147483648
    %v724 = vxor.u32 %v578, 2147483648
    %v725 = vxor.u32 %v583, 2147483648
    %v726 = vxor.u32 %v588, 2147483648
    %v727 = vxor.u32 %v593, 2147483648
    %v728 = vxor.u32 %v598, 2147483648
    %v729 = vxor.u32 %v603, 2147483648
    %v730 = vxor.u32 %v608, 2147483648
    %v731 = vxor.u32 %v613, 2147483648
    %v732 = vxor.u32 %v618, 2147483648
    %v733 = vxor.u32 %v623, 2147483648
    %v734 = vxor.u32 %v628, 2147483648
    %v735 = vxor.u32 %v633, 2147483648
    %v736 = vxor.u32 %v638, 2147483648
    %v737 = vxor.u32 %v643, 2147483648
    %v738 = vxor.u32 %v648, 2147483648
    %v739 = vxor.u32 %v653, 2147483648
    %v740 = vxor.u32 %v658, 2147483648
    %v741 = vxor.u32 %v663, 2147483648
    %v742 = vxor.u32 %v668, 2147483648
    %v743 = vxor.u32 %v673, 2147483648
    %v744 = vxor.u32 %v678, 2147483648
    %v745 = vmul.f32 %v681, 1.442695
    %v746 = vpow.pop %v745
    %v747 = vmul.f32 %v682, 1.442695
    %v748 = vpow.pop %v747
    %v749 = vmul.f32 %v683, 1.442695
    %v750 = vpow.pop %v749
    %v751 = vmul.f32 %v684, 1.442695
    %v752 = vpow.pop %v751
    %v753 = vmul.f32 %v685, 1.442695
    %v754 = vpow.pop %v753
    %v755 = vmul.f32 %v686, 1.442695
    %v756 = vpow.pop %v755
    %v757 = vmul.f32 %v687, 1.442695
    %v758 = vpow.pop %v757
    %v759 = vmul.f32 %v688, 1.442695
    %v760 = vpow.pop %v759
    %v761 = vmul.f32 %v689, 1.442695
    %v762 = vpow.pop %v761
    %v763 = vmul.f32 %v690, 1.442695
    %v764 = vpow.pop %v763
    %v765 = vmul.f32 %v691, 1.442695
    %v766 = vpow.pop %v765
    %v767 = vmul.f32 %v692, 1.442695
    %v768 = vpow.pop %v767
    %v769 = vmul.f32 %v693, 1.442695
    %v770 = vpow.pop %v769
    %v771 = vmul.f32 %v694, 1.442695
    %v772 = vpow.pop %v771
    %v773 = vmul.f32 %v695, 1.442695
    %v774 = vpow.pop %v773
    %v775 = vmul.f32 %v696, 1.442695
    %v776 = vpow.pop %v775
    %v777 = vmul.f32 %v697, 1.442695
    %v778 = vpow.pop %v777
    %v779 = vmul.f32 %v698, 1.442695
    %v780 = vpow.pop %v779
    %v781 = vmul.f32 %v699, 1.442695
    %v782 = vpow.pop %v781
    %v783 = vmul.f32 %v700, 1.442695
    %v784 = vpow.pop %v783
    %v785 = vmul.f32 %v701, 1.442695
    %v786 = vpow.pop %v785
    %v787 = vmul.f32 %v702, 1.442695
    %v788 = vpow.pop %v787
    %v789 = vmul.f32 %v703, 1.442695
    %v790 = vpow.pop %v789
    %v791 = vmul.f32 %v704, 1.442695
    %v792 = vpow.pop %v791
    %v793 = vmul.f32 %v705, 1.442695
    %v794 = vpow.pop %v793
    %v795 = vmul.f32 %v706, 1.442695
    %v796 = vpow.pop %v795
    %v797 = vmul.f32 %v707, 1.442695
    %v798 = vpow.pop %v797
    %v799 = vmul.f32 %v708, 1.442695
    %v800 = vpow.pop %v799
    %v801 = vmul.f32 %v709, 1.442695
    %v802 = vpow.pop %v801
    %v803 = vmul.f32 %v710, 1.442695
    %v804 = vpow.pop %v803
    %v805 = vmul.f32 %v711, 1.442695
    %v806 = vpow.pop %v805
    %v807 = vmul.f32 %v712, 1.442695
    %v808 = vpow.pop %v807
    %v809 = vmul.f32 %v713, 1.442695
    %v810 = vpow.pop %v809
    %v811 = vmul.f32 %v714, 1.442695
    %v812 = vpow.pop %v811
    %v813 = vmul.f32 %v715, 1.442695
    %v814 = vpow.pop %v813
    %v815 = vmul.f32 %v716, 1.442695
    %v816 = vpow.pop %v815
    %v817 = vmul.f32 %v717, 1.442695
    %v818 = vpow.pop %v817
    %v819 = vmul.f32 %v718, 1.442695
    %v820 = vpow.pop %v819
    %v821 = vmul.f32 %v719, 1.442695
    %v822 = vpow.pop %v821
    %v823 = vmul.f32 %v720, 1.442695
    %v824 = vpow.pop %v823
    %v825 = vmul.f32 %v721, 1.442695
    %v826 = vpow.pop %v825
    %v827 = vmul.f32 %v722, 1.442695
    %v828 = vpow.pop %v827
    %v829 = vmul.f32 %v723, 1.442695
    %v830 = vpow.pop %v829
    %v831 = vmul.f32 %v724, 1.442695
    %v832 = vpow.pop %v831
    %v833 = vmul.f32 %v725, 1.442695
    %v834 = vpow.pop %v833
    %v835 = vmul.f32 %v726, 1.442695
    %v836 = vpow.pop %v835
    %v837 = vmul.f32 %v727, 1.442695
    %v838 = vpow.pop %v837
    %v839 = vmul.f32 %v728, 1.442695
    %v840 = vpow.pop %v839
    %v841 = vmul.f32 %v729, 1.442695
    %v842 = vpow.pop %v841
    %v843 = vmul.f32 %v730, 1.442695
    %v844 = vpow.pop %v843
    %v845 = vmul.f32 %v731, 1.442695
    %v846 = vpow.pop %v845
    %v847 = vmul.f32 %v732, 1.442695
    %v848 = vpow.pop %v847
    %v849 = vmul.f32 %v733, 1.442695
    %v850 = vpow.pop %v849
    %v851 = vmul.f32 %v734, 1.442695
    %v852 = vpow.pop %v851
    %v853 = vmul.f32 %v735, 1.442695
    %v854 = vpow.pop %v853
    %v855 = vmul.f32 %v736, 1.442695
    %v856 = vpow.pop %v855
    %v857 = vmul.f32 %v737, 1.442695
    %v858 = vpow.pop %v857
    %v859 = vmul.f32 %v738, 1.442695
    %v860 = vpow.pop %v859
    %v861 = vmul.f32 %v739, 1.442695
    %v862 = vpow.pop %v861
    %v863 = vmul.f32 %v740, 1.442695
    %v864 = vpow.pop %v863
    %v865 = vmul.f32 %v741, 1.442695
    %v866 = vpow.pop %v865
    %v867 = vmul.f32 %v742, 1.442695
    %v868 = vpow.pop %v867
    %v869 = vmul.f32 %v743, 1.442695
    %v870 = vpow.pop %v869
    %v871 = vmul.f32 %v744, 1.442695
    %v872 = vpow.pop %v871
    %v873 = vadd.f32 %v746, 1.0
    %v874 = vadd.f32 %v748, 1.0
    %v875 = vadd.f32 %v750, 1.0
    %v876 = vadd.f32 %v752, 1.0
    %v877 = vadd.f32 %v754, 1.0
    %v878 = vadd.f32 %v756, 1.0
    %v879 = vadd.f32 %v758, 1.0
    %v880 = vadd.f32 %v760, 1.0
    %v881 = vadd.f32 %v762, 1.0
    %v882 = vadd.f32 %v764, 1.0
    %v883 = vadd.f32 %v766, 1.0
    %v884 = vadd.f32 %v768, 1.0
    %v885 = vadd.f32 %v770, 1.0
    %v886 = vadd.f32 %v772, 1.0
    %v887 = vadd.f32 %v774, 1.0
    %v888 = vadd.f32 %v776, 1.0
    %v889 = vadd.f32 %v778, 1.0
    %v890 = vadd.f32 %v780, 1.0
    %v891 = vadd.f32 %v782, 1.0
    %v892 = vadd.f32 %v784, 1.0
    %v893 = vadd.f32 %v786, 1.0
    %v894 = vadd.f32 %v788, 1.0
    %v895 = vadd.f32 %v790, 1.0
    %v896 = vadd.f32 %v792, 1.0
    %v897 = vadd.f32 %v794, 1.0
    %v898 = vadd.f32 %v796, 1.0
    %v899 = vadd.f32 %v798, 1.0
    %v900 = vadd.f32 %v800, 1.0
    %v901 = vadd.f32 %v802, 1.0
    %v902 = vadd.f32 %v804, 1.0
    %v903 = vadd.f32 %v806, 1.0
    %v904 = vadd.f32 %v808, 1.0
    %v905 = vadd.f32 %v810, 1.0
    %v906 = vadd.f32 %v812, 1.0
    %v907 = vadd.f32 %v814, 1.0
    %v908 = vadd.f32 %v816, 1.0
    %v909 = vadd.f32 %v818, 1.0
    %v910 = vadd.f32 %v820, 1.0
    %v911 = vadd.f32 %v822, 1.0
    %v912 = vadd.f32 %v824, 1.0
    %v913 = vadd.f32 %v826, 1.0
    %v914 = vadd.f32 %v828, 1.0
    %v915 = vadd.f32 %v830, 1.0
    %v916 = vadd.f32 %v832, 1.0
    %v917 = vadd.f32 %v834, 1.0
    %v918 = vadd.f32 %v836, 1.0
    %v919 = vadd.f32 %v838, 1.0
    %v920 = vadd.f32 %v840, 1.0
    %v921 = vadd.f32 %v842, 1.0
    %v922 = vadd.f32 %v844, 1.0
    %v923 = vadd.f32 %v846, 1.0
    %v924 = vadd.f32 %v848, 1.0
    %v925 = vadd.f32 %v850, 1.0
    %v926 = vadd.f32 %v852, 1.0
    %v927 = vadd.f32 %v854, 1.0
    %v928 = vadd.f32 %v856, 1.0
    %v929 = vadd.f32 %v858, 1.0
    %v930 = vadd.f32 %v860, 1.0
    %v931 = vadd.f32 %v862, 1.0
    %v932 = vadd.f32 %v864, 1.0
    %v933 = vadd.f32 %v866, 1.0
    %v934 = vadd.f32 %v868, 1.0
    %v935 = vadd.f32 %v870, 1.0
    %v936 = vadd.f32 %v872, 1.0
    %v937 = vrcp.pop %v873
    %v938 = vmul.f32 1.0, %v937
    %v939 = vrcp.pop %v874
    %v940 = vmul.f32 1.0, %v939
    %v941 = vrcp.pop %v875
    %v942 = vmul.f32 1.0, %v941
    %v943 = vrcp.pop %v876
    %v944 = vmul.f32 1.0, %v943
    %v945 = vrcp.pop %v877
    %v946 = vmul.f32 1.0, %v945
    %v947 = vrcp.pop %v878
    %v948 = vmul.f32 1.0, %v947
    %v949 = vrcp.pop %v879
    %v950 = vmul.f32 1.0, %v949
    %v951 = vrcp.pop %v880
    %v952 = vmul.f32 1.0, %v951
    %v953 = vrcp.pop %v881
    %v954 = vmul.f32 1.0, %v953
    %v955 = vrcp.pop %v882
    %v956 = vmul.f32 1.0, %v955
    %v957 = vrcp.pop %v883
    %v958 = vmul.f32 1.0, %v957
    %v959 = vrcp.pop %v884
    %v960 = vmul.f32 1.0, %v959
    %v961 = vrcp.pop %v885
    %v962 = vmul.f32 1.0, %v961
    %v963 = vrcp.pop %v886
    %v964 = vmul.f32 1.0, %v963
    %v965 = vrcp.pop %v887
    %v966 = vmul.f32 1.0, %v965
    %v967 = vrcp.pop %v888
    %v968 = vmul.f32 1.0, %v967
    %v969 = vrcp.pop %v889
    %v970 = vmul.f32 1.0, %v969
    %v971 = vrcp.pop %v890
    %v972 = vmul.f32 1.0, %v971
    %v973 = vrcp.pop %v891
    %v974 = vmul.f32 1.0, %v973
    %v975 = vrcp.pop %v892
    %v976 = vmul.f32 1.0, %v975
    %v977 = vrcp.pop %v893
    %v978 = vmul.f32 1.0, %v977
    %v979 = vrcp.pop %v894
    %v980 = vmul.f32 1.0, %v979
    %v981 = vrcp.pop %v895
    %v982 = vmul.f32 1.0, %v981
    %v983 = vrcp.pop %v896
    %v984 = vmul.f32 1.0, %v983
    %v985 = vrcp.pop %v897
    %v986 = vmul.f32 1.0, %v985
    %v987 = vrcp.pop %v898
    %v988 = vmul.f32 1.0, %v987
    %v989 = vrcp.pop %v899
    %v990 = vmul.f32 1.0, %v989
    %v991 = vrcp.pop %v900
    %v992 = vmul.f32 1.0, %v991
    %v993 = vrcp.pop %v901
    %v994 = vmul.f32 1.0, %v993
    %v995 = vrcp.pop %v902
    %v996 = vmul.f32 1.0, %v995
    %v997 = vrcp.pop %v903
    %v998 = vmul.f32 1.0, %v997
    %v999 = vrcp.pop %v904
    %v1000 = vmul.f32 1.0, %v999
    %v1001 = vrcp.pop %v905
    %v1002 = vmul.f32 1.0, %v1001
    %v1003 = vrcp.pop %v906
    %v1004 = vmul.f32 1.0, %v1003
    %v1005 = vrcp.pop %v907
    %v1006 = vmul.f32 1.0, %v1005
    %v1007 = vrcp.pop %v908
    %v1008 = vmul.f32 1.0, %v1007
    %v1009 = vrcp.pop %v909
    %v1010 = vmul.f32 1.0, %v1009
    %v1011 = vrcp.pop %v910
    %v1012 = vmul.f32 1.0, %v1011
    %v1013 = vrcp.pop %v911
    %v1014 = vmul.f32 1.0, %v1013
    %v1015 = vrcp.pop %v912
    %v1016 = vmul.f32 1.0, %v1015
    %v1017 = vrcp.pop %v913
    %v1018 = vmul.f32 1.0, %v1017
    %v1019 = vrcp.pop %v914
    %v1020 = vmul.f32 1.0, %v1019
    %v1021 = vrcp.pop %v915
    %v1022 = vmul.f32 1.0, %v1021
    %v1023 = vrcp.pop %v916
    %v1024 = vmul.f32 1.0, %v1023
    %v1025 = vrcp.pop %v917
    %v1026 = vmul.f32 1.0, %v1025
    %v1027 = vrcp.pop %v918
    %v1028 = vmul.f32 1.0, %v1027
    %v1029 = vrcp.pop %v919
    %v1030 = vmul.f32 1.0, %v1029
    %v1031 = vrcp.pop %v920
    %v1032 = vmul.f32 1.0, %v1031
    %v1033 = vrcp.pop %v921
    %v1034 = vmul.f32 1.0, %v1033
    %v1035 = vrcp.pop %v922
    %v1036 = vmul.f32 1.0, %v1035
    %v1037 = vrcp.pop %v923
    %v1038 = vmul.f32 1.0, %v1037
    %v1039 = vrcp.pop %v924
    %v1040 = vmul.f32 1.0, %v1039
    %v1041 = vrcp.pop %v925
    %v1042 = vmul.f32 1.0, %v1041
    %v1043 = vrcp.pop %v926
    %v1044 = vmul.f32 1.0, %v1043
    %v1045 = vrcp.pop %v927
    %v1046 = vmul.f32 1.0, %v1045
    %v1047 = vrcp.pop %v928
    %v1048 = vmul.f32 1.0, %v1047
    %v1049 = vrcp.pop %v929
    %v1050 = vmul.f32 1.0, %v1049
    %v1051 = vrcp.pop %v930
    %v1052 = vmul.f32 1.0, %v1051
    %v1053 = vrcp.pop %v931
    %v1054 = vmul.f32 1.0, %v1053
    %v1055 = vrcp.pop %v932
    %v1056 = vmul.f32 1.0, %v1055
    %v1057 = vrcp.pop %v933
    %v1058 = vmul.f32 1.0, %v1057
    %v1059 = vrcp.pop %v934
    %v1060 = vmul.f32 1.0, %v1059
    %v1061 = vrcp.pop %v935
    %v1062 = vmul.f32 1.0, %v1061
    %v1063 = vrcp.pop %v936
    %v1064 = vmul.f32 1.0, %v1063
    %v1065 = vmul.f32 %v363, %v938
    %v1066 = vmul.f32 %v368, %v940
    %v1067 = vmul.f32 %v373, %v942
    %v1068 = vmul.f32 %v378, %v944
    %v1069 = vmul.f32 %v383, %v946
    %v1070 = vmul.f32 %v388, %v948
    %v1071 = vmul.f32 %v393, %v950
    %v1072 = vmul.f32 %v398, %v952
    %v1073 = vmul.f32 %v403, %v954
    %v1074 = vmul.f32 %v408, %v956
    %v1075 = vmul.f32 %v413, %v958
    %v1076 = vmul.f32 %v418, %v960
    %v1077 = vmul.f32 %v423, %v962
    %v1078 = vmul.f32 %v428, %v964
    %v1079 = vmul.f32 %v433, %v966
    %v1080 = vmul.f32 %v438, %v968
    %v1081 = vmul.f32 %v443, %v970
    %v1082 = vmul.f32 %v448, %v972
    %v1083 = vmul.f32 %v453, %v974
    %v1084 = vmul.f32 %v458, %v976
    %v1085 = vmul.f32 %v463, %v978
    %v1086 = vmul.f32 %v468, %v980
    %v1087 = vmul.f32 %v473, %v982
    %v1088 = vmul.f32 %v478, %v984
    %v1089 = vmul.f32 %v483, %v986
    %v1090 = vmul.f32 %v488, %v988
    %v1091 = vmul.f32 %v493, %v990
    %v1092 = vmul.f32 %v498, %v992
    %v1093 = vmul.f32 %v503, %v994
    %v1094 = vmul.f32 %v508, %v996
    %v1095 = vmul.f32 %v513, %v998
    %v1096 = vmul.f32 %v518, %v1000
    %v1097 = vmul.f32 %v523, %v1002
    %v1098 = vmul.f32 %v528, %v1004
    %v1099 = vmul.f32 %v533, %v1006
    %v1100 = vmul.f32 %v538, %v1008
    %v1101 = vmul.f32 %v543, %v1010
    %v1102 = vmul.f32 %v548, %v1012
    %v1103 = vmul.f32 %v553, %v1014
    %v1104 = vmul.f32 %v558, %v1016
    %v1105 = vmul.f32 %v563, %v1018
    %v1106 = vmul.f32 %v568, %v1020
    %v1107 = vmul.f32 %v573, %v1022
    %v1108 = vmul.f32 %v578, %v1024
    %v1109 = vmul.f32 %v583, %v1026
    %v1110 = vmul.f32 %v588, %v1028
    %v1111 = vmul.f32 %v593, %v1030
    %v1112 = vmul.f32 %v598, %v1032
    %v1113 = vmul.f32 %v603, %v1034
    %v1114 = vmul.f32 %v608, %v1036
    %v1115 = vmul.f32 %v613, %v1038
    %v1116 = vmul.f32 %v618, %v1040
    %v1117 = vmul.f32 %v623, %v1042
    %v1118 = vmul.f32 %v628, %v1044
    %v1119 = vmul.f32 %v633, %v1046
    %v1120 = vmul.f32 %v638, %v1048
    %v1121 = vmul.f32 %v643, %v1050
    %v1122 = vmul.f32 %v648, %v1052
    %v1123 = vmul.f32 %v653, %v1054
    %v1124 = vmul.f32 %v658, %v1056
    %v1125 = vmul.f32 %v663, %v1058
    %v1126 = vmul.f32 %v668, %v1060
    %v1127 = vmul.f32 %v673, %v1062
    %v1128 = vmul.f32 %v678, %v1064
    %vm1129 = vcmask 64512
    %1130 = vst.msk [vmem:[%s3] sm:$0xff] %vm1129, %v1065
    %1131 = vst.msk [vmem:[%s3 + $0x8] sm:$0xff] %vm1129, %v1066
    %1132 = vst.msk [vmem:[%s3 + $0x10] sm:$0xff] %vm1129, %v1067
    %1133 = vst.msk [vmem:[%s3 + $0x18] sm:$0xff] %vm1129, %v1068
    %1134 = vst.msk [vmem:[%s3 + $0x20] sm:$0xff] %vm1129, %v1069
    %1135 = vst.msk [vmem:[%s3 + $0x28] sm:$0xff] %vm1129, %v1070
    %1136 = vst.msk [vmem:[%s3 + $0x30] sm:$0xff] %vm1129, %v1071
    %1137 = vst.msk [vmem:[%s3 + $0x38] sm:$0xff] %vm1129, %v1072
    %1138 = vst.msk [vmem:[%s3 + $0x40] sm:$0xff] %vm1129, %v1073
    %1139 = vst.msk [vmem:[%s3 + $0x48] sm:$0xff] %vm1129, %v1074
    %1140 = vst.msk [vmem:[%s3 + $0x50] sm:$0xff] %vm1129, %v1075
    %1141 = vst.msk [vmem:[%s3 + $0x58] sm:$0xff] %vm1129, %v1076
    %1142 = vst.msk [vmem:[%s3 + $0x60] sm:$0xff] %vm1129, %v1077
    %1143 = vst.msk [vmem:[%s3 + $0x68] sm:$0xff] %vm1129, %v1078
    %1144 = vst.msk [vmem:[%s3 + $0x70] sm:$0xff] %vm1129, %v1079
    %1145 = vst.msk [vmem:[%s3 + $0x78] sm:$0xff] %vm1129, %v1080
    %1146 = vst.msk [vmem:[%s3 + $0x80] sm:$0xff] %vm1129, %v1081
    %1147 = vst.msk [vmem:[%s3 + $0x88] sm:$0xff] %vm1129, %v1082
    %1148 = vst.msk [vmem:[%s3 + $0x90] sm:$0xff] %vm1129, %v1083
    %1149 = vst.msk [vmem:[%s3 + $0x98] sm:$0xff] %vm1129, %v1084
    %1150 = vst.msk [vmem:[%s3 + $0xa0] sm:$0xff] %vm1129, %v1085
    %1151 = vst.msk [vmem:[%s3 + $0xa8] sm:$0xff] %vm1129, %v1086
    %1152 = vst.msk [vmem:[%s3 + $0xb0] sm:$0xff] %vm1129, %v1087
    %1153 = vst.msk [vmem:[%s3 + $0xb8] sm:$0xff] %vm1129, %v1088
    %1154 = vst.msk [vmem:[%s3 + $0xc0] sm:$0xff] %vm1129, %v1089
    %1155 = vst.msk [vmem:[%s3 + $0xc8] sm:$0xff] %vm1129, %v1090
    %1156 = vst.msk [vmem:[%s3 + $0xd0] sm:$0xff] %vm1129, %v1091
    %1157 = vst.msk [vmem:[%s3 + $0xd8] sm:$0xff] %vm1129, %v1092
    %1158 = vst.msk [vmem:[%s3 + $0xe0] sm:$0xff] %vm1129, %v1093
    %1159 = vst.msk [vmem:[%s3 + $0xe8] sm:$0xff] %vm1129, %v1094
    %1160 = vst.msk [vmem:[%s3 + $0xf0] sm:$0xff] %vm1129, %v1095
    %1161 = vst.msk [vmem:[%s3 + $0xf8] sm:$0xff] %vm1129, %v1096
    %1162 = vst.msk [vmem:[%s3 + $0x100] sm:$0xff] %vm1129, %v1097
    %1163 = vst.msk [vmem:[%s3 + $0x108] sm:$0xff] %vm1129, %v1098
    %1164 = vst.msk [vmem:[%s3 + $0x110] sm:$0xff] %vm1129, %v1099
    %1165 = vst.msk [vmem:[%s3 + $0x118] sm:$0xff] %vm1129, %v1100
    %1166 = vst.msk [vmem:[%s3 + $0x120] sm:$0xff] %vm1129, %v1101
    %1167 = vst.msk [vmem:[%s3 + $0x128] sm:$0xff] %vm1129, %v1102
    %1168 = vst.msk [vmem:[%s3 + $0x130] sm:$0xff] %vm1129, %v1103
    %1169 = vst.msk [vmem:[%s3 + $0x138] sm:$0xff] %vm1129, %v1104
    %1170 = vst.msk [vmem:[%s3 + $0x140] sm:$0xff] %vm1129, %v1105
    %1171 = vst.msk [vmem:[%s3 + $0x148] sm:$0xff] %vm1129, %v1106
    %1172 = vst.msk [vmem:[%s3 + $0x150] sm:$0xff] %vm1129, %v1107
    %1173 = vst.msk [vmem:[%s3 + $0x158] sm:$0xff] %vm1129, %v1108
    %1174 = vst.msk [vmem:[%s3 + $0x160] sm:$0xff] %vm1129, %v1109
    %1175 = vst.msk [vmem:[%s3 + $0x168] sm:$0xff] %vm1129, %v1110
    %1176 = vst.msk [vmem:[%s3 + $0x170] sm:$0xff] %vm1129, %v1111
    %1177 = vst.msk [vmem:[%s3 + $0x178] sm:$0xff] %vm1129, %v1112
    %1178 = vst.msk [vmem:[%s3 + $0x180] sm:$0xff] %vm1129, %v1113
    %1179 = vst.msk [vmem:[%s3 + $0x188] sm:$0xff] %vm1129, %v1114
    %1180 = vst.msk [vmem:[%s3 + $0x190] sm:$0xff] %vm1129, %v1115
    %1181 = vst.msk [vmem:[%s3 + $0x198] sm:$0xff] %vm1129, %v1116
    %1182 = vst.msk [vmem:[%s3 + $0x1a0] sm:$0xff] %vm1129, %v1117
    %1183 = vst.msk [vmem:[%s3 + $0x1a8] sm:$0xff] %vm1129, %v1118
    %1184 = vst.msk [vmem:[%s3 + $0x1b0] sm:$0xff] %vm1129, %v1119
    %1185 = vst.msk [vmem:[%s3 + $0x1b8] sm:$0xff] %vm1129, %v1120
    %1186 = vst.msk [vmem:[%s3 + $0x1c0] sm:$0xff] %vm1129, %v1121
    %1187 = vst.msk [vmem:[%s3 + $0x1c8] sm:$0xff] %vm1129, %v1122
    %1188 = vst.msk [vmem:[%s3 + $0x1d0] sm:$0xff] %vm1129, %v1123
    %1189 = vst.msk [vmem:[%s3 + $0x1d8] sm:$0xff] %vm1129, %v1124
    %1190 = vst.msk [vmem:[%s3 + $0x1e0] sm:$0xff] %vm1129, %v1125
    %1191 = vst.msk [vmem:[%s3 + $0x1e8] sm:$0xff] %vm1129, %v1126
    %1192 = vst.msk [vmem:[%s3 + $0x1f0] sm:$0xff] %vm1129, %v1127
    %1193 = vst.msk [vmem:[%s3 + $0x1f8] sm:$0xff] %vm1129, %v1128
    %1258 = vrot.lane.b32.xlu0 %v1065, 120
    %v1259 = vpop.permute.xlu0 %1258
    %1260 = vrot.lane.b32.xlu0 %v1066, 120
    %v1261 = vpop.permute.xlu0 %1260
    %1262 = vrot.lane.b32.xlu0 %v1067, 120
    %v1263 = vpop.permute.xlu0 %1262
    %1264 = vrot.lane.b32.xlu0 %v1068, 120
    %v1265 = vpop.permute.xlu0 %1264
    %1266 = vrot.lane.b32.xlu0 %v1069, 120
    %v1267 = vpop.permute.xlu0 %1266
    %1268 = vrot.lane.b32.xlu0 %v1070, 120
    %v1269 = vpop.permute.xlu0 %1268
    %1270 = vrot.lane.b32.xlu0 %v1071, 120
    %v1271 = vpop.permute.xlu0 %1270
    %1272 = vrot.lane.b32.xlu0 %v1072, 120
    %v1273 = vpop.permute.xlu0 %1272
    %1274 = vrot.lane.b32.xlu0 %v1073, 120
    %v1275 = vpop.permute.xlu0 %1274
    %1276 = vrot.lane.b32.xlu0 %v1074, 120
    %v1277 = vpop.permute.xlu0 %1276
    %1278 = vrot.lane.b32.xlu0 %v1075, 120
    %v1279 = vpop.permute.xlu0 %1278
    %1280 = vrot.lane.b32.xlu0 %v1076, 120
    %v1281 = vpop.permute.xlu0 %1280
    %1282 = vrot.lane.b32.xlu0 %v1077, 120
    %v1283 = vpop.permute.xlu0 %1282
    %1284 = vrot.lane.b32.xlu0 %v1078, 120
    %v1285 = vpop.permute.xlu0 %1284
    %1286 = vrot.lane.b32.xlu0 %v1079, 120
    %v1287 = vpop.permute.xlu0 %1286
    %1288 = vrot.lane.b32.xlu0 %v1080, 120
    %v1289 = vpop.permute.xlu0 %1288
    %1290 = vrot.lane.b32.xlu0 %v1081, 120
    %v1291 = vpop.permute.xlu0 %1290
    %1292 = vrot.lane.b32.xlu0 %v1082, 120
    %v1293 = vpop.permute.xlu0 %1292
    %1294 = vrot.lane.b32.xlu0 %v1083, 120
    %v1295 = vpop.permute.xlu0 %1294
    %1296 = vrot.lane.b32.xlu0 %v1084, 120
    %v1297 = vpop.permute.xlu0 %1296
    %1298 = vrot.lane.b32.xlu0 %v1085, 120
    %v1299 = vpop.permute.xlu0 %1298
    %1300 = vrot.lane.b32.xlu0 %v1086, 120
    %v1301 = vpop.permute.xlu0 %1300
    %1302 = vrot.lane.b32.xlu0 %v1087, 120
    %v1303 = vpop.permute.xlu0 %1302
    %1304 = vrot.lane.b32.xlu0 %v1088, 120
    %v1305 = vpop.permute.xlu0 %1304
    %1306 = vrot.lane.b32.xlu0 %v1089, 120
    %v1307 = vpop.permute.xlu0 %1306
    %1308 = vrot.lane.b32.xlu0 %v1090, 120
    %v1309 = vpop.permute.xlu0 %1308
    %1310 = vrot.lane.b32.xlu0 %v1091, 120
    %v1311 = vpop.permute.xlu0 %1310
    %1312 = vrot.lane.b32.xlu0 %v1092, 120
    %v1313 = vpop.permute.xlu0 %1312
    %1314 = vrot.lane.b32.xlu0 %v1093, 120
    %v1315 = vpop.permute.xlu0 %1314
    %1316 = vrot.lane.b32.xlu0 %v1094, 120
    %v1317 = vpop.permute.xlu0 %1316
    %1318 = vrot.lane.b32.xlu0 %v1095, 120
    %v1319 = vpop.permute.xlu0 %1318
    %1320 = vrot.lane.b32.xlu0 %v1096, 120
    %v1321 = vpop.permute.xlu0 %1320
    %1322 = vrot.lane.b32.xlu0 %v1097, 120
    %v1323 = vpop.permute.xlu0 %1322
    %1324 = vrot.lane.b32.xlu0 %v1098, 120
    %v1325 = vpop.permute.xlu0 %1324
    %1326 = vrot.lane.b32.xlu0 %v1099, 120
    %v1327 = vpop.permute.xlu0 %1326
    %1328 = vrot.lane.b32.xlu0 %v1100, 120
    %v1329 = vpop.permute.xlu0 %1328
    %1330 = vrot.lane.b32.xlu0 %v1101, 120
    %v1331 = vpop.permute.xlu0 %1330
    %1332 = vrot.lane.b32.xlu0 %v1102, 120
    %v1333 = vpop.permute.xlu0 %1332
    %1334 = vrot.lane.b32.xlu0 %v1103, 120
    %v1335 = vpop.permute.xlu0 %1334
    %1336 = vrot.lane.b32.xlu0 %v1104, 120
    %v1337 = vpop.permute.xlu0 %1336
    %1338 = vrot.lane.b32.xlu0 %v1105, 120
    %v1339 = vpop.permute.xlu0 %1338
    %1340 = vrot.lane.b32.xlu0 %v1106, 120
    %v1341 = vpop.permute.xlu0 %1340
    %1342 = vrot.lane.b32.xlu0 %v1107, 120
    %v1343 = vpop.permute.xlu0 %1342
    %1344 = vrot.lane.b32.xlu0 %v1108, 120
    %v1345 = vpop.permute.xlu0 %1344
    %1346 = vrot.lane.b32.xlu0 %v1109, 120
    %v1347 = vpop.permute.xlu0 %1346
    %1348 = vrot.lane.b32.xlu0 %v1110, 120
    %v1349 = vpop.permute.xlu0 %1348
    %1350 = vrot.lane.b32.xlu0 %v1111, 120
    %v1351 = vpop.permute.xlu0 %1350
    %1352 = vrot.lane.b32.xlu0 %v1112, 120
    %v1353 = vpop.permute.xlu0 %1352
    %1354 = vrot.lane.b32.xlu0 %v1113, 120
    %v1355 = vpop.permute.xlu0 %1354
    %1356 = vrot.lane.b32.xlu0 %v1114, 120
    %v1357 = vpop.permute.xlu0 %1356
    %1358 = vrot.lane.b32.xlu0 %v1115, 120
    %v1359 = vpop.permute.xlu0 %1358
    %1360 = vrot.lane.b32.xlu0 %v1116, 120
    %v1361 = vpop.permute.xlu0 %1360
    %1362 = vrot.lane.b32.xlu0 %v1117, 120
    %v1363 = vpop.permute.xlu0 %1362
    %1364 = vrot.lane.b32.xlu0 %v1118, 120
    %v1365 = vpop.permute.xlu0 %1364
    %1366 = vrot.lane.b32.xlu0 %v1119, 120
    %v1367 = vpop.permute.xlu0 %1366
    %1368 = vrot.lane.b32.xlu0 %v1120, 120
    %v1369 = vpop.permute.xlu0 %1368
    %1370 = vrot.lane.b32.xlu0 %v1121, 120
    %v1371 = vpop.permute.xlu0 %1370
    %1372 = vrot.lane.b32.xlu0 %v1122, 120
    %v1373 = vpop.permute.xlu0 %1372
    %1374 = vrot.lane.b32.xlu0 %v1123, 120
    %v1375 = vpop.permute.xlu0 %1374
    %1376 = vrot.lane.b32.xlu0 %v1124, 120
    %v1377 = vpop.permute.xlu0 %1376
    %1378 = vrot.lane.b32.xlu0 %v1125, 120
    %v1379 = vpop.permute.xlu0 %1378
    %1380 = vrot.lane.b32.xlu0 %v1126, 120
    %v1381 = vpop.permute.xlu0 %1380
    %1382 = vrot.lane.b32.xlu0 %v1127, 120
    %v1383 = vpop.permute.xlu0 %1382
    %1384 = vrot.lane.b32.xlu0 %v1128, 120
    %v1385 = vpop.permute.xlu0 %1384
    %1450 = vst.msk [vmem:[%s4] sm:$0xff] %vm1129, %v1259
    %1451 = vst.msk [vmem:[%s4 + $0x8] sm:$0xff] %vm1129, %v1261
    %1452 = vst.msk [vmem:[%s4 + $0x10] sm:$0xff] %vm1129, %v1263
    %1453 = vst.msk [vmem:[%s4 + $0x18] sm:$0xff] %vm1129, %v1265
    %1454 = vst.msk [vmem:[%s4 + $0x20] sm:$0xff] %vm1129, %v1267
    %1455 = vst.msk [vmem:[%s4 + $0x28] sm:$0xff] %vm1129, %v1269
    %1456 = vst.msk [vmem:[%s4 + $0x30] sm:$0xff] %vm1129, %v1271
    %1457 = vst.msk [vmem:[%s4 + $0x38] sm:$0xff] %vm1129, %v1273
    %1458 = vst.msk [vmem:[%s4 + $0x40] sm:$0xff] %vm1129, %v1275
    %1459 = vst.msk [vmem:[%s4 + $0x48] sm:$0xff] %vm1129, %v1277
    %1460 = vst.msk [vmem:[%s4 + $0x50] sm:$0xff] %vm1129, %v1279
    %1461 = vst.msk [vmem:[%s4 + $0x58] sm:$0xff] %vm1129, %v1281
    %1462 = vst.msk [vmem:[%s4 + $0x60] sm:$0xff] %vm1129, %v1283
    %1463 = vst.msk [vmem:[%s4 + $0x68] sm:$0xff] %vm1129, %v1285
    %1464 = vst.msk [vmem:[%s4 + $0x70] sm:$0xff] %vm1129, %v1287
    %1465 = vst.msk [vmem:[%s4 + $0x78] sm:$0xff] %vm1129, %v1289
    %1466 = vst.msk [vmem:[%s4 + $0x80] sm:$0xff] %vm1129, %v1291
    %1467 = vst.msk [vmem:[%s4 + $0x88] sm:$0xff] %vm1129, %v1293
    %1468 = vst.msk [vmem:[%s4 + $0x90] sm:$0xff] %vm1129, %v1295
    %1469 = vst.msk [vmem:[%s4 + $0x98] sm:$0xff] %vm1129, %v1297
    %1470 = vst.msk [vmem:[%s4 + $0xa0] sm:$0xff] %vm1129, %v1299
    %1471 = vst.msk [vmem:[%s4 + $0xa8] sm:$0xff] %vm1129, %v1301
    %1472 = vst.msk [vmem:[%s4 + $0xb0] sm:$0xff] %vm1129, %v1303
    %1473 = vst.msk [vmem:[%s4 + $0xb8] sm:$0xff] %vm1129, %v1305
    %1474 = vst.msk [vmem:[%s4 + $0xc0] sm:$0xff] %vm1129, %v1307
    %1475 = vst.msk [vmem:[%s4 + $0xc8] sm:$0xff] %vm1129, %v1309
    %1476 = vst.msk [vmem:[%s4 + $0xd0] sm:$0xff] %vm1129, %v1311
    %1477 = vst.msk [vmem:[%s4 + $0xd8] sm:$0xff] %vm1129, %v1313
    %1478 = vst.msk [vmem:[%s4 + $0xe0] sm:$0xff] %vm1129, %v1315
    %1479 = vst.msk [vmem:[%s4 + $0xe8] sm:$0xff] %vm1129, %v1317
    %1480 = vst.msk [vmem:[%s4 + $0xf0] sm:$0xff] %vm1129, %v1319
    %1481 = vst.msk [vmem:[%s4 + $0xf8] sm:$0xff] %vm1129, %v1321
    %1482 = vst.msk [vmem:[%s4 + $0x100] sm:$0xff] %vm1129, %v1323
    %1483 = vst.msk [vmem:[%s4 + $0x108] sm:$0xff] %vm1129, %v1325
    %1484 = vst.msk [vmem:[%s4 + $0x110] sm:$0xff] %vm1129, %v1327
    %1485 = vst.msk [vmem:[%s4 + $0x118] sm:$0xff] %vm1129, %v1329
    %1486 = vst.msk [vmem:[%s4 + $0x120] sm:$0xff] %vm1129, %v1331
    %1487 = vst.msk [vmem:[%s4 + $0x128] sm:$0xff] %vm1129, %v1333
    %1488 = vst.msk [vmem:[%s4 + $0x130] sm:$0xff] %vm1129, %v1335
    %1489 = vst.msk [vmem:[%s4 + $0x138] sm:$0xff] %vm1129, %v1337
    %1490 = vst.msk [vmem:[%s4 + $0x140] sm:$0xff] %vm1129, %v1339
    %1491 = vst.msk [vmem:[%s4 + $0x148] sm:$0xff] %vm1129, %v1341
    %1492 = vst.msk [vmem:[%s4 + $0x150] sm:$0xff] %vm1129, %v1343
    %1493 = vst.msk [vmem:[%s4 + $0x158] sm:$0xff] %vm1129, %v1345
    %1494 = vst.msk [vmem:[%s4 + $0x160] sm:$0xff] %vm1129, %v1347
    %1495 = vst.msk [vmem:[%s4 + $0x168] sm:$0xff] %vm1129, %v1349
    %1496 = vst.msk [vmem:[%s4 + $0x170] sm:$0xff] %vm1129, %v1351
    %1497 = vst.msk [vmem:[%s4 + $0x178] sm:$0xff] %vm1129, %v1353
    %1498 = vst.msk [vmem:[%s4 + $0x180] sm:$0xff] %vm1129, %v1355
    %1499 = vst.msk [vmem:[%s4 + $0x188] sm:$0xff] %vm1129, %v1357
    %1500 = vst.msk [vmem:[%s4 + $0x190] sm:$0xff] %vm1129, %v1359
    %1501 = vst.msk [vmem:[%s4 + $0x198] sm:$0xff] %vm1129, %v1361
    %1502 = vst.msk [vmem:[%s4 + $0x1a0] sm:$0xff] %vm1129, %v1363
    %1503 = vst.msk [vmem:[%s4 + $0x1a8] sm:$0xff] %vm1129, %v1365
    %1504 = vst.msk [vmem:[%s4 + $0x1b0] sm:$0xff] %vm1129, %v1367
    %1505 = vst.msk [vmem:[%s4 + $0x1b8] sm:$0xff] %vm1129, %v1369
    %1506 = vst.msk [vmem:[%s4 + $0x1c0] sm:$0xff] %vm1129, %v1371
    %1507 = vst.msk [vmem:[%s4 + $0x1c8] sm:$0xff] %vm1129, %v1373
    %1508 = vst.msk [vmem:[%s4 + $0x1d0] sm:$0xff] %vm1129, %v1375
    %1509 = vst.msk [vmem:[%s4 + $0x1d8] sm:$0xff] %vm1129, %v1377
    %1510 = vst.msk [vmem:[%s4 + $0x1e0] sm:$0xff] %vm1129, %v1379
    %1511 = vst.msk [vmem:[%s4 + $0x1e8] sm:$0xff] %vm1129, %v1381
    %1512 = vst.msk [vmem:[%s4 + $0x1f0] sm:$0xff] %vm1129, %v1383
    %1513 = vst.msk [vmem:[%s4 + $0x1f8] sm:$0xff] %vm1129, %v1385
    // Predicated region
    $region18: #{c2f_forward.3} parent=1 // pred_check
      _
    $region19: #{c2f_forward.3} parent=1 // pred_check_branch
      %1515 = sbr.rel (0) target = $region21
    $region20: #{c2f_forward.3} parent=1 // pred_region
      _
    $region21: #{c2f_forward.3} parent=1 // pred_fallthru
      _
    // Predicated region
    $region22: #{c2f_forward.3} parent=1 // pred_check
      _
    $region23: #{c2f_forward.3} parent=1 // pred_check_branch
      %1517 = sbr.rel (0) target = $region25
    $region24: #{c2f_forward.3} parent=1 // pred_region
      _
    $region25: #{c2f_forward.3} parent=1 // pred_fallthru
      _
    // Predicated region
    $region26: #{c2f_forward.3} parent=1 // pred_check
      _
    $region27: #{c2f_forward.3} parent=1 // pred_check_branch
      %1519 = sbr.rel (0) target = $region29
    $region28: #{c2f_forward.3} parent=1 // pred_region
      _
    $region29: #{c2f_forward.3} parent=1 // pred_fallthru
      _
    // Predicated region
    $region30: #{c2f_forward.3} parent=1 // pred_check
      _
    $region31: #{c2f_forward.3} parent=1 // pred_check_branch
      %1521 = sbr.rel (0) target = $region33
    $region32: #{c2f_forward.3} parent=1 // pred_region
      _
    $region33: #{c2f_forward.3} parent=1 // pred_fallthru
      _
    %1522 = vsyncpa [#allocation3], 1

// kernel: c2f_forward.5
$region0: #{c2f_forward.5}
  #allocation0 [shape = 'u32[]', space=smem, size = 0x4, offset = 0x4, fixed_abs, tag = 'smem constant byte address 0x4 - core index']
  #allocation1 [shape = 'u32[144,128]{1,0:T(1,128)}', space=vmem, size = 0x12000, scoped, tag = 'internal scratch']
  %s0 = inlined_call_operand.vmem [shape: f32[512,8], index: 0, kind: input, shape index: {}]
  %s1 = inlined_call_operand.vmem [shape: f32[512,8], index: 1, kind: input, shape index: {}]
  %s2 = inlined_call_operand.vmem [shape: f32[512,8], index: 2, kind: input, shape index: {}]
  %s3 = inlined_call_operand.vmem [shape: f32[24,16], index: 3, kind: input, shape index: {}]
  %s4 = inlined_call_operand.vmem [shape: f32[1,16], index: 4, kind: input, shape index: {}]
  %s5 = inlined_call_operand.hbm [shape: f32[512,16], index: 5, kind: output, shape index: {}]
  %s6 = sld [smem:[#allocation0]]
  $region30: #{c2f_forward.5} parent=0
    _
  %s8 = ssub.s32 1, %s6
  %s9 = scalar_select 0, %s8, %s6
  $region1: #{c2f_forward.5} parent=0
    #allocation2 [shape = 'u8[262144]{0}', space=vmem, size = 0x40000, scoped, tag = 'output window, operand 0, single buffered']
    #allocation3 [shape = 's32[1]{0}', space=sflag, size = 0x4, scoped, tag = 'scoped memory for c2f_forward.5']
    %10 = vsyncpa [#allocation3], 0
    // Predicated region
    $region2: #{c2f_forward.5} parent=1 // pred_check
      _
    $region3: #{c2f_forward.5} parent=1 // pred_check_branch
      %12 = sbr.rel (0) target = $region5
    $region4: #{c2f_forward.5} parent=1 // pred_region
      _
    $region5: #{c2f_forward.5} parent=1 // pred_fallthru
      _
    // Predicated region
    $region6: #{c2f_forward.5} parent=1 // pred_check
      _
    $region7: #{c2f_forward.5} parent=1 // pred_check_branch
      %14 = sbr.rel (0) target = $region9
    $region8: #{c2f_forward.5} parent=1 // pred_region
      _
    $region9: #{c2f_forward.5} parent=1 // pred_fallthru
      _
    // Predicated region
    $region10: #{c2f_forward.5} parent=1 // pred_check
      _
    $region11: #{c2f_forward.5} parent=1 // pred_check_branch
      %16 = sbr.rel (0) target = $region13
    $region12: #{c2f_forward.5} parent=1 // pred_region
      _
    $region13: #{c2f_forward.5} parent=1 // pred_fallthru
      _
    // Predicated region
    $region14: #{c2f_forward.5} parent=1 // pred_check
      _
    $region15: #{c2f_forward.5} parent=1 // pred_check_branch
      %18 = sbr.rel (0) target = $region17
    $region16: #{c2f_forward.5} parent=1 // pred_region
      _
    $region17: #{c2f_forward.5} parent=1 // pred_fallthru
      _
    // Predicated region
    $region18: #{c2f_forward.5} parent=1 // pred_check
      _
    $region19: #{c2f_forward.5} parent=1 // pred_check_branch
      %20 = sbr.rel (0) target = $region21
    $region20: #{c2f_forward.5} parent=1 // pred_region
      _
    $region21: #{c2f_forward.5} parent=1 // pred_fallthru
      _
    %v21 = vld [vmem:[%s0] sm:$0xff]
    %v22 = vld [vmem:[%s0 + $0x8] sm:$0xff]
    %v23 = vld [vmem:[%s0 + $0x10] sm:$0xff]
    %v24 = vld [vmem:[%s0 + $0x18] sm:$0xff]
    %v25 = vld [vmem:[%s0 + $0x20] sm:$0xff]
    %v26 = vld [vmem:[%s0 + $0x28] sm:$0xff]
    %v27 = vld [vmem:[%s0 + $0x30] sm:$0xff]
    %v28 = vld [vmem:[%s0 + $0x38] sm:$0xff]
    %v29 = vld [vmem:[%s0 + $0x40] sm:$0xff]
    %v30 = vld [vmem:[%s0 + $0x48] sm:$0xff]
    %v31 = vld [vmem:[%s0 + $0x50] sm:$0xff]
    %v32 = vld [vmem:[%s0 + $0x58] sm:$0xff]
    %v33 = vld [vmem:[%s0 + $0x60] sm:$0xff]
    %v34 = vld [vmem:[%s0 + $0x68] sm:$0xff]
    %v35 = vld [vmem:[%s0 + $0x70] sm:$0xff]
    %v36 = vld [vmem:[%s0 + $0x78] sm:$0xff]
    %v37 = vld [vmem:[%s0 + $0x80] sm:$0xff]
    %v38 = vld [vmem:[%s0 + $0x88] sm:$0xff]
    %v39 = vld [vmem:[%s0 + $0x90] sm:$0xff]
    %v40 = vld [vmem:[%s0 + $0x98] sm:$0xff]
    %v41 = vld [vmem:[%s0 + $0xa0] sm:$0xff]
    %v42 = vld [vmem:[%s0 + $0xa8] sm:$0xff]
    %v43 = vld [vmem:[%s0 + $0xb0] sm:$0xff]
    %v44 = vld [vmem:[%s0 + $0xb8] sm:$0xff]
    %v45 = vld [vmem:[%s0 + $0xc0] sm:$0xff]
    %v46 = vld [vmem:[%s0 + $0xc8] sm:$0xff]
    %v47 = vld [vmem:[%s0 + $0xd0] sm:$0xff]
    %v48 = vld [vmem:[%s0 + $0xd8] sm:$0xff]
    %v49 = vld [vmem:[%s0 + $0xe0] sm:$0xff]
    %v50 = vld [vmem:[%s0 + $0xe8] sm:$0xff]
    %v51 = vld [vmem:[%s0 + $0xf0] sm:$0xff]
    %v52 = vld [vmem:[%s0 + $0xf8] sm:$0xff]
    %v53 = vld [vmem:[%s0 + $0x100] sm:$0xff]
    %v54 = vld [vmem:[%s0 + $0x108] sm:$0xff]
    %v55 = vld [vmem:[%s0 + $0x110] sm:$0xff]
    %v56 = vld [vmem:[%s0 + $0x118] sm:$0xff]
    %v57 = vld [vmem:[%s0 + $0x120] sm:$0xff]
    %v58 = vld [vmem:[%s0 + $0x128] sm:$0xff]
    %v59 = vld [vmem:[%s0 + $0x130] sm:$0xff]
    %v60 = vld [vmem:[%s0 + $0x138] sm:$0xff]
    %v61 = vld [vmem:[%s0 + $0x140] sm:$0xff]
    %v62 = vld [vmem:[%s0 + $0x148] sm:$0xff]
    %v63 = vld [vmem:[%s0 + $0x150] sm:$0xff]
    %v64 = vld [vmem:[%s0 + $0x158] sm:$0xff]
    %v65 = vld [vmem:[%s0 + $0x160] sm:$0xff]
    %v66 = vld [vmem:[%s0 + $0x168] sm:$0xff]
    %v67 = vld [vmem:[%s0 + $0x170] sm:$0xff]
    %v68 = vld [vmem:[%s0 + $0x178] sm:$0xff]
    %v69 = vld [vmem:[%s0 + $0x180] sm:$0xff]
    %v70 = vld [vmem:[%s0 + $0x188] sm:$0xff]
    %v71 = vld [vmem:[%s0 + $0x190] sm:$0xff]
    %v72 = vld [vmem:[%s0 + $0x198] sm:$0xff]
    %v73 = vld [vmem:[%s0 + $0x1a0] sm:$0xff]
    %v74 = vld [vmem:[%s0 + $0x1a8] sm:$0xff]
    %v75 = vld [vmem:[%s0 + $0x1b0] sm:$0xff]
    %v76 = vld [vmem:[%s0 + $0x1b8] sm:$0xff]
    %v77 = vld [vmem:[%s0 + $0x1c0] sm:$0xff]
    %v78 = vld [vmem:[%s0 + $0x1c8] sm:$0xff]
    %v79 = vld [vmem:[%s0 + $0x1d0] sm:$0xff]
    %v80 = vld [vmem:[%s0 + $0x1d8] sm:$0xff]
    %v81 = vld [vmem:[%s0 + $0x1e0] sm:$0xff]
    %v82 = vld [vmem:[%s0 + $0x1e8] sm:$0xff]
    %v83 = vld [vmem:[%s0 + $0x1f0] sm:$0xff]
    %v84 = vld [vmem:[%s0 + $0x1f8] sm:$0xff]
    %v85 = vld [vmem:[%s1] sm:$0xff]
    %v86 = vld [vmem:[%s1 + $0x8] sm:$0xff]
    %v87 = vld [vmem:[%s1 + $0x10] sm:$0xff]
    %v88 = vld [vmem:[%s1 + $0x18] sm:$0xff]
    %v89 = vld [vmem:[%s1 + $0x20] sm:$0xff]
    %v90 = vld [vmem:[%s1 + $0x28] sm:$0xff]
    %v91 = vld [vmem:[%s1 + $0x30] sm:$0xff]
    %v92 = vld [vmem:[%s1 + $0x38] sm:$0xff]
    %v93 = vld [vmem:[%s1 + $0x40] sm:$0xff]
    %v94 = vld [vmem:[%s1 + $0x48] sm:$0xff]
    %v95 = vld [vmem:[%s1 + $0x50] sm:$0xff]
    %v96 = vld [vmem:[%s1 + $0x58] sm:$0xff]
    %v97 = vld [vmem:[%s1 + $0x60] sm:$0xff]
    %v98 = vld [vmem:[%s1 + $0x68] sm:$0xff]
    %v99 = vld [vmem:[%s1 + $0x70] sm:$0xff]
    %v100 = vld [vmem:[%s1 + $0x78] sm:$0xff]
    %v101 = vld [vmem:[%s1 + $0x80] sm:$0xff]
    %v102 = vld [vmem:[%s1 + $0x88] sm:$0xff]
    %v103 = vld [vmem:[%s1 + $0x90] sm:$0xff]
    %v104 = vld [vmem:[%s1 + $0x98] sm:$0xff]
    %v105 = vld [vmem:[%s1 + $0xa0] sm:$0xff]
    %v106 = vld [vmem:[%s1 + $0xa8] sm:$0xff]
    %v107 = vld [vmem:[%s1 + $0xb0] sm:$0xff]
    %v108 = vld [vmem:[%s1 + $0xb8] sm:$0xff]
    %v109 = vld [vmem:[%s1 + $0xc0] sm:$0xff]
    %v110 = vld [vmem:[%s1 + $0xc8] sm:$0xff]
    %v111 = vld [vmem:[%s1 + $0xd0] sm:$0xff]
    %v112 = vld [vmem:[%s1 + $0xd8] sm:$0xff]
    %v113 = vld [vmem:[%s1 + $0xe0] sm:$0xff]
    %v114 = vld [vmem:[%s1 + $0xe8] sm:$0xff]
    %v115 = vld [vmem:[%s1 + $0xf0] sm:$0xff]
    %v116 = vld [vmem:[%s1 + $0xf8] sm:$0xff]
    %v117 = vld [vmem:[%s1 + $0x100] sm:$0xff]
    %v118 = vld [vmem:[%s1 + $0x108] sm:$0xff]
    %v119 = vld [vmem:[%s1 + $0x110] sm:$0xff]
    %v120 = vld [vmem:[%s1 + $0x118] sm:$0xff]
    %v121 = vld [vmem:[%s1 + $0x120] sm:$0xff]
    %v122 = vld [vmem:[%s1 + $0x128] sm:$0xff]
    %v123 = vld [vmem:[%s1 + $0x130] sm:$0xff]
    %v124 = vld [vmem:[%s1 + $0x138] sm:$0xff]
    %v125 = vld [vmem:[%s1 + $0x140] sm:$0xff]
    %v126 = vld [vmem:[%s1 + $0x148] sm:$0xff]
    %v127 = vld [vmem:[%s1 + $0x150] sm:$0xff]
    %v128 = vld [vmem:[%s1 + $0x158] sm:$0xff]
    %v129 = vld [vmem:[%s1 + $0x160] sm:$0xff]
    %v130 = vld [vmem:[%s1 + $0x168] sm:$0xff]
    %v131 = vld [vmem:[%s1 + $0x170] sm:$0xff]
    %v132 = vld [vmem:[%s1 + $0x178] sm:$0xff]
    %v133 = vld [vmem:[%s1 + $0x180] sm:$0xff]
    %v134 = vld [vmem:[%s1 + $0x188] sm:$0xff]
    %v135 = vld [vmem:[%s1 + $0x190] sm:$0xff]
    %v136 = vld [vmem:[%s1 + $0x198] sm:$0xff]
    %v137 = vld [vmem:[%s1 + $0x1a0] sm:$0xff]
    %v138 = vld [vmem:[%s1 + $0x1a8] sm:$0xff]
    %v139 = vld [vmem:[%s1 + $0x1b0] sm:$0xff]
    %v140 = vld [vmem:[%s1 + $0x1b8] sm:$0xff]
    %v141 = vld [vmem:[%s1 + $0x1c0] sm:$0xff]
    %v142 = vld [vmem:[%s1 + $0x1c8] sm:$0xff]
    %v143 = vld [vmem:[%s1 + $0x1d0] sm:$0xff]
    %v144 = vld [vmem:[%s1 + $0x1d8] sm:$0xff]
    %v145 = vld [vmem:[%s1 + $0x1e0] sm:$0xff]
    %v146 = vld [vmem:[%s1 + $0x1e8] sm:$0xff]
    %v147 = vld [vmem:[%s1 + $0x1f0] sm:$0xff]
    %v148 = vld [vmem:[%s1 + $0x1f8] sm:$0xff]
    %v149 = vld [vmem:[%s2] sm:$0xff]
    %v150 = vld [vmem:[%s2 + $0x8] sm:$0xff]
    %v151 = vld [vmem:[%s2 + $0x10] sm:$0xff]
    %v152 = vld [vmem:[%s2 + $0x18] sm:$0xff]
    %v153 = vld [vmem:[%s2 + $0x20] sm:$0xff]
    %v154 = vld [vmem:[%s2 + $0x28] sm:$0xff]
    %v155 = vld [vmem:[%s2 + $0x30] sm:$0xff]
    %v156 = vld [vmem:[%s2 + $0x38] sm:$0xff]
    %v157 = vld [vmem:[%s2 + $0x40] sm:$0xff]
    %v158 = vld [vmem:[%s2 + $0x48] sm:$0xff]
    %v159 = vld [vmem:[%s2 + $0x50] sm:$0xff]
    %v160 = vld [vmem:[%s2 + $0x58] sm:$0xff]
    %v161 = vld [vmem:[%s2 + $0x60] sm:$0xff]
    %v162 = vld [vmem:[%s2 + $0x68] sm:$0xff]
    %v163 = vld [vmem:[%s2 + $0x70] sm:$0xff]
    %v164 = vld [vmem:[%s2 + $0x78] sm:$0xff]
    %v165 = vld [vmem:[%s2 + $0x80] sm:$0xff]
    %v166 = vld [vmem:[%s2 + $0x88] sm:$0xff]
    %v167 = vld [vmem:[%s2 + $0x90] sm:$0xff]
    %v168 = vld [vmem:[%s2 + $0x98] sm:$0xff]
    %v169 = vld [vmem:[%s2 + $0xa0] sm:$0xff]
    %v170 = vld [vmem:[%s2 + $0xa8] sm:$0xff]
    %v171 = vld [vmem:[%s2 + $0xb0] sm:$0xff]
    %v172 = vld [vmem:[%s2 + $0xb8] sm:$0xff]
    %v173 = vld [vmem:[%s2 + $0xc0] sm:$0xff]
    %v174 = vld [vmem:[%s2 + $0xc8] sm:$0xff]
    %v175 = vld [vmem:[%s2 + $0xd0] sm:$0xff]
    %v176 = vld [vmem:[%s2 + $0xd8] sm:$0xff]
    %v177 = vld [vmem:[%s2 + $0xe0] sm:$0xff]
    %v178 = vld [vmem:[%s2 + $0xe8] sm:$0xff]
    %v179 = vld [vmem:[%s2 + $0xf0] sm:$0xff]
    %v180 = vld [vmem:[%s2 + $0xf8] sm:$0xff]
    %v181 = vld [vmem:[%s2 + $0x100] sm:$0xff]
    %v182 = vld [vmem:[%s2 + $0x108] sm:$0xff]
    %v183 = vld [vmem:[%s2 + $0x110] sm:$0xff]
    %v184 = vld [vmem:[%s2 + $0x118] sm:$0xff]
    %v185 = vld [vmem:[%s2 + $0x120] sm:$0xff]
    %v186 = vld [vmem:[%s2 + $0x128] sm:$0xff]
    %v187 = vld [vmem:[%s2 + $0x130] sm:$0xff]
    %v188 = vld [vmem:[%s2 + $0x138] sm:$0xff]
    %v189 = vld [vmem:[%s2 + $0x140] sm:$0xff]
    %v190 = vld [vmem:[%s2 + $0x148] sm:$0xff]
    %v191 = vld [vmem:[%s2 + $0x150] sm:$0xff]
    %v192 = vld [vmem:[%s2 + $0x158] sm:$0xff]
    %v193 = vld [vmem:[%s2 + $0x160] sm:$0xff]
    %v194 = vld [vmem:[%s2 + $0x168] sm:$0xff]
    %v195 = vld [vmem:[%s2 + $0x170] sm:$0xff]
    %v196 = vld [vmem:[%s2 + $0x178] sm:$0xff]
    %v197 = vld [vmem:[%s2 + $0x180] sm:$0xff]
    %v198 = vld [vmem:[%s2 + $0x188] sm:$0xff]
    %v199 = vld [vmem:[%s2 + $0x190] sm:$0xff]
    %v200 = vld [vmem:[%s2 + $0x198] sm:$0xff]
    %v201 = vld [vmem:[%s2 + $0x1a0] sm:$0xff]
    %v202 = vld [vmem:[%s2 + $0x1a8] sm:$0xff]
    %v203 = vld [vmem:[%s2 + $0x1b0] sm:$0xff]
    %v204 = vld [vmem:[%s2 + $0x1b8] sm:$0xff]
    %v205 = vld [vmem:[%s2 + $0x1c0] sm:$0xff]
    %v206 = vld [vmem:[%s2 + $0x1c8] sm:$0xff]
    %v207 = vld [vmem:[%s2 + $0x1d0] sm:$0xff]
    %v208 = vld [vmem:[%s2 + $0x1d8] sm:$0xff]
    %v209 = vld [vmem:[%s2 + $0x1e0] sm:$0xff]
    %v210 = vld [vmem:[%s2 + $0x1e8] sm:$0xff]
    %v211 = vld [vmem:[%s2 + $0x1f0] sm:$0xff]
    %v212 = vld [vmem:[%s2 + $0x1f8] sm:$0xff]
    %277 = vrot.lane.b32.xlu0 %v85, 8
    %v278 = vpop.permute.xlu0 %277
    %279 = vrot.lane.b32.xlu0 %v86, 8
    %v280 = vpop.permute.xlu0 %279
    %281 = vrot.lane.b32.xlu0 %v87, 8
    %v282 = vpop.permute.xlu0 %281
    %283 = vrot.lane.b32.xlu0 %v88, 8
    %v284 = vpop.permute.xlu0 %283
    %285 = vrot.lane.b32.xlu0 %v89, 8
    %v286 = vpop.permute.xlu0 %285
    %287 = vrot.lane.b32.xlu0 %v90, 8
    %v288 = vpop.permute.xlu0 %287
    %289 = vrot.lane.b32.xlu0 %v91, 8
    %v290 = vpop.permute.xlu0 %289
    %291 = vrot.lane.b32.xlu0 %v92, 8
    %v292 = vpop.permute.xlu0 %291
    %293 = vrot.lane.b32.xlu0 %v93, 8
    %v294 = vpop.permute.xlu0 %293
    %295 = vrot.lane.b32.xlu0 %v94, 8
    %v296 = vpop.permute.xlu0 %295
    %297 = vrot.lane.b32.xlu0 %v95, 8
    %v298 = vpop.permute.xlu0 %297
    %299 = vrot.lane.b32.xlu0 %v96, 8
    %v300 = vpop.permute.xlu0 %299
    %301 = vrot.lane.b32.xlu0 %v97, 8
    %v302 = vpop.permute.xlu0 %301
    %303 = vrot.lane.b32.xlu0 %v98, 8
    %v304 = vpop.permute.xlu0 %303
    %305 = vrot.lane.b32.xlu0 %v99, 8
    %v306 = vpop.permute.xlu0 %305
    %307 = vrot.lane.b32.xlu0 %v100, 8
    %v308 = vpop.permute.xlu0 %307
    %309 = vrot.lane.b32.xlu0 %v101, 8
    %v310 = vpop.permute.xlu0 %309
    %311 = vrot.lane.b32.xlu0 %v102, 8
    %v312 = vpop.permute.xlu0 %311
    %313 = vrot.lane.b32.xlu0 %v103, 8
    %v314 = vpop.permute.xlu0 %313
    %315 = vrot.lane.b32.xlu0 %v104, 8
    %v316 = vpop.permute.xlu0 %315
    %317 = vrot.lane.b32.xlu0 %v105, 8
    %v318 = vpop.permute.xlu0 %317
    %319 = vrot.lane.b32.xlu0 %v106, 8
    %v320 = vpop.permute.xlu0 %319
    %321 = vrot.lane.b32.xlu0 %v107, 8
    %v322 = vpop.permute.xlu0 %321
    %323 = vrot.lane.b32.xlu0 %v108, 8
    %v324 = vpop.permute.xlu0 %323
    %325 = vrot.lane.b32.xlu0 %v109, 8
    %v326 = vpop.permute.xlu0 %325
    %327 = vrot.lane.b32.xlu0 %v110, 8
    %v328 = vpop.permute.xlu0 %327
    %329 = vrot.lane.b32.xlu0 %v111, 8
    %v330 = vpop.permute.xlu0 %329
    %331 = vrot.lane.b32.xlu0 %v112, 8
    %v332 = vpop.permute.xlu0 %331
    %333 = vrot.lane.b32.xlu0 %v113, 8
    %v334 = vpop.permute.xlu0 %333
    %335 = vrot.lane.b32.xlu0 %v114, 8
    %v336 = vpop.permute.xlu0 %335
    %337 = vrot.lane.b32.xlu0 %v115, 8
    %v338 = vpop.permute.xlu0 %337
    %339 = vrot.lane.b32.xlu0 %v116, 8
    %v340 = vpop.permute.xlu0 %339
    %341 = vrot.lane.b32.xlu0 %v117, 8
    %v342 = vpop.permute.xlu0 %341
    %343 = vrot.lane.b32.xlu0 %v118, 8
    %v344 = vpop.permute.xlu0 %343
    %345 = vrot.lane.b32.xlu0 %v119, 8
    %v346 = vpop.permute.xlu0 %345
    %347 = vrot.lane.b32.xlu0 %v120, 8
    %v348 = vpop.permute.xlu0 %347
    %349 = vrot.lane.b32.xlu0 %v121, 8
    %v350 = vpop.permute.xlu0 %349
    %351 = vrot.lane.b32.xlu0 %v122, 8
    %v352 = vpop.permute.xlu0 %351
    %353 = vrot.lane.b32.xlu0 %v123, 8
    %v354 = vpop.permute.xlu0 %353
    %355 = vrot.lane.b32.xlu0 %v124, 8
    %v356 = vpop.permute.xlu0 %355
    %357 = vrot.lane.b32.xlu0 %v125, 8
    %v358 = vpop.permute.xlu0 %357
    %359 = vrot.lane.b32.xlu0 %v126, 8
    %v360 = vpop.permute.xlu0 %359
    %361 = vrot.lane.b32.xlu0 %v127, 8
    %v362 = vpop.permute.xlu0 %361
    %363 = vrot.lane.b32.xlu0 %v128, 8
    %v364 = vpop.permute.xlu0 %363
    %365 = vrot.lane.b32.xlu0 %v129, 8
    %v366 = vpop.permute.xlu0 %365
    %367 = vrot.lane.b32.xlu0 %v130, 8
    %v368 = vpop.permute.xlu0 %367
    %369 = vrot.lane.b32.xlu0 %v131, 8
    %v370 = vpop.permute.xlu0 %369
    %371 = vrot.lane.b32.xlu0 %v132, 8
    %v372 = vpop.permute.xlu0 %371
    %373 = vrot.lane.b32.xlu0 %v133, 8
    %v374 = vpop.permute.xlu0 %373
    %375 = vrot.lane.b32.xlu0 %v134, 8
    %v376 = vpop.permute.xlu0 %375
    %377 = vrot.lane.b32.xlu0 %v135, 8
    %v378 = vpop.permute.xlu0 %377
    %379 = vrot.lane.b32.xlu0 %v136, 8
    %v380 = vpop.permute.xlu0 %379
    %381 = vrot.lane.b32.xlu0 %v137, 8
    %v382 = vpop.permute.xlu0 %381
    %383 = vrot.lane.b32.xlu0 %v138, 8
    %v384 = vpop.permute.xlu0 %383
    %385 = vrot.lane.b32.xlu0 %v139, 8
    %v386 = vpop.permute.xlu0 %385
    %387 = vrot.lane.b32.xlu0 %v140, 8
    %v388 = vpop.permute.xlu0 %387
    %389 = vrot.lane.b32.xlu0 %v141, 8
    %v390 = vpop.permute.xlu0 %389
    %391 = vrot.lane.b32.xlu0 %v142, 8
    %v392 = vpop.permute.xlu0 %391
    %393 = vrot.lane.b32.xlu0 %v143, 8
    %v394 = vpop.permute.xlu0 %393
    %395 = vrot.lane.b32.xlu0 %v144, 8
    %v396 = vpop.permute.xlu0 %395
    %397 = vrot.lane.b32.xlu0 %v145, 8
    %v398 = vpop.permute.xlu0 %397
    %399 = vrot.lane.b32.xlu0 %v146, 8
    %v400 = vpop.permute.xlu0 %399
    %401 = vrot.lane.b32.xlu0 %v147, 8
    %v402 = vpop.permute.xlu0 %401
    %403 = vrot.lane.b32.xlu0 %v148, 8
    %v404 = vpop.permute.xlu0 %403
    %533 = vrot.lane.b32.xlu0 %v149, 16
    %v534 = vpop.permute.xlu0 %533
    %535 = vrot.lane.b32.xlu0 %v150, 16
    %v536 = vpop.permute.xlu0 %535
    %537 = vrot.lane.b32.xlu0 %v151, 16
    %v538 = vpop.permute.xlu0 %537
    %539 = vrot.lane.b32.xlu0 %v152, 16
    %v540 = vpop.permute.xlu0 %539
    %541 = vrot.lane.b32.xlu0 %v153, 16
    %v542 = vpop.permute.xlu0 %541
    %543 = vrot.lane.b32.xlu0 %v154, 16
    %v544 = vpop.permute.xlu0 %543
    %545 = vrot.lane.b32.xlu0 %v155, 16
    %v546 = vpop.permute.xlu0 %545
    %547 = vrot.lane.b32.xlu0 %v156, 16
    %v548 = vpop.permute.xlu0 %547
    %549 = vrot.lane.b32.xlu0 %v157, 16
    %v550 = vpop.permute.xlu0 %549
    %551 = vrot.lane.b32.xlu0 %v158, 16
    %v552 = vpop.permute.xlu0 %551
    %553 = vrot.lane.b32.xlu0 %v159, 16
    %v554 = vpop.permute.xlu0 %553
    %555 = vrot.lane.b32.xlu0 %v160, 16
    %v556 = vpop.permute.xlu0 %555
    %557 = vrot.lane.b32.xlu0 %v161, 16
    %v558 = vpop.permute.xlu0 %557
    %559 = vrot.lane.b32.xlu0 %v162, 16
    %v560 = vpop.permute.xlu0 %559
    %561 = vrot.lane.b32.xlu0 %v163, 16
    %v562 = vpop.permute.xlu0 %561
    %563 = vrot.lane.b32.xlu0 %v164, 16
    %v564 = vpop.permute.xlu0 %563
    %565 = vrot.lane.b32.xlu0 %v165, 16
    %v566 = vpop.permute.xlu0 %565
    %567 = vrot.lane.b32.xlu0 %v166, 16
    %v568 = vpop.permute.xlu0 %567
    %569 = vrot.lane.b32.xlu0 %v167, 16
    %v570 = vpop.permute.xlu0 %569
    %571 = vrot.lane.b32.xlu0 %v168, 16
    %v572 = vpop.permute.xlu0 %571
    %573 = vrot.lane.b32.xlu0 %v169, 16
    %v574 = vpop.permute.xlu0 %573
    %575 = vrot.lane.b32.xlu0 %v170, 16
    %v576 = vpop.permute.xlu0 %575
    %577 = vrot.lane.b32.xlu0 %v171, 16
    %v578 = vpop.permute.xlu0 %577
    %579 = vrot.lane.b32.xlu0 %v172, 16
    %v580 = vpop.permute.xlu0 %579
    %581 = vrot.lane.b32.xlu0 %v173, 16
    %v582 = vpop.permute.xlu0 %581
    %583 = vrot.lane.b32.xlu0 %v174, 16
    %v584 = vpop.permute.xlu0 %583
    %585 = vrot.lane.b32.xlu0 %v175, 16
    %v586 = vpop.permute.xlu0 %585
    %587 = vrot.lane.b32.xlu0 %v176, 16
    %v588 = vpop.permute.xlu0 %587
    %589 = vrot.lane.b32.xlu0 %v177, 16
    %v590 = vpop.permute.xlu0 %589
    %591 = vrot.lane.b32.xlu0 %v178, 16
    %v592 = vpop.permute.xlu0 %591
    %593 = vrot.lane.b32.xlu0 %v179, 16
    %v594 = vpop.permute.xlu0 %593
    %595 = vrot.lane.b32.xlu0 %v180, 16
    %v596 = vpop.permute.xlu0 %595
    %597 = vrot.lane.b32.xlu0 %v181, 16
    %v598 = vpop.permute.xlu0 %597
    %599 = vrot.lane.b32.xlu0 %v182, 16
    %v600 = vpop.permute.xlu0 %599
    %601 = vrot.lane.b32.xlu0 %v183, 16
    %v602 = vpop.permute.xlu0 %601
    %603 = vrot.lane.b32.xlu0 %v184, 16
    %v604 = vpop.permute.xlu0 %603
    %605 = vrot.lane.b32.xlu0 %v185, 16
    %v606 = vpop.permute.xlu0 %605
    %607 = vrot.lane.b32.xlu0 %v186, 16
    %v608 = vpop.permute.xlu0 %607
    %609 = vrot.lane.b32.xlu0 %v187, 16
    %v610 = vpop.permute.xlu0 %609
    %611 = vrot.lane.b32.xlu0 %v188, 16
    %v612 = vpop.permute.xlu0 %611
    %613 = vrot.lane.b32.xlu0 %v189, 16
    %v614 = vpop.permute.xlu0 %613
    %615 = vrot.lane.b32.xlu0 %v190, 16
    %v616 = vpop.permute.xlu0 %615
    %617 = vrot.lane.b32.xlu0 %v191, 16
    %v618 = vpop.permute.xlu0 %617
    %619 = vrot.lane.b32.xlu0 %v192, 16
    %v620 = vpop.permute.xlu0 %619
    %621 = vrot.lane.b32.xlu0 %v193, 16
    %v622 = vpop.permute.xlu0 %621
    %623 = vrot.lane.b32.xlu0 %v194, 16
    %v624 = vpop.permute.xlu0 %623
    %625 = vrot.lane.b32.xlu0 %v195, 16
    %v626 = vpop.permute.xlu0 %625
    %627 = vrot.lane.b32.xlu0 %v196, 16
    %v628 = vpop.permute.xlu0 %627
    %629 = vrot.lane.b32.xlu0 %v197, 16
    %v630 = vpop.permute.xlu0 %629
    %631 = vrot.lane.b32.xlu0 %v198, 16
    %v632 = vpop.permute.xlu0 %631
    %633 = vrot.lane.b32.xlu0 %v199, 16
    %v634 = vpop.permute.xlu0 %633
    %635 = vrot.lane.b32.xlu0 %v200, 16
    %v636 = vpop.permute.xlu0 %635
    %637 = vrot.lane.b32.xlu0 %v201, 16
    %v638 = vpop.permute.xlu0 %637
    %639 = vrot.lane.b32.xlu0 %v202, 16
    %v640 = vpop.permute.xlu0 %639
    %641 = vrot.lane.b32.xlu0 %v203, 16
    %v642 = vpop.permute.xlu0 %641
    %643 = vrot.lane.b32.xlu0 %v204, 16
    %v644 = vpop.permute.xlu0 %643
    %645 = vrot.lane.b32.xlu0 %v205, 16
    %v646 = vpop.permute.xlu0 %645
    %647 = vrot.lane.b32.xlu0 %v206, 16
    %v648 = vpop.permute.xlu0 %647
    %649 = vrot.lane.b32.xlu0 %v207, 16
    %v650 = vpop.permute.xlu0 %649
    %651 = vrot.lane.b32.xlu0 %v208, 16
    %v652 = vpop.permute.xlu0 %651
    %653 = vrot.lane.b32.xlu0 %v209, 16
    %v654 = vpop.permute.xlu0 %653
    %655 = vrot.lane.b32.xlu0 %v210, 16
    %v656 = vpop.permute.xlu0 %655
    %657 = vrot.lane.b32.xlu0 %v211, 16
    %v658 = vpop.permute.xlu0 %657
    %659 = vrot.lane.b32.xlu0 %v212, 16
    %v660 = vpop.permute.xlu0 %659
    %vm725 = vcmask 64512
    %v726 = vsel %vm725, %v21, %v278
    %v727 = vsel %vm725, %v22, %v280
    %v728 = vsel %vm725, %v23, %v282
    %v729 = vsel %vm725, %v24, %v284
    %v730 = vsel %vm725, %v25, %v286
    %v731 = vsel %vm725, %v26, %v288
    %v732 = vsel %vm725, %v27, %v290
    %v733 = vsel %vm725, %v28, %v292
    %v734 = vsel %vm725, %v29, %v294
    %v735 = vsel %vm725, %v30, %v296
    %v736 = vsel %vm725, %v31, %v298
    %v737 = vsel %vm725, %v32, %v300
    %v738 = vsel %vm725, %v33, %v302
    %v739 = vsel %vm725, %v34, %v304
    %v740 = vsel %vm725, %v35, %v306
    %v741 = vsel %vm725, %v36, %v308
    %v742 = vsel %vm725, %v37, %v310
    %v743 = vsel %vm725, %v38, %v312
    %v744 = vsel %vm725, %v39, %v314
    %v745 = vsel %vm725, %v40, %v316
    %v746 = vsel %vm725, %v41, %v318
    %v747 = vsel %vm725, %v42, %v320
    %v748 = vsel %vm725, %v43, %v322
    %v749 = vsel %vm725, %v44, %v324
    %v750 = vsel %vm725, %v45, %v326
    %v751 = vsel %vm725, %v46, %v328
    %v752 = vsel %vm725, %v47, %v330
    %v753 = vsel %vm725, %v48, %v332
    %v754 = vsel %vm725, %v49, %v334
    %v755 = vsel %vm725, %v50, %v336
    %v756 = vsel %vm725, %v51, %v338
    %v757 = vsel %vm725, %v52, %v340
    %v758 = vsel %vm725, %v53, %v342
    %v759 = vsel %vm725, %v54, %v344
    %v760 = vsel %vm725, %v55, %v346
    %v761 = vsel %vm725, %v56, %v348
    %v762 = vsel %vm725, %v57, %v350
    %v763 = vsel %vm725, %v58, %v352
    %v764 = vsel %vm725, %v59, %v354
    %v765 = vsel %vm725, %v60, %v356
    %v766 = vsel %vm725, %v61, %v358
    %v767 = vsel %vm725, %v62, %v360
    %v768 = vsel %vm725, %v63, %v362
    %v769 = vsel %vm725, %v64, %v364
    %v770 = vsel %vm725, %v65, %v366
    %v771 = vsel %vm725, %v66, %v368
    %v772 = vsel %vm725, %v67, %v370
    %v773 = vsel %vm725, %v68, %v372
    %v774 = vsel %vm725, %v69, %v374
    %v775 = vsel %vm725, %v70, %v376
    %v776 = vsel %vm725, %v71, %v378
    %v777 = vsel %vm725, %v72, %v380
    %v778 = vsel %vm725, %v73, %v382
    %v779 = vsel %vm725, %v74, %v384
    %v780 = vsel %vm725, %v75, %v386
    %v781 = vsel %vm725, %v76, %v388
    %v782 = vsel %vm725, %v77, %v390
    %v783 = vsel %vm725, %v78, %v392
    %v784 = vsel %vm725, %v79, %v394
    %v785 = vsel %vm725, %v80, %v396
    %v786 = vsel %vm725, %v81, %v398
    %v787 = vsel %vm725, %v82, %v400
    %v788 = vsel %vm725, %v83, %v402
    %v789 = vsel %vm725, %v84, %v404
    %vm790 = vcmask 130048
    %v791 = vsel %vm790, %v726, %v534
    %v792 = vsel %vm790, %v727, %v536
    %v793 = vsel %vm790, %v728, %v538
    %v794 = vsel %vm790, %v729, %v540
    %v795 = vsel %vm790, %v730, %v542
    %v796 = vsel %vm790, %v731, %v544
    %v797 = vsel %vm790, %v732, %v546
    %v798 = vsel %vm790, %v733, %v548
    %v799 = vsel %vm790, %v734, %v550
    %v800 = vsel %vm790, %v735, %v552
    %v801 = vsel %vm790, %v736, %v554
    %v802 = vsel %vm790, %v737, %v556
    %v803 = vsel %vm790, %v738, %v558
    %v804 = vsel %vm790, %v739, %v560
    %v805 = vsel %vm790, %v740, %v562
    %v806 = vsel %vm790, %v741, %v564
    %v807 = vsel %vm790, %v742, %v566
    %v808 = vsel %vm790, %v743, %v568
    %v809 = vsel %vm790, %v744, %v570
    %v810 = vsel %vm790, %v745, %v572
    %v811 = vsel %vm790, %v746, %v574
    %v812 = vsel %vm790, %v747, %v576
    %v813 = vsel %vm790, %v748, %v578
    %v814 = vsel %vm790, %v749, %v580
    %v815 = vsel %vm790, %v750, %v582
    %v816 = vsel %vm790, %v751, %v584
    %v817 = vsel %vm790, %v752, %v586
    %v818 = vsel %vm790, %v753, %v588
    %v819 = vsel %vm790, %v754, %v590
    %v820 = vsel %vm790, %v755, %v592
    %v821 = vsel %vm790, %v756, %v594
    %v822 = vsel %vm790, %v757, %v596
    %v823 = vsel %vm790, %v758, %v598
    %v824 = vsel %vm790, %v759, %v600
    %v825 = vsel %vm790, %v760, %v602
    %v826 = vsel %vm790, %v761, %v604
    %v827 = vsel %vm790, %v762, %v606
    %v828 = vsel %vm790, %v763, %v608
    %v829 = vsel %vm790, %v764, %v610
    %v830 = vsel %vm790, %v765, %v612
    %v831 = vsel %vm790, %v766, %v614
    %v832 = vsel %vm790, %v767, %v616
    %v833 = vsel %vm790, %v768, %v618
    %v834 = vsel %vm790, %v769, %v620
    %v835 = vsel %vm790, %v770, %v622
    %v836 = vsel %vm790, %v771, %v624
    %v837 = vsel %vm790, %v772, %v626
    %v838 = vsel %vm790, %v773, %v628
    %v839 = vsel %vm790, %v774, %v630
    %v840 = vsel %vm790, %v775, %v632
    %v841 = vsel %vm790, %v776, %v634
    %v842 = vsel %vm790, %v777, %v636
    %v843 = vsel %vm790, %v778, %v638
    %v844 = vsel %vm790, %v779, %v640
    %v845 = vsel %vm790, %v780, %v642
    %v846 = vsel %vm790, %v781, %v644
    %v847 = vsel %vm790, %v782, %v646
    %v848 = vsel %vm790, %v783, %v648
    %v849 = vsel %vm790, %v784, %v650
    %v850 = vsel %vm790, %v785, %v652
    %v851 = vsel %vm790, %v786, %v654
    %v852 = vsel %vm790, %v787, %v656
    %v853 = vsel %vm790, %v788, %v658
    %v854 = vsel %vm790, %v789, %v660
    %v855 = vld [vmem:[%s3] sm:$0xff]
    %v856 = vld [vmem:[%s3 + $0x8] sm:$0xff]
    %v857 = vld [vmem:[%s3 + $0x10] sm:$0xff]
    %v858 = vld [vmem:[%s4] sm:$0x1]
    %v860 = vlaneseq
    %v861 = vshrl.u32 %v860, 7
    %v862 = vsub.s32 0, %v861
    %v863 = vrot.slane %v858, %v862
    %vm865 = vcmask 195584
    %v867 = vsel %vm865, %v791, 0
    %v870 = vsel %vm865, %v792, 0
    %v873 = vsel %vm865, %v793, 0
    %v876 = vsel %vm865, %v794, 0
    %v879 = vsel %vm865, %v795, 0
    %v882 = vsel %vm865, %v796, 0
    %v885 = vsel %vm865, %v797, 0
    %v888 = vsel %vm865, %v798, 0
    %v891 = vsel %vm865, %v799, 0
    %v894 = vsel %vm865, %v800, 0
    %v897 = vsel %vm865, %v801, 0
    %v900 = vsel %vm865, %v802, 0
    %v903 = vsel %vm865, %v803, 0
    %v906 = vsel %vm865, %v804, 0
    %v909 = vsel %vm865, %v805, 0
    %v912 = vsel %vm865, %v806, 0
    %v915 = vsel %vm865, %v807, 0
    %v918 = vsel %vm865, %v808, 0
    %v921 = vsel %vm865, %v809, 0
    %v924 = vsel %vm865, %v810, 0
    %v927 = vsel %vm865, %v811, 0
    %v930 = vsel %vm865, %v812, 0
    %v933 = vsel %vm865, %v813, 0
    %v936 = vsel %vm865, %v814, 0
    %v939 = vsel %vm865, %v815, 0
    %v942 = vsel %vm865, %v816, 0
    %v945 = vsel %vm865, %v817, 0
    %v948 = vsel %vm865, %v818, 0
    %v951 = vsel %vm865, %v819, 0
    %v954 = vsel %vm865, %v820, 0
    %v957 = vsel %vm865, %v821, 0
    %v960 = vsel %vm865, %v822, 0
    %v963 = vsel %vm865, %v823, 0
    %v966 = vsel %vm865, %v824, 0
    %v969 = vsel %vm865, %v825, 0
    %v972 = vsel %vm865, %v826, 0
    %v975 = vsel %vm865, %v827, 0
    %v978 = vsel %vm865, %v828, 0
    %v981 = vsel %vm865, %v829, 0
    %v984 = vsel %vm865, %v830, 0
    %v987 = vsel %vm865, %v831, 0
    %v990 = vsel %vm865, %v832, 0
    %v993 = vsel %vm865, %v833, 0
    %v996 = vsel %vm865, %v834, 0
    %v999 = vsel %vm865, %v835, 0
    %v1002 = vsel %vm865, %v836, 0
    %v1005 = vsel %vm865, %v837, 0
    %v1008 = vsel %vm865, %v838, 0
    %v1011 = vsel %vm865, %v839, 0
    %v1014 = vsel %vm865, %v840, 0
    %v1017 = vsel %vm865, %v841, 0
    %v1020 = vsel %vm865, %v842, 0
    %v1023 = vsel %vm865, %v843, 0
    %v1026 = vsel %vm865, %v844, 0
    %v1029 = vsel %vm865, %v845, 0
    %v1032 = vsel %vm865, %v846, 0
    %v1035 = vsel %vm865, %v847, 0
    %v1038 = vsel %vm865, %v848, 0
    %v1041 = vsel %vm865, %v849, 0
    %v1044 = vsel %vm865, %v850, 0
    %v1047 = vsel %vm865, %v851, 0
    %v1050 = vsel %vm865, %v852, 0
    %v1053 = vsel %vm865, %v853, 0
    %v1056 = vsel %vm865, %v854, 0
    %1058 = vmatprep.subr.mxu0 0.0
    %1059 = vmatpush1.msra.mxu0 %v855
    %1060 = vmatprep.subr.mxu0 0.0
    %1061 = vmatpush1.msra.mxu0 %v856
    %1062 = vmatprep.subr.mxu0 0.0
    %1063 = vmatpush1.msra.mxu0 %v857
    %1064 = vmatprep.subr.mxu0 0.0
    %1065 = vmatpush1.msra.mxu0 0.0
    %1066 = vmatprep.subr.mxu0 0.0
    %1067 = vmatpush1.msra.mxu0 0.0
    %1068 = vmatprep.subr.mxu0 0.0
    %1069 = vmatpush1.msra.mxu0 0.0
    %1070 = vmatprep.subr.mxu0 0.0
    %1071 = vmatpush1.msra.mxu0 0.0
    %1072 = vmatprep.subr.mxu0 0.0
    %1073 = vmatpush1.msra.mxu0 0.0
    %1074 = vmatprep.subr.mxu0 0.0
    %1075 = vmatpush1.msra.mxu0 0.0
    %1076 = vmatprep.subr.mxu0 0.0
    %1077 = vmatpush1.msra.mxu0 0.0
    %1078 = vmatprep.subr.mxu0 0.0
    %1079 = vmatpush1.msra.mxu0 0.0
    %1080 = vmatprep.subr.mxu0 0.0
    %1081 = vmatpush1.msra.mxu0 0.0
    %1082 = vmatprep.subr.mxu0 0.0
    %1083 = vmatpush1.msra.mxu0 0.0
    %1084 = vmatprep.subr.mxu0 0.0
    %1085 = vmatpush1.msra.mxu0 0.0
    %1086 = vmatprep.subr.mxu0 0.0
    %1087 = vmatpush1.msra.mxu0 0.0
    %1088 = vmatprep.subr.mxu0 0.0
    %1089 = vmatpush1.msra.mxu0 0.0
    %1090 = vmatprep.subr.mxu0 0.0
    %1091 = vmatpush1.msra.mxu0 0.0
    %1092 = vmatprep.subr.mxu0 0.0
    %1093 = vmatpush1.msra.mxu0 0.0
    %1094 = vmatprep.subr.mxu0 0.0
    %1095 = vmatpush1.msra.mxu0 0.0
    %1096 = vmatprep.subr.mxu0 0.0
    %1097 = vmatpush1.msra.mxu0 0.0
    %1098 = vmatprep.subr.mxu0 0.0
    %1099 = vmatpush1.msra.mxu0 0.0
    %1100 = vmatprep.subr.mxu0 0.0
    %1101 = vmatpush1.msra.mxu0 0.0
    %1102 = vmatprep.subr.mxu0 0.0
    %1103 = vmatpush1.msra.mxu0 0.0
    %1104 = vmatprep.subr.mxu0 0.0
    %1105 = vmatpush1.msra.mxu0 0.0
    %1106 = vmatprep.subr.mxu0 0.0
    %1107 = vmatpush1.msra.mxu0 0.0
    %1108 = vmatprep.subr.mxu0 0.0
    %1109 = vmatpush1.msra.mxu0 0.0
    %1110 = vmatprep.subr.mxu0 0.0
    %1111 = vmatpush1.msra.mxu0 0.0
    %1112 = vmatprep.subr.mxu0 0.0
    %1113 = vmatpush1.msra.mxu0 0.0
    %1114 = vmatprep.subr.mxu0 0.0
    %1115 = vmatpush1.msra.mxu0 0.0
    %1116 = vmatprep.subr.mxu0 0.0
    %1117 = vmatpush1.msra.mxu0 0.0
    %1118 = vmatprep.subr.mxu0 0.0
    %1119 = vmatpush1.msra.mxu0 0.0
    %1120 = vmatprep.subr.mxu0 0.0
    %1121 = vmatpush1.msra.mxu0 0.0
    %1122 = vmatprep.mubr.f32.mxu0 0.0
    %1123 = vmatmul.mubr.f32.gmra.mrb[0].mxu0 %v867
    %v1124 = vpop.f32.mrb[0].mxu0
    %v1125 = vadd.f32 %v863, %v1124
    %v1126 = vpop.f32.mrb[0].mxu0
    %1127 = vmatprep.mubr.f32.mxu0 0.0
    %1128 = vmatmul.mubr.f32.gmra.mrb[0].mxu0 %v870
    %v1129 = vpop.f32.mrb[0].mxu0
    %v1130 = vadd.f32 %v863, %v1129
    %v1131 = vpop.f32.mrb[0].mxu0
    %1132 = vmatprep.mubr.f32.mxu0 0.0
    %1133 = vmatmul.mubr.f32.gmra.mrb[0].mxu0 %v873
    %v1134 = vpop.f32.mrb[0].mxu0
    %v1135 = vadd.f32 %v863, %v1134
    %v1136 = vpop.f32.mrb[0].mxu0
    %1137 = vmatprep.mubr.f32.mxu0 0.0
    %1138 = vmatmul.mubr.f32.gmra.mrb[0].mxu0 %v876
    %v1139 = vpop.f32.mrb[0].mxu0
    %v1140 = vadd.f32 %v863, %v1139
    %v1141 = vpop.f32.mrb[0].mxu0
    %1142 = vmatprep.mubr.f32.mxu0 0.0
    %1143 = vmatmul.mubr.f32.gmra.mrb[0].mxu0 %v879
    %v1144 = vpop.f32.mrb[0].mxu0
    %v1145 = vadd.f32 %v863, %v1144
    %v1146 = vpop.f32.mrb[0].mxu0
    %1147 = vmatprep.mubr.f32.mxu0 0.0
    %1148 = vmatmul.mubr.f32.gmra.mrb[0].mxu0 %v882
    %v1149 = vpop.f32.mrb[0].mxu0
    %v1150 = vadd.f32 %v863, %v1149
    %v1151 = vpop.f32.mrb[0].mxu0
    %1152 = vmatprep.mubr.f32.mxu0 0.0
    %1153 = vmatmul.mubr.f32.gmra.mrb[0].mxu0 %v885
    %v1154 = vpop.f32.mrb[0].mxu0
    %v1155 = vadd.f32 %v863, %v1154
    %v1156 = vpop.f32.mrb[0].mxu0
    %1157 = vmatprep.mubr.f32.mxu0 0.0
    %1158 = vmatmul.mubr.f32.gmra.mrb[0].mxu0 %v888
    %v1159 = vpop.f32.mrb[0].mxu0
    %v1160 = vadd.f32 %v863, %v1159
    %v1161 = vpop.f32.mrb[0].mxu0
    %1162 = vmatprep.mubr.f32.mxu0 0.0
    %1163 = vmatmul.mubr.f32.gmra.mrb[0].mxu0 %v891
    %v1164 = vpop.f32.mrb[0].mxu0
    %v1165 = vadd.f32 %v863, %v1164
    %v1166 = vpop.f32.mrb[0].mxu0
    %1167 = vmatprep.mubr.f32.mxu0 0.0
    %1168 = vmatmul.mubr.f32.gmra.mrb[0].mxu0 %v894
    %v1169 = vpop.f32.mrb[0].mxu0
    %v1170 = vadd.f32 %v863, %v1169
    %v1171 = vpop.f32.mrb[0].mxu0
    %1172 = vmatprep.mubr.f32.mxu0 0.0
    %1173 = vmatmul.mubr.f32.gmra.mrb[0].mxu0 %v897
    %v1174 = vpop.f32.mrb[0].mxu0
    %v1175 = vadd.f32 %v863, %v1174
    %v1176 = vpop.f32.mrb[0].mxu0
    %1177 = vmatprep.mubr.f32.mxu0 0.0
    %1178 = vmatmul.mubr.f32.gmra.mrb[0].mxu0 %v900
    %v1179 = vpop.f32.mrb[0].mxu0
    %v1180 = vadd.f32 %v863, %v1179
    %v1181 = vpop.f32.mrb[0].mxu0
    %1182 = vmatprep.mubr.f32.mxu0 0.0
    %1183 = vmatmul.mubr.f32.gmra.mrb[0].mxu0 %v903
    %v1184 = vpop.f32.mrb[0].mxu0
    %v1185 = vadd.f32 %v863, %v1184
    %v1186 = vpop.f32.mrb[0].mxu0
    %1187 = vmatprep.mubr.f32.mxu0 0.0
    %1188 = vmatmul.mubr.f32.gmra.mrb[0].mxu0 %v906
    %v1189 = vpop.f32.mrb[0].mxu0
    %v1190 = vadd.f32 %v863, %v1189
    %v1191 = vpop.f32.mrb[0].mxu0
    %1192 = vmatprep.mubr.f32.mxu0 0.0
    %1193 = vmatmul.mubr.f32.gmra.mrb[0].mxu0 %v909
    %v1194 = vpop.f32.mrb[0].mxu0
    %v1195 = vadd.f32 %v863, %v1194
    %v1196 = vpop.f32.mrb[0].mxu0
    %1197 = vmatprep.mubr.f32.mxu0 0.0
    %1198 = vmatmul.mubr.f32.gmra.mrb[0].mxu0 %v912
    %v1199 = vpop.f32.mrb[0].mxu0
    %v1200 = vadd.f32 %v863, %v1199
    %v1201 = vpop.f32.mrb[0].mxu0
    %1202 = vmatprep.mubr.f32.mxu0 0.0
    %1203 = vmatmul.mubr.f32.gmra.mrb[0].mxu0 %v915
    %v1204 = vpop.f32.mrb[0].mxu0
    %v1205 = vadd.f32 %v863, %v1204
    %v1206 = vpop.f32.mrb[0].mxu0
    %1207 = vmatprep.mubr.f32.mxu0 0.0
    %1208 = vmatmul.mubr.f32.gmra.mrb[0].mxu0 %v918
    %v1209 = vpop.f32.mrb[0].mxu0
    %v1210 = vadd.f32 %v863, %v1209
    %v1211 = vpop.f32.mrb[0].mxu0
    %1212 = vmatprep.mubr.f32.mxu0 0.0
    %1213 = vmatmul.mubr.f32.gmra.mrb[0].mxu0 %v921
    %v1214 = vpop.f32.mrb[0].mxu0
    %v1215 = vadd.f32 %v863, %v1214
    %v1216 = vpop.f32.mrb[0].mxu0
    %1217 = vmatprep.mubr.f32.mxu0 0.0
    %1218 = vmatmul.mubr.f32.gmra.mrb[0].mxu0 %v924
    %v1219 = vpop.f32.mrb[0].mxu0
    %v1220 = vadd.f32 %v863, %v1219
    %v1221 = vpop.f32.mrb[0].mxu0
    %1222 = vmatprep.mubr.f32.mxu0 0.0
    %1223 = vmatmul.mubr.f32.gmra.mrb[0].mxu0 %v927
    %v1224 = vpop.f32.mrb[0].mxu0
    %v1225 = vadd.f32 %v863, %v1224
    %v1226 = vpop.f32.mrb[0].mxu0
    %1227 = vmatprep.mubr.f32.mxu0 0.0
    %1228 = vmatmul.mubr.f32.gmra.mrb[0].mxu0 %v930
    %v1229 = vpop.f32.mrb[0].mxu0
    %v1230 = vadd.f32 %v863, %v1229
    %v1231 = vpop.f32.mrb[0].mxu0
    %1232 = vmatprep.mubr.f32.mxu0 0.0
    %1233 = vmatmul.mubr.f32.gmra.mrb[0].mxu0 %v933
    %v1234 = vpop.f32.mrb[0].mxu0
    %v1235 = vadd.f32 %v863, %v1234
    %v1236 = vpop.f32.mrb[0].mxu0
    %1237 = vmatprep.mubr.f32.mxu0 0.0
    %1238 = vmatmul.mubr.f32.gmra.mrb[0].mxu0 %v936
    %v1239 = vpop.f32.mrb[0].mxu0
    %v1240 = vadd.f32 %v863, %v1239
    %v1241 = vpop.f32.mrb[0].mxu0
    %1242 = vmatprep.mubr.f32.mxu0 0.0
    %1243 = vmatmul.mubr.f32.gmra.mrb[0].mxu0 %v939
    %v1244 = vpop.f32.mrb[0].mxu0
    %v1245 = vadd.f32 %v863, %v1244
    %v1246 = vpop.f32.mrb[0].mxu0
    %1247 = vmatprep.mubr.f32.mxu0 0.0
    %1248 = vmatmul.mubr.f32.gmra.mrb[0].mxu0 %v942
    %v1249 = vpop.f32.mrb[0].mxu0
    %v1250 = vadd.f32 %v863, %v1249
    %v1251 = vpop.f32.mrb[0].mxu0
    %1252 = vmatprep.mubr.f32.mxu0 0.0
    %1253 = vmatmul.mubr.f32.gmra.mrb[0].mxu0 %v945
    %v1254 = vpop.f32.mrb[0].mxu0
    %v1255 = vadd.f32 %v863, %v1254
    %v1256 = vpop.f32.mrb[0].mxu0
    %1257 = vmatprep.mubr.f32.mxu0 0.0
    %1258 = vmatmul.mubr.f32.gmra.mrb[0].mxu0 %v948
    %v1259 = vpop.f32.mrb[0].mxu0
    %v1260 = vadd.f32 %v863, %v1259
    %v1261 = vpop.f32.mrb[0].mxu0
    %1262 = vmatprep.mubr.f32.mxu0 0.0
    %1263 = vmatmul.mubr.f32.gmra.mrb[0].mxu0 %v951
    %v1264 = vpop.f32.mrb[0].mxu0
    %v1265 = vadd.f32 %v863, %v1264
    %v1266 = vpop.f32.mrb[0].mxu0
    %1267 = vmatprep.mubr.f32.mxu0 0.0
    %1268 = vmatmul.mubr.f32.gmra.mrb[0].mxu0 %v954
    %v1269 = vpop.f32.mrb[0].mxu0
    %v1270 = vadd.f32 %v863, %v1269
    %v1271 = vpop.f32.mrb[0].mxu0
    %1272 = vmatprep.mubr.f32.mxu0 0.0
    %1273 = vmatmul.mubr.f32.gmra.mrb[0].mxu0 %v957
    %v1274 = vpop.f32.mrb[0].mxu0
    %v1275 = vadd.f32 %v863, %v1274
    %v1276 = vpop.f32.mrb[0].mxu0
    %1277 = vmatprep.mubr.f32.mxu0 0.0
    %1278 = vmatmul.mubr.f32.gmra.mrb[0].mxu0 %v960
    %v1279 = vpop.f32.mrb[0].mxu0
    %v1280 = vadd.f32 %v863, %v1279
    %v1281 = vpop.f32.mrb[0].mxu0
    %1282 = vmatprep.mubr.f32.mxu0 0.0
    %1283 = vmatmul.mubr.f32.gmra.mrb[0].mxu0 %v963
    %v1284 = vpop.f32.mrb[0].mxu0
    %v1285 = vadd.f32 %v863, %v1284
    %v1286 = vpop.f32.mrb[0].mxu0
    %1287 = vmatprep.mubr.f32.mxu0 0.0
    %1288 = vmatmul.mubr.f32.gmra.mrb[0].mxu0 %v966
    %v1289 = vpop.f32.mrb[0].mxu0
    %v1290 = vadd.f32 %v863, %v1289
    %v1291 = vpop.f32.mrb[0].mxu0
    %1292 = vmatprep.mubr.f32.mxu0 0.0
    %1293 = vmatmul.mubr.f32.gmra.mrb[0].mxu0 %v969
    %v1294 = vpop.f32.mrb[0].mxu0
    %v1295 = vadd.f32 %v863, %v1294
    %v1296 = vpop.f32.mrb[0].mxu0
    %1297 = vmatprep.mubr.f32.mxu0 0.0
    %1298 = vmatmul.mubr.f32.gmra.mrb[0].mxu0 %v972
    %v1299 = vpop.f32.mrb[0].mxu0
    %v1300 = vadd.f32 %v863, %v1299
    %v1301 = vpop.f32.mrb[0].mxu0
    %1302 = vmatprep.mubr.f32.mxu0 0.0
    %1303 = vmatmul.mubr.f32.gmra.mrb[0].mxu0 %v975
    %v1304 = vpop.f32.mrb[0].mxu0
    %v1305 = vadd.f32 %v863, %v1304
    %v1306 = vpop.f32.mrb[0].mxu0
    %1307 = vmatprep.mubr.f32.mxu0 0.0
    %1308 = vmatmul.mubr.f32.gmra.mrb[0].mxu0 %v978
    %v1309 = vpop.f32.mrb[0].mxu0
    %v1310 = vadd.f32 %v863, %v1309
    %v1311 = vpop.f32.mrb[0].mxu0
    %1312 = vmatprep.mubr.f32.mxu0 0.0
    %1313 = vmatmul.mubr.f32.gmra.mrb[0].mxu0 %v981
    %v1314 = vpop.f32.mrb[0].mxu0
    %v1315 = vadd.f32 %v863, %v1314
    %v1316 = vpop.f32.mrb[0].mxu0
    %1317 = vmatprep.mubr.f32.mxu0 0.0
    %1318 = vmatmul.mubr.f32.gmra.mrb[0].mxu0 %v984
    %v1319 = vpop.f32.mrb[0].mxu0
    %v1320 = vadd.f32 %v863, %v1319
    %v1321 = vpop.f32.mrb[0].mxu0
    %1322 = vmatprep.mubr.f32.mxu0 0.0
    %1323 = vmatmul.mubr.f32.gmra.mrb[0].mxu0 %v987
    %v1324 = vpop.f32.mrb[0].mxu0
    %v1325 = vadd.f32 %v863, %v1324
    %v1326 = vpop.f32.mrb[0].mxu0
    %1327 = vmatprep.mubr.f32.mxu0 0.0
    %1328 = vmatmul.mubr.f32.gmra.mrb[0].mxu0 %v990
    %v1329 = vpop.f32.mrb[0].mxu0
    %v1330 = vadd.f32 %v863, %v1329
    %v1331 = vpop.f32.mrb[0].mxu0
    %1332 = vmatprep.mubr.f32.mxu0 0.0
    %1333 = vmatmul.mubr.f32.gmra.mrb[0].mxu0 %v993
    %v1334 = vpop.f32.mrb[0].mxu0
    %v1335 = vadd.f32 %v863, %v1334
    %v1336 = vpop.f32.mrb[0].mxu0
    %1337 = vmatprep.mubr.f32.mxu0 0.0
    %1338 = vmatmul.mubr.f32.gmra.mrb[0].mxu0 %v996
    %v1339 = vpop.f32.mrb[0].mxu0
    %v1340 = vadd.f32 %v863, %v1339
    %v1341 = vpop.f32.mrb[0].mxu0
    %1342 = vmatprep.mubr.f32.mxu0 0.0
    %1343 = vmatmul.mubr.f32.gmra.mrb[0].mxu0 %v999
    %v1344 = vpop.f32.mrb[0].mxu0
    %v1345 = vadd.f32 %v863, %v1344
    %v1346 = vpop.f32.mrb[0].mxu0
    %1347 = vmatprep.mubr.f32.mxu0 0.0
    %1348 = vmatmul.mubr.f32.gmra.mrb[0].mxu0 %v1002
    %v1349 = vpop.f32.mrb[0].mxu0
    %v1350 = vadd.f32 %v863, %v1349
    %v1351 = vpop.f32.mrb[0].mxu0
    %1352 = vmatprep.mubr.f32.mxu0 0.0
    %1353 = vmatmul.mubr.f32.gmra.mrb[0].mxu0 %v1005
    %v1354 = vpop.f32.mrb[0].mxu0
    %v1355 = vadd.f32 %v863, %v1354
    %v1356 = vpop.f32.mrb[0].mxu0
    %1357 = vmatprep.mubr.f32.mxu0 0.0
    %1358 = vmatmul.mubr.f32.gmra.mrb[0].mxu0 %v1008
    %v1359 = vpop.f32.mrb[0].mxu0
    %v1360 = vadd.f32 %v863, %v1359
    %v1361 = vpop.f32.mrb[0].mxu0
    %1362 = vmatprep.mubr.f32.mxu0 0.0
    %1363 = vmatmul.mubr.f32.gmra.mrb[0].mxu0 %v1011
    %v1364 = vpop.f32.mrb[0].mxu0
    %v1365 = vadd.f32 %v863, %v1364
    %v1366 = vpop.f32.mrb[0].mxu0
    %1367 = vmatprep.mubr.f32.mxu0 0.0
    %1368 = vmatmul.mubr.f32.gmra.mrb[0].mxu0 %v1014
    %v1369 = vpop.f32.mrb[0].mxu0
    %v1370 = vadd.f32 %v863, %v1369
    %v1371 = vpop.f32.mrb[0].mxu0
    %1372 = vmatprep.mubr.f32.mxu0 0.0
    %1373 = vmatmul.mubr.f32.gmra.mrb[0].mxu0 %v1017
    %v1374 = vpop.f32.mrb[0].mxu0
    %v1375 = vadd.f32 %v863, %v1374
    %v1376 = vpop.f32.mrb[0].mxu0
    %1377 = vmatprep.mubr.f32.mxu0 0.0
    %1378 = vmatmul.mubr.f32.gmra.mrb[0].mxu0 %v1020
    %v1379 = vpop.f32.mrb[0].mxu0
    %v1380 = vadd.f32 %v863, %v1379
    %v1381 = vpop.f32.mrb[0].mxu0
    %1382 = vmatprep.mubr.f32.mxu0 0.0
    %1383 = vmatmul.mubr.f32.gmra.mrb[0].mxu0 %v1023
    %v1384 = vpop.f32.mrb[0].mxu0
    %v1385 = vadd.f32 %v863, %v1384
    %v1386 = vpop.f32.mrb[0].mxu0
    %1387 = vmatprep.mubr.f32.mxu0 0.0
    %1388 = vmatmul.mubr.f32.gmra.mrb[0].mxu0 %v1026
    %v1389 = vpop.f32.mrb[0].mxu0
    %v1390 = vadd.f32 %v863, %v1389
    %v1391 = vpop.f32.mrb[0].mxu0
    %1392 = vmatprep.mubr.f32.mxu0 0.0
    %1393 = vmatmul.mubr.f32.gmra.mrb[0].mxu0 %v1029
    %v1394 = vpop.f32.mrb[0].mxu0
    %v1395 = vadd.f32 %v863, %v1394
    %v1396 = vpop.f32.mrb[0].mxu0
    %1397 = vmatprep.mubr.f32.mxu0 0.0
    %1398 = vmatmul.mubr.f32.gmra.mrb[0].mxu0 %v1032
    %v1399 = vpop.f32.mrb[0].mxu0
    %v1400 = vadd.f32 %v863, %v1399
    %v1401 = vpop.f32.mrb[0].mxu0
    %1402 = vmatprep.mubr.f32.mxu0 0.0
    %1403 = vmatmul.mubr.f32.gmra.mrb[0].mxu0 %v1035
    %v1404 = vpop.f32.mrb[0].mxu0
    %v1405 = vadd.f32 %v863, %v1404
    %v1406 = vpop.f32.mrb[0].mxu0
    %1407 = vmatprep.mubr.f32.mxu0 0.0
    %1408 = vmatmul.mubr.f32.gmra.mrb[0].mxu0 %v1038
    %v1409 = vpop.f32.mrb[0].mxu0
    %v1410 = vadd.f32 %v863, %v1409
    %v1411 = vpop.f32.mrb[0].mxu0
    %1412 = vmatprep.mubr.f32.mxu0 0.0
    %1413 = vmatmul.mubr.f32.gmra.mrb[0].mxu0 %v1041
    %v1414 = vpop.f32.mrb[0].mxu0
    %v1415 = vadd.f32 %v863, %v1414
    %v1416 = vpop.f32.mrb[0].mxu0
    %1417 = vmatprep.mubr.f32.mxu0 0.0
    %1418 = vmatmul.mubr.f32.gmra.mrb[0].mxu0 %v1044
    %v1419 = vpop.f32.mrb[0].mxu0
    %v1420 = vadd.f32 %v863, %v1419
    %v1421 = vpop.f32.mrb[0].mxu0
    %1422 = vmatprep.mubr.f32.mxu0 0.0
    %1423 = vmatmul.mubr.f32.gmra.mrb[0].mxu0 %v1047
    %v1424 = vpop.f32.mrb[0].mxu0
    %v1425 = vadd.f32 %v863, %v1424
    %v1426 = vpop.f32.mrb[0].mxu0
    %1427 = vmatprep.mubr.f32.mxu0 0.0
    %1428 = vmatmul.mubr.f32.gmra.mrb[0].mxu0 %v1050
    %v1429 = vpop.f32.mrb[0].mxu0
    %v1430 = vadd.f32 %v863, %v1429
    %v1431 = vpop.f32.mrb[0].mxu0
    %1432 = vmatprep.mubr.f32.mxu0 0.0
    %1433 = vmatmul.mubr.f32.gmra.mrb[0].mxu0 %v1053
    %v1434 = vpop.f32.mrb[0].mxu0
    %v1435 = vadd.f32 %v863, %v1434
    %v1436 = vpop.f32.mrb[0].mxu0
    %1437 = vmatprep.mubr.f32.mxu0 0.0
    %1438 = vmatmul.mubr.f32.gmra.mrb[0].mxu0 %v1056
    %v1439 = vpop.f32.mrb[0].mxu0
    %v1440 = vadd.f32 %v863, %v1439
    %v1441 = vpop.f32.mrb[0].mxu0
    %1442 = vdwg.mxu0
    %v1443 = vxor.u32 %v1125, 2147483648
    %v1444 = vxor.u32 %v1130, 2147483648
    %v1445 = vxor.u32 %v1135, 2147483648
    %v1446 = vxor.u32 %v1140, 2147483648
    %v1447 = vxor.u32 %v1145, 2147483648
    %v1448 = vxor.u32 %v1150, 2147483648
    %v1449 = vxor.u32 %v1155, 2147483648
    %v1450 = vxor.u32 %v1160, 2147483648
    %v1451 = vxor.u32 %v1165, 2147483648
    %v1452 = vxor.u32 %v1170, 2147483648
    %v1453 = vxor.u32 %v1175, 2147483648
    %v1454 = vxor.u32 %v1180, 2147483648
    %v1455 = vxor.u32 %v1185, 2147483648
    %v1456 = vxor.u32 %v1190, 2147483648
    %v1457 = vxor.u32 %v1195, 2147483648
    %v1458 = vxor.u32 %v1200, 2147483648
    %v1459 = vxor.u32 %v1205, 2147483648
    %v1460 = vxor.u32 %v1210, 2147483648
    %v1461 = vxor.u32 %v1215, 2147483648
    %v1462 = vxor.u32 %v1220, 2147483648
    %v1463 = vxor.u32 %v1225, 2147483648
    %v1464 = vxor.u32 %v1230, 2147483648
    %v1465 = vxor.u32 %v1235, 2147483648
    %v1466 = vxor.u32 %v1240, 2147483648
    %v1467 = vxor.u32 %v1245, 2147483648
    %v1468 = vxor.u32 %v1250, 2147483648
    %v1469 = vxor.u32 %v1255, 2147483648
    %v1470 = vxor.u32 %v1260, 2147483648
    %v1471 = vxor.u32 %v1265, 2147483648
    %v1472 = vxor.u32 %v1270, 2147483648
    %v1473 = vxor.u32 %v1275, 2147483648
    %v1474 = vxor.u32 %v1280, 2147483648
    %v1475 = vxor.u32 %v1285, 2147483648
    %v1476 = vxor.u32 %v1290, 2147483648
    %v1477 = vxor.u32 %v1295, 2147483648
    %v1478 = vxor.u32 %v1300, 2147483648
    %v1479 = vxor.u32 %v1305, 2147483648
    %v1480 = vxor.u32 %v1310, 2147483648
    %v1481 = vxor.u32 %v1315, 2147483648
    %v1482 = vxor.u32 %v1320, 2147483648
    %v1483 = vxor.u32 %v1325, 2147483648
    %v1484 = vxor.u32 %v1330, 2147483648
    %v1485 = vxor.u32 %v1335, 2147483648
    %v1486 = vxor.u32 %v1340, 2147483648
    %v1487 = vxor.u32 %v1345, 2147483648
    %v1488 = vxor.u32 %v1350, 2147483648
    %v1489 = vxor.u32 %v1355, 2147483648
    %v1490 = vxor.u32 %v1360, 2147483648
    %v1491 = vxor.u32 %v1365, 2147483648
    %v1492 = vxor.u32 %v1370, 2147483648
    %v1493 = vxor.u32 %v1375, 2147483648
    %v1494 = vxor.u32 %v1380, 2147483648
    %v1495 = vxor.u32 %v1385, 2147483648
    %v1496 = vxor.u32 %v1390, 2147483648
    %v1497 = vxor.u32 %v1395, 2147483648
    %v1498 = vxor.u32 %v1400, 2147483648
    %v1499 = vxor.u32 %v1405, 2147483648
    %v1500 = vxor.u32 %v1410, 2147483648
    %v1501 = vxor.u32 %v1415, 2147483648
    %v1502 = vxor.u32 %v1420, 2147483648
    %v1503 = vxor.u32 %v1425, 2147483648
    %v1504 = vxor.u32 %v1430, 2147483648
    %v1505 = vxor.u32 %v1435, 2147483648
    %v1506 = vxor.u32 %v1440, 2147483648
    %v1507 = vmul.f32 %v1443, 1.442695
    %v1508 = vpow.pop %v1507
    %v1509 = vmul.f32 %v1444, 1.442695
    %v1510 = vpow.pop %v1509
    %v1511 = vmul.f32 %v1445, 1.442695
    %v1512 = vpow.pop %v1511
    %v1513 = vmul.f32 %v1446, 1.442695
    %v1514 = vpow.pop %v1513
    %v1515 = vmul.f32 %v1447, 1.442695
    %v1516 = vpow.pop %v1515
    %v1517 = vmul.f32 %v1448, 1.442695
    %v1518 = vpow.pop %v1517
    %v1519 = vmul.f32 %v1449, 1.442695
    %v1520 = vpow.pop %v1519
    %v1521 = vmul.f32 %v1450, 1.442695
    %v1522 = vpow.pop %v1521
    %v1523 = vmul.f32 %v1451, 1.442695
    %v1524 = vpow.pop %v1523
    %v1525 = vmul.f32 %v1452, 1.442695
    %v1526 = vpow.pop %v1525
    %v1527 = vmul.f32 %v1453, 1.442695
    %v1528 = vpow.pop %v1527
    %v1529 = vmul.f32 %v1454, 1.442695
    %v1530 = vpow.pop %v1529
    %v1531 = vmul.f32 %v1455, 1.442695
    %v1532 = vpow.pop %v1531
    %v1533 = vmul.f32 %v1456, 1.442695
    %v1534 = vpow.pop %v1533
    %v1535 = vmul.f32 %v1457, 1.442695
    %v1536 = vpow.pop %v1535
    %v1537 = vmul.f32 %v1458, 1.442695
    %v1538 = vpow.pop %v1537
    %v1539 = vmul.f32 %v1459, 1.442695
    %v1540 = vpow.pop %v1539
    %v1541 = vmul.f32 %v1460, 1.442695
    %v1542 = vpow.pop %v1541
    %v1543 = vmul.f32 %v1461, 1.442695
    %v1544 = vpow.pop %v1543
    %v1545 = vmul.f32 %v1462, 1.442695
    %v1546 = vpow.pop %v1545
    %v1547 = vmul.f32 %v1463, 1.442695
    %v1548 = vpow.pop %v1547
    %v1549 = vmul.f32 %v1464, 1.442695
    %v1550 = vpow.pop %v1549
    %v1551 = vmul.f32 %v1465, 1.442695
    %v1552 = vpow.pop %v1551
    %v1553 = vmul.f32 %v1466, 1.442695
    %v1554 = vpow.pop %v1553
    %v1555 = vmul.f32 %v1467, 1.442695
    %v1556 = vpow.pop %v1555
    %v1557 = vmul.f32 %v1468, 1.442695
    %v1558 = vpow.pop %v1557
    %v1559 = vmul.f32 %v1469, 1.442695
    %v1560 = vpow.pop %v1559
    %v1561 = vmul.f32 %v1470, 1.442695
    %v1562 = vpow.pop %v1561
    %v1563 = vmul.f32 %v1471, 1.442695
    %v1564 = vpow.pop %v1563
    %v1565 = vmul.f32 %v1472, 1.442695
    %v1566 = vpow.pop %v1565
    %v1567 = vmul.f32 %v1473, 1.442695
    %v1568 = vpow.pop %v1567
    %v1569 = vmul.f32 %v1474, 1.442695
    %v1570 = vpow.pop %v1569
    %v1571 = vmul.f32 %v1475, 1.442695
    %v1572 = vpow.pop %v1571
    %v1573 = vmul.f32 %v1476, 1.442695
    %v1574 = vpow.pop %v1573
    %v1575 = vmul.f32 %v1477, 1.442695
    %v1576 = vpow.pop %v1575
    %v1577 = vmul.f32 %v1478, 1.442695
    %v1578 = vpow.pop %v1577
    %v1579 = vmul.f32 %v1479, 1.442695
    %v1580 = vpow.pop %v1579
    %v1581 = vmul.f32 %v1480, 1.442695
    %v1582 = vpow.pop %v1581
    %v1583 = vmul.f32 %v1481, 1.442695
    %v1584 = vpow.pop %v1583
    %v1585 = vmul.f32 %v1482, 1.442695
    %v1586 = vpow.pop %v1585
    %v1587 = vmul.f32 %v1483, 1.442695
    %v1588 = vpow.pop %v1587
    %v1589 = vmul.f32 %v1484, 1.442695
    %v1590 = vpow.pop %v1589
    %v1591 = vmul.f32 %v1485, 1.442695
    %v1592 = vpow.pop %v1591
    %v1593 = vmul.f32 %v1486, 1.442695
    %v1594 = vpow.pop %v1593
    %v1595 = vmul.f32 %v1487, 1.442695
    %v1596 = vpow.pop %v1595
    %v1597 = vmul.f32 %v1488, 1.442695
    %v1598 = vpow.pop %v1597
    %v1599 = vmul.f32 %v1489, 1.442695
    %v1600 = vpow.pop %v1599
    %v1601 = vmul.f32 %v1490, 1.442695
    %v1602 = vpow.pop %v1601
    %v1603 = vmul.f32 %v1491, 1.442695
    %v1604 = vpow.pop %v1603
    %v1605 = vmul.f32 %v1492, 1.442695
    %v1606 = vpow.pop %v1605
    %v1607 = vmul.f32 %v1493, 1.442695
    %v1608 = vpow.pop %v1607
    %v1609 = vmul.f32 %v1494, 1.442695
    %v1610 = vpow.pop %v1609
    %v1611 = vmul.f32 %v1495, 1.442695
    %v1612 = vpow.pop %v1611
    %v1613 = vmul.f32 %v1496, 1.442695
    %v1614 = vpow.pop %v1613
    %v1615 = vmul.f32 %v1497, 1.442695
    %v1616 = vpow.pop %v1615
    %v1617 = vmul.f32 %v1498, 1.442695
    %v1618 = vpow.pop %v1617
    %v1619 = vmul.f32 %v1499, 1.442695
    %v1620 = vpow.pop %v1619
    %v1621 = vmul.f32 %v1500, 1.442695
    %v1622 = vpow.pop %v1621
    %v1623 = vmul.f32 %v1501, 1.442695
    %v1624 = vpow.pop %v1623
    %v1625 = vmul.f32 %v1502, 1.442695
    %v1626 = vpow.pop %v1625
    %v1627 = vmul.f32 %v1503, 1.442695
    %v1628 = vpow.pop %v1627
    %v1629 = vmul.f32 %v1504, 1.442695
    %v1630 = vpow.pop %v1629
    %v1631 = vmul.f32 %v1505, 1.442695
    %v1632 = vpow.pop %v1631
    %v1633 = vmul.f32 %v1506, 1.442695
    %v1634 = vpow.pop %v1633
    %v1635 = vadd.f32 %v1508, 1.0
    %v1636 = vadd.f32 %v1510, 1.0
    %v1637 = vadd.f32 %v1512, 1.0
    %v1638 = vadd.f32 %v1514, 1.0
    %v1639 = vadd.f32 %v1516, 1.0
    %v1640 = vadd.f32 %v1518, 1.0
    %v1641 = vadd.f32 %v1520, 1.0
    %v1642 = vadd.f32 %v1522, 1.0
    %v1643 = vadd.f32 %v1524, 1.0
    %v1644 = vadd.f32 %v1526, 1.0
    %v1645 = vadd.f32 %v1528, 1.0
    %v1646 = vadd.f32 %v1530, 1.0
    %v1647 = vadd.f32 %v1532, 1.0
    %v1648 = vadd.f32 %v1534, 1.0
    %v1649 = vadd.f32 %v1536, 1.0
    %v1650 = vadd.f32 %v1538, 1.0
    %v1651 = vadd.f32 %v1540, 1.0
    %v1652 = vadd.f32 %v1542, 1.0
    %v1653 = vadd.f32 %v1544, 1.0
    %v1654 = vadd.f32 %v1546, 1.0
    %v1655 = vadd.f32 %v1548, 1.0
    %v1656 = vadd.f32 %v1550, 1.0
    %v1657 = vadd.f32 %v1552, 1.0
    %v1658 = vadd.f32 %v1554, 1.0
    %v1659 = vadd.f32 %v1556, 1.0
    %v1660 = vadd.f32 %v1558, 1.0
    %v1661 = vadd.f32 %v1560, 1.0
    %v1662 = vadd.f32 %v1562, 1.0
    %v1663 = vadd.f32 %v1564, 1.0
    %v1664 = vadd.f32 %v1566, 1.0
    %v1665 = vadd.f32 %v1568, 1.0
    %v1666 = vadd.f32 %v1570, 1.0
    %v1667 = vadd.f32 %v1572, 1.0
    %v1668 = vadd.f32 %v1574, 1.0
    %v1669 = vadd.f32 %v1576, 1.0
    %v1670 = vadd.f32 %v1578, 1.0
    %v1671 = vadd.f32 %v1580, 1.0
    %v1672 = vadd.f32 %v1582, 1.0
    %v1673 = vadd.f32 %v1584, 1.0
    %v1674 = vadd.f32 %v1586, 1.0
    %v1675 = vadd.f32 %v1588, 1.0
    %v1676 = vadd.f32 %v1590, 1.0
    %v1677 = vadd.f32 %v1592, 1.0
    %v1678 = vadd.f32 %v1594, 1.0
    %v1679 = vadd.f32 %v1596, 1.0
    %v1680 = vadd.f32 %v1598, 1.0
    %v1681 = vadd.f32 %v1600, 1.0
    %v1682 = vadd.f32 %v1602, 1.0
    %v1683 = vadd.f32 %v1604, 1.0
    %v1684 = vadd.f32 %v1606, 1.0
    %v1685 = vadd.f32 %v1608, 1.0
    %v1686 = vadd.f32 %v1610, 1.0
    %v1687 = vadd.f32 %v1612, 1.0
    %v1688 = vadd.f32 %v1614, 1.0
    %v1689 = vadd.f32 %v1616, 1.0
    %v1690 = vadd.f32 %v1618, 1.0
    %v1691 = vadd.f32 %v1620, 1.0
    %v1692 = vadd.f32 %v1622, 1.0
    %v1693 = vadd.f32 %v1624, 1.0
    %v1694 = vadd.f32 %v1626, 1.0
    %v1695 = vadd.f32 %v1628, 1.0
    %v1696 = vadd.f32 %v1630, 1.0
    %v1697 = vadd.f32 %v1632, 1.0
    %v1698 = vadd.f32 %v1634, 1.0
    %v1699 = vrcp.pop %v1635
    %v1700 = vmul.f32 1.0, %v1699
    %v1701 = vrcp.pop %v1636
    %v1702 = vmul.f32 1.0, %v1701
    %v1703 = vrcp.pop %v1637
    %v1704 = vmul.f32 1.0, %v1703
    %v1705 = vrcp.pop %v1638
    %v1706 = vmul.f32 1.0, %v1705
    %v1707 = vrcp.pop %v1639
    %v1708 = vmul.f32 1.0, %v1707
    %v1709 = vrcp.pop %v1640
    %v1710 = vmul.f32 1.0, %v1709
    %v1711 = vrcp.pop %v1641
    %v1712 = vmul.f32 1.0, %v1711
    %v1713 = vrcp.pop %v1642
    %v1714 = vmul.f32 1.0, %v1713
    %v1715 = vrcp.pop %v1643
    %v1716 = vmul.f32 1.0, %v1715
    %v1717 = vrcp.pop %v1644
    %v1718 = vmul.f32 1.0, %v1717
    %v1719 = vrcp.pop %v1645
    %v1720 = vmul.f32 1.0, %v1719
    %v1721 = vrcp.pop %v1646
    %v1722 = vmul.f32 1.0, %v1721
    %v1723 = vrcp.pop %v1647
    %v1724 = vmul.f32 1.0, %v1723
    %v1725 = vrcp.pop %v1648
    %v1726 = vmul.f32 1.0, %v1725
    %v1727 = vrcp.pop %v1649
    %v1728 = vmul.f32 1.0, %v1727
    %v1729 = vrcp.pop %v1650
    %v1730 = vmul.f32 1.0, %v1729
    %v1731 = vrcp.pop %v1651
    %v1732 = vmul.f32 1.0, %v1731
    %v1733 = vrcp.pop %v1652
    %v1734 = vmul.f32 1.0, %v1733
    %v1735 = vrcp.pop %v1653
    %v1736 = vmul.f32 1.0, %v1735
    %v1737 = vrcp.pop %v1654
    %v1738 = vmul.f32 1.0, %v1737
    %v1739 = vrcp.pop %v1655
    %v1740 = vmul.f32 1.0, %v1739
    %v1741 = vrcp.pop %v1656
    %v1742 = vmul.f32 1.0, %v1741
    %v1743 = vrcp.pop %v1657
    %v1744 = vmul.f32 1.0, %v1743
    %v1745 = vrcp.pop %v1658
    %v1746 = vmul.f32 1.0, %v1745
    %v1747 = vrcp.pop %v1659
    %v1748 = vmul.f32 1.0, %v1747
    %v1749 = vrcp.pop %v1660
    %v1750 = vmul.f32 1.0, %v1749
    %v1751 = vrcp.pop %v1661
    %v1752 = vmul.f32 1.0, %v1751
    %v1753 = vrcp.pop %v1662
    %v1754 = vmul.f32 1.0, %v1753
    %v1755 = vrcp.pop %v1663
    %v1756 = vmul.f32 1.0, %v1755
    %v1757 = vrcp.pop %v1664
    %v1758 = vmul.f32 1.0, %v1757
    %v1759 = vrcp.pop %v1665
    %v1760 = vmul.f32 1.0, %v1759
    %v1761 = vrcp.pop %v1666
    %v1762 = vmul.f32 1.0, %v1761
    %v1763 = vrcp.pop %v1667
    %v1764 = vmul.f32 1.0, %v1763
    %v1765 = vrcp.pop %v1668
    %v1766 = vmul.f32 1.0, %v1765
    %v1767 = vrcp.pop %v1669
    %v1768 = vmul.f32 1.0, %v1767
    %v1769 = vrcp.pop %v1670
    %v1770 = vmul.f32 1.0, %v1769
    %v1771 = vrcp.pop %v1671
    %v1772 = vmul.f32 1.0, %v1771
    %v1773 = vrcp.pop %v1672
    %v1774 = vmul.f32 1.0, %v1773
    %v1775 = vrcp.pop %v1673
    %v1776 = vmul.f32 1.0, %v1775
    %v1777 = vrcp.pop %v1674
    %v1778 = vmul.f32 1.0, %v1777
    %v1779 = vrcp.pop %v1675
    %v1780 = vmul.f32 1.0, %v1779
    %v1781 = vrcp.pop %v1676
    %v1782 = vmul.f32 1.0, %v1781
    %v1783 = vrcp.pop %v1677
    %v1784 = vmul.f32 1.0, %v1783
    %v1785 = vrcp.pop %v1678
    %v1786 = vmul.f32 1.0, %v1785
    %v1787 = vrcp.pop %v1679
    %v1788 = vmul.f32 1.0, %v1787
    %v1789 = vrcp.pop %v1680
    %v1790 = vmul.f32 1.0, %v1789
    %v1791 = vrcp.pop %v1681
    %v1792 = vmul.f32 1.0, %v1791
    %v1793 = vrcp.pop %v1682
    %v1794 = vmul.f32 1.0, %v1793
    %v1795 = vrcp.pop %v1683
    %v1796 = vmul.f32 1.0, %v1795
    %v1797 = vrcp.pop %v1684
    %v1798 = vmul.f32 1.0, %v1797
    %v1799 = vrcp.pop %v1685
    %v1800 = vmul.f32 1.0, %v1799
    %v1801 = vrcp.pop %v1686
    %v1802 = vmul.f32 1.0, %v1801
    %v1803 = vrcp.pop %v1687
    %v1804 = vmul.f32 1.0, %v1803
    %v1805 = vrcp.pop %v1688
    %v1806 = vmul.f32 1.0, %v1805
    %v1807 = vrcp.pop %v1689
    %v1808 = vmul.f32 1.0, %v1807
    %v1809 = vrcp.pop %v1690
    %v1810 = vmul.f32 1.0, %v1809
    %v1811 = vrcp.pop %v1691
    %v1812 = vmul.f32 1.0, %v1811
    %v1813 = vrcp.pop %v1692
    %v1814 = vmul.f32 1.0, %v1813
    %v1815 = vrcp.pop %v1693
    %v1816 = vmul.f32 1.0, %v1815
    %v1817 = vrcp.pop %v1694
    %v1818 = vmul.f32 1.0, %v1817
    %v1819 = vrcp.pop %v1695
    %v1820 = vmul.f32 1.0, %v1819
    %v1821 = vrcp.pop %v1696
    %v1822 = vmul.f32 1.0, %v1821
    %v1823 = vrcp.pop %v1697
    %v1824 = vmul.f32 1.0, %v1823
    %v1825 = vrcp.pop %v1698
    %v1826 = vmul.f32 1.0, %v1825
    %v1827 = vmul.f32 %v1125, %v1700
    %v1828 = vmul.f32 %v1130, %v1702
    %v1829 = vmul.f32 %v1135, %v1704
    %v1830 = vmul.f32 %v1140, %v1706
    %v1831 = vmul.f32 %v1145, %v1708
    %v1832 = vmul.f32 %v1150, %v1710
    %v1833 = vmul.f32 %v1155, %v1712
    %v1834 = vmul.f32 %v1160, %v1714
    %v1835 = vmul.f32 %v1165, %v1716
    %v1836 = vmul.f32 %v1170, %v1718
    %v1837 = vmul.f32 %v1175, %v1720
    %v1838 = vmul.f32 %v1180, %v1722
    %v1839 = vmul.f32 %v1185, %v1724
    %v1840 = vmul.f32 %v1190, %v1726
    %v1841 = vmul.f32 %v1195, %v1728
    %v1842 = vmul.f32 %v1200, %v1730
    %v1843 = vmul.f32 %v1205, %v1732
    %v1844 = vmul.f32 %v1210, %v1734
    %v1845 = vmul.f32 %v1215, %v1736
    %v1846 = vmul.f32 %v1220, %v1738
    %v1847 = vmul.f32 %v1225, %v1740
    %v1848 = vmul.f32 %v1230, %v1742
    %v1849 = vmul.f32 %v1235, %v1744
    %v1850 = vmul.f32 %v1240, %v1746
    %v1851 = vmul.f32 %v1245, %v1748
    %v1852 = vmul.f32 %v1250, %v1750
    %v1853 = vmul.f32 %v1255, %v1752
    %v1854 = vmul.f32 %v1260, %v1754
    %v1855 = vmul.f32 %v1265, %v1756
    %v1856 = vmul.f32 %v1270, %v1758
    %v1857 = vmul.f32 %v1275, %v1760
    %v1858 = vmul.f32 %v1280, %v1762
    %v1859 = vmul.f32 %v1285, %v1764
    %v1860 = vmul.f32 %v1290, %v1766
    %v1861 = vmul.f32 %v1295, %v1768
    %v1862 = vmul.f32 %v1300, %v1770
    %v1863 = vmul.f32 %v1305, %v1772
    %v1864 = vmul.f32 %v1310, %v1774
    %v1865 = vmul.f32 %v1315, %v1776
    %v1866 = vmul.f32 %v1320, %v1778
    %v1867 = vmul.f32 %v1325, %v1780
    %v1868 = vmul.f32 %v1330, %v1782
    %v1869 = vmul.f32 %v1335, %v1784
    %v1870 = vmul.f32 %v1340, %v1786
    %v1871 = vmul.f32 %v1345, %v1788
    %v1872 = vmul.f32 %v1350, %v1790
    %v1873 = vmul.f32 %v1355, %v1792
    %v1874 = vmul.f32 %v1360, %v1794
    %v1875 = vmul.f32 %v1365, %v1796
    %v1876 = vmul.f32 %v1370, %v1798
    %v1877 = vmul.f32 %v1375, %v1800
    %v1878 = vmul.f32 %v1380, %v1802
    %v1879 = vmul.f32 %v1385, %v1804
    %v1880 = vmul.f32 %v1390, %v1806
    %v1881 = vmul.f32 %v1395, %v1808
    %v1882 = vmul.f32 %v1400, %v1810
    %v1883 = vmul.f32 %v1405, %v1812
    %v1884 = vmul.f32 %v1410, %v1814
    %v1885 = vmul.f32 %v1415, %v1816
    %v1886 = vmul.f32 %v1420, %v1818
    %v1887 = vmul.f32 %v1425, %v1820
    %v1888 = vmul.f32 %v1430, %v1822
    %v1889 = vmul.f32 %v1435, %v1824
    %v1890 = vmul.f32 %v1440, %v1826
    %1891 = vst.msk [vmem:[#allocation2] sm:$0xff] %vm790, %v1827
    %1892 = vst.msk [vmem:[#allocation2 + $0x8] sm:$0xff] %vm790, %v1828
    %1893 = vst.msk [vmem:[#allocation2 + $0x10] sm:$0xff] %vm790, %v1829
    %1894 = vst.msk [vmem:[#allocation2 + $0x18] sm:$0xff] %vm790, %v1830
    %1895 = vst.msk [vmem:[#allocation2 + $0x20] sm:$0xff] %vm790, %v1831
    %1896 = vst.msk [vmem:[#allocation2 + $0x28] sm:$0xff] %vm790, %v1832
    %1897 = vst.msk [vmem:[#allocation2 + $0x30] sm:$0xff] %vm790, %v1833
    %1898 = vst.msk [vmem:[#allocation2 + $0x38] sm:$0xff] %vm790, %v1834
    %1899 = vst.msk [vmem:[#allocation2 + $0x40] sm:$0xff] %vm790, %v1835
    %1900 = vst.msk [vmem:[#allocation2 + $0x48] sm:$0xff] %vm790, %v1836
    %1901 = vst.msk [vmem:[#allocation2 + $0x50] sm:$0xff] %vm790, %v1837
    %1902 = vst.msk [vmem:[#allocation2 + $0x58] sm:$0xff] %vm790, %v1838
    %1903 = vst.msk [vmem:[#allocation2 + $0x60] sm:$0xff] %vm790, %v1839
    %1904 = vst.msk [vmem:[#allocation2 + $0x68] sm:$0xff] %vm790, %v1840
    %1905 = vst.msk [vmem:[#allocation2 + $0x70] sm:$0xff] %vm790, %v1841
    %1906 = vst.msk [vmem:[#allocation2 + $0x78] sm:$0xff] %vm790, %v1842
    %1907 = vst.msk [vmem:[#allocation2 + $0x80] sm:$0xff] %vm790, %v1843
    %1908 = vst.msk [vmem:[#allocation2 + $0x88] sm:$0xff] %vm790, %v1844
    %1909 = vst.msk [vmem:[#allocation2 + $0x90] sm:$0xff] %vm790, %v1845
    %1910 = vst.msk [vmem:[#allocation2 + $0x98] sm:$0xff] %vm790, %v1846
    %1911 = vst.msk [vmem:[#allocation2 + $0xa0] sm:$0xff] %vm790, %v1847
    %1912 = vst.msk [vmem:[#allocation2 + $0xa8] sm:$0xff] %vm790, %v1848
    %1913 = vst.msk [vmem:[#allocation2 + $0xb0] sm:$0xff] %vm790, %v1849
    %1914 = vst.msk [vmem:[#allocation2 + $0xb8] sm:$0xff] %vm790, %v1850
    %1915 = vst.msk [vmem:[#allocation2 + $0xc0] sm:$0xff] %vm790, %v1851
    %1916 = vst.msk [vmem:[#allocation2 + $0xc8] sm:$0xff] %vm790, %v1852
    %1917 = vst.msk [vmem:[#allocation2 + $0xd0] sm:$0xff] %vm790, %v1853
    %1918 = vst.msk [vmem:[#allocation2 + $0xd8] sm:$0xff] %vm790, %v1854
    %1919 = vst.msk [vmem:[#allocation2 + $0xe0] sm:$0xff] %vm790, %v1855
    %1920 = vst.msk [vmem:[#allocation2 + $0xe8] sm:$0xff] %vm790, %v1856
    %1921 = vst.msk [vmem:[#allocation2 + $0xf0] sm:$0xff] %vm790, %v1857
    %1922 = vst.msk [vmem:[#allocation2 + $0xf8] sm:$0xff] %vm790, %v1858
    %1923 = vst.msk [vmem:[#allocation2 + $0x100] sm:$0xff] %vm790, %v1859
    %1924 = vst.msk [vmem:[#allocation2 + $0x108] sm:$0xff] %vm790, %v1860
    %1925 = vst.msk [vmem:[#allocation2 + $0x110] sm:$0xff] %vm790, %v1861
    %1926 = vst.msk [vmem:[#allocation2 + $0x118] sm:$0xff] %vm790, %v1862
    %1927 = vst.msk [vmem:[#allocation2 + $0x120] sm:$0xff] %vm790, %v1863
    %1928 = vst.msk [vmem:[#allocation2 + $0x128] sm:$0xff] %vm790, %v1864
    %1929 = vst.msk [vmem:[#allocation2 + $0x130] sm:$0xff] %vm790, %v1865
    %1930 = vst.msk [vmem:[#allocation2 + $0x138] sm:$0xff] %vm790, %v1866
    %1931 = vst.msk [vmem:[#allocation2 + $0x140] sm:$0xff] %vm790, %v1867
    %1932 = vst.msk [vmem:[#allocation2 + $0x148] sm:$0xff] %vm790, %v1868
    %1933 = vst.msk [vmem:[#allocation2 + $0x150] sm:$0xff] %vm790, %v1869
    %1934 = vst.msk [vmem:[#allocation2 + $0x158] sm:$0xff] %vm790, %v1870
    %1935 = vst.msk [vmem:[#allocation2 + $0x160] sm:$0xff] %vm790, %v1871
    %1936 = vst.msk [vmem:[#allocation2 + $0x168] sm:$0xff] %vm790, %v1872
    %1937 = vst.msk [vmem:[#allocation2 + $0x170] sm:$0xff] %vm790, %v1873
    %1938 = vst.msk [vmem:[#allocation2 + $0x178] sm:$0xff] %vm790, %v1874
    %1939 = vst.msk [vmem:[#allocation2 + $0x180] sm:$0xff] %vm790, %v1875
    %1940 = vst.msk [vmem:[#allocation2 + $0x188] sm:$0xff] %vm790, %v1876
    %1941 = vst.msk [vmem:[#allocation2 + $0x190] sm:$0xff] %vm790, %v1877
    %1942 = vst.msk [vmem:[#allocation2 + $0x198] sm:$0xff] %vm790, %v1878
    %1943 = vst.msk [vmem:[#allocation2 + $0x1a0] sm:$0xff] %vm790, %v1879
    %1944 = vst.msk [vmem:[#allocation2 + $0x1a8] sm:$0xff] %vm790, %v1880
    %1945 = vst.msk [vmem:[#allocation2 + $0x1b0] sm:$0xff] %vm790, %v1881
    %1946 = vst.msk [vmem:[#allocation2 + $0x1b8] sm:$0xff] %vm790, %v1882
    %1947 = vst.msk [vmem:[#allocation2 + $0x1c0] sm:$0xff] %vm790, %v1883
    %1948 = vst.msk [vmem:[#allocation2 + $0x1c8] sm:$0xff] %vm790, %v1884
    %1949 = vst.msk [vmem:[#allocation2 + $0x1d0] sm:$0xff] %vm790, %v1885
    %1950 = vst.msk [vmem:[#allocation2 + $0x1d8] sm:$0xff] %vm790, %v1886
    %1951 = vst.msk [vmem:[#allocation2 + $0x1e0] sm:$0xff] %vm790, %v1887
    %1952 = vst.msk [vmem:[#allocation2 + $0x1e8] sm:$0xff] %vm790, %v1888
    %1953 = vst.msk [vmem:[#allocation2 + $0x1f0] sm:$0xff] %vm790, %v1889
    %1954 = vst.msk [vmem:[#allocation2 + $0x1f8] sm:$0xff] %vm790, %v1890
    // Predicated region
    $region22: #{c2f_forward.5} parent=1 // pred_check
      _
    $region23: #{c2f_forward.5} parent=1 // pred_check_branch
      %1956 = sbr.rel (0) target = $region25
    $region24: #{c2f_forward.5} parent=1 // pred_region
      %s1958 = ssub.s32 8192, 8192
      %1959 = vsyncadd [#allocation3], %s1958
      %s1960 = sshll.u32 [#allocation2], 4
      %s1961 = int_to_ptr.vmem [resolvable:$true] %s1960
      %1966 = dma.vmem_to_hbm [thread:$0]  %s1961, 8192, %s5, [#allocation3], 128, 128, 8
    $region25: #{c2f_forward.5} parent=1 // pred_fallthru
      _
    // Predicated region
    $region26: #{c2f_forward.5} parent=1 // pred_check
      _
    $region27: #{c2f_forward.5} parent=1 // pred_check_branch
      %1968 = sbr.rel (0) target = $region29
    $region28: #{c2f_forward.5} parent=1 // pred_region
      %1969 = dma.done [#allocation3], 8192
    $region29: #{c2f_forward.5} parent=1 // pred_fallthru
      _
    %1970 = vsyncpa [#allocation3], 1

// kernel: c2f_forward.4
$region0: #{c2f_forward.4}
  #allocation0 [shape = 'u32[]', space=smem, size = 0x4, offset = 0x4, fixed_abs, tag = 'smem constant byte address 0x4 - core index']
  #allocation1 [shape = 'u32[144,128]{1,0:T(1,128)}', space=vmem, size = 0x12000, scoped, tag = 'internal scratch']
  %s0 = inlined_call_operand.vmem [shape: f32[2,16,16,8], index: 0, kind: input, shape index: {}, may-alias: {0,1,2}]
  %s1 = inlined_call_operand.vmem [shape: f32[2,16,16,8], index: 1, kind: input, shape index: {}, may-alias: {0,1,2}]
  %s2 = inlined_call_operand.vmem [shape: f32[2,16,16,8], index: 2, kind: input, shape index: {}, may-alias: {0,1,2}]
  %s3 = inlined_call_operand.vmem [shape: f32[72,8], index: 3, kind: input, shape index: {}]
  %s4 = inlined_call_operand.vmem [shape: f32[1,8], index: 4, kind: input, shape index: {}]
  %s5 = inlined_call_operand.vmem [shape: f32[72,8], index: 5, kind: input, shape index: {}]
  %s6 = inlined_call_operand.vmem [shape: f32[1,8], index: 6, kind: input, shape index: {}]
  %s7 = inlined_call_operand.vmem [shape: f32[2,16,16,8], index: 7, kind: output, shape index: {}]
  %s8 = sld [smem:[#allocation0]]
  $region61: #{c2f_forward.4} parent=0
    _
  %s10 = ssub.s32 1, %s8
  %s11 = scalar_select 0, %s10, %s8
  loop: start=0, step=1, limit=4
  $region2: #{c2f_forward.4} parent=0 // loop_pre_header
    _
  $region3: #{c2f_forward.4} parent=0 // loop_header
    %s13 = sphi 0, %s17
    %p14 = scmp.ge.s32.totalorder %s13, 4
    %s20 = sphi 0, %s32
    %s21 = sphi 0, %s28
    %s22 = sphi 0, %s20
    %s23 = sphi 0, %s21
    %s24 = sphi 0, %s22
    %s25 = sphi 0, %s23
    %s37 = sphi 0, %s39
    %s40 = sphi 0, %s37
    %s41 = sphi 0, %s40
    %s57 = sphi 0, %s41
    %s73 = sphi 0, %s75
    %s76 = sphi 0, %s73
    %s77 = sphi 0, %s76
    %s93 = sphi 0, %s77
    %s109 = sphi 0, %s111
    %s112 = sphi 0, %s109
    %s113 = sphi 0, %s112
    %s129 = sphi 0, %s113
    %s133 = sphi 0, %s133
    %s135 = sphi 0, %s133
    %s136 = sphi 0, %s135
    %s150 = sphi 0, %s136
    %s154 = sphi 0, %s154
    %s156 = sphi 0, %s154
    %s157 = sphi 0, %s156
    %s171 = sphi 0, %s157
    %s175 = sphi 0, %s175
    %s177 = sphi 0, %s175
    %s178 = sphi 0, %s177
    %s192 = sphi 0, %s178
    %s196 = sphi 0, %s196
    %s198 = sphi 0, %s196
    %s199 = sphi 0, %s198
    %s213 = sphi 0, %s199
    %s221 = sphi 0, %s223
    %s224 = sphi 0, %s221
    %s225 = sphi 0, %s224
    %s241 = sphi 0, %s225
  $region4: #{c2f_forward.4} parent=0 // loop_header_branch
    %16 = sbr.rel (%p14) target = $region8
  $region5: #{c2f_forward.4} parent=0 // loop_body
    %s18 = ssub.s32 %s13, 1
    %s19 = ssub.s32 %s13, 2
    %s26 = sadd.s32 1, %s21
    %p27 = scmp.ge.s32.totalorder %s26, 1
    %s28 = scalar_select %p27, 0, %s26
    %s29 = sadd.s32 1, %s20
    %s30 = scalar_select %p27, %s29, %s20
    %p31 = scmp.ge.s32.totalorder %s30, 2
    %s32 = scalar_select %p31, 0, %s30
    %s33 = ssub.s32 %s20, %s32
    %s34 = ssub.s32 %s21, %s28
    %s35 = sor.u32 %s33, %s34
    %p36 = scmp.eq.s32.totalorder %s35, 0
    %s38 = sadd.s32 %s37, 1
    %s39 = scalar_select %p36, %s37, %s38
    %p42 = pneg %p36
    %p43 = scmp.eq.s32.totalorder %s13, 1
    %p44 = por %p42, %p43
    %p45 = scmp.ne.s32.totalorder %s37, %s40
    %p46 = scmp.eq.s32.totalorder %s13, 0
    %p47 = por %p45, %p46
    %p48 = scmp.ne.s32.totalorder %s37, %s40
    %p49 = scmp.eq.s32.totalorder %s18, 1
    %p50 = por %p48, %p49
    %p51 = scmp.ne.s32.totalorder %s40, %s41
    %p52 = scmp.eq.s32.totalorder %s18, 0
    %p53 = por %p51, %p52
    %p54 = scmp.ne.s32.totalorder %s40, %s41
    %p55 = scmp.eq.s32.totalorder %s19, 1
    %p56 = por %p54, %p55
    %p58 = scmp.ne.s32.totalorder %s41, %s57
    %p59 = scmp.eq.s32.totalorder %s19, 0
    %p60 = por %p58, %p59
    %s61 = smul.u32 %s21, 8
    %s62 = ssub.s32 %s61, 1
    %p63 = scmp.gt.s32.totalorder %s62, 0
    %s64 = scalar_select %p63, %s62, 0
    %s65 = smul.u32 %s28, 8
    %s66 = ssub.s32 %s65, 1
    %p67 = scmp.gt.s32.totalorder %s66, 0
    %s68 = scalar_select %p67, %s66, 0
    %s69 = ssub.s32 %s20, %s32
    %s70 = ssub.s32 %s64, %s68
    %s71 = sor.u32 %s69, %s70
    %p72 = scmp.eq.s32.totalorder %s71, 0
    %s74 = sadd.s32 %s73, 1
    %s75 = scalar_select %p72, %s73, %s74
    %p78 = pneg %p72
    %p79 = scmp.eq.s32.totalorder %s13, 1
    %p80 = por %p78, %p79
    %p81 = scmp.ne.s32.totalorder %s73, %s76
    %p82 = scmp.eq.s32.totalorder %s13, 0
    %p83 = por %p81, %p82
    %p84 = scmp.ne.s32.totalorder %s73, %s76
    %p85 = scmp.eq.s32.totalorder %s18, 1
    %p86 = por %p84, %p85
    %p87 = scmp.ne.s32.totalorder %s76, %s77
    %p88 = scmp.eq.s32.totalorder %s18, 0
    %p89 = por %p87, %p88
    %p90 = scmp.ne.s32.totalorder %s76, %s77
    %p91 = scmp.eq.s32.totalorder %s19, 1
    %p92 = por %p90, %p91
    %p94 = scmp.ne.s32.totalorder %s77, %s93
    %p95 = scmp.eq.s32.totalorder %s19, 0
    %p96 = por %p94, %p95
    %s97 = sadd.s32 %s21, 1
    %s98 = smul.u32 %s97, 8
    %p99 = scmp.lt.s32.totalorder %s98, 7
    %s100 = scalar_select %p99, %s98, 7
    %s101 = sadd.s32 %s28, 1
    %s102 = smul.u32 %s101, 8
    %p103 = scmp.lt.s32.totalorder %s102, 7
    %s104 = scalar_select %p103, %s102, 7
    %s105 = ssub.s32 %s20, %s32
    %s106 = ssub.s32 %s100, %s104
    %s107 = sor.u32 %s105, %s106
    %p108 = scmp.eq.s32.totalorder %s107, 0
    %s110 = sadd.s32 %s109, 1
    %s111 = scalar_select %p108, %s109, %s110
    %p114 = pneg %p108
    %p115 = scmp.eq.s32.totalorder %s13, 1
    %p116 = por %p114, %p115
    %p117 = scmp.ne.s32.totalorder %s109, %s112
    %p118 = scmp.eq.s32.totalorder %s13, 0
    %p119 = por %p117, %p118
    %p120 = scmp.ne.s32.totalorder %s109, %s112
    %p121 = scmp.eq.s32.totalorder %s18, 1
    %p122 = por %p120, %p121
    %p123 = scmp.ne.s32.totalorder %s112, %s113
    %p124 = scmp.eq.s32.totalorder %s18, 0
    %p125 = por %p123, %p124
    %p126 = scmp.ne.s32.totalorder %s112, %s113
    %p127 = scmp.eq.s32.totalorder %s19, 1
    %p128 = por %p126, %p127
    %p130 = scmp.ne.s32.totalorder %s113, %s129
    %p131 = scmp.eq.s32.totalorder %s19, 0
    %p132 = por %p130, %p131
    %s134 = sadd.s32 %s133, 1
    %p137 = scmp.eq.s32.totalorder %s13, 1
    %p138 = scmp.ne.s32.totalorder %s133, %s135
    %p139 = scmp.eq.s32.totalorder %s13, 0
    %p140 = por %p138, %p139
    %p141 = scmp.ne.s32.totalorder %s133, %s135
    %p142 = scmp.eq.s32.totalorder %s18, 1
    %p143 = por %p141, %p142
    %p144 = scmp.ne.s32.totalorder %s135, %s136
    %p145 = scmp.eq.s32.totalorder %s18, 0
    %p146 = por %p144, %p145
    %p147 = scmp.ne.s32.totalorder %s135, %s136
    %p148 = scmp.eq.s32.totalorder %s19, 1
    %p149 = por %p147, %p148
    %p151 = scmp.ne.s32.totalorder %s136, %s150
    %p152 = scmp.eq.s32.totalorder %s19, 0
    %p153 = por %p151, %p152
    %s155 = sadd.s32 %s154, 1
    %p158 = scmp.eq.s32.totalorder %s13, 1
    %p159 = scmp.ne.s32.totalorder %s154, %s156
    %p160 = scmp.eq.s32.totalorder %s13, 0
    %p161 = por %p159, %p160
    %p162 = scmp.ne.s32.totalorder %s154, %s156
    %p163 = scmp.eq.s32.totalorder %s18, 1
    %p164 = por %p162, %p163
    %p165 = scmp.ne.s32.totalorder %s156, %s157
    %p166 = scmp.eq.s32.totalorder %s18, 0
    %p167 = por %p165, %p166
    %p168 = scmp.ne.s32.totalorder %s156, %s157
    %p169 = scmp.eq.s32.totalorder %s19, 1
    %p170 = por %p168, %p169
    %p172 = scmp.ne.s32.totalorder %s157, %s171
    %p173 = scmp.eq.s32.totalorder %s19, 0
    %p174 = por %p172, %p173
    %s176 = sadd.s32 %s175, 1
    %p179 = scmp.eq.s32.totalorder %s13, 1
    %p180 = scmp.ne.s32.totalorder %s175, %s177
    %p181 = scmp.eq.s32.totalorder %s13, 0
    %p182 = por %p180, %p181
    %p183 = scmp.ne.s32.totalorder %s175, %s177
    %p184 = scmp.eq.s32.totalorder %s18, 1
    %p185 = por %p183, %p184
    %p186 = scmp.ne.s32.totalorder %s177, %s178
    %p187 = scmp.eq.s32.totalorder %s18, 0
    %p188 = por %p186, %p187
    %p189 = scmp.ne.s32.totalorder %s177, %s178
    %p190 = scmp.eq.s32.totalorder %s19, 1
    %p191 = por %p189, %p190
    %p193 = scmp.ne.s32.totalorder %s178, %s192
    %p194 = scmp.eq.s32.totalorder %s19, 0
    %p195 = por %p193, %p194
    %s197 = sadd.s32 %s196, 1
    %p200 = scmp.eq.s32.totalorder %s13, 1
    %p201 = scmp.ne.s32.totalorder %s196, %s198
    %p202 = scmp.eq.s32.totalorder %s13, 0
    %p203 = por %p201, %p202
    %p204 = scmp.ne.s32.totalorder %s196, %s198
    %p205 = scmp.eq.s32.totalorder %s18, 1
    %p206 = por %p204, %p205
    %p207 = scmp.ne.s32.totalorder %s198, %s199
    %p208 = scmp.eq.s32.totalorder %s18, 0
    %p209 = por %p207, %p208
    %p210 = scmp.ne.s32.totalorder %s198, %s199
    %p211 = scmp.eq.s32.totalorder %s19, 1
    %p212 = por %p210, %p211
    %p214 = scmp.ne.s32.totalorder %s199, %s213
    %p215 = scmp.eq.s32.totalorder %s19, 0
    %p216 = por %p214, %p215
    %s217 = ssub.s32 %s20, %s32
    %s218 = ssub.s32 %s21, %s28
    %s219 = sor.u32 %s217, %s218
    %p220 = scmp.eq.s32.totalorder %s219, 0
    %s222 = sadd.s32 %s221, 1
    %s223 = scalar_select %p220, %s221, %s222
    %p226 = pneg %p220
    %p227 = scmp.eq.s32.totalorder %s13, 1
    %p228 = por %p226, %p227
    %p229 = scmp.ne.s32.totalorder %s221, %s224
    %p230 = scmp.eq.s32.totalorder %s13, 0
    %p231 = por %p229, %p230
    %p232 = scmp.ne.s32.totalorder %s221, %s224
    %p233 = scmp.eq.s32.totalorder %s18, 1
    %p234 = por %p232, %p233
    %p235 = scmp.ne.s32.totalorder %s224, %s225
    %p236 = scmp.eq.s32.totalorder %s18, 0
    %p237 = por %p235, %p236
    %p238 = scmp.ne.s32.totalorder %s224, %s225
    %p239 = scmp.eq.s32.totalorder %s19, 1
    %p240 = por %p238, %p239
    %p242 = scmp.ne.s32.totalorder %s225, %s241
    %p243 = scmp.eq.s32.totalorder %s19, 0
    %p244 = por %p242, %p243
    %p245 = scmp.le.s32.totalorder 1, %s13
    %p246 = scmp.lt.s32.totalorder %s13, 3
    %p247 = pnand %p245, %p246
    %p248 = pneg %p247
    // Predicated region
    $region9: #{c2f_forward.4} parent=5 // pred_check
      _
    $region10: #{c2f_forward.4} parent=5 // pred_check_branch
      %250 = sbr.rel (%p247) target = $region12
    $region11: #{c2f_forward.4} parent=5 // pred_region
      %s251 = ssub.s32 %s13, 1
      // Predicated region
      $region13: #{c2f_forward.4} parent=11 // pred_check
        %p252 = pneg %p146
      $region14: #{c2f_forward.4} parent=11 // pred_check_branch
        %254 = sbr.rel (%p252) target = $region16
      $region15: #{c2f_forward.4} parent=11 // pred_region
        _
      $region16: #{c2f_forward.4} parent=11 // pred_fallthru
        _
      // Predicated region
      $region17: #{c2f_forward.4} parent=11 // pred_check
        %p255 = pneg %p167
      $region18: #{c2f_forward.4} parent=11 // pred_check_branch
        %257 = sbr.rel (%p255) target = $region20
      $region19: #{c2f_forward.4} parent=11 // pred_region
        _
      $region20: #{c2f_forward.4} parent=11 // pred_fallthru
        _
      // Predicated region
      $region21: #{c2f_forward.4} parent=11 // pred_check
        %p258 = pneg %p188
      $region22: #{c2f_forward.4} parent=11 // pred_check_branch
        %260 = sbr.rel (%p258) target = $region24
      $region23: #{c2f_forward.4} parent=11 // pred_region
        _
      $region24: #{c2f_forward.4} parent=11 // pred_fallthru
        _
      // Predicated region
      $region25: #{c2f_forward.4} parent=11 // pred_check
        %p261 = pneg %p209
      $region26: #{c2f_forward.4} parent=11 // pred_check_branch
        %263 = sbr.rel (%p261) target = $region28
      $region27: #{c2f_forward.4} parent=11 // pred_region
        _
      $region28: #{c2f_forward.4} parent=11 // pred_fallthru
        _
    $region12: #{c2f_forward.4} parent=5 // pred_fallthru
      _
    %p264 = scmp.lt.s32.totalorder %s13, 2
    // Predicated region
    $region29: #{c2f_forward.4} parent=5 // pred_check
      %p265 = pneg %p264
    $region30: #{c2f_forward.4} parent=5 // pred_check_branch
      %267 = sbr.rel (%p265) target = $region32
    $region31: #{c2f_forward.4} parent=5 // pred_region
      // Predicated region
      $region33: #{c2f_forward.4} parent=31 // pred_check
        %p268 = pneg %p47
      $region34: #{c2f_forward.4} parent=31 // pred_check_branch
        %270 = sbr.rel (%p268) target = $region36
      $region35: #{c2f_forward.4} parent=31 // pred_region
        %s271 = smul.u32 16, %s21
        %p272 = scmp.lt.s32.totalorder %s20, 1
        %s273 = scalar_select %p272, %s20, 1
        %p274 = scmp.lt.s32.totalorder %s271, 15
        %s275 = scalar_select %p274, %s271, 15
        %s276 = smul.addr %s275, 2
        %s277 = smul.addr %s273, 32
        %s278 = sadd.s32 %s276, %s277
        %s279 = smul.addr %s278, 8
        %s280 = scalar_lea.vmem %s0, %s279
        %s281 = smul.u32 16, %s21
      $region36: #{c2f_forward.4} parent=31 // pred_fallthru
        _
      // Predicated region
      $region37: #{c2f_forward.4} parent=31 // pred_check
        %p282 = pneg %p83
      $region38: #{c2f_forward.4} parent=31 // pred_check_branch
        %284 = sbr.rel (%p282) target = $region40
      $region39: #{c2f_forward.4} parent=31 // pred_region
        %s285 = smul.u32 %s21, 8
        %s286 = ssub.s32 %s285, 1
        %p287 = scmp.gt.s32.totalorder %s286, 0
        %s288 = scalar_select %p287, %s286, 0
        %s289 = smul.u32 2, %s288
        %p290 = scmp.lt.s32.totalorder %s20, 1
        %s291 = scalar_select %p290, %s20, 1
        %p292 = scmp.lt.s32.totalorder %s289, 15
        %s293 = scalar_select %p292, %s289, 15
        %s294 = smul.addr %s293, 2
        %s295 = smul.addr %s291, 32
        %s296 = sadd.s32 %s294, %s295
        %s297 = smul.addr %s296, 8
        %s298 = scalar_lea.vmem %s1, %s297
        %s299 = smul.u32 %s21, 8
        %s300 = ssub.s32 %s299, 1
        %p301 = scmp.gt.s32.totalorder %s300, 0
        %s302 = scalar_select %p301, %s300, 0
        %s303 = smul.u32 2, %s302
      $region40: #{c2f_forward.4} parent=31 // pred_fallthru
        _
      // Predicated region
      $region41: #{c2f_forward.4} parent=31 // pred_check
        %p304 = pneg %p119
      $region42: #{c2f_forward.4} parent=31 // pred_check_branch
        %306 = sbr.rel (%p304) target = $region44
      $region43: #{c2f_forward.4} parent=31 // pred_region
        %s307 = sadd.s32 %s21, 1
        %s308 = smul.u32 %s307, 8
        %p309 = scmp.lt.s32.totalorder %s308, 7
        %s310 = scalar_select %p309, %s308, 7
        %s311 = smul.u32 2, %s310
        %p312 = scmp.lt.s32.totalorder %s20, 1
        %s313 = scalar_select %p312, %s20, 1
        %p314 = scmp.lt.s32.totalorder %s311, 15
        %s315 = scalar_select %p314, %s311, 15
        %s316 = smul.addr %s315, 2
        %s317 = smul.addr %s313, 32
        %s318 = sadd.s32 %s316, %s317
        %s319 = smul.addr %s318, 8
        %s320 = scalar_lea.vmem %s2, %s319
        %s321 = sadd.s32 %s21, 1
        %s322 = smul.u32 %s321, 8
        %p323 = scmp.lt.s32.totalorder %s322, 7
        %s324 = scalar_select %p323, %s322, 7
        %s325 = smul.u32 2, %s324
      $region44: #{c2f_forward.4} parent=31 // pred_fallthru
        _
    $region32: #{c2f_forward.4} parent=5 // pred_fallthru
      _
    %p326 = scmp.le.s32.totalorder 1, %s13
    %p327 = scmp.lt.s32.totalorder %s13, 3
    %p328 = pnand %p326, %p327
    %p329 = pneg %p328
    // Predicated region
    $region45: #{c2f_forward.4} parent=5 // pred_check
      _
    $region46: #{c2f_forward.4} parent=5 // pred_check_branch
      %331 = sbr.rel (%p328) target = $region48
    $region47: #{c2f_forward.4} parent=5 // pred_region
      %s332 = ssub.s32 %s13, 1
      %s333 = smul.u32 16, %s23
      %p334 = scmp.lt.s32.totalorder %s22, 1
      %s335 = scalar_select %p334, %s22, 1
      %p336 = scmp.lt.s32.totalorder %s333, 15
      %s337 = scalar_select %p336, %s333, 15
      %s338 = smul.addr %s337, 2
      %s339 = smul.addr %s335, 32
      %s340 = sadd.s32 %s338, %s339
      %s341 = smul.addr %s340, 8
      %s342 = scalar_lea.vmem %s0, %s341
      %p343 = pneg %p53
      %p344 = pneg %p50
      %s345 = smul.u32 %s23, 8
      %s346 = ssub.s32 %s345, 1
      %p347 = scmp.gt.s32.totalorder %s346, 0
      %s348 = scalar_select %p347, %s346, 0
      %s349 = smul.u32 2, %s348
      %p350 = scmp.lt.s32.totalorder %s22, 1
      %s351 = scalar_select %p350, %s22, 1
      %p352 = scmp.lt.s32.totalorder %s349, 15
      %s353 = scalar_select %p352, %s349, 15
      %s354 = smul.addr %s353, 2
      %s355 = smul.addr %s351, 32
      %s356 = sadd.s32 %s354, %s355
      %s357 = smul.addr %s356, 8
      %s358 = scalar_lea.vmem %s1, %s357
      %p359 = pneg %p89
      %p360 = pneg %p86
      %s361 = sadd.s32 %s23, 1
      %s362 = smul.u32 %s361, 8
      %p363 = scmp.lt.s32.totalorder %s362, 7
      %s364 = scalar_select %p363, %s362, 7
      %s365 = smul.u32 2, %s364
      %p366 = scmp.lt.s32.totalorder %s22, 1
      %s367 = scalar_select %p366, %s22, 1
      %p368 = scmp.lt.s32.totalorder %s365, 15
      %s369 = scalar_select %p368, %s365, 15
      %s370 = smul.addr %s369, 2
      %s371 = smul.addr %s367, 32
      %s372 = sadd.s32 %s370, %s371
      %s373 = smul.addr %s372, 8
      %s374 = scalar_lea.vmem %s2, %s373
      %p375 = pneg %p125
      %p376 = pneg %p122
      %p377 = pneg %p146
      %p378 = pneg %p143
      %p379 = pneg %p167
      %p380 = pneg %p164
      %p381 = pneg %p188
      %p382 = pneg %p185
      %p383 = pneg %p209
      %p384 = pneg %p206
      %p385 = pneg %p237
      %p386 = pneg %p234
      %s387 = smul.u32 16, %s23
      %p388 = scmp.lt.s32.totalorder %s22, 1
      %s389 = scalar_select %p388, %s22, 1
      %p390 = scmp.lt.s32.totalorder %s387, 15
      %s391 = scalar_select %p390, %s387, 15
      %s392 = smul.addr %s391, 2
      %s393 = smul.addr %s389, 32
      %s394 = sadd.s32 %s392, %s393
      %s395 = smul.addr %s394, 8
      %s396 = scalar_lea.vmem %s7, %s395
      %s397 = smul.u32 16, %s23
      %p398 = scmp.lt.s32.totalorder %s22, 1
      %s399 = scalar_select %p398, %s22, 1
      %p400 = scmp.lt.s32.totalorder %s397, 15
      %s401 = scalar_select %p400, %s397, 15
      %s402 = smul.addr %s401, 2
      %s403 = smul.addr %s399, 32
      %s404 = sadd.s32 %s402, %s403
      %s405 = smul.addr %s404, 8
      %s406 = scalar_lea.vmem %s0, %s405
      %s407 = smul.u32 16, %s23
      %s408 = smul.u32 %s23, 8
      %s409 = ssub.s32 %s408, 1
      %p410 = scmp.gt.s32.totalorder %s409, 0
      %s411 = scalar_select %p410, %s409, 0
      %s412 = smul.u32 2, %s411
      %p413 = scmp.lt.s32.totalorder %s22, 1
      %s414 = scalar_select %p413, %s22, 1
      %p415 = scmp.lt.s32.totalorder %s412, 15
      %s416 = scalar_select %p415, %s412, 15
      %s417 = smul.addr %s416, 2
      %s418 = smul.addr %s414, 32
      %s419 = sadd.s32 %s417, %s418
      %s420 = smul.addr %s419, 8
      %s421 = scalar_lea.vmem %s1, %s420
      %s422 = smul.u32 %s23, 8
      %s423 = ssub.s32 %s422, 1
      %p424 = scmp.gt.s32.totalorder %s423, 0
      %s425 = scalar_select %p424, %s423, 0
      %s426 = smul.u32 2, %s425
      %s427 = sadd.s32 %s23, 1
      %s428 = smul.u32 %s427, 8
      %p429 = scmp.lt.s32.totalorder %s428, 7
      %s430 = scalar_select %p429, %s428, 7
      %s431 = smul.u32 2, %s430
      %p432 = scmp.lt.s32.totalorder %s22, 1
      %s433 = scalar_select %p432, %s22, 1
      %p434 = scmp.lt.s32.totalorder %s431, 15
      %s435 = scalar_select %p434, %s431, 15
      %s436 = smul.addr %s435, 2
      %s437 = smul.addr %s433, 32
      %s438 = sadd.s32 %s436, %s437
      %s439 = smul.addr %s438, 8
      %s440 = scalar_lea.vmem %s2, %s439
      %s441 = sadd.s32 %s23, 1
      %s442 = smul.u32 %s441, 8
      %p443 = scmp.lt.s32.totalorder %s442, 7
      %s444 = scalar_select %p443, %s442, 7
      %s445 = smul.u32 2, %s444
      %s446 = smul.u32 16, %s23
      %p447 = scmp.lt.s32.totalorder %s22, 1
      %s448 = scalar_select %p447, %s22, 1
      %p449 = scmp.lt.s32.totalorder %s446, 15
      %s450 = scalar_select %p449, %s446, 15
      %s451 = smul.addr %s450, 2
      %s452 = smul.addr %s448, 32
      %s453 = sadd.s32 %s451, %s452
      %s454 = smul.addr %s453, 8
      %s455 = scalar_lea.vmem %s7, %s454
      %s456 = smul.u32 16, %s23
      %v457 = vld [vmem:[%s406] sm:$0xff]
      %v458 = vld [vmem:[%s406 + $0x8] sm:$0xff]
      %v459 = vld [vmem:[%s406 + $0x10] sm:$0xff]
      %v460 = vld [vmem:[%s406 + $0x18] sm:$0xff]
      %v461 = vld [vmem:[%s406 + $0x20] sm:$0xff]
      %v462 = vld [vmem:[%s406 + $0x28] sm:$0xff]
      %v463 = vld [vmem:[%s406 + $0x30] sm:$0xff]
      %v464 = vld [vmem:[%s406 + $0x38] sm:$0xff]
      %v465 = vld [vmem:[%s406 + $0x40] sm:$0xff]
      %v466 = vld [vmem:[%s406 + $0x48] sm:$0xff]
      %v467 = vld [vmem:[%s406 + $0x50] sm:$0xff]
      %v468 = vld [vmem:[%s406 + $0x58] sm:$0xff]
      %v469 = vld [vmem:[%s406 + $0x60] sm:$0xff]
      %v470 = vld [vmem:[%s406 + $0x68] sm:$0xff]
      %v471 = vld [vmem:[%s406 + $0x70] sm:$0xff]
      %v472 = vld [vmem:[%s406 + $0x78] sm:$0xff]
      %v473 = vld [vmem:[%s406 + $0x80] sm:$0xff]
      %v474 = vld [vmem:[%s406 + $0x88] sm:$0xff]
      %v475 = vld [vmem:[%s406 + $0x90] sm:$0xff]
      %v476 = vld [vmem:[%s406 + $0x98] sm:$0xff]
      %v477 = vld [vmem:[%s406 + $0xa0] sm:$0xff]
      %v478 = vld [vmem:[%s406 + $0xa8] sm:$0xff]
      %v479 = vld [vmem:[%s406 + $0xb0] sm:$0xff]
      %v480 = vld [vmem:[%s406 + $0xb8] sm:$0xff]
      %v481 = vld [vmem:[%s406 + $0xc0] sm:$0xff]
      %v482 = vld [vmem:[%s406 + $0xc8] sm:$0xff]
      %v483 = vld [vmem:[%s406 + $0xd0] sm:$0xff]
      %v484 = vld [vmem:[%s406 + $0xd8] sm:$0xff]
      %v485 = vld [vmem:[%s406 + $0xe0] sm:$0xff]
      %v486 = vld [vmem:[%s406 + $0xe8] sm:$0xff]
      %v487 = vld [vmem:[%s406 + $0xf0] sm:$0xff]
      %v488 = vld [vmem:[%s406 + $0xf8] sm:$0xff]
      %v489 = vld [vmem:[%s421] sm:$0xff]
      %v490 = vld [vmem:[%s421 + $0x8] sm:$0xff]
      %v491 = vld [vmem:[%s421 + $0x10] sm:$0xff]
      %v492 = vld [vmem:[%s421 + $0x18] sm:$0xff]
      %v493 = vld [vmem:[%s440] sm:$0xff]
      %v494 = vld [vmem:[%s440 + $0x8] sm:$0xff]
      %v495 = vld [vmem:[%s440 + $0x10] sm:$0xff]
      %v496 = vld [vmem:[%s440 + $0x18] sm:$0xff]
      %p497 = scmp.eq.s32.totalorder %s23, 0
      %s498 = scalar_select %p497, 1, 0
      %v499 = vstv %s498
      %vm500 = vcmp.eq.s32.totalorder %v499, 1
      %v501 = vsel %vm500, 0.0, %v489
      %v502 = vsel %vm500, 0.0, %v490
      %v503 = vsel %vm500, 0.0, %v491
      %v504 = vsel %vm500, 0.0, %v492
      %v505 = vsel %vm500, 0.0, %v493
      %v506 = vsel %vm500, 0.0, %v494
      %v507 = vsel %vm500, 0.0, %v495
      %v508 = vsel %vm500, 0.0, %v496
      %v509 = vld [vmem:[%s3] sm:$0xff]
      %v510 = vld [vmem:[%s3 + $0x8] sm:$0xff]
      %v511 = vld [vmem:[%s3 + $0x10] sm:$0xff]
      %v512 = vld [vmem:[%s3 + $0x18] sm:$0xff]
      %v513 = vld [vmem:[%s3 + $0x20] sm:$0xff]
      %v514 = vld [vmem:[%s3 + $0x28] sm:$0xff]
      %v515 = vld [vmem:[%s3 + $0x30] sm:$0xff]
      %v516 = vld [vmem:[%s3 + $0x38] sm:$0xff]
      %v517 = vld [vmem:[%s3 + $0x40] sm:$0xff]
      %v518 = vld [vmem:[%s4] sm:$0x1]
      %vm559 = vcmask 1040384
      %v560 = vrot.slane %v501, 7
      %v561 = vrot.slane %v502, 7
      %v562 = vsel %vm559, %v560, %v561
      %v563 = vrot.slane %v503, 7
      %v564 = vrot.slane %v504, 7
      %v565 = vsel %vm559, %v563, %v564
      %v566 = vrot.slane %v457, 7
      %v567 = vrot.slane %v458, 7
      %v568 = vsel %vm559, %v566, %v567
      %v569 = vrot.slane %v459, 7
      %v570 = vrot.slane %v460, 7
      %v571 = vsel %vm559, %v569, %v570
      %v572 = vrot.slane %v461, 7
      %v573 = vrot.slane %v462, 7
      %v574 = vsel %vm559, %v572, %v573
      %v575 = vrot.slane %v463, 7
      %v576 = vrot.slane %v464, 7
      %v577 = vsel %vm559, %v575, %v576
      %v578 = vrot.slane %v465, 7
      %v579 = vrot.slane %v466, 7
      %v580 = vsel %vm559, %v578, %v579
      %v581 = vrot.slane %v467, 7
      %v582 = vrot.slane %v468, 7
      %v583 = vsel %vm559, %v581, %v582
      %v584 = vrot.slane %v469, 7
      %v585 = vrot.slane %v470, 7
      %v586 = vsel %vm559, %v584, %v585
      %v587 = vrot.slane %v471, 7
      %v588 = vrot.slane %v472, 7
      %v589 = vsel %vm559, %v587, %v588
      %v590 = vrot.slane %v473, 7
      %v591 = vrot.slane %v474, 7
      %v592 = vsel %vm559, %v590, %v591
      %v593 = vrot.slane %v475, 7
      %v594 = vrot.slane %v476, 7
      %v595 = vsel %vm559, %v593, %v594
      %v596 = vrot.slane %v477, 7
      %v597 = vrot.slane %v478, 7
      %v598 = vsel %vm559, %v596, %v597
      %v599 = vrot.slane %v479, 7
      %v600 = vrot.slane %v480, 7
      %v601 = vsel %vm559, %v599, %v600
      %v602 = vrot.slane %v481, 7
      %v603 = vrot.slane %v482, 7
      %v604 = vsel %vm559, %v602, %v603
      %v605 = vrot.slane %v483, 7
      %v606 = vrot.slane %v484, 7
      %v607 = vsel %vm559, %v605, %v606
      %v608 = vrot.slane %v485, 7
      %v609 = vrot.slane %v486, 7
      %v610 = vsel %vm559, %v608, %v609
      %v611 = vrot.slane %v487, 7
      %v612 = vrot.slane %v488, 7
      %v613 = vsel %vm559, %v611, %v612
      %v614 = vrot.slane %v505, 7
      %v615 = vrot.slane %v506, 7
      %v616 = vsel %vm559, %v614, %v615
      %v617 = vrot.slane %v507, 7
      %v618 = vrot.slane %v508, 7
      %v619 = vsel %vm559, %v617, %v618
      %v658 = vsel %vm559, 0.0, %v560
      %v659 = vsel %vm559, 0.0, %v563
      %v660 = vsel %vm559, 0.0, %v566
      %v661 = vsel %vm559, 0.0, %v569
      %v662 = vsel %vm559, 0.0, %v572
      %v663 = vsel %vm559, 0.0, %v575
      %v664 = vsel %vm559, 0.0, %v578
      %v665 = vsel %vm559, 0.0, %v581
      %v666 = vsel %vm559, 0.0, %v584
      %v667 = vsel %vm559, 0.0, %v587
      %v668 = vsel %vm559, 0.0, %v590
      %v669 = vsel %vm559, 0.0, %v593
      %v670 = vsel %vm559, 0.0, %v596
      %v671 = vsel %vm559, 0.0, %v599
      %v672 = vsel %vm559, 0.0, %v602
      %v673 = vsel %vm559, 0.0, %v605
      %v674 = vsel %vm559, 0.0, %v608
      %v675 = vsel %vm559, 0.0, %v611
      %v676 = vsel %vm559, 0.0, %v614
      %v677 = vsel %vm559, 0.0, %v617
      %vm678 = vcmask 1046528
      %v679 = vrot.slane %v501, 1
      %v680 = vrot.slane %v502, 1
      %v681 = vsel %vm678, %v679, %v680
      %v682 = vrot.slane %v503, 1
      %v683 = vrot.slane %v504, 1
      %v684 = vsel %vm678, %v682, %v683
      %v685 = vrot.slane %v457, 1
      %v686 = vrot.slane %v458, 1
      %v687 = vsel %vm678, %v685, %v686
      %v688 = vrot.slane %v459, 1
      %v689 = vrot.slane %v460, 1
      %v690 = vsel %vm678, %v688, %v689
      %v691 = vrot.slane %v461, 1
      %v692 = vrot.slane %v462, 1
      %v693 = vsel %vm678, %v691, %v692
      %v694 = vrot.slane %v463, 1
      %v695 = vrot.slane %v464, 1
      %v696 = vsel %vm678, %v694, %v695
      %v697 = vrot.slane %v465, 1
      %v698 = vrot.slane %v466, 1
      %v699 = vsel %vm678, %v697, %v698
      %v700 = vrot.slane %v467, 1
      %v701 = vrot.slane %v468, 1
      %v702 = vsel %vm678, %v700, %v701
      %v703 = vrot.slane %v469, 1
      %v704 = vrot.slane %v470, 1
      %v705 = vsel %vm678, %v703, %v704
      %v706 = vrot.slane %v471, 1
      %v707 = vrot.slane %v472, 1
      %v708 = vsel %vm678, %v706, %v707
      %v709 = vrot.slane %v473, 1
      %v710 = vrot.slane %v474, 1
      %v711 = vsel %vm678, %v709, %v710
      %v712 = vrot.slane %v475, 1
      %v713 = vrot.slane %v476, 1
      %v714 = vsel %vm678, %v712, %v713
      %v715 = vrot.slane %v477, 1
      %v716 = vrot.slane %v478, 1
      %v717 = vsel %vm678, %v715, %v716
      %v718 = vrot.slane %v479, 1
      %v719 = vrot.slane %v480, 1
      %v720 = vsel %vm678, %v718, %v719
      %v721 = vrot.slane %v481, 1
      %v722 = vrot.slane %v482, 1
      %v723 = vsel %vm678, %v721, %v722
      %v724 = vrot.slane %v483, 1
      %v725 = vrot.slane %v484, 1
      %v726 = vsel %vm678, %v724, %v725
      %v727 = vrot.slane %v485, 1
      %v728 = vrot.slane %v486, 1
      %v729 = vsel %vm678, %v727, %v728
      %v730 = vrot.slane %v487, 1
      %v731 = vrot.slane %v488, 1
      %v732 = vsel %vm678, %v730, %v731
      %v733 = vrot.slane %v505, 1
      %v734 = vrot.slane %v506, 1
      %v735 = vsel %vm678, %v733, %v734
      %v736 = vrot.slane %v507, 1
      %v737 = vrot.slane %v508, 1
      %v738 = vsel %vm678, %v736, %v737
      %v759 = vsel %vm678, %v680, 0.0
      %v760 = vsel %vm678, %v683, 0.0
      %v761 = vsel %vm678, %v686, 0.0
      %v762 = vsel %vm678, %v689, 0.0
      %v763 = vsel %vm678, %v692, 0.0
      %v764 = vsel %vm678, %v695, 0.0
      %v765 = vsel %vm678, %v698, 0.0
      %v766 = vsel %vm678, %v701, 0.0
      %v767 = vsel %vm678, %v704, 0.0
      %v768 = vsel %vm678, %v707, 0.0
      %v769 = vsel %vm678, %v710, 0.0
      %v770 = vsel %vm678, %v713, 0.0
      %v771 = vsel %vm678, %v716, 0.0
      %v772 = vsel %vm678, %v719, 0.0
      %v773 = vsel %vm678, %v722, 0.0
      %v774 = vsel %vm678, %v725, 0.0
      %v775 = vsel %vm678, %v728, 0.0
      %v776 = vsel %vm678, %v731, 0.0
      %v777 = vsel %vm678, %v734, 0.0
      %v778 = vsel %vm678, %v737, 0.0
      %779 = vrot.lane.b32.xlu0 %v501, 8
      %v780 = vpop.permute.xlu0 %779
      %781 = vrot.lane.b32.xlu0 %v502, 8
      %v782 = vpop.permute.xlu0 %781
      %783 = vrot.lane.b32.xlu0 %v503, 8
      %v784 = vpop.permute.xlu0 %783
      %785 = vrot.lane.b32.xlu0 %v504, 8
      %v786 = vpop.permute.xlu0 %785
      %787 = vrot.lane.b32.xlu0 %v457, 8
      %v788 = vpop.permute.xlu0 %787
      %789 = vrot.lane.b32.xlu0 %v458, 8
      %v790 = vpop.permute.xlu0 %789
      %791 = vrot.lane.b32.xlu0 %v459, 8
      %v792 = vpop.permute.xlu0 %791
      %793 = vrot.lane.b32.xlu0 %v460, 8
      %v794 = vpop.permute.xlu0 %793
      %795 = vrot.lane.b32.xlu0 %v461, 8
      %v796 = vpop.permute.xlu0 %795
      %797 = vrot.lane.b32.xlu0 %v462, 8
      %v798 = vpop.permute.xlu0 %797
      %799 = vrot.lane.b32.xlu0 %v463, 8
      %v800 = vpop.permute.xlu0 %799
      %801 = vrot.lane.b32.xlu0 %v464, 8
      %v802 = vpop.permute.xlu0 %801
      %803 = vrot.lane.b32.xlu0 %v465, 8
      %v804 = vpop.permute.xlu0 %803
      %805 = vrot.lane.b32.xlu0 %v466, 8
      %v806 = vpop.permute.xlu0 %805
      %807 = vrot.lane.b32.xlu0 %v467, 8
      %v808 = vpop.permute.xlu0 %807
      %809 = vrot.lane.b32.xlu0 %v468, 8
      %v810 = vpop.permute.xlu0 %809
      %811 = vrot.lane.b32.xlu0 %v469, 8
      %v812 = vpop.permute.xlu0 %811
      %813 = vrot.lane.b32.xlu0 %v470, 8
      %v814 = vpop.permute.xlu0 %813
      %815 = vrot.lane.b32.xlu0 %v471, 8
      %v816 = vpop.permute.xlu0 %815
      %817 = vrot.lane.b32.xlu0 %v472, 8
      %v818 = vpop.permute.xlu0 %817
      %819 = vrot.lane.b32.xlu0 %v473, 8
      %v820 = vpop.permute.xlu0 %819
      %821 = vrot.lane.b32.xlu0 %v474, 8
      %v822 = vpop.permute.xlu0 %821
      %823 = vrot.lane.b32.xlu0 %v475, 8
      %v824 = vpop.permute.xlu0 %823
      %825 = vrot.lane.b32.xlu0 %v476, 8
      %v826 = vpop.permute.xlu0 %825
      %827 = vrot.lane.b32.xlu0 %v477, 8
      %v828 = vpop.permute.xlu0 %827
      %829 = vrot.lane.b32.xlu0 %v478, 8
      %v830 = vpop.permute.xlu0 %829
      %831 = vrot.lane.b32.xlu0 %v479, 8
      %v832 = vpop.permute.xlu0 %831
      %833 = vrot.lane.b32.xlu0 %v480, 8
      %v834 = vpop.permute.xlu0 %833
      %835 = vrot.lane.b32.xlu0 %v481, 8
      %v836 = vpop.permute.xlu0 %835
      %837 = vrot.lane.b32.xlu0 %v482, 8
      %v838 = vpop.permute.xlu0 %837
      %839 = vrot.lane.b32.xlu0 %v483, 8
      %v840 = vpop.permute.xlu0 %839
      %841 = vrot.lane.b32.xlu0 %v484, 8
      %v842 = vpop.permute.xlu0 %841
      %843 = vrot.lane.b32.xlu0 %v485, 8
      %v844 = vpop.permute.xlu0 %843
      %845 = vrot.lane.b32.xlu0 %v486, 8
      %v846 = vpop.permute.xlu0 %845
      %847 = vrot.lane.b32.xlu0 %v487, 8
      %v848 = vpop.permute.xlu0 %847
      %849 = vrot.lane.b32.xlu0 %v488, 8
      %v850 = vpop.permute.xlu0 %849
      %905 = vrot.lane.b32.xlu0 %v681, 16
      %v906 = vpop.permute.xlu0 %905
      %907 = vrot.lane.b32.xlu0 %v759, 16
      %v908 = vpop.permute.xlu0 %907
      %909 = vrot.lane.b32.xlu0 %v684, 16
      %v910 = vpop.permute.xlu0 %909
      %911 = vrot.lane.b32.xlu0 %v760, 16
      %v912 = vpop.permute.xlu0 %911
      %913 = vrot.lane.b32.xlu0 %v687, 16
      %v914 = vpop.permute.xlu0 %913
      %915 = vrot.lane.b32.xlu0 %v761, 16
      %v916 = vpop.permute.xlu0 %915
      %917 = vrot.lane.b32.xlu0 %v690, 16
      %v918 = vpop.permute.xlu0 %917
      %919 = vrot.lane.b32.xlu0 %v762, 16
      %v920 = vpop.permute.xlu0 %919
      %921 = vrot.lane.b32.xlu0 %v693, 16
      %v922 = vpop.permute.xlu0 %921
      %923 = vrot.lane.b32.xlu0 %v763, 16
      %v924 = vpop.permute.xlu0 %923
      %925 = vrot.lane.b32.xlu0 %v696, 16
      %v926 = vpop.permute.xlu0 %925
      %927 = vrot.lane.b32.xlu0 %v764, 16
      %v928 = vpop.permute.xlu0 %927
      %929 = vrot.lane.b32.xlu0 %v699, 16
      %v930 = vpop.permute.xlu0 %929
      %931 = vrot.lane.b32.xlu0 %v765, 16
      %v932 = vpop.permute.xlu0 %931
      %933 = vrot.lane.b32.xlu0 %v702, 16
      %v934 = vpop.permute.xlu0 %933
      %935 = vrot.lane.b32.xlu0 %v766, 16
      %v936 = vpop.permute.xlu0 %935
      %937 = vrot.lane.b32.xlu0 %v705, 16
      %v938 = vpop.permute.xlu0 %937
      %939 = vrot.lane.b32.xlu0 %v767, 16
      %v940 = vpop.permute.xlu0 %939
      %941 = vrot.lane.b32.xlu0 %v708, 16
      %v942 = vpop.permute.xlu0 %941
      %943 = vrot.lane.b32.xlu0 %v768, 16
      %v944 = vpop.permute.xlu0 %943
      %945 = vrot.lane.b32.xlu0 %v711, 16
      %v946 = vpop.permute.xlu0 %945
      %947 = vrot.lane.b32.xlu0 %v769, 16
      %v948 = vpop.permute.xlu0 %947
      %949 = vrot.lane.b32.xlu0 %v714, 16
      %v950 = vpop.permute.xlu0 %949
      %951 = vrot.lane.b32.xlu0 %v770, 16
      %v952 = vpop.permute.xlu0 %951
      %953 = vrot.lane.b32.xlu0 %v717, 16
      %v954 = vpop.permute.xlu0 %953
      %955 = vrot.lane.b32.xlu0 %v771, 16
      %v956 = vpop.permute.xlu0 %955
      %957 = vrot.lane.b32.xlu0 %v720, 16
      %v958 = vpop.permute.xlu0 %957
      %959 = vrot.lane.b32.xlu0 %v772, 16
      %v960 = vpop.permute.xlu0 %959
      %961 = vrot.lane.b32.xlu0 %v723, 16
      %v962 = vpop.permute.xlu0 %961
      %963 = vrot.lane.b32.xlu0 %v773, 16
      %v964 = vpop.permute.xlu0 %963
      %965 = vrot.lane.b32.xlu0 %v726, 16
      %v966 = vpop.permute.xlu0 %965
      %967 = vrot.lane.b32.xlu0 %v774, 16
      %v968 = vpop.permute.xlu0 %967
      %969 = vrot.lane.b32.xlu0 %v729, 16
      %v970 = vpop.permute.xlu0 %969
      %971 = vrot.lane.b32.xlu0 %v775, 16
      %v972 = vpop.permute.xlu0 %971
      %973 = vrot.lane.b32.xlu0 %v732, 16
      %v974 = vpop.permute.xlu0 %973
      %975 = vrot.lane.b32.xlu0 %v776, 16
      %v976 = vpop.permute.xlu0 %975
      %1031 = vrot.lane.b32.xlu0 %v659, 24
      %v1032 = vpop.permute.xlu0 %1031
      %1033 = vrot.lane.b32.xlu0 %v565, 24
      %v1034 = vpop.permute.xlu0 %1033
      %1035 = vrot.lane.b32.xlu0 %v660, 24
      %v1036 = vpop.permute.xlu0 %1035
      %1037 = vrot.lane.b32.xlu0 %v568, 24
      %v1038 = vpop.permute.xlu0 %1037
      %1039 = vrot.lane.b32.xlu0 %v661, 24
      %v1040 = vpop.permute.xlu0 %1039
      %1041 = vrot.lane.b32.xlu0 %v571, 24
      %v1042 = vpop.permute.xlu0 %1041
      %1043 = vrot.lane.b32.xlu0 %v662, 24
      %v1044 = vpop.permute.xlu0 %1043
      %1045 = vrot.lane.b32.xlu0 %v574, 24
      %v1046 = vpop.permute.xlu0 %1045
      %1047 = vrot.lane.b32.xlu0 %v663, 24
      %v1048 = vpop.permute.xlu0 %1047
      %1049 = vrot.lane.b32.xlu0 %v577, 24
      %v1050 = vpop.permute.xlu0 %1049
      %1051 = vrot.lane.b32.xlu0 %v664, 24
      %v1052 = vpop.permute.xlu0 %1051
      %1053 = vrot.lane.b32.xlu0 %v580, 24
      %v1054 = vpop.permute.xlu0 %1053
      %1055 = vrot.lane.b32.xlu0 %v665, 24
      %v1056 = vpop.permute.xlu0 %1055
      %1057 = vrot.lane.b32.xlu0 %v583, 24
      %v1058 = vpop.permute.xlu0 %1057
      %1059 = vrot.lane.b32.xlu0 %v666, 24
      %v1060 = vpop.permute.xlu0 %1059
      %1061 = vrot.lane.b32.xlu0 %v586, 24
      %v1062 = vpop.permute.xlu0 %1061
      %1063 = vrot.lane.b32.xlu0 %v667, 24
      %v1064 = vpop.permute.xlu0 %1063
      %1065 = vrot.lane.b32.xlu0 %v589, 24
      %v1066 = vpop.permute.xlu0 %1065
      %1067 = vrot.lane.b32.xlu0 %v668, 24
      %v1068 = vpop.permute.xlu0 %1067
      %1069 = vrot.lane.b32.xlu0 %v592, 24
      %v1070 = vpop.permute.xlu0 %1069
      %1071 = vrot.lane.b32.xlu0 %v669, 24
      %v1072 = vpop.permute.xlu0 %1071
      %1073 = vrot.lane.b32.xlu0 %v595, 24
      %v1074 = vpop.permute.xlu0 %1073
      %1075 = vrot.lane.b32.xlu0 %v670, 24
      %v1076 = vpop.permute.xlu0 %1075
      %1077 = vrot.lane.b32.xlu0 %v598, 24
      %v1078 = vpop.permute.xlu0 %1077
      %1079 = vrot.lane.b32.xlu0 %v671, 24
      %v1080 = vpop.permute.xlu0 %1079
      %1081 = vrot.lane.b32.xlu0 %v601, 24
      %v1082 = vpop.permute.xlu0 %1081
      %1083 = vrot.lane.b32.xlu0 %v672, 24
      %v1084 = vpop.permute.xlu0 %1083
      %1085 = vrot.lane.b32.xlu0 %v604, 24
      %v1086 = vpop.permute.xlu0 %1085
      %1087 = vrot.lane.b32.xlu0 %v673, 24
      %v1088 = vpop.permute.xlu0 %1087
      %1089 = vrot.lane.b32.xlu0 %v607, 24
      %v1090 = vpop.permute.xlu0 %1089
      %1091 = vrot.lane.b32.xlu0 %v674, 24
      %v1092 = vpop.permute.xlu0 %1091
      %1093 = vrot.lane.b32.xlu0 %v610, 24
      %v1094 = vpop.permute.xlu0 %1093
      %1095 = vrot.lane.b32.xlu0 %v675, 24
      %v1096 = vpop.permute.xlu0 %1095
      %1097 = vrot.lane.b32.xlu0 %v613, 24
      %v1098 = vpop.permute.xlu0 %1097
      %1099 = vrot.lane.b32.xlu0 %v676, 24
      %v1100 = vpop.permute.xlu0 %1099
      %1101 = vrot.lane.b32.xlu0 %v616, 24
      %v1102 = vpop.permute.xlu0 %1101
      %1139 = vrot.lane.b32.xlu0 %v503, 32
      %v1140 = vpop.permute.xlu0 %1139
      %1141 = vrot.lane.b32.xlu0 %v504, 32
      %v1142 = vpop.permute.xlu0 %1141
      %1143 = vrot.lane.b32.xlu0 %v457, 32
      %v1144 = vpop.permute.xlu0 %1143
      %1145 = vrot.lane.b32.xlu0 %v458, 32
      %v1146 = vpop.permute.xlu0 %1145
      %1147 = vrot.lane.b32.xlu0 %v459, 32
      %v1148 = vpop.permute.xlu0 %1147
      %1149 = vrot.lane.b32.xlu0 %v460, 32
      %v1150 = vpop.permute.xlu0 %1149
      %1151 = vrot.lane.b32.xlu0 %v461, 32
      %v1152 = vpop.permute.xlu0 %1151
      %1153 = vrot.lane.b32.xlu0 %v462, 32
      %v1154 = vpop.permute.xlu0 %1153
      %1155 = vrot.lane.b32.xlu0 %v463, 32
      %v1156 = vpop.permute.xlu0 %1155
      %1157 = vrot.lane.b32.xlu0 %v464, 32
      %v1158 = vpop.permute.xlu0 %1157
      %1159 = vrot.lane.b32.xlu0 %v465, 32
      %v1160 = vpop.permute.xlu0 %1159
      %1161 = vrot.lane.b32.xlu0 %v466, 32
      %v1162 = vpop.permute.xlu0 %1161
      %1163 = vrot.lane.b32.xlu0 %v467, 32
      %v1164 = vpop.permute.xlu0 %1163
      %1165 = vrot.lane.b32.xlu0 %v468, 32
      %v1166 = vpop.permute.xlu0 %1165
      %1167 = vrot.lane.b32.xlu0 %v469, 32
      %v1168 = vpop.permute.xlu0 %1167
      %1169 = vrot.lane.b32.xlu0 %v470, 32
      %v1170 = vpop.permute.xlu0 %1169
      %1171 = vrot.lane.b32.xlu0 %v471, 32
      %v1172 = vpop.permute.xlu0 %1171
      %1173 = vrot.lane.b32.xlu0 %v472, 32
      %v1174 = vpop.permute.xlu0 %1173
      %1175 = vrot.lane.b32.xlu0 %v473, 32
      %v1176 = vpop.permute.xlu0 %1175
      %1177 = vrot.lane.b32.xlu0 %v474, 32
      %v1178 = vpop.permute.xlu0 %1177
      %1179 = vrot.lane.b32.xlu0 %v475, 32
      %v1180 = vpop.permute.xlu0 %1179
      %1181 = vrot.lane.b32.xlu0 %v476, 32
      %v1182 = vpop.permute.xlu0 %1181
      %1183 = vrot.lane.b32.xlu0 %v477, 32
      %v1184 = vpop.permute.xlu0 %1183
      %1185 = vrot.lane.b32.xlu0 %v478, 32
      %v1186 = vpop.permute.xlu0 %1185
      %1187 = vrot.lane.b32.xlu0 %v479, 32
      %v1188 = vpop.permute.xlu0 %1187
      %1189 = vrot.lane.b32.xlu0 %v480, 32
      %v1190 = vpop.permute.xlu0 %1189
      %1191 = vrot.lane.b32.xlu0 %v481, 32
      %v1192 = vpop.permute.xlu0 %1191
      %1193 = vrot.lane.b32.xlu0 %v482, 32
      %v1194 = vpop.permute.xlu0 %1193
      %1195 = vrot.lane.b32.xlu0 %v483, 32
      %v1196 = vpop.permute.xlu0 %1195
      %1197 = vrot.lane.b32.xlu0 %v484, 32
      %v1198 = vpop.permute.xlu0 %1197
      %1199 = vrot.lane.b32.xlu0 %v485, 32
      %v1200 = vpop.permute.xlu0 %1199
      %1201 = vrot.lane.b32.xlu0 %v486, 32
      %v1202 = vpop.permute.xlu0 %1201
      %1203 = vrot.lane.b32.xlu0 %v487, 32
      %v1204 = vpop.permute.xlu0 %1203
      %1205 = vrot.lane.b32.xlu0 %v488, 32
      %v1206 = vpop.permute.xlu0 %1205
      %1207 = vrot.lane.b32.xlu0 %v505, 32
      %v1208 = vpop.permute.xlu0 %1207
      %1209 = vrot.lane.b32.xlu0 %v506, 32
      %v1210 = vpop.permute.xlu0 %1209
      %1248 = vrot.lane.b32.xlu0 %v684, 40
      %v1249 = vpop.permute.xlu0 %1248
      %1250 = vrot.lane.b32.xlu0 %v760, 40
      %v1251 = vpop.permute.xlu0 %1250
      %1252 = vrot.lane.b32.xlu0 %v687, 40
      %v1253 = vpop.permute.xlu0 %1252
      %1254 = vrot.lane.b32.xlu0 %v761, 40
      %v1255 = vpop.permute.xlu0 %1254
      %1256 = vrot.lane.b32.xlu0 %v690, 40
      %v1257 = vpop.permute.xlu0 %1256
      %1258 = vrot.lane.b32.xlu0 %v762, 40
      %v1259 = vpop.permute.xlu0 %1258
      %1260 = vrot.lane.b32.xlu0 %v693, 40
      %v1261 = vpop.permute.xlu0 %1260
      %1262 = vrot.lane.b32.xlu0 %v763, 40
      %v1263 = vpop.permute.xlu0 %1262
      %1264 = vrot.lane.b32.xlu0 %v696, 40
      %v1265 = vpop.permute.xlu0 %1264
      %1266 = vrot.lane.b32.xlu0 %v764, 40
      %v1267 = vpop.permute.xlu0 %1266
      %1268 = vrot.lane.b32.xlu0 %v699, 40
      %v1269 = vpop.permute.xlu0 %1268
      %1270 = vrot.lane.b32.xlu0 %v765, 40
      %v1271 = vpop.permute.xlu0 %1270
      %1272 = vrot.lane.b32.xlu0 %v702, 40
      %v1273 = vpop.permute.xlu0 %1272
      %1274 = vrot.lane.b32.xlu0 %v766, 40
      %v1275 = vpop.permute.xlu0 %1274
      %1276 = vrot.lane.b32.xlu0 %v705, 40
      %v1277 = vpop.permute.xlu0 %1276
      %1278 = vrot.lane.b32.xlu0 %v767, 40
      %v1279 = vpop.permute.xlu0 %1278
      %1280 = vrot.lane.b32.xlu0 %v708, 40
      %v1281 = vpop.permute.xlu0 %1280
      %1282 = vrot.lane.b32.xlu0 %v768, 40
      %v1283 = vpop.permute.xlu0 %1282
      %1284 = vrot.lane.b32.xlu0 %v711, 40
      %v1285 = vpop.permute.xlu0 %1284
      %1286 = vrot.lane.b32.xlu0 %v769, 40
      %v1287 = vpop.permute.xlu0 %1286
      %1288 = vrot.lane.b32.xlu0 %v714, 40
      %v1289 = vpop.permute.xlu0 %1288
      %1290 = vrot.lane.b32.xlu0 %v770, 40
      %v1291 = vpop.permute.xlu0 %1290
      %1292 = vrot.lane.b32.xlu0 %v717, 40
      %v1293 = vpop.permute.xlu0 %1292
      %1294 = vrot.lane.b32.xlu0 %v771, 40
      %v1295 = vpop.permute.xlu0 %1294
      %1296 = vrot.lane.b32.xlu0 %v720, 40
      %v1297 = vpop.permute.xlu0 %1296
      %1298 = vrot.lane.b32.xlu0 %v772, 40
      %v1299 = vpop.permute.xlu0 %1298
      %1300 = vrot.lane.b32.xlu0 %v723, 40
      %v1301 = vpop.permute.xlu0 %1300
      %1302 = vrot.lane.b32.xlu0 %v773, 40
      %v1303 = vpop.permute.xlu0 %1302
      %1304 = vrot.lane.b32.xlu0 %v726, 40
      %v1305 = vpop.permute.xlu0 %1304
      %1306 = vrot.lane.b32.xlu0 %v774, 40
      %v1307 = vpop.permute.xlu0 %1306
      %1308 = vrot.lane.b32.xlu0 %v729, 40
      %v1309 = vpop.permute.xlu0 %1308
      %1310 = vrot.lane.b32.xlu0 %v775, 40
      %v1311 = vpop.permute.xlu0 %1310
      %1312 = vrot.lane.b32.xlu0 %v732, 40
      %v1313 = vpop.permute.xlu0 %1312
      %1314 = vrot.lane.b32.xlu0 %v776, 40
      %v1315 = vpop.permute.xlu0 %1314
      %1316 = vrot.lane.b32.xlu0 %v735, 40
      %v1317 = vpop.permute.xlu0 %1316
      %1318 = vrot.lane.b32.xlu0 %v777, 40
      %v1319 = vpop.permute.xlu0 %1318
      %1357 = vrot.lane.b32.xlu0 %v660, 48
      %v1358 = vpop.permute.xlu0 %1357
      %1359 = vrot.lane.b32.xlu0 %v568, 48
      %v1360 = vpop.permute.xlu0 %1359
      %1361 = vrot.lane.b32.xlu0 %v661, 48
      %v1362 = vpop.permute.xlu0 %1361
      %1363 = vrot.lane.b32.xlu0 %v571, 48
      %v1364 = vpop.permute.xlu0 %1363
      %1365 = vrot.lane.b32.xlu0 %v662, 48
      %v1366 = vpop.permute.xlu0 %1365
      %1367 = vrot.lane.b32.xlu0 %v574, 48
      %v1368 = vpop.permute.xlu0 %1367
      %1369 = vrot.lane.b32.xlu0 %v663, 48
      %v1370 = vpop.permute.xlu0 %1369
      %1371 = vrot.lane.b32.xlu0 %v577, 48
      %v1372 = vpop.permute.xlu0 %1371
      %1373 = vrot.lane.b32.xlu0 %v664, 48
      %v1374 = vpop.permute.xlu0 %1373
      %1375 = vrot.lane.b32.xlu0 %v580, 48
      %v1376 = vpop.permute.xlu0 %1375
      %1377 = vrot.lane.b32.xlu0 %v665, 48
      %v1378 = vpop.permute.xlu0 %1377
      %1379 = vrot.lane.b32.xlu0 %v583, 48
      %v1380 = vpop.permute.xlu0 %1379
      %1381 = vrot.lane.b32.xlu0 %v666, 48
      %v1382 = vpop.permute.xlu0 %1381
      %1383 = vrot.lane.b32.xlu0 %v586, 48
      %v1384 = vpop.permute.xlu0 %1383
      %1385 = vrot.lane.b32.xlu0 %v667, 48
      %v1386 = vpop.permute.xlu0 %1385
      %1387 = vrot.lane.b32.xlu0 %v589, 48
      %v1388 = vpop.permute.xlu0 %1387
      %1389 = vrot.lane.b32.xlu0 %v668, 48
      %v1390 = vpop.permute.xlu0 %1389
      %1391 = vrot.lane.b32.xlu0 %v592, 48
      %v1392 = vpop.permute.xlu0 %1391
      %1393 = vrot.lane.b32.xlu0 %v669, 48
      %v1394 = vpop.permute.xlu0 %1393
      %1395 = vrot.lane.b32.xlu0 %v595, 48
      %v1396 = vpop.permute.xlu0 %1395
      %1397 = vrot.lane.b32.xlu0 %v670, 48
      %v1398 = vpop.permute.xlu0 %1397
      %1399 = vrot.lane.b32.xlu0 %v598, 48
      %v1400 = vpop.permute.xlu0 %1399
      %1401 = vrot.lane.b32.xlu0 %v671, 48
      %v1402 = vpop.permute.xlu0 %1401
      %1403 = vrot.lane.b32.xlu0 %v601, 48
      %v1404 = vpop.permute.xlu0 %1403
      %1405 = vrot.lane.b32.xlu0 %v672, 48
      %v1406 = vpop.permute.xlu0 %1405
      %1407 = vrot.lane.b32.xlu0 %v604, 48
      %v1408 = vpop.permute.xlu0 %1407
      %1409 = vrot.lane.b32.xlu0 %v673, 48
      %v1410 = vpop.permute.xlu0 %1409
      %1411 = vrot.lane.b32.xlu0 %v607, 48
      %v1412 = vpop.permute.xlu0 %1411
      %1413 = vrot.lane.b32.xlu0 %v674, 48
      %v1414 = vpop.permute.xlu0 %1413
      %1415 = vrot.lane.b32.xlu0 %v610, 48
      %v1416 = vpop.permute.xlu0 %1415
      %1417 = vrot.lane.b32.xlu0 %v675, 48
      %v1418 = vpop.permute.xlu0 %1417
      %1419 = vrot.lane.b32.xlu0 %v613, 48
      %v1420 = vpop.permute.xlu0 %1419
      %1421 = vrot.lane.b32.xlu0 %v676, 48
      %v1422 = vpop.permute.xlu0 %1421
      %1423 = vrot.lane.b32.xlu0 %v616, 48
      %v1424 = vpop.permute.xlu0 %1423
      %1425 = vrot.lane.b32.xlu0 %v677, 48
      %v1426 = vpop.permute.xlu0 %1425
      %1427 = vrot.lane.b32.xlu0 %v619, 48
      %v1428 = vpop.permute.xlu0 %1427
      %1465 = vrot.lane.b32.xlu0 %v457, 56
      %v1466 = vpop.permute.xlu0 %1465
      %1467 = vrot.lane.b32.xlu0 %v458, 56
      %v1468 = vpop.permute.xlu0 %1467
      %1469 = vrot.lane.b32.xlu0 %v459, 56
      %v1470 = vpop.permute.xlu0 %1469
      %1471 = vrot.lane.b32.xlu0 %v460, 56
      %v1472 = vpop.permute.xlu0 %1471
      %1473 = vrot.lane.b32.xlu0 %v461, 56
      %v1474 = vpop.permute.xlu0 %1473
      %1475 = vrot.lane.b32.xlu0 %v462, 56
      %v1476 = vpop.permute.xlu0 %1475
      %1477 = vrot.lane.b32.xlu0 %v463, 56
      %v1478 = vpop.permute.xlu0 %1477
      %1479 = vrot.lane.b32.xlu0 %v464, 56
      %v1480 = vpop.permute.xlu0 %1479
      %1481 = vrot.lane.b32.xlu0 %v465, 56
      %v1482 = vpop.permute.xlu0 %1481
      %1483 = vrot.lane.b32.xlu0 %v466, 56
      %v1484 = vpop.permute.xlu0 %1483
      %1485 = vrot.lane.b32.xlu0 %v467, 56
      %v1486 = vpop.permute.xlu0 %1485
      %1487 = vrot.lane.b32.xlu0 %v468, 56
      %v1488 = vpop.permute.xlu0 %1487
      %1489 = vrot.lane.b32.xlu0 %v469, 56
      %v1490 = vpop.permute.xlu0 %1489
      %1491 = vrot.lane.b32.xlu0 %v470, 56
      %v1492 = vpop.permute.xlu0 %1491
      %1493 = vrot.lane.b32.xlu0 %v471, 56
      %v1494 = vpop.permute.xlu0 %1493
      %1495 = vrot.lane.b32.xlu0 %v472, 56
      %v1496 = vpop.permute.xlu0 %1495
      %1497 = vrot.lane.b32.xlu0 %v473, 56
      %v1498 = vpop.permute.xlu0 %1497
      %1499 = vrot.lane.b32.xlu0 %v474, 56
      %v1500 = vpop.permute.xlu0 %1499
      %1501 = vrot.lane.b32.xlu0 %v475, 56
      %v1502 = vpop.permute.xlu0 %1501
      %1503 = vrot.lane.b32.xlu0 %v476, 56
      %v1504 = vpop.permute.xlu0 %1503
      %1505 = vrot.lane.b32.xlu0 %v477, 56
      %v1506 = vpop.permute.xlu0 %1505
      %1507 = vrot.lane.b32.xlu0 %v478, 56
      %v1508 = vpop.permute.xlu0 %1507
      %1509 = vrot.lane.b32.xlu0 %v479, 56
      %v1510 = vpop.permute.xlu0 %1509
      %1511 = vrot.lane.b32.xlu0 %v480, 56
      %v1512 = vpop.permute.xlu0 %1511
      %1513 = vrot.lane.b32.xlu0 %v481, 56
      %v1514 = vpop.permute.xlu0 %1513
      %1515 = vrot.lane.b32.xlu0 %v482, 56
      %v1516 = vpop.permute.xlu0 %1515
      %1517 = vrot.lane.b32.xlu0 %v483, 56
      %v1518 = vpop.permute.xlu0 %1517
      %1519 = vrot.lane.b32.xlu0 %v484, 56
      %v1520 = vpop.permute.xlu0 %1519
      %1521 = vrot.lane.b32.xlu0 %v485, 56
      %v1522 = vpop.permute.xlu0 %1521
      %1523 = vrot.lane.b32.xlu0 %v486, 56
      %v1524 = vpop.permute.xlu0 %1523
      %1525 = vrot.lane.b32.xlu0 %v487, 56
      %v1526 = vpop.permute.xlu0 %1525
      %1527 = vrot.lane.b32.xlu0 %v488, 56
      %v1528 = vpop.permute.xlu0 %1527
      %1529 = vrot.lane.b32.xlu0 %v505, 56
      %v1530 = vpop.permute.xlu0 %1529
      %1531 = vrot.lane.b32.xlu0 %v506, 56
      %v1532 = vpop.permute.xlu0 %1531
      %1533 = vrot.lane.b32.xlu0 %v507, 56
      %v1534 = vpop.permute.xlu0 %1533
      %1535 = vrot.lane.b32.xlu0 %v508, 56
      %v1536 = vpop.permute.xlu0 %1535
      %1574 = vrot.lane.b32.xlu0 %v687, 64
      %v1575 = vpop.permute.xlu0 %1574
      %1576 = vrot.lane.b32.xlu0 %v761, 64
      %v1577 = vpop.permute.xlu0 %1576
      %1578 = vrot.lane.b32.xlu0 %v690, 64
      %v1579 = vpop.permute.xlu0 %1578
      %1580 = vrot.lane.b32.xlu0 %v762, 64
      %v1581 = vpop.permute.xlu0 %1580
      %1582 = vrot.lane.b32.xlu0 %v693, 64
      %v1583 = vpop.permute.xlu0 %1582
      %1584 = vrot.lane.b32.xlu0 %v763, 64
      %v1585 = vpop.permute.xlu0 %1584
      %1586 = vrot.lane.b32.xlu0 %v696, 64
      %v1587 = vpop.permute.xlu0 %1586
      %1588 = vrot.lane.b32.xlu0 %v764, 64
      %v1589 = vpop.permute.xlu0 %1588
      %1590 = vrot.lane.b32.xlu0 %v699, 64
      %v1591 = vpop.permute.xlu0 %1590
      %1592 = vrot.lane.b32.xlu0 %v765, 64
      %v1593 = vpop.permute.xlu0 %1592
      %1594 = vrot.lane.b32.xlu0 %v702, 64
      %v1595 = vpop.permute.xlu0 %1594
      %1596 = vrot.lane.b32.xlu0 %v766, 64
      %v1597 = vpop.permute.xlu0 %1596
      %1598 = vrot.lane.b32.xlu0 %v705, 64
      %v1599 = vpop.permute.xlu0 %1598
      %1600 = vrot.lane.b32.xlu0 %v767, 64
      %v1601 = vpop.permute.xlu0 %1600
      %1602 = vrot.lane.b32.xlu0 %v708, 64
      %v1603 = vpop.permute.xlu0 %1602
      %1604 = vrot.lane.b32.xlu0 %v768, 64
      %v1605 = vpop.permute.xlu0 %1604
      %1606 = vrot.lane.b32.xlu0 %v711, 64
      %v1607 = vpop.permute.xlu0 %1606
      %1608 = vrot.lane.b32.xlu0 %v769, 64
      %v1609 = vpop.permute.xlu0 %1608
      %1610 = vrot.lane.b32.xlu0 %v714, 64
      %v1611 = vpop.permute.xlu0 %1610
      %1612 = vrot.lane.b32.xlu0 %v770, 64
      %v1613 = vpop.permute.xlu0 %1612
      %1614 = vrot.lane.b32.xlu0 %v717, 64
      %v1615 = vpop.permute.xlu0 %1614
      %1616 = vrot.lane.b32.xlu0 %v771, 64
      %v1617 = vpop.permute.xlu0 %1616
      %1618 = vrot.lane.b32.xlu0 %v720, 64
      %v1619 = vpop.permute.xlu0 %1618
      %1620 = vrot.lane.b32.xlu0 %v772, 64
      %v1621 = vpop.permute.xlu0 %1620
      %1622 = vrot.lane.b32.xlu0 %v723, 64
      %v1623 = vpop.permute.xlu0 %1622
      %1624 = vrot.lane.b32.xlu0 %v773, 64
      %v1625 = vpop.permute.xlu0 %1624
      %1626 = vrot.lane.b32.xlu0 %v726, 64
      %v1627 = vpop.permute.xlu0 %1626
      %1628 = vrot.lane.b32.xlu0 %v774, 64
      %v1629 = vpop.permute.xlu0 %1628
      %1630 = vrot.lane.b32.xlu0 %v729, 64
      %v1631 = vpop.permute.xlu0 %1630
      %1632 = vrot.lane.b32.xlu0 %v775, 64
      %v1633 = vpop.permute.xlu0 %1632
      %1634 = vrot.lane.b32.xlu0 %v732, 64
      %v1635 = vpop.permute.xlu0 %1634
      %1636 = vrot.lane.b32.xlu0 %v776, 64
      %v1637 = vpop.permute.xlu0 %1636
      %1638 = vrot.lane.b32.xlu0 %v735, 64
      %v1639 = vpop.permute.xlu0 %1638
      %1640 = vrot.lane.b32.xlu0 %v777, 64
      %v1641 = vpop.permute.xlu0 %1640
      %1642 = vrot.lane.b32.xlu0 %v738, 64
      %v1643 = vpop.permute.xlu0 %1642
      %1644 = vrot.lane.b32.xlu0 %v778, 64
      %v1645 = vpop.permute.xlu0 %1644
      %vm1682 = vcmask 64512
      %v1683 = vsel %vm1682, %v658, %v780
      %v1684 = vsel %vm1682, %v562, %v782
      %v1685 = vsel %vm1682, %v659, %v784
      %v1686 = vsel %vm1682, %v565, %v786
      %v1687 = vsel %vm1682, %v660, %v788
      %v1688 = vsel %vm1682, %v568, %v790
      %v1689 = vsel %vm1682, %v661, %v792
      %v1690 = vsel %vm1682, %v571, %v794
      %v1691 = vsel %vm1682, %v662, %v796
      %v1692 = vsel %vm1682, %v574, %v798
      %v1693 = vsel %vm1682, %v663, %v800
      %v1694 = vsel %vm1682, %v577, %v802
      %v1695 = vsel %vm1682, %v664, %v804
      %v1696 = vsel %vm1682, %v580, %v806
      %v1697 = vsel %vm1682, %v665, %v808
      %v1698 = vsel %vm1682, %v583, %v810
      %v1699 = vsel %vm1682, %v666, %v812
      %v1700 = vsel %vm1682, %v586, %v814
      %v1701 = vsel %vm1682, %v667, %v816
      %v1702 = vsel %vm1682, %v589, %v818
      %v1703 = vsel %vm1682, %v668, %v820
      %v1704 = vsel %vm1682, %v592, %v822
      %v1705 = vsel %vm1682, %v669, %v824
      %v1706 = vsel %vm1682, %v595, %v826
      %v1707 = vsel %vm1682, %v670, %v828
      %v1708 = vsel %vm1682, %v598, %v830
      %v1709 = vsel %vm1682, %v671, %v832
      %v1710 = vsel %vm1682, %v601, %v834
      %v1711 = vsel %vm1682, %v672, %v836
      %v1712 = vsel %vm1682, %v604, %v838
      %v1713 = vsel %vm1682, %v673, %v840
      %v1714 = vsel %vm1682, %v607, %v842
      %v1715 = vsel %vm1682, %v674, %v844
      %v1716 = vsel %vm1682, %v610, %v846
      %v1717 = vsel %vm1682, %v675, %v848
      %v1718 = vsel %vm1682, %v613, %v850
      %vm1719 = vcmask 130048
      %v1720 = vsel %vm1719, %v1683, %v906
      %v1721 = vsel %vm1719, %v1684, %v908
      %v1722 = vsel %vm1719, %v1685, %v910
      %v1723 = vsel %vm1719, %v1686, %v912
      %v1724 = vsel %vm1719, %v1687, %v914
      %v1725 = vsel %vm1719, %v1688, %v916
      %v1726 = vsel %vm1719, %v1689, %v918
      %v1727 = vsel %vm1719, %v1690, %v920
      %v1728 = vsel %vm1719, %v1691, %v922
      %v1729 = vsel %vm1719, %v1692, %v924
      %v1730 = vsel %vm1719, %v1693, %v926
      %v1731 = vsel %vm1719, %v1694, %v928
      %v1732 = vsel %vm1719, %v1695, %v930
      %v1733 = vsel %vm1719, %v1696, %v932
      %v1734 = vsel %vm1719, %v1697, %v934
      %v1735 = vsel %vm1719, %v1698, %v936
      %v1736 = vsel %vm1719, %v1699, %v938
      %v1737 = vsel %vm1719, %v1700, %v940
      %v1738 = vsel %vm1719, %v1701, %v942
      %v1739 = vsel %vm1719, %v1702, %v944
      %v1740 = vsel %vm1719, %v1703, %v946
      %v1741 = vsel %vm1719, %v1704, %v948
      %v1742 = vsel %vm1719, %v1705, %v950
      %v1743 = vsel %vm1719, %v1706, %v952
      %v1744 = vsel %vm1719, %v1707, %v954
      %v1745 = vsel %vm1719, %v1708, %v956
      %v1746 = vsel %vm1719, %v1709, %v958
      %v1747 = vsel %vm1719, %v1710, %v960
      %v1748 = vsel %vm1719, %v1711, %v962
      %v1749 = vsel %vm1719, %v1712, %v964
      %v1750 = vsel %vm1719, %v1713, %v966
      %v1751 = vsel %vm1719, %v1714, %v968
      %v1752 = vsel %vm1719, %v1715, %v970
      %v1753 = vsel %vm1719, %v1716, %v972
      %v1754 = vsel %vm1719, %v1717, %v974
      %v1755 = vsel %vm1719, %v1718, %v976
      %vm1756 = vcmask 195584
      %v1757 = vsel %vm1756, %v1720, %v1032
      %v1758 = vsel %vm1756, %v1721, %v1034
      %v1759 = vsel %vm1756, %v1722, %v1036
      %v1760 = vsel %vm1756, %v1723, %v1038
      %v1761 = vsel %vm1756, %v1724, %v1040
      %v1762 = vsel %vm1756, %v1725, %v1042
      %v1763 = vsel %vm1756, %v1726, %v1044
      %v1764 = vsel %vm1756, %v1727, %v1046
      %v1765 = vsel %vm1756, %v1728, %v1048
      %v1766 = vsel %vm1756, %v1729, %v1050
      %v1767 = vsel %vm1756, %v1730, %v1052
      %v1768 = vsel %vm1756, %v1731, %v1054
      %v1769 = vsel %vm1756, %v1732, %v1056
      %v1770 = vsel %vm1756, %v1733, %v1058
      %v1771 = vsel %vm1756, %v1734, %v1060
      %v1772 = vsel %vm1756, %v1735, %v1062
      %v1773 = vsel %vm1756, %v1736, %v1064
      %v1774 = vsel %vm1756, %v1737, %v1066
      %v1775 = vsel %vm1756, %v1738, %v1068
      %v1776 = vsel %vm1756, %v1739, %v1070
      %v1777 = vsel %vm1756, %v1740, %v1072
      %v1778 = vsel %vm1756, %v1741, %v1074
      %v1779 = vsel %vm1756, %v1742, %v1076
      %v1780 = vsel %vm1756, %v1743, %v1078
      %v1781 = vsel %vm1756, %v1744, %v1080
      %v1782 = vsel %vm1756, %v1745, %v1082
      %v1783 = vsel %vm1756, %v1746, %v1084
      %v1784 = vsel %vm1756, %v1747, %v1086
      %v1785 = vsel %vm1756, %v1748, %v1088
      %v1786 = vsel %vm1756, %v1749, %v1090
      %v1787 = vsel %vm1756, %v1750, %v1092
      %v1788 = vsel %vm1756, %v1751, %v1094
      %v1789 = vsel %vm1756, %v1752, %v1096
      %v1790 = vsel %vm1756, %v1753, %v1098
      %v1791 = vsel %vm1756, %v1754, %v1100
      %v1792 = vsel %vm1756, %v1755, %v1102
      %vm1793 = vcmask 261120
      %v1794 = vsel %vm1793, %v1757, %v1140
      %v1795 = vsel %vm1793, %v1758, %v1142
      %v1796 = vsel %vm1793, %v1759, %v1144
      %v1797 = vsel %vm1793, %v1760, %v1146
      %v1798 = vsel %vm1793, %v1761, %v1148
      %v1799 = vsel %vm1793, %v1762, %v1150
      %v1800 = vsel %vm1793, %v1763, %v1152
      %v1801 = vsel %vm1793, %v1764, %v1154
      %v1802 = vsel %vm1793, %v1765, %v1156
      %v1803 = vsel %vm1793, %v1766, %v1158
      %v1804 = vsel %vm1793, %v1767, %v1160
      %v1805 = vsel %vm1793, %v1768, %v1162
      %v1806 = vsel %vm1793, %v1769, %v1164
      %v1807 = vsel %vm1793, %v1770, %v1166
      %v1808 = vsel %vm1793, %v1771, %v1168
      %v1809 = vsel %vm1793, %v1772, %v1170
      %v1810 = vsel %vm1793, %v1773, %v1172
      %v1811 = vsel %vm1793, %v1774, %v1174
      %v1812 = vsel %vm1793, %v1775, %v1176
      %v1813 = vsel %vm1793, %v1776, %v1178
      %v1814 = vsel %vm1793, %v1777, %v1180
      %v1815 = vsel %vm1793, %v1778, %v1182
      %v1816 = vsel %vm1793, %v1779, %v1184
      %v1817 = vsel %vm1793, %v1780, %v1186
      %v1818 = vsel %vm1793, %v1781, %v1188
      %v1819 = vsel %vm1793, %v1782, %v1190
      %v1820 = vsel %vm1793, %v1783, %v1192
      %v1821 = vsel %vm1793, %v1784, %v1194
      %v1822 = vsel %vm1793, %v1785, %v1196
      %v1823 = vsel %vm1793, %v1786, %v1198
      %v1824 = vsel %vm1793, %v1787, %v1200
      %v1825 = vsel %vm1793, %v1788, %v1202
      %v1826 = vsel %vm1793, %v1789, %v1204
      %v1827 = vsel %vm1793, %v1790, %v1206
      %v1828 = vsel %vm1793, %v1791, %v1208
      %v1829 = vsel %vm1793, %v1792, %v1210
      %vm1830 = vcmask 326656
      %v1831 = vsel %vm1830, %v1794, %v1249
      %v1832 = vsel %vm1830, %v1795, %v1251
      %v1833 = vsel %vm1830, %v1796, %v1253
      %v1834 = vsel %vm1830, %v1797, %v1255
      %v1835 = vsel %vm1830, %v1798, %v1257
      %v1836 = vsel %vm1830, %v1799, %v1259
      %v1837 = vsel %vm1830, %v1800, %v1261
      %v1838 = vsel %vm1830, %v1801, %v1263
      %v1839 = vsel %vm1830, %v1802, %v1265
      %v1840 = vsel %vm1830, %v1803, %v1267
      %v1841 = vsel %vm1830, %v1804, %v1269
      %v1842 = vsel %vm1830, %v1805, %v1271
      %v1843 = vsel %vm1830, %v1806, %v1273
      %v1844 = vsel %vm1830, %v1807, %v1275
      %v1845 = vsel %vm1830, %v1808, %v1277
      %v1846 = vsel %vm1830, %v1809, %v1279
      %v1847 = vsel %vm1830, %v1810, %v1281
      %v1848 = vsel %vm1830, %v1811, %v1283
      %v1849 = vsel %vm1830, %v1812, %v1285
      %v1850 = vsel %vm1830, %v1813, %v1287
      %v1851 = vsel %vm1830, %v1814, %v1289
      %v1852 = vsel %vm1830, %v1815, %v1291
      %v1853 = vsel %vm1830, %v1816, %v1293
      %v1854 = vsel %vm1830, %v1817, %v1295
      %v1855 = vsel %vm1830, %v1818, %v1297
      %v1856 = vsel %vm1830, %v1819, %v1299
      %v1857 = vsel %vm1830, %v1820, %v1301
      %v1858 = vsel %vm1830, %v1821, %v1303
      %v1859 = vsel %vm1830, %v1822, %v1305
      %v1860 = vsel %vm1830, %v1823, %v1307
      %v1861 = vsel %vm1830, %v1824, %v1309
      %v1862 = vsel %vm1830, %v1825, %v1311
      %v1863 = vsel %vm1830, %v1826, %v1313
      %v1864 = vsel %vm1830, %v1827, %v1315
      %v1865 = vsel %vm1830, %v1828, %v1317
      %v1866 = vsel %vm1830, %v1829, %v1319
      %vm1867 = vcmask 392192
      %v1868 = vsel %vm1867, %v1831, %v1358
      %v1869 = vsel %vm1867, %v1832, %v1360
      %v1870 = vsel %vm1867, %v1833, %v1362
      %v1871 = vsel %vm1867, %v1834, %v1364
      %v1872 = vsel %vm1867, %v1835, %v1366
      %v1873 = vsel %vm1867, %v1836, %v1368
      %v1874 = vsel %vm1867, %v1837, %v1370
      %v1875 = vsel %vm1867, %v1838, %v1372
      %v1876 = vsel %vm1867, %v1839, %v1374
      %v1877 = vsel %vm1867, %v1840, %v1376
      %v1878 = vsel %vm1867, %v1841, %v1378
      %v1879 = vsel %vm1867, %v1842, %v1380
      %v1880 = vsel %vm1867, %v1843, %v1382
      %v1881 = vsel %vm1867, %v1844, %v1384
      %v1882 = vsel %vm1867, %v1845, %v1386
      %v1883 = vsel %vm1867, %v1846, %v1388
      %v1884 = vsel %vm1867, %v1847, %v1390
      %v1885 = vsel %vm1867, %v1848, %v1392
      %v1886 = vsel %vm1867, %v1849, %v1394
      %v1887 = vsel %vm1867, %v1850, %v1396
      %v1888 = vsel %vm1867, %v1851, %v1398
      %v1889 = vsel %vm1867, %v1852, %v1400
      %v1890 = vsel %vm1867, %v1853, %v1402
      %v1891 = vsel %vm1867, %v1854, %v1404
      %v1892 = vsel %vm1867, %v1855, %v1406
      %v1893 = vsel %vm1867, %v1856, %v1408
      %v1894 = vsel %vm1867, %v1857, %v1410
      %v1895 = vsel %vm1867, %v1858, %v1412
      %v1896 = vsel %vm1867, %v1859, %v1414
      %v1897 = vsel %vm1867, %v1860, %v1416
      %v1898 = vsel %vm1867, %v1861, %v1418
      %v1899 = vsel %vm1867, %v1862, %v1420
      %v1900 = vsel %vm1867, %v1863, %v1422
      %v1901 = vsel %vm1867, %v1864, %v1424
      %v1902 = vsel %vm1867, %v1865, %v1426
      %v1903 = vsel %vm1867, %v1866, %v1428
      %vm1904 = vcmask 457728
      %v1905 = vsel %vm1904, %v1868, %v1466
      %v1906 = vsel %vm1904, %v1869, %v1468
      %v1907 = vsel %vm1904, %v1870, %v1470
      %v1908 = vsel %vm1904, %v1871, %v1472
      %v1909 = vsel %vm1904, %v1872, %v1474
      %v1910 = vsel %vm1904, %v1873, %v1476
      %v1911 = vsel %vm1904, %v1874, %v1478
      %v1912 = vsel %vm1904, %v1875, %v1480
      %v1913 = vsel %vm1904, %v1876, %v1482
      %v1914 = vsel %vm1904, %v1877, %v1484
      %v1915 = vsel %vm1904, %v1878, %v1486
      %v1916 = vsel %vm1904, %v1879, %v1488
      %v1917 = vsel %vm1904, %v1880, %v1490
      %v1918 = vsel %vm1904, %v1881, %v1492
      %v1919 = vsel %vm1904, %v1882, %v1494
      %v1920 = vsel %vm1904, %v1883, %v1496
      %v1921 = vsel %vm1904, %v1884, %v1498
      %v1922 = vsel %vm1904, %v1885, %v1500
      %v1923 = vsel %vm1904, %v1886, %v1502
      %v1924 = vsel %vm1904, %v1887, %v1504
      %v1925 = vsel %vm1904, %v1888, %v1506
      %v1926 = vsel %vm1904, %v1889, %v1508
      %v1927 = vsel %vm1904, %v1890, %v1510
      %v1928 = vsel %vm1904, %v1891, %v1512
      %v1929 = vsel %vm1904, %v1892, %v1514
      %v1930 = vsel %vm1904, %v1893, %v1516
      %v1931 = vsel %vm1904, %v1894, %v1518
      %v1932 = vsel %vm1904, %v1895, %v1520
      %v1933 = vsel %vm1904, %v1896, %v1522
      %v1934 = vsel %vm1904, %v1897, %v1524
      %v1935 = vsel %vm1904, %v1898, %v1526
      %v1936 = vsel %vm1904, %v1899, %v1528
      %v1937 = vsel %vm1904, %v1900, %v1530
      %v1938 = vsel %vm1904, %v1901, %v1532
      %v1939 = vsel %vm1904, %v1902, %v1534
      %v1940 = vsel %vm1904, %v1903, %v1536
      %vm1941 = vcmask 523264
      %v1942 = vsel %vm1941, %v1905, %v1575
      %v1943 = vsel %vm1941, %v1906, %v1577
      %v1944 = vsel %vm1941, %v1907, %v1579
      %v1945 = vsel %vm1941, %v1908, %v1581
      %v1946 = vsel %vm1941, %v1909, %v1583
      %v1947 = vsel %vm1941, %v1910, %v1585
      %v1948 = vsel %vm1941, %v1911, %v1587
      %v1949 = vsel %vm1941, %v1912, %v1589
      %v1950 = vsel %vm1941, %v1913, %v1591
      %v1951 = vsel %vm1941, %v1914, %v1593
      %v1952 = vsel %vm1941, %v1915, %v1595
      %v1953 = vsel %vm1941, %v1916, %v1597
      %v1954 = vsel %vm1941, %v1917, %v1599
      %v1955 = vsel %vm1941, %v1918, %v1601
      %v1956 = vsel %vm1941, %v1919, %v1603
      %v1957 = vsel %vm1941, %v1920, %v1605
      %v1958 = vsel %vm1941, %v1921, %v1607
      %v1959 = vsel %vm1941, %v1922, %v1609
      %v1960 = vsel %vm1941, %v1923, %v1611
      %v1961 = vsel %vm1941, %v1924, %v1613
      %v1962 = vsel %vm1941, %v1925, %v1615
      %v1963 = vsel %vm1941, %v1926, %v1617
      %v1964 = vsel %vm1941, %v1927, %v1619
      %v1965 = vsel %vm1941, %v1928, %v1621
      %v1966 = vsel %vm1941, %v1929, %v1623
      %v1967 = vsel %vm1941, %v1930, %v1625
      %v1968 = vsel %vm1941, %v1931, %v1627
      %v1969 = vsel %vm1941, %v1932, %v1629
      %v1970 = vsel %vm1941, %v1933, %v1631
      %v1971 = vsel %vm1941, %v1934, %v1633
      %v1972 = vsel %vm1941, %v1935, %v1635
      %v1973 = vsel %vm1941, %v1936, %v1637
      %v1974 = vsel %vm1941, %v1937, %v1639
      %v1975 = vsel %vm1941, %v1938, %v1641
      %v1976 = vsel %vm1941, %v1939, %v1643
      %v1977 = vsel %vm1941, %v1940, %v1645
      %v1979 = vlaneseq
      %v1980 = vshrl.u32 %v1979, 7
      %v1981 = vsub.s32 0, %v1980
      %v1982 = vrot.slane %v518, %v1981
      %vm1984 = vcmask 588800
      %v1986 = vsel %vm1984, %v1942, 0
      %v1989 = vsel %vm1984, %v1943, 0
      %v1992 = vsel %vm1984, %v1944, 0
      %v1995 = vsel %vm1984, %v1945, 0
      %v1998 = vsel %vm1984, %v1946, 0
      %v2001 = vsel %vm1984, %v1947, 0
      %v2004 = vsel %vm1984, %v1948, 0
      %v2007 = vsel %vm1984, %v1949, 0
      %v2010 = vsel %vm1984, %v1950, 0
      %v2013 = vsel %vm1984, %v1951, 0
      %v2016 = vsel %vm1984, %v1952, 0
      %v2019 = vsel %vm1984, %v1953, 0
      %v2022 = vsel %vm1984, %v1954, 0
      %v2025 = vsel %vm1984, %v1955, 0
      %v2028 = vsel %vm1984, %v1956, 0
      %v2031 = vsel %vm1984, %v1957, 0
      %v2034 = vsel %vm1984, %v1958, 0
      %v2037 = vsel %vm1984, %v1959, 0
      %v2040 = vsel %vm1984, %v1960, 0
      %v2043 = vsel %vm1984, %v1961, 0
      %v2046 = vsel %vm1984, %v1962, 0
      %v2049 = vsel %vm1984, %v1963, 0
      %v2052 = vsel %vm1984, %v1964, 0
      %v2055 = vsel %vm1984, %v1965, 0
      %v2058 = vsel %vm1984, %v1966, 0
      %v2061 = vsel %vm1984, %v1967, 0
      %v2064 = vsel %vm1984, %v1968, 0
      %v2067 = vsel %vm1984, %v1969, 0
      %v2070 = vsel %vm1984, %v1970, 0
      %v2073 = vsel %vm1984, %v1971, 0
      %v2076 = vsel %vm1984, %v1972, 0
      %v2079 = vsel %vm1984, %v1973, 0
      %v2082 = vsel %vm1984, %v1974, 0
      %v2085 = vsel %vm1984, %v1975, 0
      %v2088 = vsel %vm1984, %v1976, 0
      %v2091 = vsel %vm1984, %v1977, 0
      %2093 = vmatprep.subr.mxu0 0.0
      %2094 = vmatpush1.msra.mxu0 %v509
      %2095 = vmatprep.subr.mxu0 0.0
      %2096 = vmatpush1.msra.mxu0 %v510
      %2097 = vmatprep.subr.mxu0 0.0
      %2098 = vmatpush1.msra.mxu0 %v511
      %2099 = vmatprep.subr.mxu0 0.0
      %2100 = vmatpush1.msra.mxu0 %v512
      %2101 = vmatprep.subr.mxu0 0.0
      %2102 = vmatpush1.msra.mxu0 %v513
      %2103 = vmatprep.subr.mxu0 0.0
      %2104 = vmatpush1.msra.mxu0 %v514
      %2105 = vmatprep.subr.mxu0 0.0
      %2106 = vmatpush1.msra.mxu0 %v515
      %2107 = vmatprep.subr.mxu0 0.0
      %2108 = vmatpush1.msra.mxu0 %v516
      %2109 = vmatprep.subr.mxu0 0.0
      %2110 = vmatpush1.msra.mxu0 %v517
      %2111 = vmatprep.subr.mxu0 0.0
      %2112 = vmatpush1.msra.mxu0 0.0
      %2113 = vmatprep.subr.mxu0 0.0
      %2114 = vmatpush1.msra.mxu0 0.0
      %2115 = vmatprep.subr.mxu0 0.0
      %2116 = vmatpush1.msra.mxu0 0.0
      %2117 = vmatprep.subr.mxu0 0.0
      %2118 = vmatpush1.msra.mxu0 0.0
      %2119 = vmatprep.subr.mxu0 0.0
      %2120 = vmatpush1.msra.mxu0 0.0
      %2121 = vmatprep.subr.mxu0 0.0
      %2122 = vmatpush1.msra.mxu0 0.0
      %2123 = vmatprep.subr.mxu0 0.0
      %2124 = vmatpush1.msra.mxu0 0.0
      %2125 = vmatprep.subr.mxu0 0.0
      %2126 = vmatpush1.msra.mxu0 0.0
      %2127 = vmatprep.subr.mxu0 0.0
      %2128 = vmatpush1.msra.mxu0 0.0
      %2129 = vmatprep.subr.mxu0 0.0
      %2130 = vmatpush1.msra.mxu0 0.0
      %2131 = vmatprep.subr.mxu0 0.0
      %2132 = vmatpush1.msra.mxu0 0.0
      %2133 = vmatprep.subr.mxu0 0.0
      %2134 = vmatpush1.msra.mxu0 0.0
      %2135 = vmatprep.subr.mxu0 0.0
      %2136 = vmatpush1.msra.mxu0 0.0
      %2137 = vmatprep.subr.mxu0 0.0
      %2138 = vmatpush1.msra.mxu0 0.0
      %2139 = vmatprep.subr.mxu0 0.0
      %2140 = vmatpush1.msra.mxu0 0.0
      %2141 = vmatprep.subr.mxu0 0.0
      %2142 = vmatpush1.msra.mxu0 0.0
      %2143 = vmatprep.subr.mxu0 0.0
      %2144 = vmatpush1.msra.mxu0 0.0
      %2145 = vmatprep.subr.mxu0 0.0
      %2146 = vmatpush1.msra.mxu0 0.0
      %2147 = vmatprep.subr.mxu0 0.0
      %2148 = vmatpush1.msra.mxu0 0.0
      %2149 = vmatprep.subr.mxu0 0.0
      %2150 = vmatpush1.msra.mxu0 0.0
      %2151 = vmatprep.subr.mxu0 0.0
      %2152 = vmatpush1.msra.mxu0 0.0
      %2153 = vmatprep.subr.mxu0 0.0
      %2154 = vmatpush1.msra.mxu0 0.0
      %2155 = vmatprep.subr.mxu0 0.0
      %2156 = vmatpush1.msra.mxu0 0.0
      %2157 = vmatprep.mubr.f32.mxu0 0.0
      %2158 = vmatmul.mubr.f32.gmra.mrb[0].mxu0 %v1986
      %v2159 = vpop.f32.mrb[0].mxu0
      %v2160 = vadd.f32 %v1982, %v2159
      %v2161 = vpop.f32.mrb[0].mxu0
      %2162 = vmatprep.mubr.f32.mxu0 0.0
      %2163 = vmatmul.mubr.f32.gmra.mrb[0].mxu0 %v1989
      %v2164 = vpop.f32.mrb[0].mxu0
      %v2165 = vadd.f32 %v1982, %v2164
      %v2166 = vpop.f32.mrb[0].mxu0
      %2167 = vmatprep.mubr.f32.mxu0 0.0
      %2168 = vmatmul.mubr.f32.gmra.mrb[0].mxu0 %v1992
      %v2169 = vpop.f32.mrb[0].mxu0
      %v2170 = vadd.f32 %v1982, %v2169
      %v2171 = vpop.f32.mrb[0].mxu0
      %2172 = vmatprep.mubr.f32.mxu0 0.0
      %2173 = vmatmul.mubr.f32.gmra.mrb[0].mxu0 %v1995
      %v2174 = vpop.f32.mrb[0].mxu0
      %v2175 = vadd.f32 %v1982, %v2174
      %v2176 = vpop.f32.mrb[0].mxu0
      %2177 = vmatprep.mubr.f32.mxu0 0.0
      %2178 = vmatmul.mubr.f32.gmra.mrb[0].mxu0 %v1998
      %v2179 = vpop.f32.mrb[0].mxu0
      %v2180 = vadd.f32 %v1982, %v2179
      %v2181 = vpop.f32.mrb[0].mxu0
      %2182 = vmatprep.mubr.f32.mxu0 0.0
      %2183 = vmatmul.mubr.f32.gmra.mrb[0].mxu0 %v2001
      %v2184 = vpop.f32.mrb[0].mxu0
      %v2185 = vadd.f32 %v1982, %v2184
      %v2186 = vpop.f32.mrb[0].mxu0
      %2187 = vmatprep.mubr.f32.mxu0 0.0
      %2188 = vmatmul.mubr.f32.gmra.mrb[0].mxu0 %v2004
      %v2189 = vpop.f32.mrb[0].mxu0
      %v2190 = vadd.f32 %v1982, %v2189
      %v2191 = vpop.f32.mrb[0].mxu0
      %2192 = vmatprep.mubr.f32.mxu0 0.0
      %2193 = vmatmul.mubr.f32.gmra.mrb[0].mxu0 %v2007
      %v2194 = vpop.f32.mrb[0].mxu0
      %v2195 = vadd.f32 %v1982, %v2194
      %v2196 = vpop.f32.mrb[0].mxu0
      %2197 = vmatprep.mubr.f32.mxu0 0.0
      %2198 = vmatmul.mubr.f32.gmra.mrb[0].mxu0 %v2010
      %v2199 = vpop.f32.mrb[0].mxu0
      %v2200 = vadd.f32 %v1982, %v2199
      %v2201 = vpop.f32.mrb[0].mxu0
      %2202 = vmatprep.mubr.f32.mxu0 0.0
      %2203 = vmatmul.mubr.f32.gmra.mrb[0].mxu0 %v2013
      %v2204 = vpop.f32.mrb[0].mxu0
      %v2205 = vadd.f32 %v1982, %v2204
      %v2206 = vpop.f32.mrb[0].mxu0
      %2207 = vmatprep.mubr.f32.mxu0 0.0
      %2208 = vmatmul.mubr.f32.gmra.mrb[0].mxu0 %v2016
      %v2209 = vpop.f32.mrb[0].mxu0
      %v2210 = vadd.f32 %v1982, %v2209
      %v2211 = vpop.f32.mrb[0].mxu0
      %2212 = vmatprep.mubr.f32.mxu0 0.0
      %2213 = vmatmul.mubr.f32.gmra.mrb[0].mxu0 %v2019
      %v2214 = vpop.f32.mrb[0].mxu0
      %v2215 = vadd.f32 %v1982, %v2214
      %v2216 = vpop.f32.mrb[0].mxu0
      %2217 = vmatprep.mubr.f32.mxu0 0.0
      %2218 = vmatmul.mubr.f32.gmra.mrb[0].mxu0 %v2022
      %v2219 = vpop.f32.mrb[0].mxu0
      %v2220 = vadd.f32 %v1982, %v2219
      %v2221 = vpop.f32.mrb[0].mxu0
      %2222 = vmatprep.mubr.f32.mxu0 0.0
      %2223 = vmatmul.mubr.f32.gmra.mrb[0].mxu0 %v2025
      %v2224 = vpop.f32.mrb[0].mxu0
      %v2225 = vadd.f32 %v1982, %v2224
      %v2226 = vpop.f32.mrb[0].mxu0
      %2227 = vmatprep.mubr.f32.mxu0 0.0
      %2228 = vmatmul.mubr.f32.gmra.mrb[0].mxu0 %v2028
      %v2229 = vpop.f32.mrb[0].mxu0
      %v2230 = vadd.f32 %v1982, %v2229
      %v2231 = vpop.f32.mrb[0].mxu0
      %2232 = vmatprep.mubr.f32.mxu0 0.0
      %2233 = vmatmul.mubr.f32.gmra.mrb[0].mxu0 %v2031
      %v2234 = vpop.f32.mrb[0].mxu0
      %v2235 = vadd.f32 %v1982, %v2234
      %v2236 = vpop.f32.mrb[0].mxu0
      %2237 = vmatprep.mubr.f32.mxu0 0.0
      %2238 = vmatmul.mubr.f32.gmra.mrb[0].mxu0 %v2034
      %v2239 = vpop.f32.mrb[0].mxu0
      %v2240 = vadd.f32 %v1982, %v2239
      %v2241 = vpop.f32.mrb[0].mxu0
      %2242 = vmatprep.mubr.f32.mxu0 0.0
      %2243 = vmatmul.mubr.f32.gmra.mrb[0].mxu0 %v2037
      %v2244 = vpop.f32.mrb[0].mxu0
      %v2245 = vadd.f32 %v1982, %v2244
      %v2246 = vpop.f32.mrb[0].mxu0
      %2247 = vmatprep.mubr.f32.mxu0 0.0
      %2248 = vmatmul.mubr.f32.gmra.mrb[0].mxu0 %v2040
      %v2249 = vpop.f32.mrb[0].mxu0
      %v2250 = vadd.f32 %v1982, %v2249
      %v2251 = vpop.f32.mrb[0].mxu0
      %2252 = vmatprep.mubr.f32.mxu0 0.0
      %2253 = vmatmul.mubr.f32.gmra.mrb[0].mxu0 %v2043
      %v2254 = vpop.f32.mrb[0].mxu0
      %v2255 = vadd.f32 %v1982, %v2254
      %v2256 = vpop.f32.mrb[0].mxu0
      %2257 = vmatprep.mubr.f32.mxu0 0.0
      %2258 = vmatmul.mubr.f32.gmra.mrb[0].mxu0 %v2046
      %v2259 = vpop.f32.mrb[0].mxu0
      %v2260 = vadd.f32 %v1982, %v2259
      %v2261 = vpop.f32.mrb[0].mxu0
      %2262 = vmatprep.mubr.f32.mxu0 0.0
      %2263 = vmatmul.mubr.f32.gmra.mrb[0].mxu0 %v2049
      %v2264 = vpop.f32.mrb[0].mxu0
      %v2265 = vadd.f32 %v1982, %v2264
      %v2266 = vpop.f32.mrb[0].mxu0
      %2267 = vmatprep.mubr.f32.mxu0 0.0
      %2268 = vmatmul.mubr.f32.gmra.mrb[0].mxu0 %v2052
      %v2269 = vpop.f32.mrb[0].mxu0
      %v2270 = vadd.f32 %v1982, %v2269
      %v2271 = vpop.f32.mrb[0].mxu0
      %2272 = vmatprep.mubr.f32.mxu0 0.0
      %2273 = vmatmul.mubr.f32.gmra.mrb[0].mxu0 %v2055
      %v2274 = vpop.f32.mrb[0].mxu0
      %v2275 = vadd.f32 %v1982, %v2274
      %v2276 = vpop.f32.mrb[0].mxu0
      %2277 = vmatprep.mubr.f32.mxu0 0.0
      %2278 = vmatmul.mubr.f32.gmra.mrb[0].mxu0 %v2058
      %v2279 = vpop.f32.mrb[0].mxu0
      %v2280 = vadd.f32 %v1982, %v2279
      %v2281 = vpop.f32.mrb[0].mxu0
      %2282 = vmatprep.mubr.f32.mxu0 0.0
      %2283 = vmatmul.mubr.f32.gmra.mrb[0].mxu0 %v2061
      %v2284 = vpop.f32.mrb[0].mxu0
      %v2285 = vadd.f32 %v1982, %v2284
      %v2286 = vpop.f32.mrb[0].mxu0
      %2287 = vmatprep.mubr.f32.mxu0 0.0
      %2288 = vmatmul.mubr.f32.gmra.mrb[0].mxu0 %v2064
      %v2289 = vpop.f32.mrb[0].mxu0
      %v2290 = vadd.f32 %v1982, %v2289
      %v2291 = vpop.f32.mrb[0].mxu0
      %2292 = vmatprep.mubr.f32.mxu0 0.0
      %2293 = vmatmul.mubr.f32.gmra.mrb[0].mxu0 %v2067
      %v2294 = vpop.f32.mrb[0].mxu0
      %v2295 = vadd.f32 %v1982, %v2294
      %v2296 = vpop.f32.mrb[0].mxu0
      %2297 = vmatprep.mubr.f32.mxu0 0.0
      %2298 = vmatmul.mubr.f32.gmra.mrb[0].mxu0 %v2070
      %v2299 = vpop.f32.mrb[0].mxu0
      %v2300 = vadd.f32 %v1982, %v2299
      %v2301 = vpop.f32.mrb[0].mxu0
      %2302 = vmatprep.mubr.f32.mxu0 0.0
      %2303 = vmatmul.mubr.f32.gmra.mrb[0].mxu0 %v2073
      %v2304 = vpop.f32.mrb[0].mxu0
      %v2305 = vadd.f32 %v1982, %v2304
      %v2306 = vpop.f32.mrb[0].mxu0
      %2307 = vmatprep.mubr.f32.mxu0 0.0
      %2308 = vmatmul.mubr.f32.gmra.mrb[0].mxu0 %v2076
      %v2309 = vpop.f32.mrb[0].mxu0
      %v2310 = vadd.f32 %v1982, %v2309
      %v2311 = vpop.f32.mrb[0].mxu0
      %2312 = vmatprep.mubr.f32.mxu0 0.0
      %2313 = vmatmul.mubr.f32.gmra.mrb[0].mxu0 %v2079
      %v2314 = vpop.f32.mrb[0].mxu0
      %v2315 = vadd.f32 %v1982, %v2314
      %v2316 = vpop.f32.mrb[0].mxu0
      %2317 = vmatprep.mubr.f32.mxu0 0.0
      %2318 = vmatmul.mubr.f32.gmra.mrb[0].mxu0 %v2082
      %v2319 = vpop.f32.mrb[0].mxu0
      %v2320 = vadd.f32 %v1982, %v2319
      %v2321 = vpop.f32.mrb[0].mxu0
      %2322 = vmatprep.mubr.f32.mxu0 0.0
      %2323 = vmatmul.mubr.f32.gmra.mrb[0].mxu0 %v2085
      %v2324 = vpop.f32.mrb[0].mxu0
      %v2325 = vadd.f32 %v1982, %v2324
      %v2326 = vpop.f32.mrb[0].mxu0
      %2327 = vmatprep.mubr.f32.mxu0 0.0
      %2328 = vmatmul.mubr.f32.gmra.mrb[0].mxu0 %v2088
      %v2329 = vpop.f32.mrb[0].mxu0
      %v2330 = vadd.f32 %v1982, %v2329
      %v2331 = vpop.f32.mrb[0].mxu0
      %2332 = vmatprep.mubr.f32.mxu0 0.0
      %2333 = vmatmul.mubr.f32.gmra.mrb[0].mxu0 %v2091
      %v2334 = vpop.f32.mrb[0].mxu0
      %v2335 = vadd.f32 %v1982, %v2334
      %v2336 = vpop.f32.mrb[0].mxu0
      %2337 = vdwg.mxu0
      %v2338 = vxor.u32 %v2160, 2147483648
      %v2339 = vxor.u32 %v2165, 2147483648
      %v2340 = vxor.u32 %v2170, 2147483648
      %v2341 = vxor.u32 %v2175, 2147483648
      %v2342 = vxor.u32 %v2180, 2147483648
      %v2343 = vxor.u32 %v2185, 2147483648
      %v2344 = vxor.u32 %v2190, 2147483648
      %v2345 = vxor.u32 %v2195, 2147483648
      %v2346 = vxor.u32 %v2200, 2147483648
      %v2347 = vxor.u32 %v2205, 2147483648
      %v2348 = vxor.u32 %v2210, 2147483648
      %v2349 = vxor.u32 %v2215, 2147483648
      %v2350 = vxor.u32 %v2220, 2147483648
      %v2351 = vxor.u32 %v2225, 2147483648
      %v2352 = vxor.u32 %v2230, 2147483648
      %v2353 = vxor.u32 %v2235, 2147483648
      %v2354 = vxor.u32 %v2240, 2147483648
      %v2355 = vxor.u32 %v2245, 2147483648
      %v2356 = vxor.u32 %v2250, 2147483648
      %v2357 = vxor.u32 %v2255, 2147483648
      %v2358 = vxor.u32 %v2260, 2147483648
      %v2359 = vxor.u32 %v2265, 2147483648
      %v2360 = vxor.u32 %v2270, 2147483648
      %v2361 = vxor.u32 %v2275, 2147483648
      %v2362 = vxor.u32 %v2280, 2147483648
      %v2363 = vxor.u32 %v2285, 2147483648
      %v2364 = vxor.u32 %v2290, 2147483648
      %v2365 = vxor.u32 %v2295, 2147483648
      %v2366 = vxor.u32 %v2300, 2147483648
      %v2367 = vxor.u32 %v2305, 2147483648
      %v2368 = vxor.u32 %v2310, 2147483648
      %v2369 = vxor.u32 %v2315, 2147483648
      %v2370 = vxor.u32 %v2320, 2147483648
      %v2371 = vxor.u32 %v2325, 2147483648
      %v2372 = vxor.u32 %v2330, 2147483648
      %v2373 = vxor.u32 %v2335, 2147483648
      %v2374 = vmul.f32 %v2338, 1.442695
      %v2375 = vpow.pop %v2374
      %v2376 = vmul.f32 %v2339, 1.442695
      %v2377 = vpow.pop %v2376
      %v2378 = vmul.f32 %v2340, 1.442695
      %v2379 = vpow.pop %v2378
      %v2380 = vmul.f32 %v2341, 1.442695
      %v2381 = vpow.pop %v2380
      %v2382 = vmul.f32 %v2342, 1.442695
      %v2383 = vpow.pop %v2382
      %v2384 = vmul.f32 %v2343, 1.442695
      %v2385 = vpow.pop %v2384
      %v2386 = vmul.f32 %v2344, 1.442695
      %v2387 = vpow.pop %v2386
      %v2388 = vmul.f32 %v2345, 1.442695
      %v2389 = vpow.pop %v2388
      %v2390 = vmul.f32 %v2346, 1.442695
      %v2391 = vpow.pop %v2390
      %v2392 = vmul.f32 %v2347, 1.442695
      %v2393 = vpow.pop %v2392
      %v2394 = vmul.f32 %v2348, 1.442695
      %v2395 = vpow.pop %v2394
      %v2396 = vmul.f32 %v2349, 1.442695
      %v2397 = vpow.pop %v2396
      %v2398 = vmul.f32 %v2350, 1.442695
      %v2399 = vpow.pop %v2398
      %v2400 = vmul.f32 %v2351, 1.442695
      %v2401 = vpow.pop %v2400
      %v2402 = vmul.f32 %v2352, 1.442695
      %v2403 = vpow.pop %v2402
      %v2404 = vmul.f32 %v2353, 1.442695
      %v2405 = vpow.pop %v2404
      %v2406 = vmul.f32 %v2354, 1.442695
      %v2407 = vpow.pop %v2406
      %v2408 = vmul.f32 %v2355, 1.442695
      %v2409 = vpow.pop %v2408
      %v2410 = vmul.f32 %v2356, 1.442695
      %v2411 = vpow.pop %v2410
      %v2412 = vmul.f32 %v2357, 1.442695
      %v2413 = vpow.pop %v2412
      %v2414 = vmul.f32 %v2358, 1.442695
      %v2415 = vpow.pop %v2414
      %v2416 = vmul.f32 %v2359, 1.442695
      %v2417 = vpow.pop %v2416
      %v2418 = vmul.f32 %v2360, 1.442695
      %v2419 = vpow.pop %v2418
      %v2420 = vmul.f32 %v2361, 1.442695
      %v2421 = vpow.pop %v2420
      %v2422 = vmul.f32 %v2362, 1.442695
      %v2423 = vpow.pop %v2422
      %v2424 = vmul.f32 %v2363, 1.442695
      %v2425 = vpow.pop %v2424
      %v2426 = vmul.f32 %v2364, 1.442695
      %v2427 = vpow.pop %v2426
      %v2428 = vmul.f32 %v2365, 1.442695
      %v2429 = vpow.pop %v2428
      %v2430 = vmul.f32 %v2366, 1.442695
      %v2431 = vpow.pop %v2430
      %v2432 = vmul.f32 %v2367, 1.442695
      %v2433 = vpow.pop %v2432
      %v2434 = vmul.f32 %v2368, 1.442695
      %v2435 = vpow.pop %v2434
      %v2436 = vmul.f32 %v2369, 1.442695
      %v2437 = vpow.pop %v2436
      %v2438 = vmul.f32 %v2370, 1.442695
      %v2439 = vpow.pop %v2438
      %v2440 = vmul.f32 %v2371, 1.442695
      %v2441 = vpow.pop %v2440
      %v2442 = vmul.f32 %v2372, 1.442695
      %v2443 = vpow.pop %v2442
      %v2444 = vmul.f32 %v2373, 1.442695
      %v2445 = vpow.pop %v2444
      %v2446 = vadd.f32 %v2375, 1.0
      %v2447 = vadd.f32 %v2377, 1.0
      %v2448 = vadd.f32 %v2379, 1.0
      %v2449 = vadd.f32 %v2381, 1.0
      %v2450 = vadd.f32 %v2383, 1.0
      %v2451 = vadd.f32 %v2385, 1.0
      %v2452 = vadd.f32 %v2387, 1.0
      %v2453 = vadd.f32 %v2389, 1.0
      %v2454 = vadd.f32 %v2391, 1.0
      %v2455 = vadd.f32 %v2393, 1.0
      %v2456 = vadd.f32 %v2395, 1.0
      %v2457 = vadd.f32 %v2397, 1.0
      %v2458 = vadd.f32 %v2399, 1.0
      %v2459 = vadd.f32 %v2401, 1.0
      %v2460 = vadd.f32 %v2403, 1.0
      %v2461 = vadd.f32 %v2405, 1.0
      %v2462 = vadd.f32 %v2407, 1.0
      %v2463 = vadd.f32 %v2409, 1.0
      %v2464 = vadd.f32 %v2411, 1.0
      %v2465 = vadd.f32 %v2413, 1.0
      %v2466 = vadd.f32 %v2415, 1.0
      %v2467 = vadd.f32 %v2417, 1.0
      %v2468 = vadd.f32 %v2419, 1.0
      %v2469 = vadd.f32 %v2421, 1.0
      %v2470 = vadd.f32 %v2423, 1.0
      %v2471 = vadd.f32 %v2425, 1.0
      %v2472 = vadd.f32 %v2427, 1.0
      %v2473 = vadd.f32 %v2429, 1.0
      %v2474 = vadd.f32 %v2431, 1.0
      %v2475 = vadd.f32 %v2433, 1.0
      %v2476 = vadd.f32 %v2435, 1.0
      %v2477 = vadd.f32 %v2437, 1.0
      %v2478 = vadd.f32 %v2439, 1.0
      %v2479 = vadd.f32 %v2441, 1.0
      %v2480 = vadd.f32 %v2443, 1.0
      %v2481 = vadd.f32 %v2445, 1.0
      %v2482 = vrcp.pop %v2446
      %v2483 = vmul.f32 1.0, %v2482
      %v2484 = vrcp.pop %v2447
      %v2485 = vmul.f32 1.0, %v2484
      %v2486 = vrcp.pop %v2448
      %v2487 = vmul.f32 1.0, %v2486
      %v2488 = vrcp.pop %v2449
      %v2489 = vmul.f32 1.0, %v2488
      %v2490 = vrcp.pop %v2450
      %v2491 = vmul.f32 1.0, %v2490
      %v2492 = vrcp.pop %v2451
      %v2493 = vmul.f32 1.0, %v2492
      %v2494 = vrcp.pop %v2452
      %v2495 = vmul.f32 1.0, %v2494
      %v2496 = vrcp.pop %v2453
      %v2497 = vmul.f32 1.0, %v2496
      %v2498 = vrcp.pop %v2454
      %v2499 = vmul.f32 1.0, %v2498
      %v2500 = vrcp.pop %v2455
      %v2501 = vmul.f32 1.0, %v2500
      %v2502 = vrcp.pop %v2456
      %v2503 = vmul.f32 1.0, %v2502
      %v2504 = vrcp.pop %v2457
      %v2505 = vmul.f32 1.0, %v2504
      %v2506 = vrcp.pop %v2458
      %v2507 = vmul.f32 1.0, %v2506
      %v2508 = vrcp.pop %v2459
      %v2509 = vmul.f32 1.0, %v2508
      %v2510 = vrcp.pop %v2460
      %v2511 = vmul.f32 1.0, %v2510
      %v2512 = vrcp.pop %v2461
      %v2513 = vmul.f32 1.0, %v2512
      %v2514 = vrcp.pop %v2462
      %v2515 = vmul.f32 1.0, %v2514
      %v2516 = vrcp.pop %v2463
      %v2517 = vmul.f32 1.0, %v2516
      %v2518 = vrcp.pop %v2464
      %v2519 = vmul.f32 1.0, %v2518
      %v2520 = vrcp.pop %v2465
      %v2521 = vmul.f32 1.0, %v2520
      %v2522 = vrcp.pop %v2466
      %v2523 = vmul.f32 1.0, %v2522
      %v2524 = vrcp.pop %v2467
      %v2525 = vmul.f32 1.0, %v2524
      %v2526 = vrcp.pop %v2468
      %v2527 = vmul.f32 1.0, %v2526
      %v2528 = vrcp.pop %v2469
      %v2529 = vmul.f32 1.0, %v2528
      %v2530 = vrcp.pop %v2470
      %v2531 = vmul.f32 1.0, %v2530
      %v2532 = vrcp.pop %v2471
      %v2533 = vmul.f32 1.0, %v2532
      %v2534 = vrcp.pop %v2472
      %v2535 = vmul.f32 1.0, %v2534
      %v2536 = vrcp.pop %v2473
      %v2537 = vmul.f32 1.0, %v2536
      %v2538 = vrcp.pop %v2474
      %v2539 = vmul.f32 1.0, %v2538
      %v2540 = vrcp.pop %v2475
      %v2541 = vmul.f32 1.0, %v2540
      %v2542 = vrcp.pop %v2476
      %v2543 = vmul.f32 1.0, %v2542
      %v2544 = vrcp.pop %v2477
      %v2545 = vmul.f32 1.0, %v2544
      %v2546 = vrcp.pop %v2478
      %v2547 = vmul.f32 1.0, %v2546
      %v2548 = vrcp.pop %v2479
      %v2549 = vmul.f32 1.0, %v2548
      %v2550 = vrcp.pop %v2480
      %v2551 = vmul.f32 1.0, %v2550
      %v2552 = vrcp.pop %v2481
      %v2553 = vmul.f32 1.0, %v2552
      %v2554 = vmul.f32 %v2160, %v2483
      %v2555 = vmul.f32 %v2165, %v2485
      %v2556 = vmul.f32 %v2170, %v2487
      %v2557 = vmul.f32 %v2175, %v2489
      %v2558 = vmul.f32 %v2180, %v2491
      %v2559 = vmul.f32 %v2185, %v2493
      %v2560 = vmul.f32 %v2190, %v2495
      %v2561 = vmul.f32 %v2195, %v2497
      %v2562 = vmul.f32 %v2200, %v2499
      %v2563 = vmul.f32 %v2205, %v2501
      %v2564 = vmul.f32 %v2210, %v2503
      %v2565 = vmul.f32 %v2215, %v2505
      %v2566 = vmul.f32 %v2220, %v2507
      %v2567 = vmul.f32 %v2225, %v2509
      %v2568 = vmul.f32 %v2230, %v2511
      %v2569 = vmul.f32 %v2235, %v2513
      %v2570 = vmul.f32 %v2240, %v2515
      %v2571 = vmul.f32 %v2245, %v2517
      %v2572 = vmul.f32 %v2250, %v2519
      %v2573 = vmul.f32 %v2255, %v2521
      %v2574 = vmul.f32 %v2260, %v2523
      %v2575 = vmul.f32 %v2265, %v2525
      %v2576 = vmul.f32 %v2270, %v2527
      %v2577 = vmul.f32 %v2275, %v2529
      %v2578 = vmul.f32 %v2280, %v2531
      %v2579 = vmul.f32 %v2285, %v2533
      %v2580 = vmul.f32 %v2290, %v2535
      %v2581 = vmul.f32 %v2295, %v2537
      %v2582 = vmul.f32 %v2300, %v2539
      %v2583 = vmul.f32 %v2305, %v2541
      %v2584 = vmul.f32 %v2310, %v2543
      %v2585 = vmul.f32 %v2315, %v2545
      %v2586 = vmul.f32 %v2320, %v2547
      %v2587 = vmul.f32 %v2325, %v2549
      %v2588 = vmul.f32 %v2330, %v2551
      %v2589 = vmul.f32 %v2335, %v2553
      %v2590 = vsel %vm500, 0.0, %v2554
      %v2591 = vsel %vm500, 0.0, %v2555
      %v2592 = vsel %vm500, 0.0, %v2588
      %v2593 = vsel %vm500, 0.0, %v2589
      %v2594 = vld [vmem:[%s5] sm:$0xff]
      %v2595 = vld [vmem:[%s5 + $0x8] sm:$0xff]
      %v2596 = vld [vmem:[%s5 + $0x10] sm:$0xff]
      %v2597 = vld [vmem:[%s5 + $0x18] sm:$0xff]
      %v2598 = vld [vmem:[%s5 + $0x20] sm:$0xff]
      %v2599 = vld [vmem:[%s5 + $0x28] sm:$0xff]
      %v2600 = vld [vmem:[%s5 + $0x30] sm:$0xff]
      %v2601 = vld [vmem:[%s5 + $0x38] sm:$0xff]
      %v2602 = vld [vmem:[%s5 + $0x40] sm:$0xff]
      %v2603 = vld [vmem:[%s6] sm:$0x1]
      %v2640 = vrot.slane %v2590, 7
      %v2641 = vrot.slane %v2591, 7
      %v2642 = vsel %vm559, %v2640, %v2641
      %v2643 = vrot.slane %v2556, 7
      %v2644 = vrot.slane %v2557, 7
      %v2645 = vsel %vm559, %v2643, %v2644
      %v2646 = vrot.slane %v2558, 7
      %v2647 = vrot.slane %v2559, 7
      %v2648 = vsel %vm559, %v2646, %v2647
      %v2649 = vrot.slane %v2560, 7
      %v2650 = vrot.slane %v2561, 7
      %v2651 = vsel %vm559, %v2649, %v2650
      %v2652 = vrot.slane %v2562, 7
      %v2653 = vrot.slane %v2563, 7
      %v2654 = vsel %vm559, %v2652, %v2653
      %v2655 = vrot.slane %v2564, 7
      %v2656 = vrot.slane %v2565, 7
      %v2657 = vsel %vm559, %v2655, %v2656
      %v2658 = vrot.slane %v2566, 7
      %v2659 = vrot.slane %v2567, 7
      %v2660 = vsel %vm559, %v2658, %v2659
      %v2661 = vrot.slane %v2568, 7
      %v2662 = vrot.slane %v2569, 7
      %v2663 = vsel %vm559, %v2661, %v2662
      %v2664 = vrot.slane %v2570, 7
      %v2665 = vrot.slane %v2571, 7
      %v2666 = vsel %vm559, %v2664, %v2665
      %v2667 = vrot.slane %v2572, 7
      %v2668 = vrot.slane %v2573, 7
      %v2669 = vsel %vm559, %v2667, %v2668
      %v2670 = vrot.slane %v2574, 7
      %v2671 = vrot.slane %v2575, 7
      %v2672 = vsel %vm559, %v2670, %v2671
      %v2673 = vrot.slane %v2576, 7
      %v2674 = vrot.slane %v2577, 7
      %v2675 = vsel %vm559, %v2673, %v2674
      %v2676 = vrot.slane %v2578, 7
      %v2677 = vrot.slane %v2579, 7
      %v2678 = vsel %vm559, %v2676, %v2677
      %v2679 = vrot.slane %v2580, 7
      %v2680 = vrot.slane %v2581, 7
      %v2681 = vsel %vm559, %v2679, %v2680
      %v2682 = vrot.slane %v2582, 7
      %v2683 = vrot.slane %v2583, 7
      %v2684 = vsel %vm559, %v2682, %v2683
      %v2685 = vrot.slane %v2584, 7
      %v2686 = vrot.slane %v2585, 7
      %v2687 = vsel %vm559, %v2685, %v2686
      %v2688 = vrot.slane %v2586, 7
      %v2689 = vrot.slane %v2587, 7
      %v2690 = vsel %vm559, %v2688, %v2689
      %v2691 = vrot.slane %v2592, 7
      %v2692 = vrot.slane %v2593, 7
      %v2693 = vsel %vm559, %v2691, %v2692
      %v2728 = vsel %vm559, 0.0, %v2640
      %v2729 = vsel %vm559, 0.0, %v2643
      %v2730 = vsel %vm559, 0.0, %v2646
      %v2731 = vsel %vm559, 0.0, %v2649
      %v2732 = vsel %vm559, 0.0, %v2652
      %v2733 = vsel %vm559, 0.0, %v2655
      %v2734 = vsel %vm559, 0.0, %v2658
      %v2735 = vsel %vm559, 0.0, %v2661
      %v2736 = vsel %vm559, 0.0, %v2664
      %v2737 = vsel %vm559, 0.0, %v2667
      %v2738 = vsel %vm559, 0.0, %v2670
      %v2739 = vsel %vm559, 0.0, %v2673
      %v2740 = vsel %vm559, 0.0, %v2676
      %v2741 = vsel %vm559, 0.0, %v2679
      %v2742 = vsel %vm559, 0.0, %v2682
      %v2743 = vsel %vm559, 0.0, %v2685
      %v2744 = vsel %vm559, 0.0, %v2688
      %v2745 = vsel %vm559, 0.0, %v2691
      %v2746 = vrot.slane %v2590, 1
      %v2747 = vrot.slane %v2591, 1
      %v2748 = vsel %vm678, %v2746, %v2747
      %v2749 = vrot.slane %v2556, 1
      %v2750 = vrot.slane %v2557, 1
      %v2751 = vsel %vm678, %v2749, %v2750
      %v2752 = vrot.slane %v2558, 1
      %v2753 = vrot.slane %v2559, 1
      %v2754 = vsel %vm678, %v2752, %v2753
      %v2755 = vrot.slane %v2560, 1
      %v2756 = vrot.slane %v2561, 1
      %v2757 = vsel %vm678, %v2755, %v2756
      %v2758 = vrot.slane %v2562, 1
      %v2759 = vrot.slane %v2563, 1
      %v2760 = vsel %vm678, %v2758, %v2759
      %v2761 = vrot.slane %v2564, 1
      %v2762 = vrot.slane %v2565, 1
      %v2763 = vsel %vm678, %v2761, %v2762
      %v2764 = vrot.slane %v2566, 1
      %v2765 = vrot.slane %v2567, 1
      %v2766 = vsel %vm678, %v2764, %v2765
      %v2767 = vrot.slane %v2568, 1
      %v2768 = vrot.slane %v2569, 1
      %v2769 = vsel %vm678, %v2767, %v2768
      %v2770 = vrot.slane %v2570, 1
      %v2771 = vrot.slane %v2571, 1
      %v2772 = vsel %vm678, %v2770, %v2771
      %v2773 = vrot.slane %v2572, 1
      %v2774 = vrot.slane %v2573, 1
      %v2775 = vsel %vm678, %v2773, %v2774
      %v2776 = vrot.slane %v2574, 1
      %v2777 = vrot.slane %v2575, 1
      %v2778 = vsel %vm678, %v2776, %v2777
      %v2779 = vrot.slane %v2576, 1
      %v2780 = vrot.slane %v2577, 1
      %v2781 = vsel %vm678, %v2779, %v2780
      %v2782 = vrot.slane %v2578, 1
      %v2783 = vrot.slane %v2579, 1
      %v2784 = vsel %vm678, %v2782, %v2783
      %v2785 = vrot.slane %v2580, 1
      %v2786 = vrot.slane %v2581, 1
      %v2787 = vsel %vm678, %v2785, %v2786
      %v2788 = vrot.slane %v2582, 1
      %v2789 = vrot.slane %v2583, 1
      %v2790 = vsel %vm678, %v2788, %v2789
      %v2791 = vrot.slane %v2584, 1
      %v2792 = vrot.slane %v2585, 1
      %v2793 = vsel %vm678, %v2791, %v2792
      %v2794 = vrot.slane %v2586, 1
      %v2795 = vrot.slane %v2587, 1
      %v2796 = vsel %vm678, %v2794, %v2795
      %v2797 = vrot.slane %v2592, 1
      %v2798 = vrot.slane %v2593, 1
      %v2799 = vsel %vm678, %v2797, %v2798
      %v2818 = vsel %vm678, %v2747, 0.0
      %v2819 = vsel %vm678, %v2750, 0.0
      %v2820 = vsel %vm678, %v2753, 0.0
      %v2821 = vsel %vm678, %v2756, 0.0
      %v2822 = vsel %vm678, %v2759, 0.0
      %v2823 = vsel %vm678, %v2762, 0.0
      %v2824 = vsel %vm678, %v2765, 0.0
      %v2825 = vsel %vm678, %v2768, 0.0
      %v2826 = vsel %vm678, %v2771, 0.0
      %v2827 = vsel %vm678, %v2774, 0.0
      %v2828 = vsel %vm678, %v2777, 0.0
      %v2829 = vsel %vm678, %v2780, 0.0
      %v2830 = vsel %vm678, %v2783, 0.0
      %v2831 = vsel %vm678, %v2786, 0.0
      %v2832 = vsel %vm678, %v2789, 0.0
      %v2833 = vsel %vm678, %v2792, 0.0
      %v2834 = vsel %vm678, %v2795, 0.0
      %v2835 = vsel %vm678, %v2798, 0.0
      %2836 = vrot.lane.b32.xlu0 %v2590, 8
      %v2837 = vpop.permute.xlu0 %2836
      %2838 = vrot.lane.b32.xlu0 %v2591, 8
      %v2839 = vpop.permute.xlu0 %2838
      %2840 = vrot.lane.b32.xlu0 %v2556, 8
      %v2841 = vpop.permute.xlu0 %2840
      %2842 = vrot.lane.b32.xlu0 %v2557, 8
      %v2843 = vpop.permute.xlu0 %2842
      %2844 = vrot.lane.b32.xlu0 %v2558, 8
      %v2845 = vpop.permute.xlu0 %2844
      %2846 = vrot.lane.b32.xlu0 %v2559, 8
      %v2847 = vpop.permute.xlu0 %2846
      %2848 = vrot.lane.b32.xlu0 %v2560, 8
      %v2849 = vpop.permute.xlu0 %2848
      %2850 = vrot.lane.b32.xlu0 %v2561, 8
      %v2851 = vpop.permute.xlu0 %2850
      %2852 = vrot.lane.b32.xlu0 %v2562, 8
      %v2853 = vpop.permute.xlu0 %2852
      %2854 = vrot.lane.b32.xlu0 %v2563, 8
      %v2855 = vpop.permute.xlu0 %2854
      %2856 = vrot.lane.b32.xlu0 %v2564, 8
      %v2857 = vpop.permute.xlu0 %2856
      %2858 = vrot.lane.b32.xlu0 %v2565, 8
      %v2859 = vpop.permute.xlu0 %2858
      %2860 = vrot.lane.b32.xlu0 %v2566, 8
      %v2861 = vpop.permute.xlu0 %2860
      %2862 = vrot.lane.b32.xlu0 %v2567, 8
      %v2863 = vpop.permute.xlu0 %2862
      %2864 = vrot.lane.b32.xlu0 %v2568, 8
      %v2865 = vpop.permute.xlu0 %2864
      %2866 = vrot.lane.b32.xlu0 %v2569, 8
      %v2867 = vpop.permute.xlu0 %2866
      %2868 = vrot.lane.b32.xlu0 %v2570, 8
      %v2869 = vpop.permute.xlu0 %2868
      %2870 = vrot.lane.b32.xlu0 %v2571, 8
      %v2871 = vpop.permute.xlu0 %2870
      %2872 = vrot.lane.b32.xlu0 %v2572, 8
      %v2873 = vpop.permute.xlu0 %2872
      %2874 = vrot.lane.b32.xlu0 %v2573, 8
      %v2875 = vpop.permute.xlu0 %2874
      %2876 = vrot.lane.b32.xlu0 %v2574, 8
      %v2877 = vpop.permute.xlu0 %2876
      %2878 = vrot.lane.b32.xlu0 %v2575, 8
      %v2879 = vpop.permute.xlu0 %2878
      %2880 = vrot.lane.b32.xlu0 %v2576, 8
      %v2881 = vpop.permute.xlu0 %2880
      %2882 = vrot.lane.b32.xlu0 %v2577, 8
      %v2883 = vpop.permute.xlu0 %2882
      %2884 = vrot.lane.b32.xlu0 %v2578, 8
      %v2885 = vpop.permute.xlu0 %2884
      %2886 = vrot.lane.b32.xlu0 %v2579, 8
      %v2887 = vpop.permute.xlu0 %2886
      %2888 = vrot.lane.b32.xlu0 %v2580, 8
      %v2889 = vpop.permute.xlu0 %2888
      %2890 = vrot.lane.b32.xlu0 %v2581, 8
      %v2891 = vpop.permute.xlu0 %2890
      %2892 = vrot.lane.b32.xlu0 %v2582, 8
      %v2893 = vpop.permute.xlu0 %2892
      %2894 = vrot.lane.b32.xlu0 %v2583, 8
      %v2895 = vpop.permute.xlu0 %2894
      %2896 = vrot.lane.b32.xlu0 %v2584, 8
      %v2897 = vpop.permute.xlu0 %2896
      %2898 = vrot.lane.b32.xlu0 %v2585, 8
      %v2899 = vpop.permute.xlu0 %2898
      %2948 = vrot.lane.b32.xlu0 %v2748, 16
      %v2949 = vpop.permute.xlu0 %2948
      %2950 = vrot.lane.b32.xlu0 %v2818, 16
      %v2951 = vpop.permute.xlu0 %2950
      %2952 = vrot.lane.b32.xlu0 %v2751, 16
      %v2953 = vpop.permute.xlu0 %2952
      %2954 = vrot.lane.b32.xlu0 %v2819, 16
      %v2955 = vpop.permute.xlu0 %2954
      %2956 = vrot.lane.b32.xlu0 %v2754, 16
      %v2957 = vpop.permute.xlu0 %2956
      %2958 = vrot.lane.b32.xlu0 %v2820, 16
      %v2959 = vpop.permute.xlu0 %2958
      %2960 = vrot.lane.b32.xlu0 %v2757, 16
      %v2961 = vpop.permute.xlu0 %2960
      %2962 = vrot.lane.b32.xlu0 %v2821, 16
      %v2963 = vpop.permute.xlu0 %2962
      %2964 = vrot.lane.b32.xlu0 %v2760, 16
      %v2965 = vpop.permute.xlu0 %2964
      %2966 = vrot.lane.b32.xlu0 %v2822, 16
      %v2967 = vpop.permute.xlu0 %2966
      %2968 = vrot.lane.b32.xlu0 %v2763, 16
      %v2969 = vpop.permute.xlu0 %2968
      %2970 = vrot.lane.b32.xlu0 %v2823, 16
      %v2971 = vpop.permute.xlu0 %2970
      %2972 = vrot.lane.b32.xlu0 %v2766, 16
      %v2973 = vpop.permute.xlu0 %2972
      %2974 = vrot.lane.b32.xlu0 %v2824, 16
      %v2975 = vpop.permute.xlu0 %2974
      %2976 = vrot.lane.b32.xlu0 %v2769, 16
      %v2977 = vpop.permute.xlu0 %2976
      %2978 = vrot.lane.b32.xlu0 %v2825, 16
      %v2979 = vpop.permute.xlu0 %2978
      %2980 = vrot.lane.b32.xlu0 %v2772, 16
      %v2981 = vpop.permute.xlu0 %2980
      %2982 = vrot.lane.b32.xlu0 %v2826, 16
      %v2983 = vpop.permute.xlu0 %2982
      %2984 = vrot.lane.b32.xlu0 %v2775, 16
      %v2985 = vpop.permute.xlu0 %2984
      %2986 = vrot.lane.b32.xlu0 %v2827, 16
      %v2987 = vpop.permute.xlu0 %2986
      %2988 = vrot.lane.b32.xlu0 %v2778, 16
      %v2989 = vpop.permute.xlu0 %2988
      %2990 = vrot.lane.b32.xlu0 %v2828, 16
      %v2991 = vpop.permute.xlu0 %2990
      %2992 = vrot.lane.b32.xlu0 %v2781, 16
      %v2993 = vpop.permute.xlu0 %2992
      %2994 = vrot.lane.b32.xlu0 %v2829, 16
      %v2995 = vpop.permute.xlu0 %2994
      %2996 = vrot.lane.b32.xlu0 %v2784, 16
      %v2997 = vpop.permute.xlu0 %2996
      %2998 = vrot.lane.b32.xlu0 %v2830, 16
      %v2999 = vpop.permute.xlu0 %2998
      %3000 = vrot.lane.b32.xlu0 %v2787, 16
      %v3001 = vpop.permute.xlu0 %3000
      %3002 = vrot.lane.b32.xlu0 %v2831, 16
      %v3003 = vpop.permute.xlu0 %3002
      %3004 = vrot.lane.b32.xlu0 %v2790, 16
      %v3005 = vpop.permute.xlu0 %3004
      %3006 = vrot.lane.b32.xlu0 %v2832, 16
      %v3007 = vpop.permute.xlu0 %3006
      %3008 = vrot.lane.b32.xlu0 %v2793, 16
      %v3009 = vpop.permute.xlu0 %3008
      %3010 = vrot.lane.b32.xlu0 %v2833, 16
      %v3011 = vpop.permute.xlu0 %3010
      %3060 = vrot.lane.b32.xlu0 %v2729, 24
      %v3061 = vpop.permute.xlu0 %3060
      %3062 = vrot.lane.b32.xlu0 %v2645, 24
      %v3063 = vpop.permute.xlu0 %3062
      %3064 = vrot.lane.b32.xlu0 %v2730, 24
      %v3065 = vpop.permute.xlu0 %3064
      %3066 = vrot.lane.b32.xlu0 %v2648, 24
      %v3067 = vpop.permute.xlu0 %3066
      %3068 = vrot.lane.b32.xlu0 %v2731, 24
      %v3069 = vpop.permute.xlu0 %3068
      %3070 = vrot.lane.b32.xlu0 %v2651, 24
      %v3071 = vpop.permute.xlu0 %3070
      %3072 = vrot.lane.b32.xlu0 %v2732, 24
      %v3073 = vpop.permute.xlu0 %3072
      %3074 = vrot.lane.b32.xlu0 %v2654, 24
      %v3075 = vpop.permute.xlu0 %3074
      %3076 = vrot.lane.b32.xlu0 %v2733, 24
      %v3077 = vpop.permute.xlu0 %3076
      %3078 = vrot.lane.b32.xlu0 %v2657, 24
      %v3079 = vpop.permute.xlu0 %3078
      %3080 = vrot.lane.b32.xlu0 %v2734, 24
      %v3081 = vpop.permute.xlu0 %3080
      %3082 = vrot.lane.b32.xlu0 %v2660, 24
      %v3083 = vpop.permute.xlu0 %3082
      %3084 = vrot.lane.b32.xlu0 %v2735, 24
      %v3085 = vpop.permute.xlu0 %3084
      %3086 = vrot.lane.b32.xlu0 %v2663, 24
      %v3087 = vpop.permute.xlu0 %3086
      %3088 = vrot.lane.b32.xlu0 %v2736, 24
      %v3089 = vpop.permute.xlu0 %3088
      %3090 = vrot.lane.b32.xlu0 %v2666, 24
      %v3091 = vpop.permute.xlu0 %3090
      %3092 = vrot.lane.b32.xlu0 %v2737, 24
      %v3093 = vpop.permute.xlu0 %3092
      %3094 = vrot.lane.b32.xlu0 %v2669, 24
      %v3095 = vpop.permute.xlu0 %3094
      %3096 = vrot.lane.b32.xlu0 %v2738, 24
      %v3097 = vpop.permute.xlu0 %3096
      %3098 = vrot.lane.b32.xlu0 %v2672, 24
      %v3099 = vpop.permute.xlu0 %3098
      %3100 = vrot.lane.b32.xlu0 %v2739, 24
      %v3101 = vpop.permute.xlu0 %3100
      %3102 = vrot.lane.b32.xlu0 %v2675, 24
      %v3103 = vpop.permute.xlu0 %3102
      %3104 = vrot.lane.b32.xlu0 %v2740, 24
      %v3105 = vpop.permute.xlu0 %3104
      %3106 = vrot.lane.b32.xlu0 %v2678, 24
      %v3107 = vpop.permute.xlu0 %3106
      %3108 = vrot.lane.b32.xlu0 %v2741, 24
      %v3109 = vpop.permute.xlu0 %3108
      %3110 = vrot.lane.b32.xlu0 %v2681, 24
      %v3111 = vpop.permute.xlu0 %3110
      %3112 = vrot.lane.b32.xlu0 %v2742, 24
      %v3113 = vpop.permute.xlu0 %3112
      %3114 = vrot.lane.b32.xlu0 %v2684, 24
      %v3115 = vpop.permute.xlu0 %3114
      %3116 = vrot.lane.b32.xlu0 %v2743, 24
      %v3117 = vpop.permute.xlu0 %3116
      %3118 = vrot.lane.b32.xlu0 %v2687, 24
      %v3119 = vpop.permute.xlu0 %3118
      %3120 = vrot.lane.b32.xlu0 %v2744, 24
      %v3121 = vpop.permute.xlu0 %3120
      %3122 = vrot.lane.b32.xlu0 %v2690, 24
      %v3123 = vpop.permute.xlu0 %3122
      %3156 = vrot.lane.b32.xlu0 %v2556, 32
      %v3157 = vpop.permute.xlu0 %3156
      %3158 = vrot.lane.b32.xlu0 %v2557, 32
      %v3159 = vpop.permute.xlu0 %3158
      %3160 = vrot.lane.b32.xlu0 %v2558, 32
      %v3161 = vpop.permute.xlu0 %3160
      %3162 = vrot.lane.b32.xlu0 %v2559, 32
      %v3163 = vpop.permute.xlu0 %3162
      %3164 = vrot.lane.b32.xlu0 %v2560, 32
      %v3165 = vpop.permute.xlu0 %3164
      %3166 = vrot.lane.b32.xlu0 %v2561, 32
      %v3167 = vpop.permute.xlu0 %3166
      %3168 = vrot.lane.b32.xlu0 %v2562, 32
      %v3169 = vpop.permute.xlu0 %3168
      %3170 = vrot.lane.b32.xlu0 %v2563, 32
      %v3171 = vpop.permute.xlu0 %3170
      %3172 = vrot.lane.b32.xlu0 %v2564, 32
      %v3173 = vpop.permute.xlu0 %3172
      %3174 = vrot.lane.b32.xlu0 %v2565, 32
      %v3175 = vpop.permute.xlu0 %3174
      %3176 = vrot.lane.b32.xlu0 %v2566, 32
      %v3177 = vpop.permute.xlu0 %3176
      %3178 = vrot.lane.b32.xlu0 %v2567, 32
      %v3179 = vpop.permute.xlu0 %3178
      %3180 = vrot.lane.b32.xlu0 %v2568, 32
      %v3181 = vpop.permute.xlu0 %3180
      %3182 = vrot.lane.b32.xlu0 %v2569, 32
      %v3183 = vpop.permute.xlu0 %3182
      %3184 = vrot.lane.b32.xlu0 %v2570, 32
      %v3185 = vpop.permute.xlu0 %3184
      %3186 = vrot.lane.b32.xlu0 %v2571, 32
      %v3187 = vpop.permute.xlu0 %3186
      %3188 = vrot.lane.b32.xlu0 %v2572, 32
      %v3189 = vpop.permute.xlu0 %3188
      %3190 = vrot.lane.b32.xlu0 %v2573, 32
      %v3191 = vpop.permute.xlu0 %3190
      %3192 = vrot.lane.b32.xlu0 %v2574, 32
      %v3193 = vpop.permute.xlu0 %3192
      %3194 = vrot.lane.b32.xlu0 %v2575, 32
      %v3195 = vpop.permute.xlu0 %3194
      %3196 = vrot.lane.b32.xlu0 %v2576, 32
      %v3197 = vpop.permute.xlu0 %3196
      %3198 = vrot.lane.b32.xlu0 %v2577, 32
      %v3199 = vpop.permute.xlu0 %3198
      %3200 = vrot.lane.b32.xlu0 %v2578, 32
      %v3201 = vpop.permute.xlu0 %3200
      %3202 = vrot.lane.b32.xlu0 %v2579, 32
      %v3203 = vpop.permute.xlu0 %3202
      %3204 = vrot.lane.b32.xlu0 %v2580, 32
      %v3205 = vpop.permute.xlu0 %3204
      %3206 = vrot.lane.b32.xlu0 %v2581, 32
      %v3207 = vpop.permute.xlu0 %3206
      %3208 = vrot.lane.b32.xlu0 %v2582, 32
      %v3209 = vpop.permute.xlu0 %3208
      %3210 = vrot.lane.b32.xlu0 %v2583, 32
      %v3211 = vpop.permute.xlu0 %3210
      %3212 = vrot.lane.b32.xlu0 %v2584, 32
      %v3213 = vpop.permute.xlu0 %3212
      %3214 = vrot.lane.b32.xlu0 %v2585, 32
      %v3215 = vpop.permute.xlu0 %3214
      %3216 = vrot.lane.b32.xlu0 %v2586, 32
      %v3217 = vpop.permute.xlu0 %3216
      %3218 = vrot.lane.b32.xlu0 %v2587, 32
      %v3219 = vpop.permute.xlu0 %3218
      %3253 = vrot.lane.b32.xlu0 %v2751, 40
      %v3254 = vpop.permute.xlu0 %3253
      %3255 = vrot.lane.b32.xlu0 %v2819, 40
      %v3256 = vpop.permute.xlu0 %3255
      %3257 = vrot.lane.b32.xlu0 %v2754, 40
      %v3258 = vpop.permute.xlu0 %3257
      %3259 = vrot.lane.b32.xlu0 %v2820, 40
      %v3260 = vpop.permute.xlu0 %3259
      %3261 = vrot.lane.b32.xlu0 %v2757, 40
      %v3262 = vpop.permute.xlu0 %3261
      %3263 = vrot.lane.b32.xlu0 %v2821, 40
      %v3264 = vpop.permute.xlu0 %3263
      %3265 = vrot.lane.b32.xlu0 %v2760, 40
      %v3266 = vpop.permute.xlu0 %3265
      %3267 = vrot.lane.b32.xlu0 %v2822, 40
      %v3268 = vpop.permute.xlu0 %3267
      %3269 = vrot.lane.b32.xlu0 %v2763, 40
      %v3270 = vpop.permute.xlu0 %3269
      %3271 = vrot.lane.b32.xlu0 %v2823, 40
      %v3272 = vpop.permute.xlu0 %3271
      %3273 = vrot.lane.b32.xlu0 %v2766, 40
      %v3274 = vpop.permute.xlu0 %3273
      %3275 = vrot.lane.b32.xlu0 %v2824, 40
      %v3276 = vpop.permute.xlu0 %3275
      %3277 = vrot.lane.b32.xlu0 %v2769, 40
      %v3278 = vpop.permute.xlu0 %3277
      %3279 = vrot.lane.b32.xlu0 %v2825, 40
      %v3280 = vpop.permute.xlu0 %3279
      %3281 = vrot.lane.b32.xlu0 %v2772, 40
      %v3282 = vpop.permute.xlu0 %3281
      %3283 = vrot.lane.b32.xlu0 %v2826, 40
      %v3284 = vpop.permute.xlu0 %3283
      %3285 = vrot.lane.b32.xlu0 %v2775, 40
      %v3286 = vpop.permute.xlu0 %3285
      %3287 = vrot.lane.b32.xlu0 %v2827, 40
      %v3288 = vpop.permute.xlu0 %3287
      %3289 = vrot.lane.b32.xlu0 %v2778, 40
      %v3290 = vpop.permute.xlu0 %3289
      %3291 = vrot.lane.b32.xlu0 %v2828, 40
      %v3292 = vpop.permute.xlu0 %3291
      %3293 = vrot.lane.b32.xlu0 %v2781, 40
      %v3294 = vpop.permute.xlu0 %3293
      %3295 = vrot.lane.b32.xlu0 %v2829, 40
      %v3296 = vpop.permute.xlu0 %3295
      %3297 = vrot.lane.b32.xlu0 %v2784, 40
      %v3298 = vpop.permute.xlu0 %3297
      %3299 = vrot.lane.b32.xlu0 %v2830, 40
      %v3300 = vpop.permute.xlu0 %3299
      %3301 = vrot.lane.b32.xlu0 %v2787, 40
      %v3302 = vpop.permute.xlu0 %3301
      %3303 = vrot.lane.b32.xlu0 %v2831, 40
      %v3304 = vpop.permute.xlu0 %3303
      %3305 = vrot.lane.b32.xlu0 %v2790, 40
      %v3306 = vpop.permute.xlu0 %3305
      %3307 = vrot.lane.b32.xlu0 %v2832, 40
      %v3308 = vpop.permute.xlu0 %3307
      %3309 = vrot.lane.b32.xlu0 %v2793, 40
      %v3310 = vpop.permute.xlu0 %3309
      %3311 = vrot.lane.b32.xlu0 %v2833, 40
      %v3312 = vpop.permute.xlu0 %3311
      %3313 = vrot.lane.b32.xlu0 %v2796, 40
      %v3314 = vpop.permute.xlu0 %3313
      %3315 = vrot.lane.b32.xlu0 %v2834, 40
      %v3316 = vpop.permute.xlu0 %3315
      %3350 = vrot.lane.b32.xlu0 %v2730, 48
      %v3351 = vpop.permute.xlu0 %3350
      %3352 = vrot.lane.b32.xlu0 %v2648, 48
      %v3353 = vpop.permute.xlu0 %3352
      %3354 = vrot.lane.b32.xlu0 %v2731, 48
      %v3355 = vpop.permute.xlu0 %3354
      %3356 = vrot.lane.b32.xlu0 %v2651, 48
      %v3357 = vpop.permute.xlu0 %3356
      %3358 = vrot.lane.b32.xlu0 %v2732, 48
      %v3359 = vpop.permute.xlu0 %3358
      %3360 = vrot.lane.b32.xlu0 %v2654, 48
      %v3361 = vpop.permute.xlu0 %3360
      %3362 = vrot.lane.b32.xlu0 %v2733, 48
      %v3363 = vpop.permute.xlu0 %3362
      %3364 = vrot.lane.b32.xlu0 %v2657, 48
      %v3365 = vpop.permute.xlu0 %3364
      %3366 = vrot.lane.b32.xlu0 %v2734, 48
      %v3367 = vpop.permute.xlu0 %3366
      %3368 = vrot.lane.b32.xlu0 %v2660, 48
      %v3369 = vpop.permute.xlu0 %3368
      %3370 = vrot.lane.b32.xlu0 %v2735, 48
      %v3371 = vpop.permute.xlu0 %3370
      %3372 = vrot.lane.b32.xlu0 %v2663, 48
      %v3373 = vpop.permute.xlu0 %3372
      %3374 = vrot.lane.b32.xlu0 %v2736, 48
      %v3375 = vpop.permute.xlu0 %3374
      %3376 = vrot.lane.b32.xlu0 %v2666, 48
      %v3377 = vpop.permute.xlu0 %3376
      %3378 = vrot.lane.b32.xlu0 %v2737, 48
      %v3379 = vpop.permute.xlu0 %3378
      %3380 = vrot.lane.b32.xlu0 %v2669, 48
      %v3381 = vpop.permute.xlu0 %3380
      %3382 = vrot.lane.b32.xlu0 %v2738, 48
      %v3383 = vpop.permute.xlu0 %3382
      %3384 = vrot.lane.b32.xlu0 %v2672, 48
      %v3385 = vpop.permute.xlu0 %3384
      %3386 = vrot.lane.b32.xlu0 %v2739, 48
      %v3387 = vpop.permute.xlu0 %3386
      %3388 = vrot.lane.b32.xlu0 %v2675, 48
      %v3389 = vpop.permute.xlu0 %3388
      %3390 = vrot.lane.b32.xlu0 %v2740, 48
      %v3391 = vpop.permute.xlu0 %3390
      %3392 = vrot.lane.b32.xlu0 %v2678, 48
      %v3393 = vpop.permute.xlu0 %3392
      %3394 = vrot.lane.b32.xlu0 %v2741, 48
      %v3395 = vpop.permute.xlu0 %3394
      %3396 = vrot.lane.b32.xlu0 %v2681, 48
      %v3397 = vpop.permute.xlu0 %3396
      %3398 = vrot.lane.b32.xlu0 %v2742, 48
      %v3399 = vpop.permute.xlu0 %3398
      %3400 = vrot.lane.b32.xlu0 %v2684, 48
      %v3401 = vpop.permute.xlu0 %3400
      %3402 = vrot.lane.b32.xlu0 %v2743, 48
      %v3403 = vpop.permute.xlu0 %3402
      %3404 = vrot.lane.b32.xlu0 %v2687, 48
      %v3405 = vpop.permute.xlu0 %3404
      %3406 = vrot.lane.b32.xlu0 %v2744, 48
      %v3407 = vpop.permute.xlu0 %3406
      %3408 = vrot.lane.b32.xlu0 %v2690, 48
      %v3409 = vpop.permute.xlu0 %3408
      %3410 = vrot.lane.b32.xlu0 %v2745, 48
      %v3411 = vpop.permute.xlu0 %3410
      %3412 = vrot.lane.b32.xlu0 %v2693, 48
      %v3413 = vpop.permute.xlu0 %3412
      %3446 = vrot.lane.b32.xlu0 %v2558, 56
      %v3447 = vpop.permute.xlu0 %3446
      %3448 = vrot.lane.b32.xlu0 %v2559, 56
      %v3449 = vpop.permute.xlu0 %3448
      %3450 = vrot.lane.b32.xlu0 %v2560, 56
      %v3451 = vpop.permute.xlu0 %3450
      %3452 = vrot.lane.b32.xlu0 %v2561, 56
      %v3453 = vpop.permute.xlu0 %3452
      %3454 = vrot.lane.b32.xlu0 %v2562, 56
      %v3455 = vpop.permute.xlu0 %3454
      %3456 = vrot.lane.b32.xlu0 %v2563, 56
      %v3457 = vpop.permute.xlu0 %3456
      %3458 = vrot.lane.b32.xlu0 %v2564, 56
      %v3459 = vpop.permute.xlu0 %3458
      %3460 = vrot.lane.b32.xlu0 %v2565, 56
      %v3461 = vpop.permute.xlu0 %3460
      %3462 = vrot.lane.b32.xlu0 %v2566, 56
      %v3463 = vpop.permute.xlu0 %3462
      %3464 = vrot.lane.b32.xlu0 %v2567, 56
      %v3465 = vpop.permute.xlu0 %3464
      %3466 = vrot.lane.b32.xlu0 %v2568, 56
      %v3467 = vpop.permute.xlu0 %3466
      %3468 = vrot.lane.b32.xlu0 %v2569, 56
      %v3469 = vpop.permute.xlu0 %3468
      %3470 = vrot.lane.b32.xlu0 %v2570, 56
      %v3471 = vpop.permute.xlu0 %3470
      %3472 = vrot.lane.b32.xlu0 %v2571, 56
      %v3473 = vpop.permute.xlu0 %3472
      %3474 = vrot.lane.b32.xlu0 %v2572, 56
      %v3475 = vpop.permute.xlu0 %3474
      %3476 = vrot.lane.b32.xlu0 %v2573, 56
      %v3477 = vpop.permute.xlu0 %3476
      %3478 = vrot.lane.b32.xlu0 %v2574, 56
      %v3479 = vpop.permute.xlu0 %3478
      %3480 = vrot.lane.b32.xlu0 %v2575, 56
      %v3481 = vpop.permute.xlu0 %3480
      %3482 = vrot.lane.b32.xlu0 %v2576, 56
      %v3483 = vpop.permute.xlu0 %3482
      %3484 = vrot.lane.b32.xlu0 %v2577, 56
      %v3485 = vpop.permute.xlu0 %3484
      %3486 = vrot.lane.b32.xlu0 %v2578, 56
      %v3487 = vpop.permute.xlu0 %3486
      %3488 = vrot.lane.b32.xlu0 %v2579, 56
      %v3489 = vpop.permute.xlu0 %3488
      %3490 = vrot.lane.b32.xlu0 %v2580, 56
      %v3491 = vpop.permute.xlu0 %3490
      %3492 = vrot.lane.b32.xlu0 %v2581, 56
      %v3493 = vpop.permute.xlu0 %3492
      %3494 = vrot.lane.b32.xlu0 %v2582, 56
      %v3495 = vpop.permute.xlu0 %3494
      %3496 = vrot.lane.b32.xlu0 %v2583, 56
      %v3497 = vpop.permute.xlu0 %3496
      %3498 = vrot.lane.b32.xlu0 %v2584, 56
      %v3499 = vpop.permute.xlu0 %3498
      %3500 = vrot.lane.b32.xlu0 %v2585, 56
      %v3501 = vpop.permute.xlu0 %3500
      %3502 = vrot.lane.b32.xlu0 %v2586, 56
      %v3503 = vpop.permute.xlu0 %3502
      %3504 = vrot.lane.b32.xlu0 %v2587, 56
      %v3505 = vpop.permute.xlu0 %3504
      %3506 = vrot.lane.b32.xlu0 %v2592, 56
      %v3507 = vpop.permute.xlu0 %3506
      %3508 = vrot.lane.b32.xlu0 %v2593, 56
      %v3509 = vpop.permute.xlu0 %3508
      %3543 = vrot.lane.b32.xlu0 %v2754, 64
      %v3544 = vpop.permute.xlu0 %3543
      %3545 = vrot.lane.b32.xlu0 %v2820, 64
      %v3546 = vpop.permute.xlu0 %3545
      %3547 = vrot.lane.b32.xlu0 %v2757, 64
      %v3548 = vpop.permute.xlu0 %3547
      %3549 = vrot.lane.b32.xlu0 %v2821, 64
      %v3550 = vpop.permute.xlu0 %3549
      %3551 = vrot.lane.b32.xlu0 %v2760, 64
      %v3552 = vpop.permute.xlu0 %3551
      %3553 = vrot.lane.b32.xlu0 %v2822, 64
      %v3554 = vpop.permute.xlu0 %3553
      %3555 = vrot.lane.b32.xlu0 %v2763, 64
      %v3556 = vpop.permute.xlu0 %3555
      %3557 = vrot.lane.b32.xlu0 %v2823, 64
      %v3558 = vpop.permute.xlu0 %3557
      %3559 = vrot.lane.b32.xlu0 %v2766, 64
      %v3560 = vpop.permute.xlu0 %3559
      %3561 = vrot.lane.b32.xlu0 %v2824, 64
      %v3562 = vpop.permute.xlu0 %3561
      %3563 = vrot.lane.b32.xlu0 %v2769, 64
      %v3564 = vpop.permute.xlu0 %3563
      %3565 = vrot.lane.b32.xlu0 %v2825, 64
      %v3566 = vpop.permute.xlu0 %3565
      %3567 = vrot.lane.b32.xlu0 %v2772, 64
      %v3568 = vpop.permute.xlu0 %3567
      %3569 = vrot.lane.b32.xlu0 %v2826, 64
      %v3570 = vpop.permute.xlu0 %3569
      %3571 = vrot.lane.b32.xlu0 %v2775, 64
      %v3572 = vpop.permute.xlu0 %3571
      %3573 = vrot.lane.b32.xlu0 %v2827, 64
      %v3574 = vpop.permute.xlu0 %3573
      %3575 = vrot.lane.b32.xlu0 %v2778, 64
      %v3576 = vpop.permute.xlu0 %3575
      %3577 = vrot.lane.b32.xlu0 %v2828, 64
      %v3578 = vpop.permute.xlu0 %3577
      %3579 = vrot.lane.b32.xlu0 %v2781, 64
      %v3580 = vpop.permute.xlu0 %3579
      %3581 = vrot.lane.b32.xlu0 %v2829, 64
      %v3582 = vpop.permute.xlu0 %3581
      %3583 = vrot.lane.b32.xlu0 %v2784, 64
      %v3584 = vpop.permute.xlu0 %3583
      %3585 = vrot.lane.b32.xlu0 %v2830, 64
      %v3586 = vpop.permute.xlu0 %3585
      %3587 = vrot.lane.b32.xlu0 %v2787, 64
      %v3588 = vpop.permute.xlu0 %3587
      %3589 = vrot.lane.b32.xlu0 %v2831, 64
      %v3590 = vpop.permute.xlu0 %3589
      %3591 = vrot.lane.b32.xlu0 %v2790, 64
      %v3592 = vpop.permute.xlu0 %3591
      %3593 = vrot.lane.b32.xlu0 %v2832, 64
      %v3594 = vpop.permute.xlu0 %3593
      %3595 = vrot.lane.b32.xlu0 %v2793, 64
      %v3596 = vpop.permute.xlu0 %3595
      %3597 = vrot.lane.b32.xlu0 %v2833, 64
      %v3598 = vpop.permute.xlu0 %3597
      %3599 = vrot.lane.b32.xlu0 %v2796, 64
      %v3600 = vpop.permute.xlu0 %3599
      %3601 = vrot.lane.b32.xlu0 %v2834, 64
      %v3602 = vpop.permute.xlu0 %3601
      %3603 = vrot.lane.b32.xlu0 %v2799, 64
      %v3604 = vpop.permute.xlu0 %3603
      %3605 = vrot.lane.b32.xlu0 %v2835, 64
      %v3606 = vpop.permute.xlu0 %3605
      %v3639 = vsel %vm1682, %v2728, %v2837
      %v3640 = vsel %vm1682, %v2642, %v2839
      %v3641 = vsel %vm1682, %v2729, %v2841
      %v3642 = vsel %vm1682, %v2645, %v2843
      %v3643 = vsel %vm1682, %v2730, %v2845
      %v3644 = vsel %vm1682, %v2648, %v2847
      %v3645 = vsel %vm1682, %v2731, %v2849
      %v3646 = vsel %vm1682, %v2651, %v2851
      %v3647 = vsel %vm1682, %v2732, %v2853
      %v3648 = vsel %vm1682, %v2654, %v2855
      %v3649 = vsel %vm1682, %v2733, %v2857
      %v3650 = vsel %vm1682, %v2657, %v2859
      %v3651 = vsel %vm1682, %v2734, %v2861
      %v3652 = vsel %vm1682, %v2660, %v2863
      %v3653 = vsel %vm1682, %v2735, %v2865
      %v3654 = vsel %vm1682, %v2663, %v2867
      %v3655 = vsel %vm1682, %v2736, %v2869
      %v3656 = vsel %vm1682, %v2666, %v2871
      %v3657 = vsel %vm1682, %v2737, %v2873
      %v3658 = vsel %vm1682, %v2669, %v2875
      %v3659 = vsel %vm1682, %v2738, %v2877
      %v3660 = vsel %vm1682, %v2672, %v2879
      %v3661 = vsel %vm1682, %v2739, %v2881
      %v3662 = vsel %vm1682, %v2675, %v2883
      %v3663 = vsel %vm1682, %v2740, %v2885
      %v3664 = vsel %vm1682, %v2678, %v2887
      %v3665 = vsel %vm1682, %v2741, %v2889
      %v3666 = vsel %vm1682, %v2681, %v2891
      %v3667 = vsel %vm1682, %v2742, %v2893
      %v3668 = vsel %vm1682, %v2684, %v2895
      %v3669 = vsel %vm1682, %v2743, %v2897
      %v3670 = vsel %vm1682, %v2687, %v2899
      %v3671 = vsel %vm1719, %v3639, %v2949
      %v3672 = vsel %vm1719, %v3640, %v2951
      %v3673 = vsel %vm1719, %v3641, %v2953
      %v3674 = vsel %vm1719, %v3642, %v2955
      %v3675 = vsel %vm1719, %v3643, %v2957
      %v3676 = vsel %vm1719, %v3644, %v2959
      %v3677 = vsel %vm1719, %v3645, %v2961
      %v3678 = vsel %vm1719, %v3646, %v2963
      %v3679 = vsel %vm1719, %v3647, %v2965
      %v3680 = vsel %vm1719, %v3648, %v2967
      %v3681 = vsel %vm1719, %v3649, %v2969
      %v3682 = vsel %vm1719, %v3650, %v2971
      %v3683 = vsel %vm1719, %v3651, %v2973
      %v3684 = vsel %vm1719, %v3652, %v2975
      %v3685 = vsel %vm1719, %v3653, %v2977
      %v3686 = vsel %vm1719, %v3654, %v2979
      %v3687 = vsel %vm1719, %v3655, %v2981
      %v3688 = vsel %vm1719, %v3656, %v2983
      %v3689 = vsel %vm1719, %v3657, %v2985
      %v3690 = vsel %vm1719, %v3658, %v2987
      %v3691 = vsel %vm1719, %v3659, %v2989
      %v3692 = vsel %vm1719, %v3660, %v2991
      %v3693 = vsel %vm1719, %v3661, %v2993
      %v3694 = vsel %vm1719, %v3662, %v2995
      %v3695 = vsel %vm1719, %v3663, %v2997
      %v3696 = vsel %vm1719, %v3664, %v2999
      %v3697 = vsel %vm1719, %v3665, %v3001
      %v3698 = vsel %vm1719, %v3666, %v3003
      %v3699 = vsel %vm1719, %v3667, %v3005
      %v3700 = vsel %vm1719, %v3668, %v3007
      %v3701 = vsel %vm1719, %v3669, %v3009
      %v3702 = vsel %vm1719, %v3670, %v3011
      %v3703 = vsel %vm1756, %v3671, %v3061
      %v3704 = vsel %vm1756, %v3672, %v3063
      %v3705 = vsel %vm1756, %v3673, %v3065
      %v3706 = vsel %vm1756, %v3674, %v3067
      %v3707 = vsel %vm1756, %v3675, %v3069
      %v3708 = vsel %vm1756, %v3676, %v3071
      %v3709 = vsel %vm1756, %v3677, %v3073
      %v3710 = vsel %vm1756, %v3678, %v3075
      %v3711 = vsel %vm1756, %v3679, %v3077
      %v3712 = vsel %vm1756, %v3680, %v3079
      %v3713 = vsel %vm1756, %v3681, %v3081
      %v3714 = vsel %vm1756, %v3682, %v3083
      %v3715 = vsel %vm1756, %v3683, %v3085
      %v3716 = vsel %vm1756, %v3684, %v3087
      %v3717 = vsel %vm1756, %v3685, %v3089
      %v3718 = vsel %vm1756, %v3686, %v3091
      %v3719 = vsel %vm1756, %v3687, %v3093
      %v3720 = vsel %vm1756, %v3688, %v3095
      %v3721 = vsel %vm1756, %v3689, %v3097
      %v3722 = vsel %vm1756, %v3690, %v3099
      %v3723 = vsel %vm1756, %v3691, %v3101
      %v3724 = vsel %vm1756, %v3692, %v3103
      %v3725 = vsel %vm1756, %v3693, %v3105
      %v3726 = vsel %vm1756, %v3694, %v3107
      %v3727 = vsel %vm1756, %v3695, %v3109
      %v3728 = vsel %vm1756, %v3696, %v3111
      %v3729 = vsel %vm1756, %v3697, %v3113
      %v3730 = vsel %vm1756, %v3698, %v3115
      %v3731 = vsel %vm1756, %v3699, %v3117
      %v3732 = vsel %vm1756, %v3700, %v3119
      %v3733 = vsel %vm1756, %v3701, %v3121
      %v3734 = vsel %vm1756, %v3702, %v3123
      %v3735 = vsel %vm1793, %v3703, %v3157
      %v3736 = vsel %vm1793, %v3704, %v3159
      %v3737 = vsel %vm1793, %v3705, %v3161
      %v3738 = vsel %vm1793, %v3706, %v3163
      %v3739 = vsel %vm1793, %v3707, %v3165
      %v3740 = vsel %vm1793, %v3708, %v3167
      %v3741 = vsel %vm1793, %v3709, %v3169
      %v3742 = vsel %vm1793, %v3710, %v3171
      %v3743 = vsel %vm1793, %v3711, %v3173
      %v3744 = vsel %vm1793, %v3712, %v3175
      %v3745 = vsel %vm1793, %v3713, %v3177
      %v3746 = vsel %vm1793, %v3714, %v3179
      %v3747 = vsel %vm1793, %v3715, %v3181
      %v3748 = vsel %vm1793, %v3716, %v3183
      %v3749 = vsel %vm1793, %v3717, %v3185
      %v3750 = vsel %vm1793, %v3718, %v3187
      %v3751 = vsel %vm1793, %v3719, %v3189
      %v3752 = vsel %vm1793, %v3720, %v3191
      %v3753 = vsel %vm1793, %v3721, %v3193
      %v3754 = vsel %vm1793, %v3722, %v3195
      %v3755 = vsel %vm1793, %v3723, %v3197
      %v3756 = vsel %vm1793, %v3724, %v3199
      %v3757 = vsel %vm1793, %v3725, %v3201
      %v3758 = vsel %vm1793, %v3726, %v3203
      %v3759 = vsel %vm1793, %v3727, %v3205
      %v3760 = vsel %vm1793, %v3728, %v3207
      %v3761 = vsel %vm1793, %v3729, %v3209
      %v3762 = vsel %vm1793, %v3730, %v3211
      %v3763 = vsel %vm1793, %v3731, %v3213
      %v3764 = vsel %vm1793, %v3732, %v3215
      %v3765 = vsel %vm1793, %v3733, %v3217
      %v3766 = vsel %vm1793, %v3734, %v3219
      %v3767 = vsel %vm1830, %v3735, %v3254
      %v3768 = vsel %vm1830, %v3736, %v3256
      %v3769 = vsel %vm1830, %v3737, %v3258
      %v3770 = vsel %vm1830, %v3738, %v3260
      %v3771 = vsel %vm1830, %v3739, %v3262
      %v3772 = vsel %vm1830, %v3740, %v3264
      %v3773 = vsel %vm1830, %v3741, %v3266
      %v3774 = vsel %vm1830, %v3742, %v3268
      %v3775 = vsel %vm1830, %v3743, %v3270
      %v3776 = vsel %vm1830, %v3744, %v3272
      %v3777 = vsel %vm1830, %v3745, %v3274
      %v3778 = vsel %vm1830, %v3746, %v3276
      %v3779 = vsel %vm1830, %v3747, %v3278
      %v3780 = vsel %vm1830, %v3748, %v3280
      %v3781 = vsel %vm1830, %v3749, %v3282
      %v3782 = vsel %vm1830, %v3750, %v3284
      %v3783 = vsel %vm1830, %v3751, %v3286
      %v3784 = vsel %vm1830, %v3752, %v3288
      %v3785 = vsel %vm1830, %v3753, %v3290
      %v3786 = vsel %vm1830, %v3754, %v3292
      %v3787 = vsel %vm1830, %v3755, %v3294
      %v3788 = vsel %vm1830, %v3756, %v3296
      %v3789 = vsel %vm1830, %v3757, %v3298
      %v3790 = vsel %vm1830, %v3758, %v3300
      %v3791 = vsel %vm1830, %v3759, %v3302
      %v3792 = vsel %vm1830, %v3760, %v3304
      %v3793 = vsel %vm1830, %v3761, %v3306
      %v3794 = vsel %vm1830, %v3762, %v3308
      %v3795 = vsel %vm1830, %v3763, %v3310
      %v3796 = vsel %vm1830, %v3764, %v3312
      %v3797 = vsel %vm1830, %v3765, %v3314
      %v3798 = vsel %vm1830, %v3766, %v3316
      %v3799 = vsel %vm1867, %v3767, %v3351
      %v3800 = vsel %vm1867, %v3768, %v3353
      %v3801 = vsel %vm1867, %v3769, %v3355
      %v3802 = vsel %vm1867, %v3770, %v3357
      %v3803 = vsel %vm1867, %v3771, %v3359
      %v3804 = vsel %vm1867, %v3772, %v3361
      %v3805 = vsel %vm1867, %v3773, %v3363
      %v3806 = vsel %vm1867, %v3774, %v3365
      %v3807 = vsel %vm1867, %v3775, %v3367
      %v3808 = vsel %vm1867, %v3776, %v3369
      %v3809 = vsel %vm1867, %v3777, %v3371
      %v3810 = vsel %vm1867, %v3778, %v3373
      %v3811 = vsel %vm1867, %v3779, %v3375
      %v3812 = vsel %vm1867, %v3780, %v3377
      %v3813 = vsel %vm1867, %v3781, %v3379
      %v3814 = vsel %vm1867, %v3782, %v3381
      %v3815 = vsel %vm1867, %v3783, %v3383
      %v3816 = vsel %vm1867, %v3784, %v3385
      %v3817 = vsel %vm1867, %v3785, %v3387
      %v3818 = vsel %vm1867, %v3786, %v3389
      %v3819 = vsel %vm1867, %v3787, %v3391
      %v3820 = vsel %vm1867, %v3788, %v3393
      %v3821 = vsel %vm1867, %v3789, %v3395
      %v3822 = vsel %vm1867, %v3790, %v3397
      %v3823 = vsel %vm1867, %v3791, %v3399
      %v3824 = vsel %vm1867, %v3792, %v3401
      %v3825 = vsel %vm1867, %v3793, %v3403
      %v3826 = vsel %vm1867, %v3794, %v3405
      %v3827 = vsel %vm1867, %v3795, %v3407
      %v3828 = vsel %vm1867, %v3796, %v3409
      %v3829 = vsel %vm1867, %v3797, %v3411
      %v3830 = vsel %vm1867, %v3798, %v3413
      %v3831 = vsel %vm1904, %v3799, %v3447
      %v3832 = vsel %vm1904, %v3800, %v3449
      %v3833 = vsel %vm1904, %v3801, %v3451
      %v3834 = vsel %vm1904, %v3802, %v3453
      %v3835 = vsel %vm1904, %v3803, %v3455
      %v3836 = vsel %vm1904, %v3804, %v3457
      %v3837 = vsel %vm1904, %v3805, %v3459
      %v3838 = vsel %vm1904, %v3806, %v3461
      %v3839 = vsel %vm1904, %v3807, %v3463
      %v3840 = vsel %vm1904, %v3808, %v3465
      %v3841 = vsel %vm1904, %v3809, %v3467
      %v3842 = vsel %vm1904, %v3810, %v3469
      %v3843 = vsel %vm1904, %v3811, %v3471
      %v3844 = vsel %vm1904, %v3812, %v3473
      %v3845 = vsel %vm1904, %v3813, %v3475
      %v3846 = vsel %vm1904, %v3814, %v3477
      %v3847 = vsel %vm1904, %v3815, %v3479
      %v3848 = vsel %vm1904, %v3816, %v3481
      %v3849 = vsel %vm1904, %v3817, %v3483
      %v3850 = vsel %vm1904, %v3818, %v3485
      %v3851 = vsel %vm1904, %v3819, %v3487
      %v3852 = vsel %vm1904, %v3820, %v3489
      %v3853 = vsel %vm1904, %v3821, %v3491
      %v3854 = vsel %vm1904, %v3822, %v3493
      %v3855 = vsel %vm1904, %v3823, %v3495
      %v3856 = vsel %vm1904, %v3824, %v3497
      %v3857 = vsel %vm1904, %v3825, %v3499
      %v3858 = vsel %vm1904, %v3826, %v3501
      %v3859 = vsel %vm1904, %v3827, %v3503
      %v3860 = vsel %vm1904, %v3828, %v3505
      %v3861 = vsel %vm1904, %v3829, %v3507
      %v3862 = vsel %vm1904, %v3830, %v3509
      %v3863 = vsel %vm1941, %v3831, %v3544
      %v3864 = vsel %vm1941, %v3832, %v3546
      %v3865 = vsel %vm1941, %v3833, %v3548
      %v3866 = vsel %vm1941, %v3834, %v3550
      %v3867 = vsel %vm1941, %v3835, %v3552
      %v3868 = vsel %vm1941, %v3836, %v3554
      %v3869 = vsel %vm1941, %v3837, %v3556
      %v3870 = vsel %vm1941, %v3838, %v3558
      %v3871 = vsel %vm1941, %v3839, %v3560
      %v3872 = vsel %vm1941, %v3840, %v3562
      %v3873 = vsel %vm1941, %v3841, %v3564
      %v3874 = vsel %vm1941, %v3842, %v3566
      %v3875 = vsel %vm1941, %v3843, %v3568
      %v3876 = vsel %vm1941, %v3844, %v3570
      %v3877 = vsel %vm1941, %v3845, %v3572
      %v3878 = vsel %vm1941, %v3846, %v3574
      %v3879 = vsel %vm1941, %v3847, %v3576
      %v3880 = vsel %vm1941, %v3848, %v3578
      %v3881 = vsel %vm1941, %v3849, %v3580
      %v3882 = vsel %vm1941, %v3850, %v3582
      %v3883 = vsel %vm1941, %v3851, %v3584
      %v3884 = vsel %vm1941, %v3852, %v3586
      %v3885 = vsel %vm1941, %v3853, %v3588
      %v3886 = vsel %vm1941, %v3854, %v3590
      %v3887 = vsel %vm1941, %v3855, %v3592
      %v3888 = vsel %vm1941, %v3856, %v3594
      %v3889 = vsel %vm1941, %v3857, %v3596
      %v3890 = vsel %vm1941, %v3858, %v3598
      %v3891 = vsel %vm1941, %v3859, %v3600
      %v3892 = vsel %vm1941, %v3860, %v3602
      %v3893 = vsel %vm1941, %v3861, %v3604
      %v3894 = vsel %vm1941, %v3862, %v3606
      %v3896 = vlaneseq
      %v3897 = vshrl.u32 %v3896, 7
      %v3898 = vsub.s32 0, %v3897
      %v3899 = vrot.slane %v2603, %v3898
      %v3902 = vsel %vm1984, %v3863, 0
      %v3905 = vsel %vm1984, %v3864, 0
      %v3908 = vsel %vm1984, %v3865, 0
      %v3911 = vsel %vm1984, %v3866, 0
      %v3914 = vsel %vm1984, %v3867, 0
      %v3917 = vsel %vm1984, %v3868, 0
      %v3920 = vsel %vm1984, %v3869, 0
      %v3923 = vsel %vm1984, %v3870, 0
      %v3926 = vsel %vm1984, %v3871, 0
      %v3929 = vsel %vm1984, %v3872, 0
      %v3932 = vsel %vm1984, %v3873, 0
      %v3935 = vsel %vm1984, %v3874, 0
      %v3938 = vsel %vm1984, %v3875, 0
      %v3941 = vsel %vm1984, %v3876, 0
      %v3944 = vsel %vm1984, %v3877, 0
      %v3947 = vsel %vm1984, %v3878, 0
      %v3950 = vsel %vm1984, %v3879, 0
      %v3953 = vsel %vm1984, %v3880, 0
      %v3956 = vsel %vm1984, %v3881, 0
      %v3959 = vsel %vm1984, %v3882, 0
      %v3962 = vsel %vm1984, %v3883, 0
      %v3965 = vsel %vm1984, %v3884, 0
      %v3968 = vsel %vm1984, %v3885, 0
      %v3971 = vsel %vm1984, %v3886, 0
      %v3974 = vsel %vm1984, %v3887, 0
      %v3977 = vsel %vm1984, %v3888, 0
      %v3980 = vsel %vm1984, %v3889, 0
      %v3983 = vsel %vm1984, %v3890, 0
      %v3986 = vsel %vm1984, %v3891, 0
      %v3989 = vsel %vm1984, %v3892, 0
      %v3992 = vsel %vm1984, %v3893, 0
      %v3995 = vsel %vm1984, %v3894, 0
      %3997 = vmatprep.subr.mxu0 0.0
      %3998 = vmatpush1.msra.mxu0 %v2594
      %3999 = vmatprep.subr.mxu0 0.0
      %4000 = vmatpush1.msra.mxu0 %v2595
      %4001 = vmatprep.subr.mxu0 0.0
      %4002 = vmatpush1.msra.mxu0 %v2596
      %4003 = vmatprep.subr.mxu0 0.0
      %4004 = vmatpush1.msra.mxu0 %v2597
      %4005 = vmatprep.subr.mxu0 0.0
      %4006 = vmatpush1.msra.mxu0 %v2598
      %4007 = vmatprep.subr.mxu0 0.0
      %4008 = vmatpush1.msra.mxu0 %v2599
      %4009 = vmatprep.subr.mxu0 0.0
      %4010 = vmatpush1.msra.mxu0 %v2600
      %4011 = vmatprep.subr.mxu0 0.0
      %4012 = vmatpush1.msra.mxu0 %v2601
      %4013 = vmatprep.subr.mxu0 0.0
      %4014 = vmatpush1.msra.mxu0 %v2602
      %4015 = vmatprep.subr.mxu0 0.0
      %4016 = vmatpush1.msra.mxu0 0.0
      %4017 = vmatprep.subr.mxu0 0.0
      %4018 = vmatpush1.msra.mxu0 0.0
      %4019 = vmatprep.subr.mxu0 0.0
      %4020 = vmatpush1.msra.mxu0 0.0
      %4021 = vmatprep.subr.mxu0 0.0
      %4022 = vmatpush1.msra.mxu0 0.0
      %4023 = vmatprep.subr.mxu0 0.0
      %4024 = vmatpush1.msra.mxu0 0.0
      %4025 = vmatprep.subr.mxu0 0.0
      %4026 = vmatpush1.msra.mxu0 0.0
      %4027 = vmatprep.subr.mxu0 0.0
      %4028 = vmatpush1.msra.mxu0 0.0
      %4029 = vmatprep.subr.mxu0 0.0
      %4030 = vmatpush1.msra.mxu0 0.0
      %4031 = vmatprep.subr.mxu0 0.0
      %4032 = vmatpush1.msra.mxu0 0.0
      %4033 = vmatprep.subr.mxu0 0.0
      %4034 = vmatpush1.msra.mxu0 0.0
      %4035 = vmatprep.subr.mxu0 0.0
      %4036 = vmatpush1.msra.mxu0 0.0
      %4037 = vmatprep.subr.mxu0 0.0
      %4038 = vmatpush1.msra.mxu0 0.0
      %4039 = vmatprep.subr.mxu0 0.0
      %4040 = vmatpush1.msra.mxu0 0.0
      %4041 = vmatprep.subr.mxu0 0.0
      %4042 = vmatpush1.msra.mxu0 0.0
      %4043 = vmatprep.subr.mxu0 0.0
      %4044 = vmatpush1.msra.mxu0 0.0
      %4045 = vmatprep.subr.mxu0 0.0
      %4046 = vmatpush1.msra.mxu0 0.0
      %4047 = vmatprep.subr.mxu0 0.0
      %4048 = vmatpush1.msra.mxu0 0.0
      %4049 = vmatprep.subr.mxu0 0.0
      %4050 = vmatpush1.msra.mxu0 0.0
      %4051 = vmatprep.subr.mxu0 0.0
      %4052 = vmatpush1.msra.mxu0 0.0
      %4053 = vmatprep.subr.mxu0 0.0
      %4054 = vmatpush1.msra.mxu0 0.0
      %4055 = vmatprep.subr.mxu0 0.0
      %4056 = vmatpush1.msra.mxu0 0.0
      %4057 = vmatprep.subr.mxu0 0.0
      %4058 = vmatpush1.msra.mxu0 0.0
      %4059 = vmatprep.subr.mxu0 0.0
      %4060 = vmatpush1.msra.mxu0 0.0
      %4061 = vmatprep.mubr.f32.mxu0 0.0
      %4062 = vmatmul.mubr.f32.gmra.mrb[0].mxu0 %v3902
      %v4063 = vpop.f32.mrb[0].mxu0
      %v4064 = vadd.f32 %v3899, %v4063
      %v4065 = vpop.f32.mrb[0].mxu0
      %4066 = vmatprep.mubr.f32.mxu0 0.0
      %4067 = vmatmul.mubr.f32.gmra.mrb[0].mxu0 %v3905
      %v4068 = vpop.f32.mrb[0].mxu0
      %v4069 = vadd.f32 %v3899, %v4068
      %v4070 = vpop.f32.mrb[0].mxu0
      %4071 = vmatprep.mubr.f32.mxu0 0.0
      %4072 = vmatmul.mubr.f32.gmra.mrb[0].mxu0 %v3908
      %v4073 = vpop.f32.mrb[0].mxu0
      %v4074 = vadd.f32 %v3899, %v4073
      %v4075 = vpop.f32.mrb[0].mxu0
      %4076 = vmatprep.mubr.f32.mxu0 0.0
      %4077 = vmatmul.mubr.f32.gmra.mrb[0].mxu0 %v3911
      %v4078 = vpop.f32.mrb[0].mxu0
      %v4079 = vadd.f32 %v3899, %v4078
      %v4080 = vpop.f32.mrb[0].mxu0
      %4081 = vmatprep.mubr.f32.mxu0 0.0
      %4082 = vmatmul.mubr.f32.gmra.mrb[0].mxu0 %v3914
      %v4083 = vpop.f32.mrb[0].mxu0
      %v4084 = vadd.f32 %v3899, %v4083
      %v4085 = vpop.f32.mrb[0].mxu0
      %4086 = vmatprep.mubr.f32.mxu0 0.0
      %4087 = vmatmul.mubr.f32.gmra.mrb[0].mxu0 %v3917
      %v4088 = vpop.f32.mrb[0].mxu0
      %v4089 = vadd.f32 %v3899, %v4088
      %v4090 = vpop.f32.mrb[0].mxu0
      %4091 = vmatprep.mubr.f32.mxu0 0.0
      %4092 = vmatmul.mubr.f32.gmra.mrb[0].mxu0 %v3920
      %v4093 = vpop.f32.mrb[0].mxu0
      %v4094 = vadd.f32 %v3899, %v4093
      %v4095 = vpop.f32.mrb[0].mxu0
      %4096 = vmatprep.mubr.f32.mxu0 0.0
      %4097 = vmatmul.mubr.f32.gmra.mrb[0].mxu0 %v3923
      %v4098 = vpop.f32.mrb[0].mxu0
      %v4099 = vadd.f32 %v3899, %v4098
      %v4100 = vpop.f32.mrb[0].mxu0
      %4101 = vmatprep.mubr.f32.mxu0 0.0
      %4102 = vmatmul.mubr.f32.gmra.mrb[0].mxu0 %v3926
      %v4103 = vpop.f32.mrb[0].mxu0
      %v4104 = vadd.f32 %v3899, %v4103
      %v4105 = vpop.f32.mrb[0].mxu0
      %4106 = vmatprep.mubr.f32.mxu0 0.0
      %4107 = vmatmul.mubr.f32.gmra.mrb[0].mxu0 %v3929
      %v4108 = vpop.f32.mrb[0].mxu0
      %v4109 = vadd.f32 %v3899, %v4108
      %v4110 = vpop.f32.mrb[0].mxu0
      %4111 = vmatprep.mubr.f32.mxu0 0.0
      %4112 = vmatmul.mubr.f32.gmra.mrb[0].mxu0 %v3932
      %v4113 = vpop.f32.mrb[0].mxu0
      %v4114 = vadd.f32 %v3899, %v4113
      %v4115 = vpop.f32.mrb[0].mxu0
      %4116 = vmatprep.mubr.f32.mxu0 0.0
      %4117 = vmatmul.mubr.f32.gmra.mrb[0].mxu0 %v3935
      %v4118 = vpop.f32.mrb[0].mxu0
      %v4119 = vadd.f32 %v3899, %v4118
      %v4120 = vpop.f32.mrb[0].mxu0
      %4121 = vmatprep.mubr.f32.mxu0 0.0
      %4122 = vmatmul.mubr.f32.gmra.mrb[0].mxu0 %v3938
      %v4123 = vpop.f32.mrb[0].mxu0
      %v4124 = vadd.f32 %v3899, %v4123
      %v4125 = vpop.f32.mrb[0].mxu0
      %4126 = vmatprep.mubr.f32.mxu0 0.0
      %4127 = vmatmul.mubr.f32.gmra.mrb[0].mxu0 %v3941
      %v4128 = vpop.f32.mrb[0].mxu0
      %v4129 = vadd.f32 %v3899, %v4128
      %v4130 = vpop.f32.mrb[0].mxu0
      %4131 = vmatprep.mubr.f32.mxu0 0.0
      %4132 = vmatmul.mubr.f32.gmra.mrb[0].mxu0 %v3944
      %v4133 = vpop.f32.mrb[0].mxu0
      %v4134 = vadd.f32 %v3899, %v4133
      %v4135 = vpop.f32.mrb[0].mxu0
      %4136 = vmatprep.mubr.f32.mxu0 0.0
      %4137 = vmatmul.mubr.f32.gmra.mrb[0].mxu0 %v3947
      %v4138 = vpop.f32.mrb[0].mxu0
      %v4139 = vadd.f32 %v3899, %v4138
      %v4140 = vpop.f32.mrb[0].mxu0
      %4141 = vmatprep.mubr.f32.mxu0 0.0
      %4142 = vmatmul.mubr.f32.gmra.mrb[0].mxu0 %v3950
      %v4143 = vpop.f32.mrb[0].mxu0
      %v4144 = vadd.f32 %v3899, %v4143
      %v4145 = vpop.f32.mrb[0].mxu0
      %4146 = vmatprep.mubr.f32.mxu0 0.0
      %4147 = vmatmul.mubr.f32.gmra.mrb[0].mxu0 %v3953
      %v4148 = vpop.f32.mrb[0].mxu0
      %v4149 = vadd.f32 %v3899, %v4148
      %v4150 = vpop.f32.mrb[0].mxu0
      %4151 = vmatprep.mubr.f32.mxu0 0.0
      %4152 = vmatmul.mubr.f32.gmra.mrb[0].mxu0 %v3956
      %v4153 = vpop.f32.mrb[0].mxu0
      %v4154 = vadd.f32 %v3899, %v4153
      %v4155 = vpop.f32.mrb[0].mxu0
      %4156 = vmatprep.mubr.f32.mxu0 0.0
      %4157 = vmatmul.mubr.f32.gmra.mrb[0].mxu0 %v3959
      %v4158 = vpop.f32.mrb[0].mxu0
      %v4159 = vadd.f32 %v3899, %v4158
      %v4160 = vpop.f32.mrb[0].mxu0
      %4161 = vmatprep.mubr.f32.mxu0 0.0
      %4162 = vmatmul.mubr.f32.gmra.mrb[0].mxu0 %v3962
      %v4163 = vpop.f32.mrb[0].mxu0
      %v4164 = vadd.f32 %v3899, %v4163
      %v4165 = vpop.f32.mrb[0].mxu0
      %4166 = vmatprep.mubr.f32.mxu0 0.0
      %4167 = vmatmul.mubr.f32.gmra.mrb[0].mxu0 %v3965
      %v4168 = vpop.f32.mrb[0].mxu0
      %v4169 = vadd.f32 %v3899, %v4168
      %v4170 = vpop.f32.mrb[0].mxu0
      %4171 = vmatprep.mubr.f32.mxu0 0.0
      %4172 = vmatmul.mubr.f32.gmra.mrb[0].mxu0 %v3968
      %v4173 = vpop.f32.mrb[0].mxu0
      %v4174 = vadd.f32 %v3899, %v4173
      %v4175 = vpop.f32.mrb[0].mxu0
      %4176 = vmatprep.mubr.f32.mxu0 0.0
      %4177 = vmatmul.mubr.f32.gmra.mrb[0].mxu0 %v3971
      %v4178 = vpop.f32.mrb[0].mxu0
      %v4179 = vadd.f32 %v3899, %v4178
      %v4180 = vpop.f32.mrb[0].mxu0
      %4181 = vmatprep.mubr.f32.mxu0 0.0
      %4182 = vmatmul.mubr.f32.gmra.mrb[0].mxu0 %v3974
      %v4183 = vpop.f32.mrb[0].mxu0
      %v4184 = vadd.f32 %v3899, %v4183
      %v4185 = vpop.f32.mrb[0].mxu0
      %4186 = vmatprep.mubr.f32.mxu0 0.0
      %4187 = vmatmul.mubr.f32.gmra.mrb[0].mxu0 %v3977
      %v4188 = vpop.f32.mrb[0].mxu0
      %v4189 = vadd.f32 %v3899, %v4188
      %v4190 = vpop.f32.mrb[0].mxu0
      %4191 = vmatprep.mubr.f32.mxu0 0.0
      %4192 = vmatmul.mubr.f32.gmra.mrb[0].mxu0 %v3980
      %v4193 = vpop.f32.mrb[0].mxu0
      %v4194 = vadd.f32 %v3899, %v4193
      %v4195 = vpop.f32.mrb[0].mxu0
      %4196 = vmatprep.mubr.f32.mxu0 0.0
      %4197 = vmatmul.mubr.f32.gmra.mrb[0].mxu0 %v3983
      %v4198 = vpop.f32.mrb[0].mxu0
      %v4199 = vadd.f32 %v3899, %v4198
      %v4200 = vpop.f32.mrb[0].mxu0
      %4201 = vmatprep.mubr.f32.mxu0 0.0
      %4202 = vmatmul.mubr.f32.gmra.mrb[0].mxu0 %v3986
      %v4203 = vpop.f32.mrb[0].mxu0
      %v4204 = vadd.f32 %v3899, %v4203
      %v4205 = vpop.f32.mrb[0].mxu0
      %4206 = vmatprep.mubr.f32.mxu0 0.0
      %4207 = vmatmul.mubr.f32.gmra.mrb[0].mxu0 %v3989
      %v4208 = vpop.f32.mrb[0].mxu0
      %v4209 = vadd.f32 %v3899, %v4208
      %v4210 = vpop.f32.mrb[0].mxu0
      %4211 = vmatprep.mubr.f32.mxu0 0.0
      %4212 = vmatmul.mubr.f32.gmra.mrb[0].mxu0 %v3992
      %v4213 = vpop.f32.mrb[0].mxu0
      %v4214 = vadd.f32 %v3899, %v4213
      %v4215 = vpop.f32.mrb[0].mxu0
      %4216 = vmatprep.mubr.f32.mxu0 0.0
      %4217 = vmatmul.mubr.f32.gmra.mrb[0].mxu0 %v3995
      %v4218 = vpop.f32.mrb[0].mxu0
      %v4219 = vadd.f32 %v3899, %v4218
      %v4220 = vpop.f32.mrb[0].mxu0
      %4221 = vdwg.mxu0
      %v4222 = vxor.u32 %v4064, 2147483648
      %v4223 = vxor.u32 %v4069, 2147483648
      %v4224 = vxor.u32 %v4074, 2147483648
      %v4225 = vxor.u32 %v4079, 2147483648
      %v4226 = vxor.u32 %v4084, 2147483648
      %v4227 = vxor.u32 %v4089, 2147483648
      %v4228 = vxor.u32 %v4094, 2147483648
      %v4229 = vxor.u32 %v4099, 2147483648
      %v4230 = vxor.u32 %v4104, 2147483648
      %v4231 = vxor.u32 %v4109, 2147483648
      %v4232 = vxor.u32 %v4114, 2147483648
      %v4233 = vxor.u32 %v4119, 2147483648
      %v4234 = vxor.u32 %v4124, 2147483648
      %v4235 = vxor.u32 %v4129, 2147483648
      %v4236 = vxor.u32 %v4134, 2147483648
      %v4237 = vxor.u32 %v4139, 2147483648
      %v4238 = vxor.u32 %v4144, 2147483648
      %v4239 = vxor.u32 %v4149, 2147483648
      %v4240 = vxor.u32 %v4154, 2147483648
      %v4241 = vxor.u32 %v4159, 2147483648
      %v4242 = vxor.u32 %v4164, 2147483648
      %v4243 = vxor.u32 %v4169, 2147483648
      %v4244 = vxor.u32 %v4174, 2147483648
      %v4245 = vxor.u32 %v4179, 2147483648
      %v4246 = vxor.u32 %v4184, 2147483648
      %v4247 = vxor.u32 %v4189, 2147483648
      %v4248 = vxor.u32 %v4194, 2147483648
      %v4249 = vxor.u32 %v4199, 2147483648
      %v4250 = vxor.u32 %v4204, 2147483648
      %v4251 = vxor.u32 %v4209, 2147483648
      %v4252 = vxor.u32 %v4214, 2147483648
      %v4253 = vxor.u32 %v4219, 2147483648
      %v4254 = vmul.f32 %v4222, 1.442695
      %v4255 = vpow.pop %v4254
      %v4256 = vmul.f32 %v4223, 1.442695
      %v4257 = vpow.pop %v4256
      %v4258 = vmul.f32 %v4224, 1.442695
      %v4259 = vpow.pop %v4258
      %v4260 = vmul.f32 %v4225, 1.442695
      %v4261 = vpow.pop %v4260
      %v4262 = vmul.f32 %v4226, 1.442695
      %v4263 = vpow.pop %v4262
      %v4264 = vmul.f32 %v4227, 1.442695
      %v4265 = vpow.pop %v4264
      %v4266 = vmul.f32 %v4228, 1.442695
      %v4267 = vpow.pop %v4266
      %v4268 = vmul.f32 %v4229, 1.442695
      %v4269 = vpow.pop %v4268
      %v4270 = vmul.f32 %v4230, 1.442695
      %v4271 = vpow.pop %v4270
      %v4272 = vmul.f32 %v4231, 1.442695
      %v4273 = vpow.pop %v4272
      %v4274 = vmul.f32 %v4232, 1.442695
      %v4275 = vpow.pop %v4274
      %v4276 = vmul.f32 %v4233, 1.442695
      %v4277 = vpow.pop %v4276
      %v4278 = vmul.f32 %v4234, 1.442695
      %v4279 = vpow.pop %v4278
      %v4280 = vmul.f32 %v4235, 1.442695
      %v4281 = vpow.pop %v4280
      %v4282 = vmul.f32 %v4236, 1.442695
      %v4283 = vpow.pop %v4282
      %v4284 = vmul.f32 %v4237, 1.442695
      %v4285 = vpow.pop %v4284
      %v4286 = vmul.f32 %v4238, 1.442695
      %v4287 = vpow.pop %v4286
      %v4288 = vmul.f32 %v4239, 1.442695
      %v4289 = vpow.pop %v4288
      %v4290 = vmul.f32 %v4240, 1.442695
      %v4291 = vpow.pop %v4290
      %v4292 = vmul.f32 %v4241, 1.442695
      %v4293 = vpow.pop %v4292
      %v4294 = vmul.f32 %v4242, 1.442695
      %v4295 = vpow.pop %v4294
      %v4296 = vmul.f32 %v4243, 1.442695
      %v4297 = vpow.pop %v4296
      %v4298 = vmul.f32 %v4244, 1.442695
      %v4299 = vpow.pop %v4298
      %v4300 = vmul.f32 %v4245, 1.442695
      %v4301 = vpow.pop %v4300
      %v4302 = vmul.f32 %v4246, 1.442695
      %v4303 = vpow.pop %v4302
      %v4304 = vmul.f32 %v4247, 1.442695
      %v4305 = vpow.pop %v4304
      %v4306 = vmul.f32 %v4248, 1.442695
      %v4307 = vpow.pop %v4306
      %v4308 = vmul.f32 %v4249, 1.442695
      %v4309 = vpow.pop %v4308
      %v4310 = vmul.f32 %v4250, 1.442695
      %v4311 = vpow.pop %v4310
      %v4312 = vmul.f32 %v4251, 1.442695
      %v4313 = vpow.pop %v4312
      %v4314 = vmul.f32 %v4252, 1.442695
      %v4315 = vpow.pop %v4314
      %v4316 = vmul.f32 %v4253, 1.442695
      %v4317 = vpow.pop %v4316
      %v4318 = vadd.f32 %v4255, 1.0
      %v4319 = vadd.f32 %v4257, 1.0
      %v4320 = vadd.f32 %v4259, 1.0
      %v4321 = vadd.f32 %v4261, 1.0
      %v4322 = vadd.f32 %v4263, 1.0
      %v4323 = vadd.f32 %v4265, 1.0
      %v4324 = vadd.f32 %v4267, 1.0
      %v4325 = vadd.f32 %v4269, 1.0
      %v4326 = vadd.f32 %v4271, 1.0
      %v4327 = vadd.f32 %v4273, 1.0
      %v4328 = vadd.f32 %v4275, 1.0
      %v4329 = vadd.f32 %v4277, 1.0
      %v4330 = vadd.f32 %v4279, 1.0
      %v4331 = vadd.f32 %v4281, 1.0
      %v4332 = vadd.f32 %v4283, 1.0
      %v4333 = vadd.f32 %v4285, 1.0
      %v4334 = vadd.f32 %v4287, 1.0
      %v4335 = vadd.f32 %v4289, 1.0
      %v4336 = vadd.f32 %v4291, 1.0
      %v4337 = vadd.f32 %v4293, 1.0
      %v4338 = vadd.f32 %v4295, 1.0
      %v4339 = vadd.f32 %v4297, 1.0
      %v4340 = vadd.f32 %v4299, 1.0
      %v4341 = vadd.f32 %v4301, 1.0
      %v4342 = vadd.f32 %v4303, 1.0
      %v4343 = vadd.f32 %v4305, 1.0
      %v4344 = vadd.f32 %v4307, 1.0
      %v4345 = vadd.f32 %v4309, 1.0
      %v4346 = vadd.f32 %v4311, 1.0
      %v4347 = vadd.f32 %v4313, 1.0
      %v4348 = vadd.f32 %v4315, 1.0
      %v4349 = vadd.f32 %v4317, 1.0
      %v4350 = vrcp.pop %v4318
      %v4351 = vmul.f32 1.0, %v4350
      %v4352 = vrcp.pop %v4319
      %v4353 = vmul.f32 1.0, %v4352
      %v4354 = vrcp.pop %v4320
      %v4355 = vmul.f32 1.0, %v4354
      %v4356 = vrcp.pop %v4321
      %v4357 = vmul.f32 1.0, %v4356
      %v4358 = vrcp.pop %v4322
      %v4359 = vmul.f32 1.0, %v4358
      %v4360 = vrcp.pop %v4323
      %v4361 = vmul.f32 1.0, %v4360
      %v4362 = vrcp.pop %v4324
      %v4363 = vmul.f32 1.0, %v4362
      %v4364 = vrcp.pop %v4325
      %v4365 = vmul.f32 1.0, %v4364
      %v4366 = vrcp.pop %v4326
      %v4367 = vmul.f32 1.0, %v4366
      %v4368 = vrcp.pop %v4327
      %v4369 = vmul.f32 1.0, %v4368
      %v4370 = vrcp.pop %v4328
      %v4371 = vmul.f32 1.0, %v4370
      %v4372 = vrcp.pop %v4329
      %v4373 = vmul.f32 1.0, %v4372
      %v4374 = vrcp.pop %v4330
      %v4375 = vmul.f32 1.0, %v4374
      %v4376 = vrcp.pop %v4331
      %v4377 = vmul.f32 1.0, %v4376
      %v4378 = vrcp.pop %v4332
      %v4379 = vmul.f32 1.0, %v4378
      %v4380 = vrcp.pop %v4333
      %v4381 = vmul.f32 1.0, %v4380
      %v4382 = vrcp.pop %v4334
      %v4383 = vmul.f32 1.0, %v4382
      %v4384 = vrcp.pop %v4335
      %v4385 = vmul.f32 1.0, %v4384
      %v4386 = vrcp.pop %v4336
      %v4387 = vmul.f32 1.0, %v4386
      %v4388 = vrcp.pop %v4337
      %v4389 = vmul.f32 1.0, %v4388
      %v4390 = vrcp.pop %v4338
      %v4391 = vmul.f32 1.0, %v4390
      %v4392 = vrcp.pop %v4339
      %v4393 = vmul.f32 1.0, %v4392
      %v4394 = vrcp.pop %v4340
      %v4395 = vmul.f32 1.0, %v4394
      %v4396 = vrcp.pop %v4341
      %v4397 = vmul.f32 1.0, %v4396
      %v4398 = vrcp.pop %v4342
      %v4399 = vmul.f32 1.0, %v4398
      %v4400 = vrcp.pop %v4343
      %v4401 = vmul.f32 1.0, %v4400
      %v4402 = vrcp.pop %v4344
      %v4403 = vmul.f32 1.0, %v4402
      %v4404 = vrcp.pop %v4345
      %v4405 = vmul.f32 1.0, %v4404
      %v4406 = vrcp.pop %v4346
      %v4407 = vmul.f32 1.0, %v4406
      %v4408 = vrcp.pop %v4347
      %v4409 = vmul.f32 1.0, %v4408
      %v4410 = vrcp.pop %v4348
      %v4411 = vmul.f32 1.0, %v4410
      %v4412 = vrcp.pop %v4349
      %v4413 = vmul.f32 1.0, %v4412
      %v4414 = vmul.f32 %v4064, %v4351
      %v4415 = vmul.f32 %v4069, %v4353
      %v4416 = vmul.f32 %v4074, %v4355
      %v4417 = vmul.f32 %v4079, %v4357
      %v4418 = vmul.f32 %v4084, %v4359
      %v4419 = vmul.f32 %v4089, %v4361
      %v4420 = vmul.f32 %v4094, %v4363
      %v4421 = vmul.f32 %v4099, %v4365
      %v4422 = vmul.f32 %v4104, %v4367
      %v4423 = vmul.f32 %v4109, %v4369
      %v4424 = vmul.f32 %v4114, %v4371
      %v4425 = vmul.f32 %v4119, %v4373
      %v4426 = vmul.f32 %v4124, %v4375
      %v4427 = vmul.f32 %v4129, %v4377
      %v4428 = vmul.f32 %v4134, %v4379
      %v4429 = vmul.f32 %v4139, %v4381
      %v4430 = vmul.f32 %v4144, %v4383
      %v4431 = vmul.f32 %v4149, %v4385
      %v4432 = vmul.f32 %v4154, %v4387
      %v4433 = vmul.f32 %v4159, %v4389
      %v4434 = vmul.f32 %v4164, %v4391
      %v4435 = vmul.f32 %v4169, %v4393
      %v4436 = vmul.f32 %v4174, %v4395
      %v4437 = vmul.f32 %v4179, %v4397
      %v4438 = vmul.f32 %v4184, %v4399
      %v4439 = vmul.f32 %v4189, %v4401
      %v4440 = vmul.f32 %v4194, %v4403
      %v4441 = vmul.f32 %v4199, %v4405
      %v4442 = vmul.f32 %v4204, %v4407
      %v4443 = vmul.f32 %v4209, %v4409
      %v4444 = vmul.f32 %v4214, %v4411
      %v4445 = vmul.f32 %v4219, %v4413
      %v4446 = vadd.f32 %v4414, %v457
      %v4447 = vadd.f32 %v4415, %v458
      %v4448 = vadd.f32 %v4416, %v459
      %v4449 = vadd.f32 %v4417, %v460
      %v4450 = vadd.f32 %v4418, %v461
      %v4451 = vadd.f32 %v4419, %v462
      %v4452 = vadd.f32 %v4420, %v463
      %v4453 = vadd.f32 %v4421, %v464
      %v4454 = vadd.f32 %v4422, %v465
      %v4455 = vadd.f32 %v4423, %v466
      %v4456 = vadd.f32 %v4424, %v467
      %v4457 = vadd.f32 %v4425, %v468
      %v4458 = vadd.f32 %v4426, %v469
      %v4459 = vadd.f32 %v4427, %v470
      %v4460 = vadd.f32 %v4428, %v471
      %v4461 = vadd.f32 %v4429, %v472
      %v4462 = vadd.f32 %v4430, %v473
      %v4463 = vadd.f32 %v4431, %v474
      %v4464 = vadd.f32 %v4432, %v475
      %v4465 = vadd.f32 %v4433, %v476
      %v4466 = vadd.f32 %v4434, %v477
      %v4467 = vadd.f32 %v4435, %v478
      %v4468 = vadd.f32 %v4436, %v479
      %v4469 = vadd.f32 %v4437, %v480
      %v4470 = vadd.f32 %v4438, %v481
      %v4471 = vadd.f32 %v4439, %v482
      %v4472 = vadd.f32 %v4440, %v483
      %v4473 = vadd.f32 %v4441, %v484
      %v4474 = vadd.f32 %v4442, %v485
      %v4475 = vadd.f32 %v4443, %v486
      %v4476 = vadd.f32 %v4444, %v487
      %v4477 = vadd.f32 %v4445, %v488
      %4478 = vst.msk [vmem:[%s455] sm:$0xff] %vm1682, %v4446
      %4479 = vst.msk [vmem:[%s455 + $0x8] sm:$0xff] %vm1682, %v4447
      %4480 = vst.msk [vmem:[%s455 + $0x10] sm:$0xff] %vm1682, %v4448
      %4481 = vst.msk [vmem:[%s455 + $0x18] sm:$0xff] %vm1682, %v4449
      %4482 = vst.msk [vmem:[%s455 + $0x20] sm:$0xff] %vm1682, %v4450
      %4483 = vst.msk [vmem:[%s455 + $0x28] sm:$0xff] %vm1682, %v4451
      %4484 = vst.msk [vmem:[%s455 + $0x30] sm:$0xff] %vm1682, %v4452
      %4485 = vst.msk [vmem:[%s455 + $0x38] sm:$0xff] %vm1682, %v4453
      %4486 = vst.msk [vmem:[%s455 + $0x40] sm:$0xff] %vm1682, %v4454
      %4487 = vst.msk [vmem:[%s455 + $0x48] sm:$0xff] %vm1682, %v4455
      %4488 = vst.msk [vmem:[%s455 + $0x50] sm:$0xff] %vm1682, %v4456
      %4489 = vst.msk [vmem:[%s455 + $0x58] sm:$0xff] %vm1682, %v4457
      %4490 = vst.msk [vmem:[%s455 + $0x60] sm:$0xff] %vm1682, %v4458
      %4491 = vst.msk [vmem:[%s455 + $0x68] sm:$0xff] %vm1682, %v4459
      %4492 = vst.msk [vmem:[%s455 + $0x70] sm:$0xff] %vm1682, %v4460
      %4493 = vst.msk [vmem:[%s455 + $0x78] sm:$0xff] %vm1682, %v4461
      %4494 = vst.msk [vmem:[%s455 + $0x80] sm:$0xff] %vm1682, %v4462
      %4495 = vst.msk [vmem:[%s455 + $0x88] sm:$0xff] %vm1682, %v4463
      %4496 = vst.msk [vmem:[%s455 + $0x90] sm:$0xff] %vm1682, %v4464
      %4497 = vst.msk [vmem:[%s455 + $0x98] sm:$0xff] %vm1682, %v4465
      %4498 = vst.msk [vmem:[%s455 + $0xa0] sm:$0xff] %vm1682, %v4466
      %4499 = vst.msk [vmem:[%s455 + $0xa8] sm:$0xff] %vm1682, %v4467
      %4500 = vst.msk [vmem:[%s455 + $0xb0] sm:$0xff] %vm1682, %v4468
      %4501 = vst.msk [vmem:[%s455 + $0xb8] sm:$0xff] %vm1682, %v4469
      %4502 = vst.msk [vmem:[%s455 + $0xc0] sm:$0xff] %vm1682, %v4470
      %4503 = vst.msk [vmem:[%s455 + $0xc8] sm:$0xff] %vm1682, %v4471
      %4504 = vst.msk [vmem:[%s455 + $0xd0] sm:$0xff] %vm1682, %v4472
      %4505 = vst.msk [vmem:[%s455 + $0xd8] sm:$0xff] %vm1682, %v4473
      %4506 = vst.msk [vmem:[%s455 + $0xe0] sm:$0xff] %vm1682, %v4474
      %4507 = vst.msk [vmem:[%s455 + $0xe8] sm:$0xff] %vm1682, %v4475
      %4508 = vst.msk [vmem:[%s455 + $0xf0] sm:$0xff] %vm1682, %v4476
      %4509 = vst.msk [vmem:[%s455 + $0xf8] sm:$0xff] %vm1682, %v4477
      %s4510 = smul.u32 16, %s23
      %p4511 = scmp.lt.s32.totalorder %s22, 1
      %s4512 = scalar_select %p4511, %s22, 1
      %p4513 = scmp.lt.s32.totalorder %s4510, 15
      %s4514 = scalar_select %p4513, %s4510, 15
      %s4515 = smul.addr %s4514, 2
      %s4516 = smul.addr %s4512, 32
      %s4517 = sadd.s32 %s4515, %s4516
      %s4518 = smul.addr %s4517, 8
      %s4519 = scalar_lea.vmem %s7, %s4518
      // Predicated region
      $region49: #{c2f_forward.4} parent=47 // pred_check
        %p4520 = pneg %p234
      $region50: #{c2f_forward.4} parent=47 // pred_check_branch
        %4522 = sbr.rel (%p4520) target = $region52
      $region51: #{c2f_forward.4} parent=47 // pred_region
        %s4523 = smul.u32 16, %s23
      $region52: #{c2f_forward.4} parent=47 // pred_fallthru
        _
    $region48: #{c2f_forward.4} parent=5 // pred_fallthru
      _
    %p4524 = scmp.le.s32.totalorder 2, %s13
    // Predicated region
    $region53: #{c2f_forward.4} parent=5 // pred_check
      %p4525 = pneg %p4524
    $region54: #{c2f_forward.4} parent=5 // pred_check_branch
      %4527 = sbr.rel (%p4525) target = $region56
    $region55: #{c2f_forward.4} parent=5 // pred_region
      %s4528 = ssub.s32 %s13, 2
      // Predicated region
      $region57: #{c2f_forward.4} parent=55 // pred_check
        %p4529 = pneg %p240
      $region58: #{c2f_forward.4} parent=55 // pred_check_branch
        %4531 = sbr.rel (%p4529) target = $region60
      $region59: #{c2f_forward.4} parent=55 // pred_region
        %s4532 = smul.u32 16, %s25
        %p4533 = scmp.lt.s32.totalorder %s24, 1
        %s4534 = scalar_select %p4533, %s24, 1
        %p4535 = scmp.lt.s32.totalorder %s4532, 15
        %s4536 = scalar_select %p4535, %s4532, 15
        %s4537 = smul.addr %s4536, 2
        %s4538 = smul.addr %s4534, 32
        %s4539 = sadd.s32 %s4537, %s4538
        %s4540 = smul.addr %s4539, 8
        %s4541 = scalar_lea.vmem %s7, %s4540
      $region60: #{c2f_forward.4} parent=55 // pred_fallthru
        _
    $region56: #{c2f_forward.4} parent=5 // pred_fallthru
      _
  $region6: #{c2f_forward.4} parent=0 // loop_footer
    %s17 = sadd.s32 1, %s13
  $region7: #{c2f_forward.4} parent=0 // loop_footer_branch
    %12 = sbr.rel target = $region3
  $region8: #{c2f_forward.4} parent=0 // loop_exit
    _

</llo_original>
